<compile_context>
chip_gen: v5e
topology: v5e:2x2
jax: 0.10.0
libtpu: 0.0.40
codegen_flags: <defaults>
</compile_context>

<pallas_src>
import functools

import jax
import jax.numpy as jnp
from jax.experimental import pallas as pl
from jax.experimental.pallas import tpu as pltpu


_VMEM_LIMIT_BYTES = 32 * 1024 * 1024  # safe on v5e/v6e/v7x


def _default_fc_tile_k():
    """Per review: keep tk=8192 on v6e/v7x, shrink to 4096 on v5e."""
    try:
        kind = jax.devices()[0].device_kind.lower()
    except Exception:
        return 8192
    return 4096 if "v5" in kind else 8192


def _pick_group(oc, wo):
    """Pooled columns per block-diagonal group so that G*OC == 128 lanes."""
    g = max(1, 128 // oc) if 128 % oc == 0 else 1
    while g > 1 and wo % g != 0:
        g //= 2
    return max(g, 1)


# ---------------------------------------------------------------------------
# Fused conv(3x3, pad=1) + bias + ReLU + maxpool(2x2) kernel
# ---------------------------------------------------------------------------
def _conv_pool_kernel(a00, a01, a10, a11, w_ref, b_ref, o_ref, *, n_i, ng, tr):
    """a{p}{dj}: [B*(Ho+1)*NG, G*3C] bf16 operands (full, VMEM resident).

    a_{p,dj}[(b,i,g),(gj,kj,c)] = padded_input[b, 2i+p, 2*(g*G+gj)+dj+kj, c].
    w_ref: [3, G*3C, G*OC] block-diagonal weights (one per ki), bf16.
    b_ref: [1, G*OC] f32 bias tiled over gj.  o_ref block: [Tr*NG, G*OC].

    pooled = relu(max_{di,dj} conv(2ho+di, 2wo+dj) + bias): bias/ReLU are
    monotone so they commute with the window max."""
    b = pl.program_id(0)
    j = pl.program_id(1)
    h0 = j * tr
    base = b * (n_i * ng)
    m = tr * ng
    a_refs = ((a00, a01), (a10, a11))  # indexed [p][dj]

    result = None
    for di in range(2):
        for dj in range(2):
            acc = None
            for ki in range(3):
                p = (di + ki) % 2
                a_off = (di + ki) // 2
                start = pl.multiple_of(base + (h0 + a_off) * ng, ng)
                blk = a_refs[p][dj][pl.ds(start, m), :]
                t = jnp.dot(blk, w_ref[ki], preferred_element_type=jnp.float32)
                acc = t if acc is None else acc + t
            result = acc if result is None else jnp.maximum(result, acc)

    o_ref[...] = jnp.maximum(result + b_ref[...], 0.0).astype(o_ref.dtype)


def conv3x3_relu_pool(x_nhwc, wbd, b_row):
    """x: [B,H,W,C] -> relu(maxpool2(conv3x3(x))) as [B,H/2,W/2,OC] bf16.

    wbd: [3, G*3C, G*OC] bf16 block-diagonal weights, b_row: [1, G*OC] f32."""
    B, H, W, C = x_nhwc.shape
    Ho, Wo = H // 2, W // 2
    G = wbd.shape[1] // (3 * C)
    OC = wbd.shape[2] // G
    NG = Wo // G
    assert wbd.shape[1] == G * 3 * C and Wo % G == 0

    # One small XLA fusion: pad + (implicit layout change) + bf16 cast + the
    # stride-2 quadrant/parity gather.  Output bytes ~= input bytes (vs the
    # old 9x f32 im2col).
    xp = jnp.pad(x_nhwc, ((0, 0), (1, 1), (1, 1), (0, 0))).astype(jnp.bfloat16)
    a_ops = []
    for p in range(2):
        rows = xp[:, p:p + 2 * Ho + 1:2]                     # [B, Ho+1, W+2, C]
        for dj in range(2):
            taps = [rows[:, :, dj + kj:dj + kj + 2 * Wo - 1:2, :]
                    for kj in range(3)]                      # 3 x [B,Ho+1,Wo,C]
            u = jnp.stack(taps, axis=3)                      # [B, Ho+1, Wo, 3, C]
            a_ops.append(u.reshape(B * (Ho + 1) * NG, G * 3 * C))

    nbands = 2 if Ho % 2 == 0 else 1   # >=2 parallel blocks per batch element
    tr = Ho // nbands
    m = tr * NG
    a_shape = a_ops[0].shape

    out = pl.pallas_call(
        functools.partial(_conv_pool_kernel, n_i=Ho + 1, ng=NG, tr=tr),
        out_shape=jax.ShapeDtypeStruct((B * Ho * NG, G * OC), jnp.bfloat16),
        grid_spec=pltpu.PrefetchScalarGridSpec(
            num_scalar_prefetch=0,
            grid=(B, nbands),
            in_specs=[
                pl.BlockSpec(a_shape, lambda b, j: (0, 0)),
                pl.BlockSpec(a_shape, lambda b, j: (0, 0)),
                pl.BlockSpec(a_shape, lambda b, j: (0, 0)),
                pl.BlockSpec(a_shape, lambda b, j: (0, 0)),
                pl.BlockSpec(wbd.shape, lambda b, j: (0, 0, 0)),
                pl.BlockSpec(b_row.shape, lambda b, j: (0, 0)),
            ],
            out_specs=pl.BlockSpec((m, G * OC),
                                   lambda b, j: (b * nbands + j, 0)),
        ),
        compiler_params=pltpu.CompilerParams(
            dimension_semantics=("parallel", "parallel"),
            vmem_limit_bytes=_VMEM_LIMIT_BYTES,
        ),
    )(*a_ops, wbd, b_row)
    # [B*Ho*NG, G*OC] is byte-identical to NHWC [B, Ho, Wo, OC]; free reshape.
    return out.reshape(B, Ho, Wo, OC)


# ---------------------------------------------------------------------------
# Fused FC head: fc1 + bias + ReLU (+ dropout=identity) + fc2 + bias
# ---------------------------------------------------------------------------
def _fc_head_kernel(x_ref, w1_ref, b1_ref, w2_ref, b2_ref, o_ref, acc_ref):
    k = pl.program_id(0)

    @pl.when(k == 0)
    def _():
        acc_ref[...] = jnp.zeros_like(acc_ref)

    acc_ref[...] += jnp.dot(x_ref[...], w1_ref[...],
                            preferred_element_type=jnp.float32)

    @pl.when(k == pl.num_programs(0) - 1)
    def _():
        h = jnp.maximum(acc_ref[...] + b1_ref[...], 0.0)      # fc1 + ReLU
        # TODO(synk): Dropout(p=0.5) is identity at inference; no training path.
        y = jnp.dot(h.astype(jnp.bfloat16), w2_ref[...],
                    preferred_element_type=jnp.float32) + b2_ref[...]
        o_ref[...] = y.astype(o_ref.dtype)


def fc_head(x, w1, b1, w2, b2, *, tk):
    """relu(x @ w1 + b1) @ w2 + b2 in one pallas_call (K streamed in tk chunks).

    x: [B,K] bf16; w1: [K,H] bf16; b1: [1,H] f32; w2: [H,N] bf16; b2: [1,N]."""
    B, K = x.shape
    Hd = w1.shape[1]
    N = w2.shape[1]
    if K % tk != 0:
        tk = K
    grid = (K // tk,)

    return pl.pallas_call(
        _fc_head_kernel,
        out_shape=jax.ShapeDtypeStruct((B, N), jnp.float32),
        grid_spec=pltpu.PrefetchScalarGridSpec(
            num_scalar_prefetch=0,
            grid=grid,
            in_specs=[
                pl.BlockSpec((B, tk), lambda k: (0, k)),
                pl.BlockSpec((tk, Hd), lambda k: (k, 0)),
                pl.BlockSpec((1, Hd), lambda k: (0, 0)),
                pl.BlockSpec((Hd, N), lambda k: (0, 0)),
                pl.BlockSpec((1, N), lambda k: (0, 0)),
            ],
            out_specs=pl.BlockSpec((B, N), lambda k: (0, 0)),
            scratch_shapes=[pltpu.VMEM((B, Hd), jnp.float32)],
        ),
        compiler_params=pltpu.CompilerParams(
            dimension_semantics=("arbitrary",),
            vmem_limit_bytes=_VMEM_LIMIT_BYTES,
        ),
    )(x, w1, b1, w2, b2)


# ---------------------------------------------------------------------------
# Parameters: PyTorch-convention init, one-time layout prep OUTSIDE jit
# ---------------------------------------------------------------------------
def init_params(key, num_classes):
    """Same layouts as nn.Conv2d / nn.Linear (OIHW conv, [out,in] linear)."""
    k = jax.random.split(key, 8)
    p = {}
    p["w_conv1"] = jax.random.normal(k[0], (32, 3, 3, 3), jnp.float32) * 0.05
    p["b_conv1"] = jax.random.normal(k[1], (32,), jnp.float32) * 0.01
    p["w_conv2"] = jax.random.normal(k[2], (64, 32, 3, 3), jnp.float32) * 0.05
    p["b_conv2"] = jax.random.normal(k[3], (64,), jnp.float32) * 0.01
    p["w_fc1"] = jax.random.normal(k[4], (128, 64 * 16 * 16), jnp.float32) * 0.01
    p["b_fc1"] = jax.random.normal(k[5], (128,), jnp.float32) * 0.01
    p["w_fc2"] = jax.random.normal(k[6], (num_classes, 128), jnp.float32) * 0.05
    p["b_fc2"] = jax.random.normal(k[7], (num_classes,), jnp.float32) * 0.01
    return p


def prepare_params(p):
    """One-time conversion to kernel-friendly layouts (runs outside jit):
       * conv weights [OC,IC,3,3] -> block-diagonal [3, G*3*IC, G*OC] bf16
         (K rows ordered (gj,kj,c); G pooled columns packed so G*OC == 128)
       * conv biases tiled over gj -> [1, G*OC] f32
       * fc1 [128, C*H*W] (NCHW cols) -> [H*W*C, 128] (NHWC rows), bf16
       * fc2 [N, 128] -> [128, N] bf16; fc biases as [1, N] f32 rows
    """
    q = {}
    for name, (c_in, oc, wo) in (("conv1", (3, 32, 32)), ("conv2", (32, 64, 16))):
        g = _pick_group(oc, wo)
        wt = jnp.transpose(p[f"w_{name}"], (2, 3, 1, 0))      # [ki, kj, c, oc]
        wk = wt.reshape(3, 3 * c_in, oc)                      # rows = (kj, c)
        eye = jnp.eye(g, dtype=wk.dtype)
        wbd = jnp.stack([jnp.kron(eye, wk[ki]) for ki in range(3)])
        q[f"w_{name}"] = wbd.astype(jnp.bfloat16)              # [3, G*3C, G*OC]
        q[f"b_{name}"] = jnp.tile(p[f"b_{name}"], g).reshape(1, g * oc)

    c, hs, ws = 64, 16, 16
    w1 = p["w_fc1"].reshape(128, c, hs, ws)                    # cols (c,h,w)
    w1 = jnp.transpose(w1, (2, 3, 1, 0)).reshape(hs * ws * c, 128)  # rows (h,w,c)
    q["w_fc1"] = w1.astype(jnp.bfloat16)
    q["b_fc1"] = p["b_fc1"].reshape(1, 128)
    q["w_fc2"] = jnp.transpose(p["w_fc2"], (1, 0)).astype(jnp.bfloat16)
    q["b_fc2"] = p["b_fc2"].reshape(1, -1)
    return q


# ---------------------------------------------------------------------------
# Full model forward
# ---------------------------------------------------------------------------
_FC_TK = _default_fc_tile_k()


@jax.jit
def cnn_forward(prepped, x_nchw):
    """x_nchw: [B, 3, 64, 64] float32 -> logits [B, num_classes]."""
    B = x_nchw.shape[0]
    # The NCHW->NHWC transpose fuses into conv1's operand-build fusion in XLA
    # (no standalone relayout op is materialized).
    x = jnp.transpose(x_nchw, (0, 2, 3, 1))                              # NHWC

    x = conv3x3_relu_pool(x, prepped["w_conv1"], prepped["b_conv1"])     # [B,32,32,32] bf16
    x = conv3x3_relu_pool(x, prepped["w_conv2"], prepped["b_conv2"])     # [B,16,16,64] bf16

    # NHWC flatten; fc1 weight rows were permuted to NHWC order at prep time,
    # so this matches PyTorch's NCHW view + fc1 numerically.
    x = x.reshape(B, 16 * 16 * 64)                                       # [B,16384] bf16

    return fc_head(x, prepped["w_fc1"], prepped["b_fc1"],
                   prepped["w_fc2"], prepped["b_fc2"], tk=_FC_TK)


if __name__ == "__main__":
    num_classes = 10
    key = jax.random.PRNGKey(0)
    pkey, xkey = jax.random.split(key)

    params = prepare_params(init_params(pkey, num_classes))
    # fc1 dimensionality (64*16*16) pins the input spatial size to 64x64.
    x = jax.random.uniform(xkey, (2, 3, 64, 64), jnp.float32)

    logits = cnn_forward(params, x)
    jax.block_until_ready(logits)
    assert logits.shape == (2, num_classes)
    assert bool(jnp.all(jnp.isfinite(logits)))
    print("KERNEL_OK")
</pallas_src>

<mosaic_0001>
module attributes {stable_mosaic.version = 11 : i64} {
  func.func @_conv_pool_kernel(%arg0: i32, %arg1: i32, %arg2: memref<528x36xbf16, #tpu.memory_space<vmem>>, %arg3: memref<528x36xbf16, #tpu.memory_space<vmem>>, %arg4: memref<528x36xbf16, #tpu.memory_space<vmem>>, %arg5: memref<528x36xbf16, #tpu.memory_space<vmem>>, %arg6: memref<3x36x128xbf16, #tpu.memory_space<vmem>>, %arg7: memref<1x128xf32, #tpu.memory_space<vmem>>, %arg8: memref<128x128xbf16, #tpu.memory_space<vmem>>) attributes {dimension_semantics = [#tpu.dimension_semantics<parallel>, #tpu.dimension_semantics<parallel>], iteration_bounds = array<i64: 2, 2>, scalar_prefetch = 0 : i64, scratch_operands = 0 : i64, tpu.core_type = #tpu.core_type<tc>, window_params = [{pipeline_mode = #tpu.pipeline_mode<synchronous>, transform_indices = @transform_0, window_bounds = array<i64: 528, 36>}, {pipeline_mode = #tpu.pipeline_mode<synchronous>, transform_indices = @transform_1, window_bounds = array<i64: 528, 36>}, {pipeline_mode = #tpu.pipeline_mode<synchronous>, transform_indices = @transform_2, window_bounds = array<i64: 528, 36>}, {pipeline_mode = #tpu.pipeline_mode<synchronous>, transform_indices = @transform_3, window_bounds = array<i64: 528, 36>}, {pipeline_mode = #tpu.pipeline_mode<synchronous>, transform_indices = @transform_4, window_bounds = array<i64: 3, 36, 128>}, {pipeline_mode = #tpu.pipeline_mode<synchronous>, transform_indices = @transform_5, window_bounds = array<i64: 1, 128>}, {transform_indices = @transform_6, window_bounds = array<i64: 128, 128>}]} {
    %c16_i32 = arith.constant 16 : i32
    %0 = arith.muli %arg1, %c16_i32 : i32
    %c264_i32 = arith.constant 264 : i32
    %1 = arith.muli %arg0, %c264_i32 : i32
    %c0_i32 = arith.constant 0 : i32
    %2 = arith.addi %0, %c0_i32 : i32
    %c8_i32 = arith.constant 8 : i32
    %3 = arith.muli %2, %c8_i32 : i32
    %4 = arith.addi %1, %3 : i32
    %5 = tpu.assume_multiple %4, 8 : i32
    %6 = arith.index_cast %5 : i32 to index
    %c0 = arith.constant 0 : index
    %7 = vector.load %arg2[%6, %c0] : memref<528x36xbf16, #tpu.memory_space<vmem>>, vector<128x36xbf16>
    %c0_0 = arith.constant 0 : index
    %c0_1 = arith.constant 0 : index
    %c0_2 = arith.constant 0 : index
    %8 = vector.load %arg6[%c0_0, %c0_1, %c0_2] : memref<3x36x128xbf16, #tpu.memory_space<vmem>>, vector<1x36x128xbf16>
    %9 = vector.shape_cast %8 : vector<1x36x128xbf16> to vector<36x128xbf16>
    %cst = arith.constant dense<0.000000e+00> : vector<128x128xf32>
    %10 = tpu.matmul %7, %9, %cst {dimension_numbers = #tpu.dot_dimension_numbers<[1], [0], [0], [1], [0, 0, 1, 1], [], []>} : vector<128x36xbf16>, vector<36x128xbf16>, vector<128x128xf32> -> vector<128x128xf32>
    %c0_i32_3 = arith.constant 0 : i32
    %11 = arith.addi %0, %c0_i32_3 : i32
    %c8_i32_4 = arith.constant 8 : i32
    %12 = arith.muli %11, %c8_i32_4 : i32
    %13 = arith.addi %1, %12 : i32
    %14 = tpu.assume_multiple %13, 8 : i32
    %15 = arith.index_cast %14 : i32 to index
    %c0_5 = arith.constant 0 : index
    %16 = vector.load %arg4[%15, %c0_5] : memref<528x36xbf16, #tpu.memory_space<vmem>>, vector<128x36xbf16>
    %c1 = arith.constant 1 : index
    %c0_6 = arith.constant 0 : index
    %c0_7 = arith.constant 0 : index
    %17 = vector.load %arg6[%c1, %c0_6, %c0_7] : memref<3x36x128xbf16, #tpu.memory_space<vmem>>, vector<1x36x128xbf16>
    %18 = vector.shape_cast %17 : vector<1x36x128xbf16> to vector<36x128xbf16>
    %cst_8 = arith.constant dense<0.000000e+00> : vector<128x128xf32>
    %19 = tpu.matmul %16, %18, %cst_8 {dimension_numbers = #tpu.dot_dimension_numbers<[1], [0], [0], [1], [0, 0, 1, 1], [], []>} : vector<128x36xbf16>, vector<36x128xbf16>, vector<128x128xf32> -> vector<128x128xf32>
    %20 = arith.addf %10, %19 : vector<128x128xf32>
    %c1_i32 = arith.constant 1 : i32
    %21 = arith.addi %0, %c1_i32 : i32
    %c8_i32_9 = arith.constant 8 : i32
    %22 = arith.muli %21, %c8_i32_9 : i32
    %23 = arith.addi %1, %22 : i32
    %24 = tpu.assume_multiple %23, 8 : i32
    %25 = arith.index_cast %24 : i32 to index
    %c0_10 = arith.constant 0 : index
    %26 = vector.load %arg2[%25, %c0_10] : memref<528x36xbf16, #tpu.memory_space<vmem>>, vector<128x36xbf16>
    %c2 = arith.constant 2 : index
    %c0_11 = arith.constant 0 : index
    %c0_12 = arith.constant 0 : index
    %27 = vector.load %arg6[%c2, %c0_11, %c0_12] : memref<3x36x128xbf16, #tpu.memory_space<vmem>>, vector<1x36x128xbf16>
    %28 = vector.shape_cast %27 : vector<1x36x128xbf16> to vector<36x128xbf16>
    %cst_13 = arith.constant dense<0.000000e+00> : vector<128x128xf32>
    %29 = tpu.matmul %26, %28, %cst_13 {dimension_numbers = #tpu.dot_dimension_numbers<[1], [0], [0], [1], [0, 0, 1, 1], [], []>} : vector<128x36xbf16>, vector<36x128xbf16>, vector<128x128xf32> -> vector<128x128xf32>
    %30 = arith.addf %20, %29 : vector<128x128xf32>
    %c0_i32_14 = arith.constant 0 : i32
    %31 = arith.addi %0, %c0_i32_14 : i32
    %c8_i32_15 = arith.constant 8 : i32
    %32 = arith.muli %31, %c8_i32_15 : i32
    %33 = arith.addi %1, %32 : i32
    %34 = tpu.assume_multiple %33, 8 : i32
    %35 = arith.index_cast %34 : i32 to index
    %c0_16 = arith.constant 0 : index
    %36 = vector.load %arg3[%35, %c0_16] : memref<528x36xbf16, #tpu.memory_space<vmem>>, vector<128x36xbf16>
    %c0_17 = arith.constant 0 : index
    %c0_18 = arith.constant 0 : index
    %c0_19 = arith.constant 0 : index
    %37 = vector.load %arg6[%c0_17, %c0_18, %c0_19] : memref<3x36x128xbf16, #tpu.memory_space<vmem>>, vector<1x36x128xbf16>
    %38 = vector.shape_cast %37 : vector<1x36x128xbf16> to vector<36x128xbf16>
    %cst_20 = arith.constant dense<0.000000e+00> : vector<128x128xf32>
    %39 = tpu.matmul %36, %38, %cst_20 {dimension_numbers = #tpu.dot_dimension_numbers<[1], [0], [0], [1], [0, 0, 1, 1], [], []>} : vector<128x36xbf16>, vector<36x128xbf16>, vector<128x128xf32> -> vector<128x128xf32>
    %c0_i32_21 = arith.constant 0 : i32
    %40 = arith.addi %0, %c0_i32_21 : i32
    %c8_i32_22 = arith.constant 8 : i32
    %41 = arith.muli %40, %c8_i32_22 : i32
    %42 = arith.addi %1, %41 : i32
    %43 = tpu.assume_multiple %42, 8 : i32
    %44 = arith.index_cast %43 : i32 to index
    %c0_23 = arith.constant 0 : index
    %45 = vector.load %arg5[%44, %c0_23] : memref<528x36xbf16, #tpu.memory_space<vmem>>, vector<128x36xbf16>
    %c1_24 = arith.constant 1 : index
    %c0_25 = arith.constant 0 : index
    %c0_26 = arith.constant 0 : index
    %46 = vector.load %arg6[%c1_24, %c0_25, %c0_26] : memref<3x36x128xbf16, #tpu.memory_space<vmem>>, vector<1x36x128xbf16>
    %47 = vector.shape_cast %46 : vector<1x36x128xbf16> to vector<36x128xbf16>
    %cst_27 = arith.constant dense<0.000000e+00> : vector<128x128xf32>
    %48 = tpu.matmul %45, %47, %cst_27 {dimension_numbers = #tpu.dot_dimension_numbers<[1], [0], [0], [1], [0, 0, 1, 1], [], []>} : vector<128x36xbf16>, vector<36x128xbf16>, vector<128x128xf32> -> vector<128x128xf32>
    %49 = arith.addf %39, %48 : vector<128x128xf32>
    %c1_i32_28 = arith.constant 1 : i32
    %50 = arith.addi %0, %c1_i32_28 : i32
    %c8_i32_29 = arith.constant 8 : i32
    %51 = arith.muli %50, %c8_i32_29 : i32
    %52 = arith.addi %1, %51 : i32
    %53 = tpu.assume_multiple %52, 8 : i32
    %54 = arith.index_cast %53 : i32 to index
    %c0_30 = arith.constant 0 : index
    %55 = vector.load %arg3[%54, %c0_30] : memref<528x36xbf16, #tpu.memory_space<vmem>>, vector<128x36xbf16>
    %c2_31 = arith.constant 2 : index
    %c0_32 = arith.constant 0 : index
    %c0_33 = arith.constant 0 : index
    %56 = vector.load %arg6[%c2_31, %c0_32, %c0_33] : memref<3x36x128xbf16, #tpu.memory_space<vmem>>, vector<1x36x128xbf16>
    %57 = vector.shape_cast %56 : vector<1x36x128xbf16> to vector<36x128xbf16>
    %cst_34 = arith.constant dense<0.000000e+00> : vector<128x128xf32>
    %58 = tpu.matmul %55, %57, %cst_34 {dimension_numbers = #tpu.dot_dimension_numbers<[1], [0], [0], [1], [0, 0, 1, 1], [], []>} : vector<128x36xbf16>, vector<36x128xbf16>, vector<128x128xf32> -> vector<128x128xf32>
    %59 = arith.addf %49, %58 : vector<128x128xf32>
    %60 = arith.maximumf %30, %59 : vector<128x128xf32>
    %c0_i32_35 = arith.constant 0 : i32
    %61 = arith.addi %0, %c0_i32_35 : i32
    %c8_i32_36 = arith.constant 8 : i32
    %62 = arith.muli %61, %c8_i32_36 : i32
    %63 = arith.addi %1, %62 : i32
    %64 = tpu.assume_multiple %63, 8 : i32
    %65 = arith.index_cast %64 : i32 to index
    %c0_37 = arith.constant 0 : index
    %66 = vector.load %arg4[%65, %c0_37] : memref<528x36xbf16, #tpu.memory_space<vmem>>, vector<128x36xbf16>
    %c0_38 = arith.constant 0 : index
    %c0_39 = arith.constant 0 : index
    %c0_40 = arith.constant 0 : index
    %67 = vector.load %arg6[%c0_38, %c0_39, %c0_40] : memref<3x36x128xbf16, #tpu.memory_space<vmem>>, vector<1x36x128xbf16>
    %68 = vector.shape_cast %67 : vector<1x36x128xbf16> to vector<36x128xbf16>
    %cst_41 = arith.constant dense<0.000000e+00> : vector<128x128xf32>
    %69 = tpu.matmul %66, %68, %cst_41 {dimension_numbers = #tpu.dot_dimension_numbers<[1], [0], [0], [1], [0, 0, 1, 1], [], []>} : vector<128x36xbf16>, vector<36x128xbf16>, vector<128x128xf32> -> vector<128x128xf32>
    %c1_i32_42 = arith.constant 1 : i32
    %70 = arith.addi %0, %c1_i32_42 : i32
    %c8_i32_43 = arith.constant 8 : i32
    %71 = arith.muli %70, %c8_i32_43 : i32
    %72 = arith.addi %1, %71 : i32
    %73 = tpu.assume_multiple %72, 8 : i32
    %74 = arith.index_cast %73 : i32 to index
    %c0_44 = arith.constant 0 : index
    %75 = vector.load %arg2[%74, %c0_44] : memref<528x36xbf16, #tpu.memory_space<vmem>>, vector<128x36xbf16>
    %c1_45 = arith.constant 1 : index
    %c0_46 = arith.constant 0 : index
    %c0_47 = arith.constant 0 : index
    %76 = vector.load %arg6[%c1_45, %c0_46, %c0_47] : memref<3x36x128xbf16, #tpu.memory_space<vmem>>, vector<1x36x128xbf16>
    %77 = vector.shape_cast %76 : vector<1x36x128xbf16> to vector<36x128xbf16>
    %cst_48 = arith.constant dense<0.000000e+00> : vector<128x128xf32>
    %78 = tpu.matmul %75, %77, %cst_48 {dimension_numbers = #tpu.dot_dimension_numbers<[1], [0], [0], [1], [0, 0, 1, 1], [], []>} : vector<128x36xbf16>, vector<36x128xbf16>, vector<128x128xf32> -> vector<128x128xf32>
    %79 = arith.addf %69, %78 : vector<128x128xf32>
    %c1_i32_49 = arith.constant 1 : i32
    %80 = arith.addi %0, %c1_i32_49 : i32
    %c8_i32_50 = arith.constant 8 : i32
    %81 = arith.muli %80, %c8_i32_50 : i32
    %82 = arith.addi %1, %81 : i32
    %83 = tpu.assume_multiple %82, 8 : i32
    %84 = arith.index_cast %83 : i32 to index
    %c0_51 = arith.constant 0 : index
    %85 = vector.load %arg4[%84, %c0_51] : memref<528x36xbf16, #tpu.memory_space<vmem>>, vector<128x36xbf16>
    %c2_52 = arith.constant 2 : index
    %c0_53 = arith.constant 0 : index
    %c0_54 = arith.constant 0 : index
    %86 = vector.load %arg6[%c2_52, %c0_53, %c0_54] : memref<3x36x128xbf16, #tpu.memory_space<vmem>>, vector<1x36x128xbf16>
    %87 = vector.shape_cast %86 : vector<1x36x128xbf16> to vector<36x128xbf16>
    %cst_55 = arith.constant dense<0.000000e+00> : vector<128x128xf32>
    %88 = tpu.matmul %85, %87, %cst_55 {dimension_numbers = #tpu.dot_dimension_numbers<[1], [0], [0], [1], [0, 0, 1, 1], [], []>} : vector<128x36xbf16>, vector<36x128xbf16>, vector<128x128xf32> -> vector<128x128xf32>
    %89 = arith.addf %79, %88 : vector<128x128xf32>
    %90 = arith.maximumf %60, %89 : vector<128x128xf32>
    %c0_i32_56 = arith.constant 0 : i32
    %91 = arith.addi %0, %c0_i32_56 : i32
    %c8_i32_57 = arith.constant 8 : i32
    %92 = arith.muli %91, %c8_i32_57 : i32
    %93 = arith.addi %1, %92 : i32
    %94 = tpu.assume_multiple %93, 8 : i32
    %95 = arith.index_cast %94 : i32 to index
    %c0_58 = arith.constant 0 : index
    %96 = vector.load %arg5[%95, %c0_58] : memref<528x36xbf16, #tpu.memory_space<vmem>>, vector<128x36xbf16>
    %c0_59 = arith.constant 0 : index
    %c0_60 = arith.constant 0 : index
    %c0_61 = arith.constant 0 : index
    %97 = vector.load %arg6[%c0_59, %c0_60, %c0_61] : memref<3x36x128xbf16, #tpu.memory_space<vmem>>, vector<1x36x128xbf16>
    %98 = vector.shape_cast %97 : vector<1x36x128xbf16> to vector<36x128xbf16>
    %cst_62 = arith.constant dense<0.000000e+00> : vector<128x128xf32>
    %99 = tpu.matmul %96, %98, %cst_62 {dimension_numbers = #tpu.dot_dimension_numbers<[1], [0], [0], [1], [0, 0, 1, 1], [], []>} : vector<128x36xbf16>, vector<36x128xbf16>, vector<128x128xf32> -> vector<128x128xf32>
    %c1_i32_63 = arith.constant 1 : i32
    %100 = arith.addi %0, %c1_i32_63 : i32
    %c8_i32_64 = arith.constant 8 : i32
    %101 = arith.muli %100, %c8_i32_64 : i32
    %102 = arith.addi %1, %101 : i32
    %103 = tpu.assume_multiple %102, 8 : i32
    %104 = arith.index_cast %103 : i32 to index
    %c0_65 = arith.constant 0 : index
    %105 = vector.load %arg3[%104, %c0_65] : memref<528x36xbf16, #tpu.memory_space<vmem>>, vector<128x36xbf16>
    %c1_66 = arith.constant 1 : index
    %c0_67 = arith.constant 0 : index
    %c0_68 = arith.constant 0 : index
    %106 = vector.load %arg6[%c1_66, %c0_67, %c0_68] : memref<3x36x128xbf16, #tpu.memory_space<vmem>>, vector<1x36x128xbf16>
    %107 = vector.shape_cast %106 : vector<1x36x128xbf16> to vector<36x128xbf16>
    %cst_69 = arith.constant dense<0.000000e+00> : vector<128x128xf32>
    %108 = tpu.matmul %105, %107, %cst_69 {dimension_numbers = #tpu.dot_dimension_numbers<[1], [0], [0], [1], [0, 0, 1, 1], [], []>} : vector<128x36xbf16>, vector<36x128xbf16>, vector<128x128xf32> -> vector<128x128xf32>
    %109 = arith.addf %99, %108 : vector<128x128xf32>
    %c1_i32_70 = arith.constant 1 : i32
    %110 = arith.addi %0, %c1_i32_70 : i32
    %c8_i32_71 = arith.constant 8 : i32
    %111 = arith.muli %110, %c8_i32_71 : i32
    %112 = arith.addi %1, %111 : i32
    %113 = tpu.assume_multiple %112, 8 : i32
    %114 = arith.index_cast %113 : i32 to index
    %c0_72 = arith.constant 0 : index
    %115 = vector.load %arg5[%114, %c0_72] : memref<528x36xbf16, #tpu.memory_space<vmem>>, vector<128x36xbf16>
    %c2_73 = arith.constant 2 : index
    %c0_74 = arith.constant 0 : index
    %c0_75 = arith.constant 0 : index
    %116 = vector.load %arg6[%c2_73, %c0_74, %c0_75] : memref<3x36x128xbf16, #tpu.memory_space<vmem>>, vector<1x36x128xbf16>
    %117 = vector.shape_cast %116 : vector<1x36x128xbf16> to vector<36x128xbf16>
    %cst_76 = arith.constant dense<0.000000e+00> : vector<128x128xf32>
    %118 = tpu.matmul %115, %117, %cst_76 {dimension_numbers = #tpu.dot_dimension_numbers<[1], [0], [0], [1], [0, 0, 1, 1], [], []>} : vector<128x36xbf16>, vector<36x128xbf16>, vector<128x128xf32> -> vector<128x128xf32>
    %119 = arith.addf %109, %118 : vector<128x128xf32>
    %120 = arith.maximumf %90, %119 : vector<128x128xf32>
    %c0_77 = arith.constant 0 : index
    %c0_78 = arith.constant 0 : index
    %121 = vector.load %arg7[%c0_77, %c0_78] : memref<1x128xf32, #tpu.memory_space<vmem>>, vector<1x128xf32>
    %122 = vector.broadcast %121 : vector<1x128xf32> to vector<128x128xf32>
    %123 = arith.addf %120, %122 : vector<128x128xf32>
    %cst_79 = arith.constant 0.000000e+00 : f32
    %124 = vector.broadcast %cst_79 : f32 to vector<128x128xf32>
    %125 = arith.maximumf %123, %124 : vector<128x128xf32>
    %126 = arith.truncf %125 : vector<128x128xf32> to vector<128x128xbf16>
    %c0_80 = arith.constant 0 : index
    %c0_81 = arith.constant 0 : index
    %127 = vector.load %arg8[%c0_80, %c0_81] : memref<128x128xbf16, #tpu.memory_space<vmem>>, vector<128x128xbf16>
    tpu.vector_store %arg8[%c0_80, %c0_81], %126 {strides = array<i32>} : memref<128x128xbf16, #tpu.memory_space<vmem>>, vector<128x128xbf16>,
    return
  }
  func.func @transform_0(%arg0: i32, %arg1: i32) -> (i32, i32) {
    %c0_i32 = arith.constant 0 : i32
    %c0_i32_0 = arith.constant 0 : i32
    %c0_i32_1 = arith.constant 0 : i32
    return %c0_i32, %c0_i32_0 : i32, i32
  }
  func.func @transform_1(%arg0: i32, %arg1: i32) -> (i32, i32) {
    %c0_i32 = arith.constant 0 : i32
    %c0_i32_0 = arith.constant 0 : i32
    %c0_i32_1 = arith.constant 0 : i32
    return %c0_i32, %c0_i32_0 : i32, i32
  }
  func.func @transform_2(%arg0: i32, %arg1: i32) -> (i32, i32) {
    %c0_i32 = arith.constant 0 : i32
    %c0_i32_0 = arith.constant 0 : i32
    %c0_i32_1 = arith.constant 0 : i32
    return %c0_i32, %c0_i32_0 : i32, i32
  }
  func.func @transform_3(%arg0: i32, %arg1: i32) -> (i32, i32) {
    %c0_i32 = arith.constant 0 : i32
    %c0_i32_0 = arith.constant 0 : i32
    %c0_i32_1 = arith.constant 0 : i32
    return %c0_i32, %c0_i32_0 : i32, i32
  }
  func.func @transform_4(%arg0: i32, %arg1: i32) -> (i32, i32, i32) {
    %c0_i32 = arith.constant 0 : i32
    %c0_i32_0 = arith.constant 0 : i32
    %c0_i32_1 = arith.constant 0 : i32
    %c0_i32_2 = arith.constant 0 : i32
    return %c0_i32, %c0_i32_0, %c0_i32_1 : i32, i32, i32
  }
  func.func @transform_5(%arg0: i32, %arg1: i32) -> (i32, i32) {
    %c0_i32 = arith.constant 0 : i32
    %c0_i32_0 = arith.constant 0 : i32
    %c0_i32_1 = arith.constant 0 : i32
    return %c0_i32, %c0_i32_0 : i32, i32
  }
  func.func @transform_6(%arg0: i32, %arg1: i32) -> (i32, i32) {
    %c2_i32 = arith.constant 2 : i32
    %0 = arith.muli %arg0, %c2_i32 : i32
    %1 = arith.addi %0, %arg1 : i32
    %c0_i32 = arith.constant 0 : i32
    %c0_i32_0 = arith.constant 0 : i32
    return %1, %c0_i32 : i32, i32
  }
}

module attributes {stable_mosaic.version = 11 : i64} {
  func.func @_conv_pool_kernel(%arg0: i32, %arg1: i32, %arg2: memref<272x192xbf16, #tpu.memory_space<vmem>>, %arg3: memref<272x192xbf16, #tpu.memory_space<vmem>>, %arg4: memref<272x192xbf16, #tpu.memory_space<vmem>>, %arg5: memref<272x192xbf16, #tpu.memory_space<vmem>>, %arg6: memref<3x192x128xbf16, #tpu.memory_space<vmem>>, %arg7: memref<1x128xf32, #tpu.memory_space<vmem>>, %arg8: memref<64x128xbf16, #tpu.memory_space<vmem>>) attributes {dimension_semantics = [#tpu.dimension_semantics<parallel>, #tpu.dimension_semantics<parallel>], iteration_bounds = array<i64: 2, 2>, scalar_prefetch = 0 : i64, scratch_operands = 0 : i64, tpu.core_type = #tpu.core_type<tc>, window_params = [{pipeline_mode = #tpu.pipeline_mode<synchronous>, transform_indices = @transform_0, window_bounds = array<i64: 272, 192>}, {pipeline_mode = #tpu.pipeline_mode<synchronous>, transform_indices = @transform_1, window_bounds = array<i64: 272, 192>}, {pipeline_mode = #tpu.pipeline_mode<synchronous>, transform_indices = @transform_2, window_bounds = array<i64: 272, 192>}, {pipeline_mode = #tpu.pipeline_mode<synchronous>, transform_indices = @transform_3, window_bounds = array<i64: 272, 192>}, {pipeline_mode = #tpu.pipeline_mode<synchronous>, transform_indices = @transform_4, window_bounds = array<i64: 3, 192, 128>}, {pipeline_mode = #tpu.pipeline_mode<synchronous>, transform_indices = @transform_5, window_bounds = array<i64: 1, 128>}, {transform_indices = @transform_6, window_bounds = array<i64: 64, 128>}]} {
    %c8_i32 = arith.constant 8 : i32
    %0 = arith.muli %arg1, %c8_i32 : i32
    %c136_i32 = arith.constant 136 : i32
    %1 = arith.muli %arg0, %c136_i32 : i32
    %c0_i32 = arith.constant 0 : i32
    %2 = arith.addi %0, %c0_i32 : i32
    %c8_i32_0 = arith.constant 8 : i32
    %3 = arith.muli %2, %c8_i32_0 : i32
    %4 = arith.addi %1, %3 : i32
    %5 = tpu.assume_multiple %4, 8 : i32
    %6 = arith.index_cast %5 : i32 to index
    %c0 = arith.constant 0 : index
    %7 = vector.load %arg2[%6, %c0] : memref<272x192xbf16, #tpu.memory_space<vmem>>, vector<64x192xbf16>
    %c0_1 = arith.constant 0 : index
    %c0_2 = arith.constant 0 : index
    %c0_3 = arith.constant 0 : index
    %8 = vector.load %arg6[%c0_1, %c0_2, %c0_3] : memref<3x192x128xbf16, #tpu.memory_space<vmem>>, vector<1x192x128xbf16>
    %9 = vector.shape_cast %8 : vector<1x192x128xbf16> to vector<192x128xbf16>
    %cst = arith.constant dense<0.000000e+00> : vector<64x128xf32>
    %10 = tpu.matmul %7, %9, %cst {dimension_numbers = #tpu.dot_dimension_numbers<[1], [0], [0], [1], [0, 0, 1, 1], [], []>} : vector<64x192xbf16>, vector<192x128xbf16>, vector<64x128xf32> -> vector<64x128xf32>
    %c0_i32_4 = arith.constant 0 : i32
    %11 = arith.addi %0, %c0_i32_4 : i32
    %c8_i32_5 = arith.constant 8 : i32
    %12 = arith.muli %11, %c8_i32_5 : i32
    %13 = arith.addi %1, %12 : i32
    %14 = tpu.assume_multiple %13, 8 : i32
    %15 = arith.index_cast %14 : i32 to index
    %c0_6 = arith.constant 0 : index
    %16 = vector.load %arg4[%15, %c0_6] : memref<272x192xbf16, #tpu.memory_space<vmem>>, vector<64x192xbf16>
    %c1 = arith.constant 1 : index
    %c0_7 = arith.constant 0 : index
    %c0_8 = arith.constant 0 : index
    %17 = vector.load %arg6[%c1, %c0_7, %c0_8] : memref<3x192x128xbf16, #tpu.memory_space<vmem>>, vector<1x192x128xbf16>
    %18 = vector.shape_cast %17 : vector<1x192x128xbf16> to vector<192x128xbf16>
    %cst_9 = arith.constant dense<0.000000e+00> : vector<64x128xf32>
    %19 = tpu.matmul %16, %18, %cst_9 {dimension_numbers = #tpu.dot_dimension_numbers<[1], [0], [0], [1], [0, 0, 1, 1], [], []>} : vector<64x192xbf16>, vector<192x128xbf16>, vector<64x128xf32> -> vector<64x128xf32>
    %20 = arith.addf %10, %19 : vector<64x128xf32>
    %c1_i32 = arith.constant 1 : i32
    %21 = arith.addi %0, %c1_i32 : i32
    %c8_i32_10 = arith.constant 8 : i32
    %22 = arith.muli %21, %c8_i32_10 : i32
    %23 = arith.addi %1, %22 : i32
    %24 = tpu.assume_multiple %23, 8 : i32
    %25 = arith.index_cast %24 : i32 to index
    %c0_11 = arith.constant 0 : index
    %26 = vector.load %arg2[%25, %c0_11] : memref<272x192xbf16, #tpu.memory_space<vmem>>, vector<64x192xbf16>
    %c2 = arith.constant 2 : index
    %c0_12 = arith.constant 0 : index
    %c0_13 = arith.constant 0 : index
    %27 = vector.load %arg6[%c2, %c0_12, %c0_13] : memref<3x192x128xbf16, #tpu.memory_space<vmem>>, vector<1x192x128xbf16>
    %28 = vector.shape_cast %27 : vector<1x192x128xbf16> to vector<192x128xbf16>
    %cst_14 = arith.constant dense<0.000000e+00> : vector<64x128xf32>
    %29 = tpu.matmul %26, %28, %cst_14 {dimension_numbers = #tpu.dot_dimension_numbers<[1], [0], [0], [1], [0, 0, 1, 1], [], []>} : vector<64x192xbf16>, vector<192x128xbf16>, vector<64x128xf32> -> vector<64x128xf32>
    %30 = arith.addf %20, %29 : vector<64x128xf32>
    %c0_i32_15 = arith.constant 0 : i32
    %31 = arith.addi %0, %c0_i32_15 : i32
    %c8_i32_16 = arith.constant 8 : i32
    %32 = arith.muli %31, %c8_i32_16 : i32
    %33 = arith.addi %1, %32 : i32
    %34 = tpu.assume_multiple %33, 8 : i32
    %35 = arith.index_cast %34 : i32 to index
    %c0_17 = arith.constant 0 : index
    %36 = vector.load %arg3[%35, %c0_17] : memref<272x192xbf16, #tpu.memory_space<vmem>>, vector<64x192xbf16>
    %c0_18 = arith.constant 0 : index
    %c0_19 = arith.constant 0 : index
    %c0_20 = arith.constant 0 : index
    %37 = vector.load %arg6[%c0_18, %c0_19, %c0_20] : memref<3x192x128xbf16, #tpu.memory_space<vmem>>, vector<1x192x128xbf16>
    %38 = vector.shape_cast %37 : vector<1x192x128xbf16> to vector<192x128xbf16>
    %cst_21 = arith.constant dense<0.000000e+00> : vector<64x128xf32>
    %39 = tpu.matmul %36, %38, %cst_21 {dimension_numbers = #tpu.dot_dimension_numbers<[1], [0], [0], [1], [0, 0, 1, 1], [], []>} : vector<64x192xbf16>, vector<192x128xbf16>, vector<64x128xf32> -> vector<64x128xf32>
    %c0_i32_22 = arith.constant 0 : i32
    %40 = arith.addi %0, %c0_i32_22 : i32
    %c8_i32_23 = arith.constant 8 : i32
    %41 = arith.muli %40, %c8_i32_23 : i32
    %42 = arith.addi %1, %41 : i32
    %43 = tpu.assume_multiple %42, 8 : i32
    %44 = arith.index_cast %43 : i32 to index
    %c0_24 = arith.constant 0 : index
    %45 = vector.load %arg5[%44, %c0_24] : memref<272x192xbf16, #tpu.memory_space<vmem>>, vector<64x192xbf16>
    %c1_25 = arith.constant 1 : index
    %c0_26 = arith.constant 0 : index
    %c0_27 = arith.constant 0 : index
    %46 = vector.load %arg6[%c1_25, %c0_26, %c0_27] : memref<3x192x128xbf16, #tpu.memory_space<vmem>>, vector<1x192x128xbf16>
    %47 = vector.shape_cast %46 : vector<1x192x128xbf16> to vector<192x128xbf16>
    %cst_28 = arith.constant dense<0.000000e+00> : vector<64x128xf32>
    %48 = tpu.matmul %45, %47, %cst_28 {dimension_numbers = #tpu.dot_dimension_numbers<[1], [0], [0], [1], [0, 0, 1, 1], [], []>} : vector<64x192xbf16>, vector<192x128xbf16>, vector<64x128xf32> -> vector<64x128xf32>
    %49 = arith.addf %39, %48 : vector<64x128xf32>
    %c1_i32_29 = arith.constant 1 : i32
    %50 = arith.addi %0, %c1_i32_29 : i32
    %c8_i32_30 = arith.constant 8 : i32
    %51 = arith.muli %50, %c8_i32_30 : i32
    %52 = arith.addi %1, %51 : i32
    %53 = tpu.assume_multiple %52, 8 : i32
    %54 = arith.index_cast %53 : i32 to index
    %c0_31 = arith.constant 0 : index
    %55 = vector.load %arg3[%54, %c0_31] : memref<272x192xbf16, #tpu.memory_space<vmem>>, vector<64x192xbf16>
    %c2_32 = arith.constant 2 : index
    %c0_33 = arith.constant 0 : index
    %c0_34 = arith.constant 0 : index
    %56 = vector.load %arg6[%c2_32, %c0_33, %c0_34] : memref<3x192x128xbf16, #tpu.memory_space<vmem>>, vector<1x192x128xbf16>
    %57 = vector.shape_cast %56 : vector<1x192x128xbf16> to vector<192x128xbf16>
    %cst_35 = arith.constant dense<0.000000e+00> : vector<64x128xf32>
    %58 = tpu.matmul %55, %57, %cst_35 {dimension_numbers = #tpu.dot_dimension_numbers<[1], [0], [0], [1], [0, 0, 1, 1], [], []>} : vector<64x192xbf16>, vector<192x128xbf16>, vector<64x128xf32> -> vector<64x128xf32>
    %59 = arith.addf %49, %58 : vector<64x128xf32>
    %60 = arith.maximumf %30, %59 : vector<64x128xf32>
    %c0_i32_36 = arith.constant 0 : i32
    %61 = arith.addi %0, %c0_i32_36 : i32
    %c8_i32_37 = arith.constant 8 : i32
    %62 = arith.muli %61, %c8_i32_37 : i32
    %63 = arith.addi %1, %62 : i32
    %64 = tpu.assume_multiple %63, 8 : i32
    %65 = arith.index_cast %64 : i32 to index
    %c0_38 = arith.constant 0 : index
    %66 = vector.load %arg4[%65, %c0_38] : memref<272x192xbf16, #tpu.memory_space<vmem>>, vector<64x192xbf16>
    %c0_39 = arith.constant 0 : index
    %c0_40 = arith.constant 0 : index
    %c0_41 = arith.constant 0 : index
    %67 = vector.load %arg6[%c0_39, %c0_40, %c0_41] : memref<3x192x128xbf16, #tpu.memory_space<vmem>>, vector<1x192x128xbf16>
    %68 = vector.shape_cast %67 : vector<1x192x128xbf16> to vector<192x128xbf16>
    %cst_42 = arith.constant dense<0.000000e+00> : vector<64x128xf32>
    %69 = tpu.matmul %66, %68, %cst_42 {dimension_numbers = #tpu.dot_dimension_numbers<[1], [0], [0], [1], [0, 0, 1, 1], [], []>} : vector<64x192xbf16>, vector<192x128xbf16>, vector<64x128xf32> -> vector<64x128xf32>
    %c1_i32_43 = arith.constant 1 : i32
    %70 = arith.addi %0, %c1_i32_43 : i32
    %c8_i32_44 = arith.constant 8 : i32
    %71 = arith.muli %70, %c8_i32_44 : i32
    %72 = arith.addi %1, %71 : i32
    %73 = tpu.assume_multiple %72, 8 : i32
    %74 = arith.index_cast %73 : i32 to index
    %c0_45 = arith.constant 0 : index
    %75 = vector.load %arg2[%74, %c0_45] : memref<272x192xbf16, #tpu.memory_space<vmem>>, vector<64x192xbf16>
    %c1_46 = arith.constant 1 : index
    %c0_47 = arith.constant 0 : index
    %c0_48 = arith.constant 0 : index
    %76 = vector.load %arg6[%c1_46, %c0_47, %c0_48] : memref<3x192x128xbf16, #tpu.memory_space<vmem>>, vector<1x192x128xbf16>
    %77 = vector.shape_cast %76 : vector<1x192x128xbf16> to vector<192x128xbf16>
    %cst_49 = arith.constant dense<0.000000e+00> : vector<64x128xf32>
    %78 = tpu.matmul %75, %77, %cst_49 {dimension_numbers = #tpu.dot_dimension_numbers<[1], [0], [0], [1], [0, 0, 1, 1], [], []>} : vector<64x192xbf16>, vector<192x128xbf16>, vector<64x128xf32> -> vector<64x128xf32>
    %79 = arith.addf %69, %78 : vector<64x128xf32>
    %c1_i32_50 = arith.constant 1 : i32
    %80 = arith.addi %0, %c1_i32_50 : i32
    %c8_i32_51 = arith.constant 8 : i32
    %81 = arith.muli %80, %c8_i32_51 : i32
    %82 = arith.addi %1, %81 : i32
    %83 = tpu.assume_multiple %82, 8 : i32
    %84 = arith.index_cast %83 : i32 to index
    %c0_52 = arith.constant 0 : index
    %85 = vector.load %arg4[%84, %c0_52] : memref<272x192xbf16, #tpu.memory_space<vmem>>, vector<64x192xbf16>
    %c2_53 = arith.constant 2 : index
    %c0_54 = arith.constant 0 : index
    %c0_55 = arith.constant 0 : index
    %86 = vector.load %arg6[%c2_53, %c0_54, %c0_55] : memref<3x192x128xbf16, #tpu.memory_space<vmem>>, vector<1x192x128xbf16>
    %87 = vector.shape_cast %86 : vector<1x192x128xbf16> to vector<192x128xbf16>
    %cst_56 = arith.constant dense<0.000000e+00> : vector<64x128xf32>
    %88 = tpu.matmul %85, %87, %cst_56 {dimension_numbers = #tpu.dot_dimension_numbers<[1], [0], [0], [1], [0, 0, 1, 1], [], []>} : vector<64x192xbf16>, vector<192x128xbf16>, vector<64x128xf32> -> vector<64x128xf32>
    %89 = arith.addf %79, %88 : vector<64x128xf32>
    %90 = arith.maximumf %60, %89 : vector<64x128xf32>
    %c0_i32_57 = arith.constant 0 : i32
    %91 = arith.addi %0, %c0_i32_57 : i32
    %c8_i32_58 = arith.constant 8 : i32
    %92 = arith.muli %91, %c8_i32_58 : i32
    %93 = arith.addi %1, %92 : i32
    %94 = tpu.assume_multiple %93, 8 : i32
    %95 = arith.index_cast %94 : i32 to index
    %c0_59 = arith.constant 0 : index
    %96 = vector.load %arg5[%95, %c0_59] : memref<272x192xbf16, #tpu.memory_space<vmem>>, vector<64x192xbf16>
    %c0_60 = arith.constant 0 : index
    %c0_61 = arith.constant 0 : index
    %c0_62 = arith.constant 0 : index
    %97 = vector.load %arg6[%c0_60, %c0_61, %c0_62] : memref<3x192x128xbf16, #tpu.memory_space<vmem>>, vector<1x192x128xbf16>
    %98 = vector.shape_cast %97 : vector<1x192x128xbf16> to vector<192x128xbf16>
    %cst_63 = arith.constant dense<0.000000e+00> : vector<64x128xf32>
    %99 = tpu.matmul %96, %98, %cst_63 {dimension_numbers = #tpu.dot_dimension_numbers<[1], [0], [0], [1], [0, 0, 1, 1], [], []>} : vector<64x192xbf16>, vector<192x128xbf16>, vector<64x128xf32> -> vector<64x128xf32>
    %c1_i32_64 = arith.constant 1 : i32
    %100 = arith.addi %0, %c1_i32_64 : i32
    %c8_i32_65 = arith.constant 8 : i32
    %101 = arith.muli %100, %c8_i32_65 : i32
    %102 = arith.addi %1, %101 : i32
    %103 = tpu.assume_multiple %102, 8 : i32
    %104 = arith.index_cast %103 : i32 to index
    %c0_66 = arith.constant 0 : index
    %105 = vector.load %arg3[%104, %c0_66] : memref<272x192xbf16, #tpu.memory_space<vmem>>, vector<64x192xbf16>
    %c1_67 = arith.constant 1 : index
    %c0_68 = arith.constant 0 : index
    %c0_69 = arith.constant 0 : index
    %106 = vector.load %arg6[%c1_67, %c0_68, %c0_69] : memref<3x192x128xbf16, #tpu.memory_space<vmem>>, vector<1x192x128xbf16>
    %107 = vector.shape_cast %106 : vector<1x192x128xbf16> to vector<192x128xbf16>
    %cst_70 = arith.constant dense<0.000000e+00> : vector<64x128xf32>
    %108 = tpu.matmul %105, %107, %cst_70 {dimension_numbers = #tpu.dot_dimension_numbers<[1], [0], [0], [1], [0, 0, 1, 1], [], []>} : vector<64x192xbf16>, vector<192x128xbf16>, vector<64x128xf32> -> vector<64x128xf32>
    %109 = arith.addf %99, %108 : vector<64x128xf32>
    %c1_i32_71 = arith.constant 1 : i32
    %110 = arith.addi %0, %c1_i32_71 : i32
    %c8_i32_72 = arith.constant 8 : i32
    %111 = arith.muli %110, %c8_i32_72 : i32
    %112 = arith.addi %1, %111 : i32
    %113 = tpu.assume_multiple %112, 8 : i32
    %114 = arith.index_cast %113 : i32 to index
    %c0_73 = arith.constant 0 : index
    %115 = vector.load %arg5[%114, %c0_73] : memref<272x192xbf16, #tpu.memory_space<vmem>>, vector<64x192xbf16>
    %c2_74 = arith.constant 2 : index
    %c0_75 = arith.constant 0 : index
    %c0_76 = arith.constant 0 : index
    %116 = vector.load %arg6[%c2_74, %c0_75, %c0_76] : memref<3x192x128xbf16, #tpu.memory_space<vmem>>, vector<1x192x128xbf16>
    %117 = vector.shape_cast %116 : vector<1x192x128xbf16> to vector<192x128xbf16>
    %cst_77 = arith.constant dense<0.000000e+00> : vector<64x128xf32>
    %118 = tpu.matmul %115, %117, %cst_77 {dimension_numbers = #tpu.dot_dimension_numbers<[1], [0], [0], [1], [0, 0, 1, 1], [], []>} : vector<64x192xbf16>, vector<192x128xbf16>, vector<64x128xf32> -> vector<64x128xf32>
    %119 = arith.addf %109, %118 : vector<64x128xf32>
    %120 = arith.maximumf %90, %119 : vector<64x128xf32>
    %c0_78 = arith.constant 0 : index
    %c0_79 = arith.constant 0 : index
    %121 = vector.load %arg7[%c0_78, %c0_79] : memref<1x128xf32, #tpu.memory_space<vmem>>, vector<1x128xf32>
    %122 = vector.broadcast %121 : vector<1x128xf32> to vector<64x128xf32>
    %123 = arith.addf %120, %122 : vector<64x128xf32>
    %cst_80 = arith.constant 0.000000e+00 : f32
    %124 = vector.broadcast %cst_80 : f32 to vector<64x128xf32>
    %125 = arith.maximumf %123, %124 : vector<64x128xf32>
    %126 = arith.truncf %125 : vector<64x128xf32> to vector<64x128xbf16>
    %c0_81 = arith.constant 0 : index
    %c0_82 = arith.constant 0 : index
    %127 = vector.load %arg8[%c0_81, %c0_82] : memref<64x128xbf16, #tpu.memory_space<vmem>>, vector<64x128xbf16>
    tpu.vector_store %arg8[%c0_81, %c0_82], %126 {strides = array<i32>} : memref<64x128xbf16, #tpu.memory_space<vmem>>, vector<64x128xbf16>,
    return
  }
  func.func @transform_0(%arg0: i32, %arg1: i32) -> (i32, i32) {
    %c0_i32 = arith.constant 0 : i32
    %c0_i32_0 = arith.constant 0 : i32
    %c0_i32_1 = arith.constant 0 : i32
    return %c0_i32, %c0_i32_0 : i32, i32
  }
  func.func @transform_1(%arg0: i32, %arg1: i32) -> (i32, i32) {
    %c0_i32 = arith.constant 0 : i32
    %c0_i32_0 = arith.constant 0 : i32
    %c0_i32_1 = arith.constant 0 : i32
    return %c0_i32, %c0_i32_0 : i32, i32
  }
  func.func @transform_2(%arg0: i32, %arg1: i32) -> (i32, i32) {
    %c0_i32 = arith.constant 0 : i32
    %c0_i32_0 = arith.constant 0 : i32
    %c0_i32_1 = arith.constant 0 : i32
    return %c0_i32, %c0_i32_0 : i32, i32
  }
  func.func @transform_3(%arg0: i32, %arg1: i32) -> (i32, i32) {
    %c0_i32 = arith.constant 0 : i32
    %c0_i32_0 = arith.constant 0 : i32
    %c0_i32_1 = arith.constant 0 : i32
    return %c0_i32, %c0_i32_0 : i32, i32
  }
  func.func @transform_4(%arg0: i32, %arg1: i32) -> (i32, i32, i32) {
    %c0_i32 = arith.constant 0 : i32
    %c0_i32_0 = arith.constant 0 : i32
    %c0_i32_1 = arith.constant 0 : i32
    %c0_i32_2 = arith.constant 0 : i32
    return %c0_i32, %c0_i32_0, %c0_i32_1 : i32, i32, i32
  }
  func.func @transform_5(%arg0: i32, %arg1: i32) -> (i32, i32) {
    %c0_i32 = arith.constant 0 : i32
    %c0_i32_0 = arith.constant 0 : i32
    %c0_i32_1 = arith.constant 0 : i32
    return %c0_i32, %c0_i32_0 : i32, i32
  }
  func.func @transform_6(%arg0: i32, %arg1: i32) -> (i32, i32) {
    %c2_i32 = arith.constant 2 : i32
    %0 = arith.muli %arg0, %c2_i32 : i32
    %1 = arith.addi %0, %arg1 : i32
    %c0_i32 = arith.constant 0 : i32
    %c0_i32_0 = arith.constant 0 : i32
    return %1, %c0_i32 : i32, i32
  }
}

module attributes {stable_mosaic.version = 11 : i64} {
  func.func @_fc_head_kernel(%arg0: i32, %arg1: memref<2x8192xbf16, #tpu.memory_space<vmem>>, %arg2: memref<8192x128xbf16, #tpu.memory_space<vmem>>, %arg3: memref<1x128xf32, #tpu.memory_space<vmem>>, %arg4: memref<128x10xbf16, #tpu.memory_space<vmem>>, %arg5: memref<1x10xf32, #tpu.memory_space<vmem>>, %arg6: memref<2x10xf32, #tpu.memory_space<vmem>>, %arg7: memref<2x128xf32, #tpu.memory_space<vmem>>) attributes {dimension_semantics = [#tpu.dimension_semantics<arbitrary>], iteration_bounds = array<i64: 2>, scalar_prefetch = 0 : i64, scratch_operands = 1 : i64, tpu.core_type = #tpu.core_type<tc>, window_params = [{transform_indices = @transform_0, window_bounds = array<i64: 2, 8192>}, {transform_indices = @transform_1, window_bounds = array<i64: 8192, 128>}, {pipeline_mode = #tpu.pipeline_mode<synchronous>, transform_indices = @transform_2, window_bounds = array<i64: 1, 128>}, {pipeline_mode = #tpu.pipeline_mode<synchronous>, transform_indices = @transform_3, window_bounds = array<i64: 128, 10>}, {pipeline_mode = #tpu.pipeline_mode<synchronous>, transform_indices = @transform_4, window_bounds = array<i64: 1, 10>}, {pipeline_mode = #tpu.pipeline_mode<synchronous>, transform_indices = @transform_5, window_bounds = array<i64: 2, 10>}]} {
    %c0_i32 = arith.constant 0 : i32
    %0 = arith.cmpi eq, %arg0, %c0_i32 : i32
    %1 = arith.extui %0 : i1 to i32
    %c0_i32_0 = arith.constant 0 : i32
    %2 = arith.cmpi ne, %1, %c0_i32_0 : i32
    scf.if %2 {
      %cst_9 = arith.constant 0.000000e+00 : f32
      %12 = vector.broadcast %cst_9 : f32 to vector<2x128xf32>
      %c0_10 = arith.constant 0 : index
      %c0_11 = arith.constant 0 : index
      %13 = vector.load %arg7[%c0_10, %c0_11] : memref<2x128xf32, #tpu.memory_space<vmem>>, vector<2x128xf32>
      tpu.vector_store %arg7[%c0_10, %c0_11], %12 {strides = array<i32>} : memref<2x128xf32, #tpu.memory_space<vmem>>, vector<2x128xf32>,
    } else {
    }
    %c0 = arith.constant 0 : index
    %c0_1 = arith.constant 0 : index
    %3 = vector.load %arg7[%c0, %c0_1] : memref<2x128xf32, #tpu.memory_space<vmem>>, vector<2x128xf32>
    %c0_2 = arith.constant 0 : index
    %c0_3 = arith.constant 0 : index
    %4 = vector.load %arg1[%c0_2, %c0_3] : memref<2x8192xbf16, #tpu.memory_space<vmem>>, vector<2x8192xbf16>
    %c0_4 = arith.constant 0 : index
    %c0_5 = arith.constant 0 : index
    %5 = vector.load %arg2[%c0_4, %c0_5] : memref<8192x128xbf16, #tpu.memory_space<vmem>>, vector<8192x128xbf16>
    %cst = arith.constant dense<0.000000e+00> : vector<2x128xf32>
    %6 = tpu.matmul %4, %5, %cst {dimension_numbers = #tpu.dot_dimension_numbers<[1], [0], [0], [1], [0, 0, 1, 1], [], []>} : vector<2x8192xbf16>, vector<8192x128xbf16>, vector<2x128xf32> -> vector<2x128xf32>
    %7 = arith.addf %3, %6 : vector<2x128xf32>
    %c0_6 = arith.constant 0 : index
    %c0_7 = arith.constant 0 : index
    %8 = vector.load %arg7[%c0_6, %c0_7] : memref<2x128xf32, #tpu.memory_space<vmem>>, vector<2x128xf32>
    tpu.vector_store %arg7[%c0_6, %c0_7], %7 {strides = array<i32>} : memref<2x128xf32, #tpu.memory_space<vmem>>, vector<2x128xf32>,
    %c1_i32 = arith.constant 1 : i32
    %9 = arith.cmpi eq, %arg0, %c1_i32 : i32
    %10 = arith.extui %9 : i1 to i32
    %c0_i32_8 = arith.constant 0 : i32
    %11 = arith.cmpi ne, %10, %c0_i32_8 : i32
    scf.if %11 {
      %c0_9 = arith.constant 0 : index
      %c0_10 = arith.constant 0 : index
      %12 = vector.load %arg7[%c0_9, %c0_10] : memref<2x128xf32, #tpu.memory_space<vmem>>, vector<2x128xf32>
      %c0_11 = arith.constant 0 : index
      %c0_12 = arith.constant 0 : index
      %13 = vector.load %arg3[%c0_11, %c0_12] : memref<1x128xf32, #tpu.memory_space<vmem>>, vector<1x128xf32>
      %14 = vector.broadcast %13 : vector<1x128xf32> to vector<2x128xf32>
      %15 = arith.addf %12, %14 : vector<2x128xf32>
      %cst_13 = arith.constant 0.000000e+00 : f32
      %16 = vector.broadcast %cst_13 : f32 to vector<2x128xf32>
      %17 = arith.maximumf %15, %16 : vector<2x128xf32>
      %18 = arith.truncf %17 : vector<2x128xf32> to vector<2x128xbf16>
      %c0_14 = arith.constant 0 : index
      %c0_15 = arith.constant 0 : index
      %19 = vector.load %arg4[%c0_14, %c0_15] : memref<128x10xbf16, #tpu.memory_space<vmem>>, vector<128x10xbf16>
      %cst_16 = arith.constant dense<0.000000e+00> : vector<2x10xf32>
      %20 = tpu.matmul %18, %19, %cst_16 {dimension_numbers = #tpu.dot_dimension_numbers<[1], [0], [0], [1], [0, 0, 1, 1], [], []>} : vector<2x128xbf16>, vector<128x10xbf16>, vector<2x10xf32> -> vector<2x10xf32>
      %c0_17 = arith.constant 0 : index
      %c0_18 = arith.constant 0 : index
      %21 = vector.load %arg5[%c0_17, %c0_18] : memref<1x10xf32, #tpu.memory_space<vmem>>, vector<1x10xf32>
      %22 = vector.broadcast %21 : vector<1x10xf32> to vector<2x10xf32>
      %23 = arith.addf %20, %22 : vector<2x10xf32>
      %c0_19 = arith.constant 0 : index
      %c0_20 = arith.constant 0 : index
      %24 = vector.load %arg6[%c0_19, %c0_20] : memref<2x10xf32, #tpu.memory_space<vmem>>, vector<2x10xf32>
      tpu.vector_store %arg6[%c0_19, %c0_20], %23 {strides = array<i32>} : memref<2x10xf32, #tpu.memory_space<vmem>>, vector<2x10xf32>,
    } else {
    }
    return
  }
  func.func @transform_0(%arg0: i32) -> (i32, i32) {
    %c0_i32 = arith.constant 0 : i32
    %c0_i32_0 = arith.constant 0 : i32
    return %c0_i32, %arg0 : i32, i32
  }
  func.func @transform_1(%arg0: i32) -> (i32, i32) {
    %c0_i32 = arith.constant 0 : i32
    %c0_i32_0 = arith.constant 0 : i32
    return %arg0, %c0_i32 : i32, i32
  }
  func.func @transform_2(%arg0: i32) -> (i32, i32) {
    %c0_i32 = arith.constant 0 : i32
    %c0_i32_0 = arith.constant 0 : i32
    %c0_i32_1 = arith.constant 0 : i32
    return %c0_i32, %c0_i32_0 : i32, i32
  }
  func.func @transform_3(%arg0: i32) -> (i32, i32) {
    %c0_i32 = arith.constant 0 : i32
    %c0_i32_0 = arith.constant 0 : i32
    %c0_i32_1 = arith.constant 0 : i32
    return %c0_i32, %c0_i32_0 : i32, i32
  }
  func.func @transform_4(%arg0: i32) -> (i32, i32) {
    %c0_i32 = arith.constant 0 : i32
    %c0_i32_0 = arith.constant 0 : i32
    %c0_i32_1 = arith.constant 0 : i32
    return %c0_i32, %c0_i32_0 : i32, i32
  }
  func.func @transform_5(%arg0: i32) -> (i32, i32) {
    %c0_i32 = arith.constant 0 : i32
    %c0_i32_0 = arith.constant 0 : i32
    %c0_i32_1 = arith.constant 0 : i32
    return %c0_i32, %c0_i32_0 : i32, i32
  }
}

</mosaic_0001>

<llo_original>
// kernel: cnn_forward.3
$region0: #{cnn_forward.3}
  #allocation0 [shape = 'u32[]', space=smem, size = 0x4, offset = 0x4, fixed_abs, tag = 'smem constant byte address 0x4 - core index']
  #allocation1 [shape = 'u32[72,128]{1,0:T(1,128)}', space=vmem, size = 0x9000, scoped, tag = 'internal scratch']
  %s0 = inlined_call_operand.vmem [shape: bf16[528,36], index: 0, kind: input, shape index: {}]
  %s1 = inlined_call_operand.vmem [shape: bf16[528,36], index: 1, kind: input, shape index: {}]
  %s2 = inlined_call_operand.vmem [shape: bf16[528,36], index: 2, kind: input, shape index: {}]
  %s3 = inlined_call_operand.vmem [shape: bf16[528,36], index: 3, kind: input, shape index: {}]
  %s4 = inlined_call_operand.vmem [shape: bf16[3,36,128], index: 4, kind: input, shape index: {}]
  %s5 = inlined_call_operand.vmem [shape: f32[1,128], index: 5, kind: input, shape index: {}]
  %s6 = inlined_call_operand.vmem [shape: bf16[512,128], index: 6, kind: output, shape index: {}]
  %s7 = sld [smem:[#allocation0]]
  $region57: #{cnn_forward.3} parent=0
    _
  %s9 = ssub.s32 1, %s7
  %s10 = scalar_select 0, %s9, %s7
  loop: start=0, step=1, limit=6
  $region2: #{cnn_forward.3} parent=0 // loop_pre_header
    _
  $region3: #{cnn_forward.3} parent=0 // loop_header
    %s12 = sphi 0, %s16
    %p13 = scmp.ge.s32.totalorder %s12, 6
    %s19 = sphi 0, %s31
    %s20 = sphi 0, %s27
    %s21 = sphi 0, %s19
    %s22 = sphi 0, %s20
    %s23 = sphi 0, %s21
    %s24 = sphi 0, %s22
    %s32 = sphi 0, %s32
    %s34 = sphi 0, %s32
    %s35 = sphi 0, %s34
    %s49 = sphi 0, %s35
    %s53 = sphi 0, %s53
    %s55 = sphi 0, %s53
    %s56 = sphi 0, %s55
    %s70 = sphi 0, %s56
    %s74 = sphi 0, %s74
    %s76 = sphi 0, %s74
    %s77 = sphi 0, %s76
    %s91 = sphi 0, %s77
    %s95 = sphi 0, %s95
    %s97 = sphi 0, %s95
    %s98 = sphi 0, %s97
    %s112 = sphi 0, %s98
    %s116 = sphi 0, %s116
    %s118 = sphi 0, %s116
    %s119 = sphi 0, %s118
    %s133 = sphi 0, %s119
    %s137 = sphi 0, %s137
    %s139 = sphi 0, %s137
    %s140 = sphi 0, %s139
    %s154 = sphi 0, %s140
    %s164 = sphi 0, %s166
    %s167 = sphi 0, %s164
    %s168 = sphi 0, %s167
    %s184 = sphi 0, %s168
  $region4: #{cnn_forward.3} parent=0 // loop_header_branch
    %15 = sbr.rel (%p13) target = $region8
  $region5: #{cnn_forward.3} parent=0 // loop_body
    %s17 = ssub.s32 %s12, 1
    %s18 = ssub.s32 %s12, 2
    %s25 = sadd.s32 1, %s20
    %p26 = scmp.ge.s32.totalorder %s25, 2
    %s27 = scalar_select %p26, 0, %s25
    %s28 = sadd.s32 1, %s19
    %s29 = scalar_select %p26, %s28, %s19
    %p30 = scmp.ge.s32.totalorder %s29, 2
    %s31 = scalar_select %p30, 0, %s29
    %s33 = sadd.s32 %s32, 1
    %p36 = scmp.eq.s32.totalorder %s12, 3
    %p37 = scmp.ne.s32.totalorder %s32, %s34
    %p38 = scmp.eq.s32.totalorder %s12, 0
    %p39 = por %p37, %p38
    %p40 = scmp.ne.s32.totalorder %s32, %s34
    %p41 = scmp.eq.s32.totalorder %s17, 3
    %p42 = por %p40, %p41
    %p43 = scmp.ne.s32.totalorder %s34, %s35
    %p44 = scmp.eq.s32.totalorder %s17, 0
    %p45 = por %p43, %p44
    %p46 = scmp.ne.s32.totalorder %s34, %s35
    %p47 = scmp.eq.s32.totalorder %s18, 3
    %p48 = por %p46, %p47
    %p50 = scmp.ne.s32.totalorder %s35, %s49
    %p51 = scmp.eq.s32.totalorder %s18, 0
    %p52 = por %p50, %p51
    %s54 = sadd.s32 %s53, 1
    %p57 = scmp.eq.s32.totalorder %s12, 3
    %p58 = scmp.ne.s32.totalorder %s53, %s55
    %p59 = scmp.eq.s32.totalorder %s12, 0
    %p60 = por %p58, %p59
    %p61 = scmp.ne.s32.totalorder %s53, %s55
    %p62 = scmp.eq.s32.totalorder %s17, 3
    %p63 = por %p61, %p62
    %p64 = scmp.ne.s32.totalorder %s55, %s56
    %p65 = scmp.eq.s32.totalorder %s17, 0
    %p66 = por %p64, %p65
    %p67 = scmp.ne.s32.totalorder %s55, %s56
    %p68 = scmp.eq.s32.totalorder %s18, 3
    %p69 = por %p67, %p68
    %p71 = scmp.ne.s32.totalorder %s56, %s70
    %p72 = scmp.eq.s32.totalorder %s18, 0
    %p73 = por %p71, %p72
    %s75 = sadd.s32 %s74, 1
    %p78 = scmp.eq.s32.totalorder %s12, 3
    %p79 = scmp.ne.s32.totalorder %s74, %s76
    %p80 = scmp.eq.s32.totalorder %s12, 0
    %p81 = por %p79, %p80
    %p82 = scmp.ne.s32.totalorder %s74, %s76
    %p83 = scmp.eq.s32.totalorder %s17, 3
    %p84 = por %p82, %p83
    %p85 = scmp.ne.s32.totalorder %s76, %s77
    %p86 = scmp.eq.s32.totalorder %s17, 0
    %p87 = por %p85, %p86
    %p88 = scmp.ne.s32.totalorder %s76, %s77
    %p89 = scmp.eq.s32.totalorder %s18, 3
    %p90 = por %p88, %p89
    %p92 = scmp.ne.s32.totalorder %s77, %s91
    %p93 = scmp.eq.s32.totalorder %s18, 0
    %p94 = por %p92, %p93
    %s96 = sadd.s32 %s95, 1
    %p99 = scmp.eq.s32.totalorder %s12, 3
    %p100 = scmp.ne.s32.totalorder %s95, %s97
    %p101 = scmp.eq.s32.totalorder %s12, 0
    %p102 = por %p100, %p101
    %p103 = scmp.ne.s32.totalorder %s95, %s97
    %p104 = scmp.eq.s32.totalorder %s17, 3
    %p105 = por %p103, %p104
    %p106 = scmp.ne.s32.totalorder %s97, %s98
    %p107 = scmp.eq.s32.totalorder %s17, 0
    %p108 = por %p106, %p107
    %p109 = scmp.ne.s32.totalorder %s97, %s98
    %p110 = scmp.eq.s32.totalorder %s18, 3
    %p111 = por %p109, %p110
    %p113 = scmp.ne.s32.totalorder %s98, %s112
    %p114 = scmp.eq.s32.totalorder %s18, 0
    %p115 = por %p113, %p114
    %s117 = sadd.s32 %s116, 1
    %p120 = scmp.eq.s32.totalorder %s12, 3
    %p121 = scmp.ne.s32.totalorder %s116, %s118
    %p122 = scmp.eq.s32.totalorder %s12, 0
    %p123 = por %p121, %p122
    %p124 = scmp.ne.s32.totalorder %s116, %s118
    %p125 = scmp.eq.s32.totalorder %s17, 3
    %p126 = por %p124, %p125
    %p127 = scmp.ne.s32.totalorder %s118, %s119
    %p128 = scmp.eq.s32.totalorder %s17, 0
    %p129 = por %p127, %p128
    %p130 = scmp.ne.s32.totalorder %s118, %s119
    %p131 = scmp.eq.s32.totalorder %s18, 3
    %p132 = por %p130, %p131
    %p134 = scmp.ne.s32.totalorder %s119, %s133
    %p135 = scmp.eq.s32.totalorder %s18, 0
    %p136 = por %p134, %p135
    %s138 = sadd.s32 %s137, 1
    %p141 = scmp.eq.s32.totalorder %s12, 3
    %p142 = scmp.ne.s32.totalorder %s137, %s139
    %p143 = scmp.eq.s32.totalorder %s12, 0
    %p144 = por %p142, %p143
    %p145 = scmp.ne.s32.totalorder %s137, %s139
    %p146 = scmp.eq.s32.totalorder %s17, 3
    %p147 = por %p145, %p146
    %p148 = scmp.ne.s32.totalorder %s139, %s140
    %p149 = scmp.eq.s32.totalorder %s17, 0
    %p150 = por %p148, %p149
    %p151 = scmp.ne.s32.totalorder %s139, %s140
    %p152 = scmp.eq.s32.totalorder %s18, 3
    %p153 = por %p151, %p152
    %p155 = scmp.ne.s32.totalorder %s140, %s154
    %p156 = scmp.eq.s32.totalorder %s18, 0
    %p157 = por %p155, %p156
    %s158 = smul.u32 %s19, 2
    %s159 = sadd.s32 %s158, %s20
    %s160 = smul.u32 %s31, 2
    %s161 = sadd.s32 %s160, %s27
    %s162 = ssub.s32 %s159, %s161
    %p163 = scmp.eq.s32.totalorder %s162, 0
    %s165 = sadd.s32 %s164, 1
    %s166 = scalar_select %p163, %s164, %s165
    %p169 = pneg %p163
    %p170 = scmp.eq.s32.totalorder %s12, 3
    %p171 = por %p169, %p170
    %p172 = scmp.ne.s32.totalorder %s164, %s167
    %p173 = scmp.eq.s32.totalorder %s12, 0
    %p174 = por %p172, %p173
    %p175 = scmp.ne.s32.totalorder %s164, %s167
    %p176 = scmp.eq.s32.totalorder %s17, 3
    %p177 = por %p175, %p176
    %p178 = scmp.ne.s32.totalorder %s167, %s168
    %p179 = scmp.eq.s32.totalorder %s17, 0
    %p180 = por %p178, %p179
    %p181 = scmp.ne.s32.totalorder %s167, %s168
    %p182 = scmp.eq.s32.totalorder %s18, 3
    %p183 = por %p181, %p182
    %p185 = scmp.ne.s32.totalorder %s168, %s184
    %p186 = scmp.eq.s32.totalorder %s18, 0
    %p187 = por %p185, %p186
    %p188 = scmp.le.s32.totalorder 1, %s12
    %p189 = scmp.lt.s32.totalorder %s12, 5
    %p190 = pnand %p188, %p189
    %p191 = pneg %p190
    // Predicated region
    $region9: #{cnn_forward.3} parent=5 // pred_check
      _
    $region10: #{cnn_forward.3} parent=5 // pred_check_branch
      %193 = sbr.rel (%p190) target = $region12
    $region11: #{cnn_forward.3} parent=5 // pred_region
      %s194 = ssub.s32 %s12, 1
      // Predicated region
      $region13: #{cnn_forward.3} parent=11 // pred_check
        %p195 = pneg %p45
      $region14: #{cnn_forward.3} parent=11 // pred_check_branch
        %197 = sbr.rel (%p195) target = $region16
      $region15: #{cnn_forward.3} parent=11 // pred_region
        _
      $region16: #{cnn_forward.3} parent=11 // pred_fallthru
        _
      // Predicated region
      $region17: #{cnn_forward.3} parent=11 // pred_check
        %p198 = pneg %p66
      $region18: #{cnn_forward.3} parent=11 // pred_check_branch
        %200 = sbr.rel (%p198) target = $region20
      $region19: #{cnn_forward.3} parent=11 // pred_region
        _
      $region20: #{cnn_forward.3} parent=11 // pred_fallthru
        _
      // Predicated region
      $region21: #{cnn_forward.3} parent=11 // pred_check
        %p201 = pneg %p87
      $region22: #{cnn_forward.3} parent=11 // pred_check_branch
        %203 = sbr.rel (%p201) target = $region24
      $region23: #{cnn_forward.3} parent=11 // pred_region
        _
      $region24: #{cnn_forward.3} parent=11 // pred_fallthru
        _
      // Predicated region
      $region25: #{cnn_forward.3} parent=11 // pred_check
        %p204 = pneg %p108
      $region26: #{cnn_forward.3} parent=11 // pred_check_branch
        %206 = sbr.rel (%p204) target = $region28
      $region27: #{cnn_forward.3} parent=11 // pred_region
        _
      $region28: #{cnn_forward.3} parent=11 // pred_fallthru
        _
      // Predicated region
      $region29: #{cnn_forward.3} parent=11 // pred_check
        %p207 = pneg %p129
      $region30: #{cnn_forward.3} parent=11 // pred_check_branch
        %209 = sbr.rel (%p207) target = $region32
      $region31: #{cnn_forward.3} parent=11 // pred_region
        _
      $region32: #{cnn_forward.3} parent=11 // pred_fallthru
        _
      // Predicated region
      $region33: #{cnn_forward.3} parent=11 // pred_check
        %p210 = pneg %p150
      $region34: #{cnn_forward.3} parent=11 // pred_check_branch
        %212 = sbr.rel (%p210) target = $region36
      $region35: #{cnn_forward.3} parent=11 // pred_region
        _
      $region36: #{cnn_forward.3} parent=11 // pred_fallthru
        _
    $region12: #{cnn_forward.3} parent=5 // pred_fallthru
      _
    %p213 = scmp.lt.s32.totalorder %s12, 4
    // Predicated region
    $region37: #{cnn_forward.3} parent=5 // pred_check
      %p214 = pneg %p213
    $region38: #{cnn_forward.3} parent=5 // pred_check_branch
      %216 = sbr.rel (%p214) target = $region40
    $region39: #{cnn_forward.3} parent=5 // pred_region
      _
    $region40: #{cnn_forward.3} parent=5 // pred_fallthru
      _
    %p217 = scmp.le.s32.totalorder 1, %s12
    %p218 = scmp.lt.s32.totalorder %s12, 5
    %p219 = pnand %p217, %p218
    %p220 = pneg %p219
    // Predicated region
    $region41: #{cnn_forward.3} parent=5 // pred_check
      _
    $region42: #{cnn_forward.3} parent=5 // pred_check_branch
      %222 = sbr.rel (%p219) target = $region44
    $region43: #{cnn_forward.3} parent=5 // pred_region
      %s223 = ssub.s32 %s12, 1
      %p224 = pneg %p45
      %p225 = pneg %p42
      %p226 = pneg %p66
      %p227 = pneg %p63
      %p228 = pneg %p87
      %p229 = pneg %p84
      %p230 = pneg %p108
      %p231 = pneg %p105
      %p232 = pneg %p129
      %p233 = pneg %p126
      %p234 = pneg %p150
      %p235 = pneg %p147
      %p236 = pneg %p180
      %p237 = pneg %p177
      %s238 = smul.u32 %s21, 2
      %s239 = sadd.s32 %s238, %s22
      %s240 = smul.u32 16, %s239
      %p241 = scmp.lt.s32.totalorder %s240, 63
      %s242 = scalar_select %p241, %s240, 63
      %s243 = smul.addr %s242, 4
      %s244 = scalar_lea.vmem %s6, %s243
      %s245 = smul.u32 %s21, 2
      %s246 = sadd.s32 %s245, %s22
      %s247 = smul.u32 16, %s246
      %p248 = scmp.lt.s32.totalorder %s247, 63
      %s249 = scalar_select %p248, %s247, 63
      %s250 = smul.addr %s249, 4
      %s251 = scalar_lea.vmem %s6, %s250
      %s252 = smul.u32 %s21, 2
      %s253 = sadd.s32 %s252, %s22
      %s254 = smul.u32 16, %s253
      %s256 = smul.u32 %s22, 16
      %s257 = smul.u32 %s21, 264
      %s258 = smul.u32 %s22, 128
      %s259 = sadd.s32 %s257, %s258
      %s260 = sshra.s32 %s259, 3
      %s261 = sand.u32 %s259, 7
      %s262 = smul.addr %s260, 4
      %s263 = scalar_lea.vmem %s0, %s262
      %v264 = vld [vmem:[%s263] sm:$0xf]
      %v265 = vld [vmem:[%s263 + $0x4] sm:$0xf]
      %v266 = vld [vmem:[%s263 + $0x8] sm:$0xf]
      %v267 = vld [vmem:[%s263 + $0xc] sm:$0xf]
      %v268 = vld [vmem:[%s263 + $0x10] sm:$0xf]
      %v269 = vld [vmem:[%s263 + $0x14] sm:$0xf]
      %v270 = vld [vmem:[%s263 + $0x18] sm:$0xf]
      %v271 = vld [vmem:[%s263 + $0x1c] sm:$0xf]
      %v272 = vld [vmem:[%s263 + $0x20] sm:$0xf]
      %v273 = vld [vmem:[%s263 + $0x24] sm:$0xf]
      %v274 = vld [vmem:[%s263 + $0x28] sm:$0xf]
      %v275 = vld [vmem:[%s263 + $0x2c] sm:$0xf]
      %v276 = vld [vmem:[%s263 + $0x30] sm:$0xf]
      %v277 = vld [vmem:[%s263 + $0x34] sm:$0xf]
      %v278 = vld [vmem:[%s263 + $0x38] sm:$0xf]
      %v279 = vld [vmem:[%s263 + $0x3c] sm:$0xf]
      %v280 = vld [vmem:[%s4] sm:$0xf]
      %v281 = vld [vmem:[%s4 + $0x4] sm:$0xf]
      %v282 = vld [vmem:[%s4 + $0x8] sm:$0xf]
      %v283 = vld [vmem:[%s4 + $0xc] sm:$0xf]
      %v284 = vld [vmem:[%s4 + $0x10] sm:$0x3]
      %s285 = smul.addr %s260, 4
      %s286 = scalar_lea.vmem %s2, %s285
      %v287 = vld [vmem:[%s286] sm:$0xf]
      %v288 = vld [vmem:[%s286 + $0x4] sm:$0xf]
      %v289 = vld [vmem:[%s286 + $0x8] sm:$0xf]
      %v290 = vld [vmem:[%s286 + $0xc] sm:$0xf]
      %v291 = vld [vmem:[%s286 + $0x10] sm:$0xf]
      %v292 = vld [vmem:[%s286 + $0x14] sm:$0xf]
      %v293 = vld [vmem:[%s286 + $0x18] sm:$0xf]
      %v294 = vld [vmem:[%s286 + $0x1c] sm:$0xf]
      %v295 = vld [vmem:[%s286 + $0x20] sm:$0xf]
      %v296 = vld [vmem:[%s286 + $0x24] sm:$0xf]
      %v297 = vld [vmem:[%s286 + $0x28] sm:$0xf]
      %v298 = vld [vmem:[%s286 + $0x2c] sm:$0xf]
      %v299 = vld [vmem:[%s286 + $0x30] sm:$0xf]
      %v300 = vld [vmem:[%s286 + $0x34] sm:$0xf]
      %v301 = vld [vmem:[%s286 + $0x38] sm:$0xf]
      %v302 = vld [vmem:[%s286 + $0x3c] sm:$0xf]
      %s303 = scalar_lea.vmem %s4, 20
      %v304 = vld [vmem:[%s303] sm:$0xf]
      %v305 = vld [vmem:[%s303 + $0x4] sm:$0xf]
      %v306 = vld [vmem:[%s303 + $0x8] sm:$0xf]
      %v307 = vld [vmem:[%s303 + $0xc] sm:$0xf]
      %v308 = vld [vmem:[%s303 + $0x10] sm:$0x3]
      %v325 = vunpack.c.l.b16 %v287
      %v326 = vunpack.c.l.b16 %v288
      %v327 = vunpack.c.l.b16 %v289
      %v328 = vunpack.c.l.b16 %v290
      %v329 = vunpack.c.l.b16 %v291
      %v330 = vunpack.c.l.b16 %v292
      %v331 = vunpack.c.l.b16 %v293
      %v332 = vunpack.c.l.b16 %v294
      %v333 = vunpack.c.l.b16 %v295
      %v334 = vunpack.c.l.b16 %v296
      %v335 = vunpack.c.l.b16 %v297
      %v336 = vunpack.c.l.b16 %v298
      %v337 = vunpack.c.l.b16 %v299
      %v338 = vunpack.c.l.b16 %v300
      %v339 = vunpack.c.l.b16 %v301
      %v340 = vunpack.c.l.b16 %v302
      %v341 = vpack.c.b16 %v326, %v325
      %v342 = vpack.c.b16 %v328, %v327
      %v343 = vpack.c.b16 %v330, %v329
      %v344 = vpack.c.b16 %v332, %v331
      %v345 = vpack.c.b16 %v334, %v333
      %v346 = vpack.c.b16 %v336, %v335
      %v347 = vpack.c.b16 %v338, %v337
      %v348 = vpack.c.b16 %v340, %v339
      %v354 = vunpack.c.l.b16 %v304
      %v355 = vunpack.c.l.b16 %v305
      %v356 = vunpack.c.l.b16 %v306
      %v357 = vunpack.c.l.b16 %v307
      %v358 = vunpack.c.l.b16 %v308
      %v359 = vpack.c.b16 %v355, %v354
      %v360 = vpack.c.b16 %v357, %v356
      %v361 = vpack.c.b16 %v358, %v358
      %vm364 = vcmask 293888
      %v366 = vsel %vm364, %v341, 0
      %v369 = vsel %vm364, %v342, 0
      %v372 = vsel %vm364, %v343, 0
      %v375 = vsel %vm364, %v344, 0
      %v378 = vsel %vm364, %v345, 0
      %v381 = vsel %vm364, %v346, 0
      %v384 = vsel %vm364, %v347, 0
      %v387 = vsel %vm364, %v348, 0
      %vm389 = vcmask 1041408
      %v391 = vsel %vm389, %v361, 0
      %393 = vmatpush.bf16.msra.mxu0 0
      %394 = vmatpush.bf16.msra.mxu0 0
      %395 = vmatpush.bf16.msra.mxu0 0
      %396 = vmatpush.bf16.msra.mxu0 0
      %397 = vmatpush.bf16.msra.mxu0 0
      %398 = vmatpush.bf16.msra.mxu0 %v391
      %399 = vmatpush.bf16.msra.mxu0 %v360
      %400 = vmatpush.bf16.msra.mxu0 %v359
      %401 = vmatmul.bf16.gmra.mxu0 %v366
      %v402 = vpop.f32.mrf.mxu0
      %v403 = vadd.f32 0.0, %v402
      %v404 = vpop.f32.mrf.mxu0
      %v405 = vadd.f32 0.0, %v404
      %406 = vmatmul.bf16.gmra.mxu0 %v369
      %v407 = vpop.f32.mrf.mxu0
      %v408 = vadd.f32 0.0, %v407
      %v409 = vpop.f32.mrf.mxu0
      %v410 = vadd.f32 0.0, %v409
      %411 = vmatmul.bf16.gmra.mxu0 %v372
      %v412 = vpop.f32.mrf.mxu0
      %v413 = vadd.f32 0.0, %v412
      %v414 = vpop.f32.mrf.mxu0
      %v415 = vadd.f32 0.0, %v414
      %416 = vmatmul.bf16.gmra.mxu0 %v375
      %v417 = vpop.f32.mrf.mxu0
      %v418 = vadd.f32 0.0, %v417
      %v419 = vpop.f32.mrf.mxu0
      %v420 = vadd.f32 0.0, %v419
      %421 = vmatmul.bf16.gmra.mxu0 %v378
      %v422 = vpop.f32.mrf.mxu0
      %v423 = vadd.f32 0.0, %v422
      %v424 = vpop.f32.mrf.mxu0
      %v425 = vadd.f32 0.0, %v424
      %426 = vmatmul.bf16.gmra.mxu0 %v381
      %v427 = vpop.f32.mrf.mxu0
      %v428 = vadd.f32 0.0, %v427
      %v429 = vpop.f32.mrf.mxu0
      %v430 = vadd.f32 0.0, %v429
      %431 = vmatmul.bf16.gmra.mxu0 %v384
      %v432 = vpop.f32.mrf.mxu0
      %v433 = vadd.f32 0.0, %v432
      %v434 = vpop.f32.mrf.mxu0
      %v435 = vadd.f32 0.0, %v434
      %436 = vmatmul.bf16.gmra.mxu0 %v387
      %v437 = vpop.f32.mrf.mxu0
      %v438 = vadd.f32 0.0, %v437
      %v439 = vpop.f32.mrf.mxu0
      %v440 = vadd.f32 0.0, %v439
      %441 = vdwg.mxu0
      %v458 = vunpack.c.l.b16 %v264
      %v459 = vunpack.c.l.b16 %v265
      %v460 = vunpack.c.l.b16 %v266
      %v461 = vunpack.c.l.b16 %v267
      %v462 = vunpack.c.l.b16 %v268
      %v463 = vunpack.c.l.b16 %v269
      %v464 = vunpack.c.l.b16 %v270
      %v465 = vunpack.c.l.b16 %v271
      %v466 = vunpack.c.l.b16 %v272
      %v467 = vunpack.c.l.b16 %v273
      %v468 = vunpack.c.l.b16 %v274
      %v469 = vunpack.c.l.b16 %v275
      %v470 = vunpack.c.l.b16 %v276
      %v471 = vunpack.c.l.b16 %v277
      %v472 = vunpack.c.l.b16 %v278
      %v473 = vunpack.c.l.b16 %v279
      %v474 = vpack.c.b16 %v459, %v458
      %v475 = vpack.c.b16 %v461, %v460
      %v476 = vpack.c.b16 %v463, %v462
      %v477 = vpack.c.b16 %v465, %v464
      %v478 = vpack.c.b16 %v467, %v466
      %v479 = vpack.c.b16 %v469, %v468
      %v480 = vpack.c.b16 %v471, %v470
      %v481 = vpack.c.b16 %v473, %v472
      %v487 = vunpack.c.l.b16 %v280
      %v488 = vunpack.c.l.b16 %v281
      %v489 = vunpack.c.l.b16 %v282
      %v490 = vunpack.c.l.b16 %v283
      %v491 = vunpack.c.l.b16 %v284
      %v492 = vpack.c.b16 %v488, %v487
      %v493 = vpack.c.b16 %v490, %v489
      %v494 = vpack.c.b16 %v491, %v491
      %v498 = vsel %vm364, %v474, 0
      %v501 = vsel %vm364, %v475, 0
      %v504 = vsel %vm364, %v476, 0
      %v507 = vsel %vm364, %v477, 0
      %v510 = vsel %vm364, %v478, 0
      %v513 = vsel %vm364, %v479, 0
      %v516 = vsel %vm364, %v480, 0
      %v519 = vsel %vm364, %v481, 0
      %v522 = vsel %vm389, %v494, 0
      %524 = vmatpush.bf16.msra.mxu0 0
      %525 = vmatpush.bf16.msra.mxu0 0
      %526 = vmatpush.bf16.msra.mxu0 0
      %527 = vmatpush.bf16.msra.mxu0 0
      %528 = vmatpush.bf16.msra.mxu0 0
      %529 = vmatpush.bf16.msra.mxu0 %v522
      %530 = vmatpush.bf16.msra.mxu0 %v493
      %531 = vmatpush.bf16.msra.mxu0 %v492
      %532 = vmatmul.bf16.gmra.mxu0 %v498
      %v533 = vpop.f32.mrf.mxu0
      %v534 = vadd.f32 %v403, %v533
      %v535 = vpop.f32.mrf.mxu0
      %v536 = vadd.f32 %v405, %v535
      %537 = vmatmul.bf16.gmra.mxu0 %v501
      %v538 = vpop.f32.mrf.mxu0
      %v539 = vadd.f32 %v408, %v538
      %v540 = vpop.f32.mrf.mxu0
      %v541 = vadd.f32 %v410, %v540
      %542 = vmatmul.bf16.gmra.mxu0 %v504
      %v543 = vpop.f32.mrf.mxu0
      %v544 = vadd.f32 %v413, %v543
      %v545 = vpop.f32.mrf.mxu0
      %v546 = vadd.f32 %v415, %v545
      %547 = vmatmul.bf16.gmra.mxu0 %v507
      %v548 = vpop.f32.mrf.mxu0
      %v549 = vadd.f32 %v418, %v548
      %v550 = vpop.f32.mrf.mxu0
      %v551 = vadd.f32 %v420, %v550
      %552 = vmatmul.bf16.gmra.mxu0 %v510
      %v553 = vpop.f32.mrf.mxu0
      %v554 = vadd.f32 %v423, %v553
      %v555 = vpop.f32.mrf.mxu0
      %v556 = vadd.f32 %v425, %v555
      %557 = vmatmul.bf16.gmra.mxu0 %v513
      %v558 = vpop.f32.mrf.mxu0
      %v559 = vadd.f32 %v428, %v558
      %v560 = vpop.f32.mrf.mxu0
      %v561 = vadd.f32 %v430, %v560
      %562 = vmatmul.bf16.gmra.mxu0 %v516
      %v563 = vpop.f32.mrf.mxu0
      %v564 = vadd.f32 %v433, %v563
      %v565 = vpop.f32.mrf.mxu0
      %v566 = vadd.f32 %v435, %v565
      %567 = vmatmul.bf16.gmra.mxu0 %v519
      %v568 = vpop.f32.mrf.mxu0
      %v569 = vadd.f32 %v438, %v568
      %v570 = vpop.f32.mrf.mxu0
      %v571 = vadd.f32 %v440, %v570
      %572 = vdwg.mxu0
      %s573 = sadd.s32 %s256, 1
      %s574 = smul.u32 %s573, 8
      %s575 = sadd.s32 %s257, %s574
      %s576 = sshra.s32 %s575, 3
      %s577 = sand.u32 %s575, 7
      %s578 = smul.addr %s576, 4
      %s579 = scalar_lea.vmem %s0, %s578
      %v580 = vld [vmem:[%s579] sm:$0xf]
      %v581 = vld [vmem:[%s579 + $0x4] sm:$0xf]
      %v582 = vld [vmem:[%s579 + $0x8] sm:$0xf]
      %v583 = vld [vmem:[%s579 + $0xc] sm:$0xf]
      %v584 = vld [vmem:[%s579 + $0x10] sm:$0xf]
      %v585 = vld [vmem:[%s579 + $0x14] sm:$0xf]
      %v586 = vld [vmem:[%s579 + $0x18] sm:$0xf]
      %v587 = vld [vmem:[%s579 + $0x1c] sm:$0xf]
      %v588 = vld [vmem:[%s579 + $0x20] sm:$0xf]
      %v589 = vld [vmem:[%s579 + $0x24] sm:$0xf]
      %v590 = vld [vmem:[%s579 + $0x28] sm:$0xf]
      %v591 = vld [vmem:[%s579 + $0x2c] sm:$0xf]
      %v592 = vld [vmem:[%s579 + $0x30] sm:$0xf]
      %v593 = vld [vmem:[%s579 + $0x34] sm:$0xf]
      %v594 = vld [vmem:[%s579 + $0x38] sm:$0xf]
      %v595 = vld [vmem:[%s579 + $0x3c] sm:$0xf]
      %s596 = scalar_lea.vmem %s4, 40
      %v597 = vld [vmem:[%s596] sm:$0xf]
      %v598 = vld [vmem:[%s596 + $0x4] sm:$0xf]
      %v599 = vld [vmem:[%s596 + $0x8] sm:$0xf]
      %v600 = vld [vmem:[%s596 + $0xc] sm:$0xf]
      %v601 = vld [vmem:[%s596 + $0x10] sm:$0x3]
      %v618 = vunpack.c.l.b16 %v580
      %v619 = vunpack.c.l.b16 %v581
      %v620 = vunpack.c.l.b16 %v582
      %v621 = vunpack.c.l.b16 %v583
      %v622 = vunpack.c.l.b16 %v584
      %v623 = vunpack.c.l.b16 %v585
      %v624 = vunpack.c.l.b16 %v586
      %v625 = vunpack.c.l.b16 %v587
      %v626 = vunpack.c.l.b16 %v588
      %v627 = vunpack.c.l.b16 %v589
      %v628 = vunpack.c.l.b16 %v590
      %v629 = vunpack.c.l.b16 %v591
      %v630 = vunpack.c.l.b16 %v592
      %v631 = vunpack.c.l.b16 %v593
      %v632 = vunpack.c.l.b16 %v594
      %v633 = vunpack.c.l.b16 %v595
      %v634 = vpack.c.b16 %v619, %v618
      %v635 = vpack.c.b16 %v621, %v620
      %v636 = vpack.c.b16 %v623, %v622
      %v637 = vpack.c.b16 %v625, %v624
      %v638 = vpack.c.b16 %v627, %v626
      %v639 = vpack.c.b16 %v629, %v628
      %v640 = vpack.c.b16 %v631, %v630
      %v641 = vpack.c.b16 %v633, %v632
      %v647 = vunpack.c.l.b16 %v597
      %v648 = vunpack.c.l.b16 %v598
      %v649 = vunpack.c.l.b16 %v599
      %v650 = vunpack.c.l.b16 %v600
      %v651 = vunpack.c.l.b16 %v601
      %v652 = vpack.c.b16 %v648, %v647
      %v653 = vpack.c.b16 %v650, %v649
      %v654 = vpack.c.b16 %v651, %v651
      %v658 = vsel %vm364, %v634, 0
      %v661 = vsel %vm364, %v635, 0
      %v664 = vsel %vm364, %v636, 0
      %v667 = vsel %vm364, %v637, 0
      %v670 = vsel %vm364, %v638, 0
      %v673 = vsel %vm364, %v639, 0
      %v676 = vsel %vm364, %v640, 0
      %v679 = vsel %vm364, %v641, 0
      %v682 = vsel %vm389, %v654, 0
      %684 = vmatpush.bf16.msra.mxu0 0
      %685 = vmatpush.bf16.msra.mxu0 0
      %686 = vmatpush.bf16.msra.mxu0 0
      %687 = vmatpush.bf16.msra.mxu0 0
      %688 = vmatpush.bf16.msra.mxu0 0
      %689 = vmatpush.bf16.msra.mxu0 %v682
      %690 = vmatpush.bf16.msra.mxu0 %v653
      %691 = vmatpush.bf16.msra.mxu0 %v652
      %692 = vmatmul.bf16.gmra.mxu0 %v658
      %v693 = vpop.f32.mrf.mxu0
      %v694 = vadd.f32 0.0, %v693
      %v695 = vpop.f32.mrf.mxu0
      %v696 = vadd.f32 0.0, %v695
      %697 = vmatmul.bf16.gmra.mxu0 %v661
      %v698 = vpop.f32.mrf.mxu0
      %v699 = vadd.f32 0.0, %v698
      %v700 = vpop.f32.mrf.mxu0
      %v701 = vadd.f32 0.0, %v700
      %702 = vmatmul.bf16.gmra.mxu0 %v664
      %v703 = vpop.f32.mrf.mxu0
      %v704 = vadd.f32 0.0, %v703
      %v705 = vpop.f32.mrf.mxu0
      %v706 = vadd.f32 0.0, %v705
      %707 = vmatmul.bf16.gmra.mxu0 %v667
      %v708 = vpop.f32.mrf.mxu0
      %v709 = vadd.f32 0.0, %v708
      %v710 = vpop.f32.mrf.mxu0
      %v711 = vadd.f32 0.0, %v710
      %712 = vmatmul.bf16.gmra.mxu0 %v670
      %v713 = vpop.f32.mrf.mxu0
      %v714 = vadd.f32 0.0, %v713
      %v715 = vpop.f32.mrf.mxu0
      %v716 = vadd.f32 0.0, %v715
      %717 = vmatmul.bf16.gmra.mxu0 %v673
      %v718 = vpop.f32.mrf.mxu0
      %v719 = vadd.f32 0.0, %v718
      %v720 = vpop.f32.mrf.mxu0
      %v721 = vadd.f32 0.0, %v720
      %722 = vmatmul.bf16.gmra.mxu0 %v676
      %v723 = vpop.f32.mrf.mxu0
      %v724 = vadd.f32 0.0, %v723
      %v725 = vpop.f32.mrf.mxu0
      %v726 = vadd.f32 0.0, %v725
      %727 = vmatmul.bf16.gmra.mxu0 %v679
      %v728 = vpop.f32.mrf.mxu0
      %v729 = vadd.f32 0.0, %v728
      %v730 = vpop.f32.mrf.mxu0
      %v731 = vadd.f32 0.0, %v730
      %732 = vdwg.mxu0
      %v733 = vadd.f32 %v534, %v694
      %v734 = vadd.f32 %v536, %v696
      %v735 = vadd.f32 %v539, %v699
      %v736 = vadd.f32 %v541, %v701
      %v737 = vadd.f32 %v544, %v704
      %v738 = vadd.f32 %v546, %v706
      %v739 = vadd.f32 %v549, %v709
      %v740 = vadd.f32 %v551, %v711
      %v741 = vadd.f32 %v554, %v714
      %v742 = vadd.f32 %v556, %v716
      %v743 = vadd.f32 %v559, %v719
      %v744 = vadd.f32 %v561, %v721
      %v745 = vadd.f32 %v564, %v724
      %v746 = vadd.f32 %v566, %v726
      %v747 = vadd.f32 %v569, %v729
      %v748 = vadd.f32 %v571, %v731
      %s749 = smul.addr %s260, 4
      %s750 = scalar_lea.vmem %s1, %s749
      %v751 = vld [vmem:[%s750] sm:$0xf]
      %v752 = vld [vmem:[%s750 + $0x4] sm:$0xf]
      %v753 = vld [vmem:[%s750 + $0x8] sm:$0xf]
      %v754 = vld [vmem:[%s750 + $0xc] sm:$0xf]
      %v755 = vld [vmem:[%s750 + $0x10] sm:$0xf]
      %v756 = vld [vmem:[%s750 + $0x14] sm:$0xf]
      %v757 = vld [vmem:[%s750 + $0x18] sm:$0xf]
      %v758 = vld [vmem:[%s750 + $0x1c] sm:$0xf]
      %v759 = vld [vmem:[%s750 + $0x20] sm:$0xf]
      %v760 = vld [vmem:[%s750 + $0x24] sm:$0xf]
      %v761 = vld [vmem:[%s750 + $0x28] sm:$0xf]
      %v762 = vld [vmem:[%s750 + $0x2c] sm:$0xf]
      %v763 = vld [vmem:[%s750 + $0x30] sm:$0xf]
      %v764 = vld [vmem:[%s750 + $0x34] sm:$0xf]
      %v765 = vld [vmem:[%s750 + $0x38] sm:$0xf]
      %v766 = vld [vmem:[%s750 + $0x3c] sm:$0xf]
      %s767 = smul.addr %s260, 4
      %s768 = scalar_lea.vmem %s3, %s767
      %v769 = vld [vmem:[%s768] sm:$0xf]
      %v770 = vld [vmem:[%s768 + $0x4] sm:$0xf]
      %v771 = vld [vmem:[%s768 + $0x8] sm:$0xf]
      %v772 = vld [vmem:[%s768 + $0xc] sm:$0xf]
      %v773 = vld [vmem:[%s768 + $0x10] sm:$0xf]
      %v774 = vld [vmem:[%s768 + $0x14] sm:$0xf]
      %v775 = vld [vmem:[%s768 + $0x18] sm:$0xf]
      %v776 = vld [vmem:[%s768 + $0x1c] sm:$0xf]
      %v777 = vld [vmem:[%s768 + $0x20] sm:$0xf]
      %v778 = vld [vmem:[%s768 + $0x24] sm:$0xf]
      %v779 = vld [vmem:[%s768 + $0x28] sm:$0xf]
      %v780 = vld [vmem:[%s768 + $0x2c] sm:$0xf]
      %v781 = vld [vmem:[%s768 + $0x30] sm:$0xf]
      %v782 = vld [vmem:[%s768 + $0x34] sm:$0xf]
      %v783 = vld [vmem:[%s768 + $0x38] sm:$0xf]
      %v784 = vld [vmem:[%s768 + $0x3c] sm:$0xf]
      %v801 = vunpack.c.l.b16 %v769
      %v802 = vunpack.c.l.b16 %v770
      %v803 = vunpack.c.l.b16 %v771
      %v804 = vunpack.c.l.b16 %v772
      %v805 = vunpack.c.l.b16 %v773
      %v806 = vunpack.c.l.b16 %v774
      %v807 = vunpack.c.l.b16 %v775
      %v808 = vunpack.c.l.b16 %v776
      %v809 = vunpack.c.l.b16 %v777
      %v810 = vunpack.c.l.b16 %v778
      %v811 = vunpack.c.l.b16 %v779
      %v812 = vunpack.c.l.b16 %v780
      %v813 = vunpack.c.l.b16 %v781
      %v814 = vunpack.c.l.b16 %v782
      %v815 = vunpack.c.l.b16 %v783
      %v816 = vunpack.c.l.b16 %v784
      %v817 = vpack.c.b16 %v802, %v801
      %v818 = vpack.c.b16 %v804, %v803
      %v819 = vpack.c.b16 %v806, %v805
      %v820 = vpack.c.b16 %v808, %v807
      %v821 = vpack.c.b16 %v810, %v809
      %v822 = vpack.c.b16 %v812, %v811
      %v823 = vpack.c.b16 %v814, %v813
      %v824 = vpack.c.b16 %v816, %v815
      %v826 = vsel %vm364, %v817, 0
      %v829 = vsel %vm364, %v818, 0
      %v832 = vsel %vm364, %v819, 0
      %v835 = vsel %vm364, %v820, 0
      %v838 = vsel %vm364, %v821, 0
      %v841 = vsel %vm364, %v822, 0
      %v844 = vsel %vm364, %v823, 0
      %v847 = vsel %vm364, %v824, 0
      %849 = vmatpush.bf16.msra.mxu0 0
      %850 = vmatpush.bf16.msra.mxu0 0
      %851 = vmatpush.bf16.msra.mxu0 0
      %852 = vmatpush.bf16.msra.mxu0 0
      %853 = vmatpush.bf16.msra.mxu0 0
      %854 = vmatpush.bf16.msra.mxu0 %v391
      %855 = vmatpush.bf16.msra.mxu0 %v360
      %856 = vmatpush.bf16.msra.mxu0 %v359
      %857 = vmatmul.bf16.gmra.mxu0 %v826
      %v858 = vpop.f32.mrf.mxu0
      %v859 = vadd.f32 0.0, %v858
      %v860 = vpop.f32.mrf.mxu0
      %v861 = vadd.f32 0.0, %v860
      %862 = vmatmul.bf16.gmra.mxu0 %v829
      %v863 = vpop.f32.mrf.mxu0
      %v864 = vadd.f32 0.0, %v863
      %v865 = vpop.f32.mrf.mxu0
      %v866 = vadd.f32 0.0, %v865
      %867 = vmatmul.bf16.gmra.mxu0 %v832
      %v868 = vpop.f32.mrf.mxu0
      %v869 = vadd.f32 0.0, %v868
      %v870 = vpop.f32.mrf.mxu0
      %v871 = vadd.f32 0.0, %v870
      %872 = vmatmul.bf16.gmra.mxu0 %v835
      %v873 = vpop.f32.mrf.mxu0
      %v874 = vadd.f32 0.0, %v873
      %v875 = vpop.f32.mrf.mxu0
      %v876 = vadd.f32 0.0, %v875
      %877 = vmatmul.bf16.gmra.mxu0 %v838
      %v878 = vpop.f32.mrf.mxu0
      %v879 = vadd.f32 0.0, %v878
      %v880 = vpop.f32.mrf.mxu0
      %v881 = vadd.f32 0.0, %v880
      %882 = vmatmul.bf16.gmra.mxu0 %v841
      %v883 = vpop.f32.mrf.mxu0
      %v884 = vadd.f32 0.0, %v883
      %v885 = vpop.f32.mrf.mxu0
      %v886 = vadd.f32 0.0, %v885
      %887 = vmatmul.bf16.gmra.mxu0 %v844
      %v888 = vpop.f32.mrf.mxu0
      %v889 = vadd.f32 0.0, %v888
      %v890 = vpop.f32.mrf.mxu0
      %v891 = vadd.f32 0.0, %v890
      %892 = vmatmul.bf16.gmra.mxu0 %v847
      %v893 = vpop.f32.mrf.mxu0
      %v894 = vadd.f32 0.0, %v893
      %v895 = vpop.f32.mrf.mxu0
      %v896 = vadd.f32 0.0, %v895
      %897 = vdwg.mxu0
      %v914 = vunpack.c.l.b16 %v751
      %v915 = vunpack.c.l.b16 %v752
      %v916 = vunpack.c.l.b16 %v753
      %v917 = vunpack.c.l.b16 %v754
      %v918 = vunpack.c.l.b16 %v755
      %v919 = vunpack.c.l.b16 %v756
      %v920 = vunpack.c.l.b16 %v757
      %v921 = vunpack.c.l.b16 %v758
      %v922 = vunpack.c.l.b16 %v759
      %v923 = vunpack.c.l.b16 %v760
      %v924 = vunpack.c.l.b16 %v761
      %v925 = vunpack.c.l.b16 %v762
      %v926 = vunpack.c.l.b16 %v763
      %v927 = vunpack.c.l.b16 %v764
      %v928 = vunpack.c.l.b16 %v765
      %v929 = vunpack.c.l.b16 %v766
      %v930 = vpack.c.b16 %v915, %v914
      %v931 = vpack.c.b16 %v917, %v916
      %v932 = vpack.c.b16 %v919, %v918
      %v933 = vpack.c.b16 %v921, %v920
      %v934 = vpack.c.b16 %v923, %v922
      %v935 = vpack.c.b16 %v925, %v924
      %v936 = vpack.c.b16 %v927, %v926
      %v937 = vpack.c.b16 %v929, %v928
      %v939 = vsel %vm364, %v930, 0
      %v942 = vsel %vm364, %v931, 0
      %v945 = vsel %vm364, %v932, 0
      %v948 = vsel %vm364, %v933, 0
      %v951 = vsel %vm364, %v934, 0
      %v954 = vsel %vm364, %v935, 0
      %v957 = vsel %vm364, %v936, 0
      %v960 = vsel %vm364, %v937, 0
      %962 = vmatpush.bf16.msra.mxu0 0
      %963 = vmatpush.bf16.msra.mxu0 0
      %964 = vmatpush.bf16.msra.mxu0 0
      %965 = vmatpush.bf16.msra.mxu0 0
      %966 = vmatpush.bf16.msra.mxu0 0
      %967 = vmatpush.bf16.msra.mxu0 %v522
      %968 = vmatpush.bf16.msra.mxu0 %v493
      %969 = vmatpush.bf16.msra.mxu0 %v492
      %970 = vmatmul.bf16.gmra.mxu0 %v939
      %v971 = vpop.f32.mrf.mxu0
      %v972 = vadd.f32 %v859, %v971
      %v973 = vpop.f32.mrf.mxu0
      %v974 = vadd.f32 %v861, %v973
      %975 = vmatmul.bf16.gmra.mxu0 %v942
      %v976 = vpop.f32.mrf.mxu0
      %v977 = vadd.f32 %v864, %v976
      %v978 = vpop.f32.mrf.mxu0
      %v979 = vadd.f32 %v866, %v978
      %980 = vmatmul.bf16.gmra.mxu0 %v945
      %v981 = vpop.f32.mrf.mxu0
      %v982 = vadd.f32 %v869, %v981
      %v983 = vpop.f32.mrf.mxu0
      %v984 = vadd.f32 %v871, %v983
      %985 = vmatmul.bf16.gmra.mxu0 %v948
      %v986 = vpop.f32.mrf.mxu0
      %v987 = vadd.f32 %v874, %v986
      %v988 = vpop.f32.mrf.mxu0
      %v989 = vadd.f32 %v876, %v988
      %990 = vmatmul.bf16.gmra.mxu0 %v951
      %v991 = vpop.f32.mrf.mxu0
      %v992 = vadd.f32 %v879, %v991
      %v993 = vpop.f32.mrf.mxu0
      %v994 = vadd.f32 %v881, %v993
      %995 = vmatmul.bf16.gmra.mxu0 %v954
      %v996 = vpop.f32.mrf.mxu0
      %v997 = vadd.f32 %v884, %v996
      %v998 = vpop.f32.mrf.mxu0
      %v999 = vadd.f32 %v886, %v998
      %1000 = vmatmul.bf16.gmra.mxu0 %v957
      %v1001 = vpop.f32.mrf.mxu0
      %v1002 = vadd.f32 %v889, %v1001
      %v1003 = vpop.f32.mrf.mxu0
      %v1004 = vadd.f32 %v891, %v1003
      %1005 = vmatmul.bf16.gmra.mxu0 %v960
      %v1006 = vpop.f32.mrf.mxu0
      %v1007 = vadd.f32 %v894, %v1006
      %v1008 = vpop.f32.mrf.mxu0
      %v1009 = vadd.f32 %v896, %v1008
      %1010 = vdwg.mxu0
      %s1011 = smul.addr %s576, 4
      %s1012 = scalar_lea.vmem %s1, %s1011
      %v1013 = vld [vmem:[%s1012] sm:$0xf]
      %v1014 = vld [vmem:[%s1012 + $0x4] sm:$0xf]
      %v1015 = vld [vmem:[%s1012 + $0x8] sm:$0xf]
      %v1016 = vld [vmem:[%s1012 + $0xc] sm:$0xf]
      %v1017 = vld [vmem:[%s1012 + $0x10] sm:$0xf]
      %v1018 = vld [vmem:[%s1012 + $0x14] sm:$0xf]
      %v1019 = vld [vmem:[%s1012 + $0x18] sm:$0xf]
      %v1020 = vld [vmem:[%s1012 + $0x1c] sm:$0xf]
      %v1021 = vld [vmem:[%s1012 + $0x20] sm:$0xf]
      %v1022 = vld [vmem:[%s1012 + $0x24] sm:$0xf]
      %v1023 = vld [vmem:[%s1012 + $0x28] sm:$0xf]
      %v1024 = vld [vmem:[%s1012 + $0x2c] sm:$0xf]
      %v1025 = vld [vmem:[%s1012 + $0x30] sm:$0xf]
      %v1026 = vld [vmem:[%s1012 + $0x34] sm:$0xf]
      %v1027 = vld [vmem:[%s1012 + $0x38] sm:$0xf]
      %v1028 = vld [vmem:[%s1012 + $0x3c] sm:$0xf]
      %v1045 = vunpack.c.l.b16 %v1013
      %v1046 = vunpack.c.l.b16 %v1014
      %v1047 = vunpack.c.l.b16 %v1015
      %v1048 = vunpack.c.l.b16 %v1016
      %v1049 = vunpack.c.l.b16 %v1017
      %v1050 = vunpack.c.l.b16 %v1018
      %v1051 = vunpack.c.l.b16 %v1019
      %v1052 = vunpack.c.l.b16 %v1020
      %v1053 = vunpack.c.l.b16 %v1021
      %v1054 = vunpack.c.l.b16 %v1022
      %v1055 = vunpack.c.l.b16 %v1023
      %v1056 = vunpack.c.l.b16 %v1024
      %v1057 = vunpack.c.l.b16 %v1025
      %v1058 = vunpack.c.l.b16 %v1026
      %v1059 = vunpack.c.l.b16 %v1027
      %v1060 = vunpack.c.l.b16 %v1028
      %v1061 = vpack.c.b16 %v1046, %v1045
      %v1062 = vpack.c.b16 %v1048, %v1047
      %v1063 = vpack.c.b16 %v1050, %v1049
      %v1064 = vpack.c.b16 %v1052, %v1051
      %v1065 = vpack.c.b16 %v1054, %v1053
      %v1066 = vpack.c.b16 %v1056, %v1055
      %v1067 = vpack.c.b16 %v1058, %v1057
      %v1068 = vpack.c.b16 %v1060, %v1059
      %v1070 = vsel %vm364, %v1061, 0
      %v1073 = vsel %vm364, %v1062, 0
      %v1076 = vsel %vm364, %v1063, 0
      %v1079 = vsel %vm364, %v1064, 0
      %v1082 = vsel %vm364, %v1065, 0
      %v1085 = vsel %vm364, %v1066, 0
      %v1088 = vsel %vm364, %v1067, 0
      %v1091 = vsel %vm364, %v1068, 0
      %1093 = vmatpush.bf16.msra.mxu0 0
      %1094 = vmatpush.bf16.msra.mxu0 0
      %1095 = vmatpush.bf16.msra.mxu0 0
      %1096 = vmatpush.bf16.msra.mxu0 0
      %1097 = vmatpush.bf16.msra.mxu0 0
      %1098 = vmatpush.bf16.msra.mxu0 %v682
      %1099 = vmatpush.bf16.msra.mxu0 %v653
      %1100 = vmatpush.bf16.msra.mxu0 %v652
      %1101 = vmatmul.bf16.gmra.mxu0 %v1070
      %v1102 = vpop.f32.mrf.mxu0
      %v1103 = vadd.f32 0.0, %v1102
      %v1104 = vpop.f32.mrf.mxu0
      %v1105 = vadd.f32 0.0, %v1104
      %1106 = vmatmul.bf16.gmra.mxu0 %v1073
      %v1107 = vpop.f32.mrf.mxu0
      %v1108 = vadd.f32 0.0, %v1107
      %v1109 = vpop.f32.mrf.mxu0
      %v1110 = vadd.f32 0.0, %v1109
      %1111 = vmatmul.bf16.gmra.mxu0 %v1076
      %v1112 = vpop.f32.mrf.mxu0
      %v1113 = vadd.f32 0.0, %v1112
      %v1114 = vpop.f32.mrf.mxu0
      %v1115 = vadd.f32 0.0, %v1114
      %1116 = vmatmul.bf16.gmra.mxu0 %v1079
      %v1117 = vpop.f32.mrf.mxu0
      %v1118 = vadd.f32 0.0, %v1117
      %v1119 = vpop.f32.mrf.mxu0
      %v1120 = vadd.f32 0.0, %v1119
      %1121 = vmatmul.bf16.gmra.mxu0 %v1082
      %v1122 = vpop.f32.mrf.mxu0
      %v1123 = vadd.f32 0.0, %v1122
      %v1124 = vpop.f32.mrf.mxu0
      %v1125 = vadd.f32 0.0, %v1124
      %1126 = vmatmul.bf16.gmra.mxu0 %v1085
      %v1127 = vpop.f32.mrf.mxu0
      %v1128 = vadd.f32 0.0, %v1127
      %v1129 = vpop.f32.mrf.mxu0
      %v1130 = vadd.f32 0.0, %v1129
      %1131 = vmatmul.bf16.gmra.mxu0 %v1088
      %v1132 = vpop.f32.mrf.mxu0
      %v1133 = vadd.f32 0.0, %v1132
      %v1134 = vpop.f32.mrf.mxu0
      %v1135 = vadd.f32 0.0, %v1134
      %1136 = vmatmul.bf16.gmra.mxu0 %v1091
      %v1137 = vpop.f32.mrf.mxu0
      %v1138 = vadd.f32 0.0, %v1137
      %v1139 = vpop.f32.mrf.mxu0
      %v1140 = vadd.f32 0.0, %v1139
      %1141 = vdwg.mxu0
      %v1142 = vadd.f32 %v972, %v1103
      %v1143 = vadd.f32 %v974, %v1105
      %v1144 = vadd.f32 %v977, %v1108
      %v1145 = vadd.f32 %v979, %v1110
      %v1146 = vadd.f32 %v982, %v1113
      %v1147 = vadd.f32 %v984, %v1115
      %v1148 = vadd.f32 %v987, %v1118
      %v1149 = vadd.f32 %v989, %v1120
      %v1150 = vadd.f32 %v992, %v1123
      %v1151 = vadd.f32 %v994, %v1125
      %v1152 = vadd.f32 %v997, %v1128
      %v1153 = vadd.f32 %v999, %v1130
      %v1154 = vadd.f32 %v1002, %v1133
      %v1155 = vadd.f32 %v1004, %v1135
      %v1156 = vadd.f32 %v1007, %v1138
      %v1157 = vadd.f32 %v1009, %v1140
      %v1158 = vmax.f32 %v733, %v1142
      %v1159 = vmax.f32 %v734, %v1143
      %v1160 = vmax.f32 %v735, %v1144
      %v1161 = vmax.f32 %v736, %v1145
      %v1162 = vmax.f32 %v737, %v1146
      %v1163 = vmax.f32 %v738, %v1147
      %v1164 = vmax.f32 %v739, %v1148
      %v1165 = vmax.f32 %v740, %v1149
      %v1166 = vmax.f32 %v741, %v1150
      %v1167 = vmax.f32 %v742, %v1151
      %v1168 = vmax.f32 %v743, %v1152
      %v1169 = vmax.f32 %v744, %v1153
      %v1170 = vmax.f32 %v745, %v1154
      %v1171 = vmax.f32 %v746, %v1155
      %v1172 = vmax.f32 %v747, %v1156
      %v1173 = vmax.f32 %v748, %v1157
      %1174 = vmatpush.bf16.msra.mxu0 0
      %1175 = vmatpush.bf16.msra.mxu0 0
      %1176 = vmatpush.bf16.msra.mxu0 0
      %1177 = vmatpush.bf16.msra.mxu0 0
      %1178 = vmatpush.bf16.msra.mxu0 0
      %1179 = vmatpush.bf16.msra.mxu0 %v391
      %1180 = vmatpush.bf16.msra.mxu0 %v360
      %1181 = vmatpush.bf16.msra.mxu0 %v359
      %1182 = vmatmul.bf16.gmra.mxu0 %v658
      %v1183 = vpop.f32.mrf.mxu0
      %v1184 = vadd.f32 0.0, %v1183
      %v1185 = vpop.f32.mrf.mxu0
      %v1186 = vadd.f32 0.0, %v1185
      %1187 = vmatmul.bf16.gmra.mxu0 %v661
      %v1188 = vpop.f32.mrf.mxu0
      %v1189 = vadd.f32 0.0, %v1188
      %v1190 = vpop.f32.mrf.mxu0
      %v1191 = vadd.f32 0.0, %v1190
      %1192 = vmatmul.bf16.gmra.mxu0 %v664
      %v1193 = vpop.f32.mrf.mxu0
      %v1194 = vadd.f32 0.0, %v1193
      %v1195 = vpop.f32.mrf.mxu0
      %v1196 = vadd.f32 0.0, %v1195
      %1197 = vmatmul.bf16.gmra.mxu0 %v667
      %v1198 = vpop.f32.mrf.mxu0
      %v1199 = vadd.f32 0.0, %v1198
      %v1200 = vpop.f32.mrf.mxu0
      %v1201 = vadd.f32 0.0, %v1200
      %1202 = vmatmul.bf16.gmra.mxu0 %v670
      %v1203 = vpop.f32.mrf.mxu0
      %v1204 = vadd.f32 0.0, %v1203
      %v1205 = vpop.f32.mrf.mxu0
      %v1206 = vadd.f32 0.0, %v1205
      %1207 = vmatmul.bf16.gmra.mxu0 %v673
      %v1208 = vpop.f32.mrf.mxu0
      %v1209 = vadd.f32 0.0, %v1208
      %v1210 = vpop.f32.mrf.mxu0
      %v1211 = vadd.f32 0.0, %v1210
      %1212 = vmatmul.bf16.gmra.mxu0 %v676
      %v1213 = vpop.f32.mrf.mxu0
      %v1214 = vadd.f32 0.0, %v1213
      %v1215 = vpop.f32.mrf.mxu0
      %v1216 = vadd.f32 0.0, %v1215
      %1217 = vmatmul.bf16.gmra.mxu0 %v679
      %v1218 = vpop.f32.mrf.mxu0
      %v1219 = vadd.f32 0.0, %v1218
      %v1220 = vpop.f32.mrf.mxu0
      %v1221 = vadd.f32 0.0, %v1220
      %1222 = vdwg.mxu0
      %1223 = vmatpush.bf16.msra.mxu0 0
      %1224 = vmatpush.bf16.msra.mxu0 0
      %1225 = vmatpush.bf16.msra.mxu0 0
      %1226 = vmatpush.bf16.msra.mxu0 0
      %1227 = vmatpush.bf16.msra.mxu0 0
      %1228 = vmatpush.bf16.msra.mxu0 %v522
      %1229 = vmatpush.bf16.msra.mxu0 %v493
      %1230 = vmatpush.bf16.msra.mxu0 %v492
      %1231 = vmatmul.bf16.gmra.mxu0 %v366
      %v1232 = vpop.f32.mrf.mxu0
      %v1233 = vadd.f32 %v1184, %v1232
      %v1234 = vpop.f32.mrf.mxu0
      %v1235 = vadd.f32 %v1186, %v1234
      %1236 = vmatmul.bf16.gmra.mxu0 %v369
      %v1237 = vpop.f32.mrf.mxu0
      %v1238 = vadd.f32 %v1189, %v1237
      %v1239 = vpop.f32.mrf.mxu0
      %v1240 = vadd.f32 %v1191, %v1239
      %1241 = vmatmul.bf16.gmra.mxu0 %v372
      %v1242 = vpop.f32.mrf.mxu0
      %v1243 = vadd.f32 %v1194, %v1242
      %v1244 = vpop.f32.mrf.mxu0
      %v1245 = vadd.f32 %v1196, %v1244
      %1246 = vmatmul.bf16.gmra.mxu0 %v375
      %v1247 = vpop.f32.mrf.mxu0
      %v1248 = vadd.f32 %v1199, %v1247
      %v1249 = vpop.f32.mrf.mxu0
      %v1250 = vadd.f32 %v1201, %v1249
      %1251 = vmatmul.bf16.gmra.mxu0 %v378
      %v1252 = vpop.f32.mrf.mxu0
      %v1253 = vadd.f32 %v1204, %v1252
      %v1254 = vpop.f32.mrf.mxu0
      %v1255 = vadd.f32 %v1206, %v1254
      %1256 = vmatmul.bf16.gmra.mxu0 %v381
      %v1257 = vpop.f32.mrf.mxu0
      %v1258 = vadd.f32 %v1209, %v1257
      %v1259 = vpop.f32.mrf.mxu0
      %v1260 = vadd.f32 %v1211, %v1259
      %1261 = vmatmul.bf16.gmra.mxu0 %v384
      %v1262 = vpop.f32.mrf.mxu0
      %v1263 = vadd.f32 %v1214, %v1262
      %v1264 = vpop.f32.mrf.mxu0
      %v1265 = vadd.f32 %v1216, %v1264
      %1266 = vmatmul.bf16.gmra.mxu0 %v387
      %v1267 = vpop.f32.mrf.mxu0
      %v1268 = vadd.f32 %v1219, %v1267
      %v1269 = vpop.f32.mrf.mxu0
      %v1270 = vadd.f32 %v1221, %v1269
      %1271 = vdwg.mxu0
      %s1272 = smul.addr %s576, 4
      %s1273 = scalar_lea.vmem %s2, %s1272
      %v1274 = vld [vmem:[%s1273] sm:$0xf]
      %v1275 = vld [vmem:[%s1273 + $0x4] sm:$0xf]
      %v1276 = vld [vmem:[%s1273 + $0x8] sm:$0xf]
      %v1277 = vld [vmem:[%s1273 + $0xc] sm:$0xf]
      %v1278 = vld [vmem:[%s1273 + $0x10] sm:$0xf]
      %v1279 = vld [vmem:[%s1273 + $0x14] sm:$0xf]
      %v1280 = vld [vmem:[%s1273 + $0x18] sm:$0xf]
      %v1281 = vld [vmem:[%s1273 + $0x1c] sm:$0xf]
      %v1282 = vld [vmem:[%s1273 + $0x20] sm:$0xf]
      %v1283 = vld [vmem:[%s1273 + $0x24] sm:$0xf]
      %v1284 = vld [vmem:[%s1273 + $0x28] sm:$0xf]
      %v1285 = vld [vmem:[%s1273 + $0x2c] sm:$0xf]
      %v1286 = vld [vmem:[%s1273 + $0x30] sm:$0xf]
      %v1287 = vld [vmem:[%s1273 + $0x34] sm:$0xf]
      %v1288 = vld [vmem:[%s1273 + $0x38] sm:$0xf]
      %v1289 = vld [vmem:[%s1273 + $0x3c] sm:$0xf]
      %v1306 = vunpack.c.l.b16 %v1274
      %v1307 = vunpack.c.l.b16 %v1275
      %v1308 = vunpack.c.l.b16 %v1276
      %v1309 = vunpack.c.l.b16 %v1277
      %v1310 = vunpack.c.l.b16 %v1278
      %v1311 = vunpack.c.l.b16 %v1279
      %v1312 = vunpack.c.l.b16 %v1280
      %v1313 = vunpack.c.l.b16 %v1281
      %v1314 = vunpack.c.l.b16 %v1282
      %v1315 = vunpack.c.l.b16 %v1283
      %v1316 = vunpack.c.l.b16 %v1284
      %v1317 = vunpack.c.l.b16 %v1285
      %v1318 = vunpack.c.l.b16 %v1286
      %v1319 = vunpack.c.l.b16 %v1287
      %v1320 = vunpack.c.l.b16 %v1288
      %v1321 = vunpack.c.l.b16 %v1289
      %v1322 = vpack.c.b16 %v1307, %v1306
      %v1323 = vpack.c.b16 %v1309, %v1308
      %v1324 = vpack.c.b16 %v1311, %v1310
      %v1325 = vpack.c.b16 %v1313, %v1312
      %v1326 = vpack.c.b16 %v1315, %v1314
      %v1327 = vpack.c.b16 %v1317, %v1316
      %v1328 = vpack.c.b16 %v1319, %v1318
      %v1329 = vpack.c.b16 %v1321, %v1320
      %v1331 = vsel %vm364, %v1322, 0
      %v1334 = vsel %vm364, %v1323, 0
      %v1337 = vsel %vm364, %v1324, 0
      %v1340 = vsel %vm364, %v1325, 0
      %v1343 = vsel %vm364, %v1326, 0
      %v1346 = vsel %vm364, %v1327, 0
      %v1349 = vsel %vm364, %v1328, 0
      %v1352 = vsel %vm364, %v1329, 0
      %1354 = vmatpush.bf16.msra.mxu0 0
      %1355 = vmatpush.bf16.msra.mxu0 0
      %1356 = vmatpush.bf16.msra.mxu0 0
      %1357 = vmatpush.bf16.msra.mxu0 0
      %1358 = vmatpush.bf16.msra.mxu0 0
      %1359 = vmatpush.bf16.msra.mxu0 %v682
      %1360 = vmatpush.bf16.msra.mxu0 %v653
      %1361 = vmatpush.bf16.msra.mxu0 %v652
      %1362 = vmatmul.bf16.gmra.mxu0 %v1331
      %v1363 = vpop.f32.mrf.mxu0
      %v1364 = vadd.f32 0.0, %v1363
      %v1365 = vpop.f32.mrf.mxu0
      %v1366 = vadd.f32 0.0, %v1365
      %1367 = vmatmul.bf16.gmra.mxu0 %v1334
      %v1368 = vpop.f32.mrf.mxu0
      %v1369 = vadd.f32 0.0, %v1368
      %v1370 = vpop.f32.mrf.mxu0
      %v1371 = vadd.f32 0.0, %v1370
      %1372 = vmatmul.bf16.gmra.mxu0 %v1337
      %v1373 = vpop.f32.mrf.mxu0
      %v1374 = vadd.f32 0.0, %v1373
      %v1375 = vpop.f32.mrf.mxu0
      %v1376 = vadd.f32 0.0, %v1375
      %1377 = vmatmul.bf16.gmra.mxu0 %v1340
      %v1378 = vpop.f32.mrf.mxu0
      %v1379 = vadd.f32 0.0, %v1378
      %v1380 = vpop.f32.mrf.mxu0
      %v1381 = vadd.f32 0.0, %v1380
      %1382 = vmatmul.bf16.gmra.mxu0 %v1343
      %v1383 = vpop.f32.mrf.mxu0
      %v1384 = vadd.f32 0.0, %v1383
      %v1385 = vpop.f32.mrf.mxu0
      %v1386 = vadd.f32 0.0, %v1385
      %1387 = vmatmul.bf16.gmra.mxu0 %v1346
      %v1388 = vpop.f32.mrf.mxu0
      %v1389 = vadd.f32 0.0, %v1388
      %v1390 = vpop.f32.mrf.mxu0
      %v1391 = vadd.f32 0.0, %v1390
      %1392 = vmatmul.bf16.gmra.mxu0 %v1349
      %v1393 = vpop.f32.mrf.mxu0
      %v1394 = vadd.f32 0.0, %v1393
      %v1395 = vpop.f32.mrf.mxu0
      %v1396 = vadd.f32 0.0, %v1395
      %1397 = vmatmul.bf16.gmra.mxu0 %v1352
      %v1398 = vpop.f32.mrf.mxu0
      %v1399 = vadd.f32 0.0, %v1398
      %v1400 = vpop.f32.mrf.mxu0
      %v1401 = vadd.f32 0.0, %v1400
      %1402 = vdwg.mxu0
      %v1403 = vadd.f32 %v1233, %v1364
      %v1404 = vadd.f32 %v1235, %v1366
      %v1405 = vadd.f32 %v1238, %v1369
      %v1406 = vadd.f32 %v1240, %v1371
      %v1407 = vadd.f32 %v1243, %v1374
      %v1408 = vadd.f32 %v1245, %v1376
      %v1409 = vadd.f32 %v1248, %v1379
      %v1410 = vadd.f32 %v1250, %v1381
      %v1411 = vadd.f32 %v1253, %v1384
      %v1412 = vadd.f32 %v1255, %v1386
      %v1413 = vadd.f32 %v1258, %v1389
      %v1414 = vadd.f32 %v1260, %v1391
      %v1415 = vadd.f32 %v1263, %v1394
      %v1416 = vadd.f32 %v1265, %v1396
      %v1417 = vadd.f32 %v1268, %v1399
      %v1418 = vadd.f32 %v1270, %v1401
      %v1419 = vmax.f32 %v1158, %v1403
      %v1420 = vmax.f32 %v1159, %v1404
      %v1421 = vmax.f32 %v1160, %v1405
      %v1422 = vmax.f32 %v1161, %v1406
      %v1423 = vmax.f32 %v1162, %v1407
      %v1424 = vmax.f32 %v1163, %v1408
      %v1425 = vmax.f32 %v1164, %v1409
      %v1426 = vmax.f32 %v1165, %v1410
      %v1427 = vmax.f32 %v1166, %v1411
      %v1428 = vmax.f32 %v1167, %v1412
      %v1429 = vmax.f32 %v1168, %v1413
      %v1430 = vmax.f32 %v1169, %v1414
      %v1431 = vmax.f32 %v1170, %v1415
      %v1432 = vmax.f32 %v1171, %v1416
      %v1433 = vmax.f32 %v1172, %v1417
      %v1434 = vmax.f32 %v1173, %v1418
      %1435 = vmatpush.bf16.msra.mxu0 0
      %1436 = vmatpush.bf16.msra.mxu0 0
      %1437 = vmatpush.bf16.msra.mxu0 0
      %1438 = vmatpush.bf16.msra.mxu0 0
      %1439 = vmatpush.bf16.msra.mxu0 0
      %1440 = vmatpush.bf16.msra.mxu0 %v391
      %1441 = vmatpush.bf16.msra.mxu0 %v360
      %1442 = vmatpush.bf16.msra.mxu0 %v359
      %1443 = vmatmul.bf16.gmra.mxu0 %v1070
      %v1444 = vpop.f32.mrf.mxu0
      %v1445 = vadd.f32 0.0, %v1444
      %v1446 = vpop.f32.mrf.mxu0
      %v1447 = vadd.f32 0.0, %v1446
      %1448 = vmatmul.bf16.gmra.mxu0 %v1073
      %v1449 = vpop.f32.mrf.mxu0
      %v1450 = vadd.f32 0.0, %v1449
      %v1451 = vpop.f32.mrf.mxu0
      %v1452 = vadd.f32 0.0, %v1451
      %1453 = vmatmul.bf16.gmra.mxu0 %v1076
      %v1454 = vpop.f32.mrf.mxu0
      %v1455 = vadd.f32 0.0, %v1454
      %v1456 = vpop.f32.mrf.mxu0
      %v1457 = vadd.f32 0.0, %v1456
      %1458 = vmatmul.bf16.gmra.mxu0 %v1079
      %v1459 = vpop.f32.mrf.mxu0
      %v1460 = vadd.f32 0.0, %v1459
      %v1461 = vpop.f32.mrf.mxu0
      %v1462 = vadd.f32 0.0, %v1461
      %1463 = vmatmul.bf16.gmra.mxu0 %v1082
      %v1464 = vpop.f32.mrf.mxu0
      %v1465 = vadd.f32 0.0, %v1464
      %v1466 = vpop.f32.mrf.mxu0
      %v1467 = vadd.f32 0.0, %v1466
      %1468 = vmatmul.bf16.gmra.mxu0 %v1085
      %v1469 = vpop.f32.mrf.mxu0
      %v1470 = vadd.f32 0.0, %v1469
      %v1471 = vpop.f32.mrf.mxu0
      %v1472 = vadd.f32 0.0, %v1471
      %1473 = vmatmul.bf16.gmra.mxu0 %v1088
      %v1474 = vpop.f32.mrf.mxu0
      %v1475 = vadd.f32 0.0, %v1474
      %v1476 = vpop.f32.mrf.mxu0
      %v1477 = vadd.f32 0.0, %v1476
      %1478 = vmatmul.bf16.gmra.mxu0 %v1091
      %v1479 = vpop.f32.mrf.mxu0
      %v1480 = vadd.f32 0.0, %v1479
      %v1481 = vpop.f32.mrf.mxu0
      %v1482 = vadd.f32 0.0, %v1481
      %1483 = vdwg.mxu0
      %1484 = vmatpush.bf16.msra.mxu0 0
      %1485 = vmatpush.bf16.msra.mxu0 0
      %1486 = vmatpush.bf16.msra.mxu0 0
      %1487 = vmatpush.bf16.msra.mxu0 0
      %1488 = vmatpush.bf16.msra.mxu0 0
      %1489 = vmatpush.bf16.msra.mxu0 %v522
      %1490 = vmatpush.bf16.msra.mxu0 %v493
      %1491 = vmatpush.bf16.msra.mxu0 %v492
      %1492 = vmatmul.bf16.gmra.mxu0 %v826
      %v1493 = vpop.f32.mrf.mxu0
      %v1494 = vadd.f32 %v1445, %v1493
      %v1495 = vpop.f32.mrf.mxu0
      %v1496 = vadd.f32 %v1447, %v1495
      %1497 = vmatmul.bf16.gmra.mxu0 %v829
      %v1498 = vpop.f32.mrf.mxu0
      %v1499 = vadd.f32 %v1450, %v1498
      %v1500 = vpop.f32.mrf.mxu0
      %v1501 = vadd.f32 %v1452, %v1500
      %1502 = vmatmul.bf16.gmra.mxu0 %v832
      %v1503 = vpop.f32.mrf.mxu0
      %v1504 = vadd.f32 %v1455, %v1503
      %v1505 = vpop.f32.mrf.mxu0
      %v1506 = vadd.f32 %v1457, %v1505
      %1507 = vmatmul.bf16.gmra.mxu0 %v835
      %v1508 = vpop.f32.mrf.mxu0
      %v1509 = vadd.f32 %v1460, %v1508
      %v1510 = vpop.f32.mrf.mxu0
      %v1511 = vadd.f32 %v1462, %v1510
      %1512 = vmatmul.bf16.gmra.mxu0 %v838
      %v1513 = vpop.f32.mrf.mxu0
      %v1514 = vadd.f32 %v1465, %v1513
      %v1515 = vpop.f32.mrf.mxu0
      %v1516 = vadd.f32 %v1467, %v1515
      %1517 = vmatmul.bf16.gmra.mxu0 %v841
      %v1518 = vpop.f32.mrf.mxu0
      %v1519 = vadd.f32 %v1470, %v1518
      %v1520 = vpop.f32.mrf.mxu0
      %v1521 = vadd.f32 %v1472, %v1520
      %1522 = vmatmul.bf16.gmra.mxu0 %v844
      %v1523 = vpop.f32.mrf.mxu0
      %v1524 = vadd.f32 %v1475, %v1523
      %v1525 = vpop.f32.mrf.mxu0
      %v1526 = vadd.f32 %v1477, %v1525
      %1527 = vmatmul.bf16.gmra.mxu0 %v847
      %v1528 = vpop.f32.mrf.mxu0
      %v1529 = vadd.f32 %v1480, %v1528
      %v1530 = vpop.f32.mrf.mxu0
      %v1531 = vadd.f32 %v1482, %v1530
      %1532 = vdwg.mxu0
      %s1533 = smul.addr %s576, 4
      %s1534 = scalar_lea.vmem %s3, %s1533
      %v1535 = vld [vmem:[%s1534] sm:$0xf]
      %v1536 = vld [vmem:[%s1534 + $0x4] sm:$0xf]
      %v1537 = vld [vmem:[%s1534 + $0x8] sm:$0xf]
      %v1538 = vld [vmem:[%s1534 + $0xc] sm:$0xf]
      %v1539 = vld [vmem:[%s1534 + $0x10] sm:$0xf]
      %v1540 = vld [vmem:[%s1534 + $0x14] sm:$0xf]
      %v1541 = vld [vmem:[%s1534 + $0x18] sm:$0xf]
      %v1542 = vld [vmem:[%s1534 + $0x1c] sm:$0xf]
      %v1543 = vld [vmem:[%s1534 + $0x20] sm:$0xf]
      %v1544 = vld [vmem:[%s1534 + $0x24] sm:$0xf]
      %v1545 = vld [vmem:[%s1534 + $0x28] sm:$0xf]
      %v1546 = vld [vmem:[%s1534 + $0x2c] sm:$0xf]
      %v1547 = vld [vmem:[%s1534 + $0x30] sm:$0xf]
      %v1548 = vld [vmem:[%s1534 + $0x34] sm:$0xf]
      %v1549 = vld [vmem:[%s1534 + $0x38] sm:$0xf]
      %v1550 = vld [vmem:[%s1534 + $0x3c] sm:$0xf]
      %v1567 = vunpack.c.l.b16 %v1535
      %v1568 = vunpack.c.l.b16 %v1536
      %v1569 = vunpack.c.l.b16 %v1537
      %v1570 = vunpack.c.l.b16 %v1538
      %v1571 = vunpack.c.l.b16 %v1539
      %v1572 = vunpack.c.l.b16 %v1540
      %v1573 = vunpack.c.l.b16 %v1541
      %v1574 = vunpack.c.l.b16 %v1542
      %v1575 = vunpack.c.l.b16 %v1543
      %v1576 = vunpack.c.l.b16 %v1544
      %v1577 = vunpack.c.l.b16 %v1545
      %v1578 = vunpack.c.l.b16 %v1546
      %v1579 = vunpack.c.l.b16 %v1547
      %v1580 = vunpack.c.l.b16 %v1548
      %v1581 = vunpack.c.l.b16 %v1549
      %v1582 = vunpack.c.l.b16 %v1550
      %v1583 = vpack.c.b16 %v1568, %v1567
      %v1584 = vpack.c.b16 %v1570, %v1569
      %v1585 = vpack.c.b16 %v1572, %v1571
      %v1586 = vpack.c.b16 %v1574, %v1573
      %v1587 = vpack.c.b16 %v1576, %v1575
      %v1588 = vpack.c.b16 %v1578, %v1577
      %v1589 = vpack.c.b16 %v1580, %v1579
      %v1590 = vpack.c.b16 %v1582, %v1581
      %v1592 = vsel %vm364, %v1583, 0
      %v1595 = vsel %vm364, %v1584, 0
      %v1598 = vsel %vm364, %v1585, 0
      %v1601 = vsel %vm364, %v1586, 0
      %v1604 = vsel %vm364, %v1587, 0
      %v1607 = vsel %vm364, %v1588, 0
      %v1610 = vsel %vm364, %v1589, 0
      %v1613 = vsel %vm364, %v1590, 0
      %1615 = vmatpush.bf16.msra.mxu0 0
      %1616 = vmatpush.bf16.msra.mxu0 0
      %1617 = vmatpush.bf16.msra.mxu0 0
      %1618 = vmatpush.bf16.msra.mxu0 0
      %1619 = vmatpush.bf16.msra.mxu0 0
      %1620 = vmatpush.bf16.msra.mxu0 %v682
      %1621 = vmatpush.bf16.msra.mxu0 %v653
      %1622 = vmatpush.bf16.msra.mxu0 %v652
      %1623 = vmatmul.bf16.gmra.mxu0 %v1592
      %v1624 = vpop.f32.mrf.mxu0
      %v1625 = vadd.f32 0.0, %v1624
      %v1626 = vpop.f32.mrf.mxu0
      %v1627 = vadd.f32 0.0, %v1626
      %1628 = vmatmul.bf16.gmra.mxu0 %v1595
      %v1629 = vpop.f32.mrf.mxu0
      %v1630 = vadd.f32 0.0, %v1629
      %v1631 = vpop.f32.mrf.mxu0
      %v1632 = vadd.f32 0.0, %v1631
      %1633 = vmatmul.bf16.gmra.mxu0 %v1598
      %v1634 = vpop.f32.mrf.mxu0
      %v1635 = vadd.f32 0.0, %v1634
      %v1636 = vpop.f32.mrf.mxu0
      %v1637 = vadd.f32 0.0, %v1636
      %1638 = vmatmul.bf16.gmra.mxu0 %v1601
      %v1639 = vpop.f32.mrf.mxu0
      %v1640 = vadd.f32 0.0, %v1639
      %v1641 = vpop.f32.mrf.mxu0
      %v1642 = vadd.f32 0.0, %v1641
      %1643 = vmatmul.bf16.gmra.mxu0 %v1604
      %v1644 = vpop.f32.mrf.mxu0
      %v1645 = vadd.f32 0.0, %v1644
      %v1646 = vpop.f32.mrf.mxu0
      %v1647 = vadd.f32 0.0, %v1646
      %1648 = vmatmul.bf16.gmra.mxu0 %v1607
      %v1649 = vpop.f32.mrf.mxu0
      %v1650 = vadd.f32 0.0, %v1649
      %v1651 = vpop.f32.mrf.mxu0
      %v1652 = vadd.f32 0.0, %v1651
      %1653 = vmatmul.bf16.gmra.mxu0 %v1610
      %v1654 = vpop.f32.mrf.mxu0
      %v1655 = vadd.f32 0.0, %v1654
      %v1656 = vpop.f32.mrf.mxu0
      %v1657 = vadd.f32 0.0, %v1656
      %1658 = vmatmul.bf16.gmra.mxu0 %v1613
      %v1659 = vpop.f32.mrf.mxu0
      %v1660 = vadd.f32 0.0, %v1659
      %v1661 = vpop.f32.mrf.mxu0
      %v1662 = vadd.f32 0.0, %v1661
      %1663 = vdwg.mxu0
      %v1664 = vadd.f32 %v1494, %v1625
      %v1665 = vadd.f32 %v1496, %v1627
      %v1666 = vadd.f32 %v1499, %v1630
      %v1667 = vadd.f32 %v1501, %v1632
      %v1668 = vadd.f32 %v1504, %v1635
      %v1669 = vadd.f32 %v1506, %v1637
      %v1670 = vadd.f32 %v1509, %v1640
      %v1671 = vadd.f32 %v1511, %v1642
      %v1672 = vadd.f32 %v1514, %v1645
      %v1673 = vadd.f32 %v1516, %v1647
      %v1674 = vadd.f32 %v1519, %v1650
      %v1675 = vadd.f32 %v1521, %v1652
      %v1676 = vadd.f32 %v1524, %v1655
      %v1677 = vadd.f32 %v1526, %v1657
      %v1678 = vadd.f32 %v1529, %v1660
      %v1679 = vadd.f32 %v1531, %v1662
      %v1680 = vmax.f32 %v1419, %v1664
      %v1681 = vmax.f32 %v1420, %v1665
      %v1682 = vmax.f32 %v1421, %v1666
      %v1683 = vmax.f32 %v1422, %v1667
      %v1684 = vmax.f32 %v1423, %v1668
      %v1685 = vmax.f32 %v1424, %v1669
      %v1686 = vmax.f32 %v1425, %v1670
      %v1687 = vmax.f32 %v1426, %v1671
      %v1688 = vmax.f32 %v1427, %v1672
      %v1689 = vmax.f32 %v1428, %v1673
      %v1690 = vmax.f32 %v1429, %v1674
      %v1691 = vmax.f32 %v1430, %v1675
      %v1692 = vmax.f32 %v1431, %v1676
      %v1693 = vmax.f32 %v1432, %v1677
      %v1694 = vmax.f32 %v1433, %v1678
      %v1695 = vmax.f32 %v1434, %v1679
      %v1696 = vld [vmem:[%s5] sm:$0x1]
      %v1698 = vperm.slane %v1696, 0
      %v1700 = vadd.f32 %v1680, %v1698
      %v1701 = vadd.f32 %v1681, %v1698
      %v1702 = vadd.f32 %v1682, %v1698
      %v1703 = vadd.f32 %v1683, %v1698
      %v1704 = vadd.f32 %v1684, %v1698
      %v1705 = vadd.f32 %v1685, %v1698
      %v1706 = vadd.f32 %v1686, %v1698
      %v1707 = vadd.f32 %v1687, %v1698
      %v1708 = vadd.f32 %v1688, %v1698
      %v1709 = vadd.f32 %v1689, %v1698
      %v1710 = vadd.f32 %v1690, %v1698
      %v1711 = vadd.f32 %v1691, %v1698
      %v1712 = vadd.f32 %v1692, %v1698
      %v1713 = vadd.f32 %v1693, %v1698
      %v1714 = vadd.f32 %v1694, %v1698
      %v1715 = vadd.f32 %v1695, %v1698
      %v1716 = vmax.f32 %v1700, 0.0
      %v1717 = vmax.f32 %v1701, 0.0
      %v1718 = vmax.f32 %v1702, 0.0
      %v1719 = vmax.f32 %v1703, 0.0
      %v1720 = vmax.f32 %v1704, 0.0
      %v1721 = vmax.f32 %v1705, 0.0
      %v1722 = vmax.f32 %v1706, 0.0
      %v1723 = vmax.f32 %v1707, 0.0
      %v1724 = vmax.f32 %v1708, 0.0
      %v1725 = vmax.f32 %v1709, 0.0
      %v1726 = vmax.f32 %v1710, 0.0
      %v1727 = vmax.f32 %v1711, 0.0
      %v1728 = vmax.f32 %v1712, 0.0
      %v1729 = vmax.f32 %v1713, 0.0
      %v1730 = vmax.f32 %v1714, 0.0
      %v1731 = vmax.f32 %v1715, 0.0
      %v1732 = vpack.c.bf16 %v1716, %v1716
      %v1733 = vpack.c.bf16 %v1717, %v1717
      %v1734 = vpack.c.bf16 %v1718, %v1718
      %v1735 = vpack.c.bf16 %v1719, %v1719
      %v1736 = vpack.c.bf16 %v1720, %v1720
      %v1737 = vpack.c.bf16 %v1721, %v1721
      %v1738 = vpack.c.bf16 %v1722, %v1722
      %v1739 = vpack.c.bf16 %v1723, %v1723
      %v1740 = vpack.c.bf16 %v1724, %v1724
      %v1741 = vpack.c.bf16 %v1725, %v1725
      %v1742 = vpack.c.bf16 %v1726, %v1726
      %v1743 = vpack.c.bf16 %v1727, %v1727
      %v1744 = vpack.c.bf16 %v1728, %v1728
      %v1745 = vpack.c.bf16 %v1729, %v1729
      %v1746 = vpack.c.bf16 %v1730, %v1730
      %v1747 = vpack.c.bf16 %v1731, %v1731
      %1748 = vst [vmem:[%s251] sm:$0xf] %v1732
      %1749 = vst [vmem:[%s251 + $0x4] sm:$0xf] %v1733
      %1750 = vst [vmem:[%s251 + $0x8] sm:$0xf] %v1734
      %1751 = vst [vmem:[%s251 + $0xc] sm:$0xf] %v1735
      %1752 = vst [vmem:[%s251 + $0x10] sm:$0xf] %v1736
      %1753 = vst [vmem:[%s251 + $0x14] sm:$0xf] %v1737
      %1754 = vst [vmem:[%s251 + $0x18] sm:$0xf] %v1738
      %1755 = vst [vmem:[%s251 + $0x1c] sm:$0xf] %v1739
      %1756 = vst [vmem:[%s251 + $0x20] sm:$0xf] %v1740
      %1757 = vst [vmem:[%s251 + $0x24] sm:$0xf] %v1741
      %1758 = vst [vmem:[%s251 + $0x28] sm:$0xf] %v1742
      %1759 = vst [vmem:[%s251 + $0x2c] sm:$0xf] %v1743
      %1760 = vst [vmem:[%s251 + $0x30] sm:$0xf] %v1744
      %1761 = vst [vmem:[%s251 + $0x34] sm:$0xf] %v1745
      %1762 = vst [vmem:[%s251 + $0x38] sm:$0xf] %v1746
      %1763 = vst [vmem:[%s251 + $0x3c] sm:$0xf] %v1747
      %s1764 = smul.u32 %s21, 2
      %s1765 = sadd.s32 %s1764, %s22
      %s1766 = smul.u32 16, %s1765
      %p1767 = scmp.lt.s32.totalorder %s1766, 63
      %s1768 = scalar_select %p1767, %s1766, 63
      %s1769 = smul.addr %s1768, 4
      %s1770 = scalar_lea.vmem %s6, %s1769
      // Predicated region
      $region45: #{cnn_forward.3} parent=43 // pred_check
        %p1771 = pneg %p177
      $region46: #{cnn_forward.3} parent=43 // pred_check_branch
        %1773 = sbr.rel (%p1771) target = $region48
      $region47: #{cnn_forward.3} parent=43 // pred_region
        %s1774 = smul.u32 %s21, 2
        %s1775 = sadd.s32 %s1774, %s22
        %s1776 = smul.u32 16, %s1775
      $region48: #{cnn_forward.3} parent=43 // pred_fallthru
        _
    $region44: #{cnn_forward.3} parent=5 // pred_fallthru
      _
    %p1777 = scmp.le.s32.totalorder 2, %s12
    // Predicated region
    $region49: #{cnn_forward.3} parent=5 // pred_check
      %p1778 = pneg %p1777
    $region50: #{cnn_forward.3} parent=5 // pred_check_branch
      %1780 = sbr.rel (%p1778) target = $region52
    $region51: #{cnn_forward.3} parent=5 // pred_region
      %s1781 = ssub.s32 %s12, 2
      // Predicated region
      $region53: #{cnn_forward.3} parent=51 // pred_check
        %p1782 = pneg %p183
      $region54: #{cnn_forward.3} parent=51 // pred_check_branch
        %1784 = sbr.rel (%p1782) target = $region56
      $region55: #{cnn_forward.3} parent=51 // pred_region
        %s1785 = smul.u32 %s23, 2
        %s1786 = sadd.s32 %s1785, %s24
        %s1787 = smul.u32 16, %s1786
        %p1788 = scmp.lt.s32.totalorder %s1787, 63
        %s1789 = scalar_select %p1788, %s1787, 63
        %s1790 = smul.addr %s1789, 4
        %s1791 = scalar_lea.vmem %s6, %s1790
      $region56: #{cnn_forward.3} parent=51 // pred_fallthru
        _
    $region52: #{cnn_forward.3} parent=5 // pred_fallthru
      _
  $region6: #{cnn_forward.3} parent=0 // loop_footer
    %s16 = sadd.s32 1, %s12
  $region7: #{cnn_forward.3} parent=0 // loop_footer_branch
    %11 = sbr.rel target = $region3
  $region8: #{cnn_forward.3} parent=0 // loop_exit
    _

// kernel: cnn_forward.4
$region0: #{cnn_forward.4}
  #allocation0 [shape = 'u32[]', space=smem, size = 0x4, offset = 0x4, fixed_abs, tag = 'smem constant byte address 0x4 - core index']
  #allocation1 [shape = 'u32[72,128]{1,0:T(1,128)}', space=vmem, size = 0x9000, scoped, tag = 'internal scratch']
  %s0 = inlined_call_operand.vmem [shape: bf16[272,192], index: 0, kind: input, shape index: {}]
  %s1 = inlined_call_operand.vmem [shape: bf16[272,192], index: 1, kind: input, shape index: {}]
  %s2 = inlined_call_operand.vmem [shape: bf16[272,192], index: 2, kind: input, shape index: {}]
  %s3 = inlined_call_operand.vmem [shape: bf16[272,192], index: 3, kind: input, shape index: {}]
  %s4 = inlined_call_operand.vmem [shape: bf16[3,192,128], index: 4, kind: input, shape index: {}]
  %s5 = inlined_call_operand.vmem [shape: f32[1,128], index: 5, kind: input, shape index: {}]
  %s6 = inlined_call_operand.vmem [shape: bf16[256,128], index: 6, kind: output, shape index: {}]
  %s7 = sld [smem:[#allocation0]]
  $region57: #{cnn_forward.4} parent=0
    _
  %s9 = ssub.s32 1, %s7
  %s10 = scalar_select 0, %s9, %s7
  loop: start=0, step=1, limit=6
  $region2: #{cnn_forward.4} parent=0 // loop_pre_header
    _
  $region3: #{cnn_forward.4} parent=0 // loop_header
    %s12 = sphi 0, %s16
    %p13 = scmp.ge.s32.totalorder %s12, 6
    %s19 = sphi 0, %s31
    %s20 = sphi 0, %s27
    %s21 = sphi 0, %s19
    %s22 = sphi 0, %s20
    %s23 = sphi 0, %s21
    %s24 = sphi 0, %s22
    %s32 = sphi 0, %s32
    %s34 = sphi 0, %s32
    %s35 = sphi 0, %s34
    %s49 = sphi 0, %s35
    %s53 = sphi 0, %s53
    %s55 = sphi 0, %s53
    %s56 = sphi 0, %s55
    %s70 = sphi 0, %s56
    %s74 = sphi 0, %s74
    %s76 = sphi 0, %s74
    %s77 = sphi 0, %s76
    %s91 = sphi 0, %s77
    %s95 = sphi 0, %s95
    %s97 = sphi 0, %s95
    %s98 = sphi 0, %s97
    %s112 = sphi 0, %s98
    %s116 = sphi 0, %s116
    %s118 = sphi 0, %s116
    %s119 = sphi 0, %s118
    %s133 = sphi 0, %s119
    %s137 = sphi 0, %s137
    %s139 = sphi 0, %s137
    %s140 = sphi 0, %s139
    %s154 = sphi 0, %s140
    %s164 = sphi 0, %s166
    %s167 = sphi 0, %s164
    %s168 = sphi 0, %s167
    %s184 = sphi 0, %s168
  $region4: #{cnn_forward.4} parent=0 // loop_header_branch
    %15 = sbr.rel (%p13) target = $region8
  $region5: #{cnn_forward.4} parent=0 // loop_body
    %s17 = ssub.s32 %s12, 1
    %s18 = ssub.s32 %s12, 2
    %s25 = sadd.s32 1, %s20
    %p26 = scmp.ge.s32.totalorder %s25, 2
    %s27 = scalar_select %p26, 0, %s25
    %s28 = sadd.s32 1, %s19
    %s29 = scalar_select %p26, %s28, %s19
    %p30 = scmp.ge.s32.totalorder %s29, 2
    %s31 = scalar_select %p30, 0, %s29
    %s33 = sadd.s32 %s32, 1
    %p36 = scmp.eq.s32.totalorder %s12, 3
    %p37 = scmp.ne.s32.totalorder %s32, %s34
    %p38 = scmp.eq.s32.totalorder %s12, 0
    %p39 = por %p37, %p38
    %p40 = scmp.ne.s32.totalorder %s32, %s34
    %p41 = scmp.eq.s32.totalorder %s17, 3
    %p42 = por %p40, %p41
    %p43 = scmp.ne.s32.totalorder %s34, %s35
    %p44 = scmp.eq.s32.totalorder %s17, 0
    %p45 = por %p43, %p44
    %p46 = scmp.ne.s32.totalorder %s34, %s35
    %p47 = scmp.eq.s32.totalorder %s18, 3
    %p48 = por %p46, %p47
    %p50 = scmp.ne.s32.totalorder %s35, %s49
    %p51 = scmp.eq.s32.totalorder %s18, 0
    %p52 = por %p50, %p51
    %s54 = sadd.s32 %s53, 1
    %p57 = scmp.eq.s32.totalorder %s12, 3
    %p58 = scmp.ne.s32.totalorder %s53, %s55
    %p59 = scmp.eq.s32.totalorder %s12, 0
    %p60 = por %p58, %p59
    %p61 = scmp.ne.s32.totalorder %s53, %s55
    %p62 = scmp.eq.s32.totalorder %s17, 3
    %p63 = por %p61, %p62
    %p64 = scmp.ne.s32.totalorder %s55, %s56
    %p65 = scmp.eq.s32.totalorder %s17, 0
    %p66 = por %p64, %p65
    %p67 = scmp.ne.s32.totalorder %s55, %s56
    %p68 = scmp.eq.s32.totalorder %s18, 3
    %p69 = por %p67, %p68
    %p71 = scmp.ne.s32.totalorder %s56, %s70
    %p72 = scmp.eq.s32.totalorder %s18, 0
    %p73 = por %p71, %p72
    %s75 = sadd.s32 %s74, 1
    %p78 = scmp.eq.s32.totalorder %s12, 3
    %p79 = scmp.ne.s32.totalorder %s74, %s76
    %p80 = scmp.eq.s32.totalorder %s12, 0
    %p81 = por %p79, %p80
    %p82 = scmp.ne.s32.totalorder %s74, %s76
    %p83 = scmp.eq.s32.totalorder %s17, 3
    %p84 = por %p82, %p83
    %p85 = scmp.ne.s32.totalorder %s76, %s77
    %p86 = scmp.eq.s32.totalorder %s17, 0
    %p87 = por %p85, %p86
    %p88 = scmp.ne.s32.totalorder %s76, %s77
    %p89 = scmp.eq.s32.totalorder %s18, 3
    %p90 = por %p88, %p89
    %p92 = scmp.ne.s32.totalorder %s77, %s91
    %p93 = scmp.eq.s32.totalorder %s18, 0
    %p94 = por %p92, %p93
    %s96 = sadd.s32 %s95, 1
    %p99 = scmp.eq.s32.totalorder %s12, 3
    %p100 = scmp.ne.s32.totalorder %s95, %s97
    %p101 = scmp.eq.s32.totalorder %s12, 0
    %p102 = por %p100, %p101
    %p103 = scmp.ne.s32.totalorder %s95, %s97
    %p104 = scmp.eq.s32.totalorder %s17, 3
    %p105 = por %p103, %p104
    %p106 = scmp.ne.s32.totalorder %s97, %s98
    %p107 = scmp.eq.s32.totalorder %s17, 0
    %p108 = por %p106, %p107
    %p109 = scmp.ne.s32.totalorder %s97, %s98
    %p110 = scmp.eq.s32.totalorder %s18, 3
    %p111 = por %p109, %p110
    %p113 = scmp.ne.s32.totalorder %s98, %s112
    %p114 = scmp.eq.s32.totalorder %s18, 0
    %p115 = por %p113, %p114
    %s117 = sadd.s32 %s116, 1
    %p120 = scmp.eq.s32.totalorder %s12, 3
    %p121 = scmp.ne.s32.totalorder %s116, %s118
    %p122 = scmp.eq.s32.totalorder %s12, 0
    %p123 = por %p121, %p122
    %p124 = scmp.ne.s32.totalorder %s116, %s118
    %p125 = scmp.eq.s32.totalorder %s17, 3
    %p126 = por %p124, %p125
    %p127 = scmp.ne.s32.totalorder %s118, %s119
    %p128 = scmp.eq.s32.totalorder %s17, 0
    %p129 = por %p127, %p128
    %p130 = scmp.ne.s32.totalorder %s118, %s119
    %p131 = scmp.eq.s32.totalorder %s18, 3
    %p132 = por %p130, %p131
    %p134 = scmp.ne.s32.totalorder %s119, %s133
    %p135 = scmp.eq.s32.totalorder %s18, 0
    %p136 = por %p134, %p135
    %s138 = sadd.s32 %s137, 1
    %p141 = scmp.eq.s32.totalorder %s12, 3
    %p142 = scmp.ne.s32.totalorder %s137, %s139
    %p143 = scmp.eq.s32.totalorder %s12, 0
    %p144 = por %p142, %p143
    %p145 = scmp.ne.s32.totalorder %s137, %s139
    %p146 = scmp.eq.s32.totalorder %s17, 3
    %p147 = por %p145, %p146
    %p148 = scmp.ne.s32.totalorder %s139, %s140
    %p149 = scmp.eq.s32.totalorder %s17, 0
    %p150 = por %p148, %p149
    %p151 = scmp.ne.s32.totalorder %s139, %s140
    %p152 = scmp.eq.s32.totalorder %s18, 3
    %p153 = por %p151, %p152
    %p155 = scmp.ne.s32.totalorder %s140, %s154
    %p156 = scmp.eq.s32.totalorder %s18, 0
    %p157 = por %p155, %p156
    %s158 = smul.u32 %s19, 2
    %s159 = sadd.s32 %s158, %s20
    %s160 = smul.u32 %s31, 2
    %s161 = sadd.s32 %s160, %s27
    %s162 = ssub.s32 %s159, %s161
    %p163 = scmp.eq.s32.totalorder %s162, 0
    %s165 = sadd.s32 %s164, 1
    %s166 = scalar_select %p163, %s164, %s165
    %p169 = pneg %p163
    %p170 = scmp.eq.s32.totalorder %s12, 3
    %p171 = por %p169, %p170
    %p172 = scmp.ne.s32.totalorder %s164, %s167
    %p173 = scmp.eq.s32.totalorder %s12, 0
    %p174 = por %p172, %p173
    %p175 = scmp.ne.s32.totalorder %s164, %s167
    %p176 = scmp.eq.s32.totalorder %s17, 3
    %p177 = por %p175, %p176
    %p178 = scmp.ne.s32.totalorder %s167, %s168
    %p179 = scmp.eq.s32.totalorder %s17, 0
    %p180 = por %p178, %p179
    %p181 = scmp.ne.s32.totalorder %s167, %s168
    %p182 = scmp.eq.s32.totalorder %s18, 3
    %p183 = por %p181, %p182
    %p185 = scmp.ne.s32.totalorder %s168, %s184
    %p186 = scmp.eq.s32.totalorder %s18, 0
    %p187 = por %p185, %p186
    %p188 = scmp.le.s32.totalorder 1, %s12
    %p189 = scmp.lt.s32.totalorder %s12, 5
    %p190 = pnand %p188, %p189
    %p191 = pneg %p190
    // Predicated region
    $region9: #{cnn_forward.4} parent=5 // pred_check
      _
    $region10: #{cnn_forward.4} parent=5 // pred_check_branch
      %193 = sbr.rel (%p190) target = $region12
    $region11: #{cnn_forward.4} parent=5 // pred_region
      %s194 = ssub.s32 %s12, 1
      // Predicated region
      $region13: #{cnn_forward.4} parent=11 // pred_check
        %p195 = pneg %p45
      $region14: #{cnn_forward.4} parent=11 // pred_check_branch
        %197 = sbr.rel (%p195) target = $region16
      $region15: #{cnn_forward.4} parent=11 // pred_region
        _
      $region16: #{cnn_forward.4} parent=11 // pred_fallthru
        _
      // Predicated region
      $region17: #{cnn_forward.4} parent=11 // pred_check
        %p198 = pneg %p66
      $region18: #{cnn_forward.4} parent=11 // pred_check_branch
        %200 = sbr.rel (%p198) target = $region20
      $region19: #{cnn_forward.4} parent=11 // pred_region
        _
      $region20: #{cnn_forward.4} parent=11 // pred_fallthru
        _
      // Predicated region
      $region21: #{cnn_forward.4} parent=11 // pred_check
        %p201 = pneg %p87
      $region22: #{cnn_forward.4} parent=11 // pred_check_branch
        %203 = sbr.rel (%p201) target = $region24
      $region23: #{cnn_forward.4} parent=11 // pred_region
        _
      $region24: #{cnn_forward.4} parent=11 // pred_fallthru
        _
      // Predicated region
      $region25: #{cnn_forward.4} parent=11 // pred_check
        %p204 = pneg %p108
      $region26: #{cnn_forward.4} parent=11 // pred_check_branch
        %206 = sbr.rel (%p204) target = $region28
      $region27: #{cnn_forward.4} parent=11 // pred_region
        _
      $region28: #{cnn_forward.4} parent=11 // pred_fallthru
        _
      // Predicated region
      $region29: #{cnn_forward.4} parent=11 // pred_check
        %p207 = pneg %p129
      $region30: #{cnn_forward.4} parent=11 // pred_check_branch
        %209 = sbr.rel (%p207) target = $region32
      $region31: #{cnn_forward.4} parent=11 // pred_region
        _
      $region32: #{cnn_forward.4} parent=11 // pred_fallthru
        _
      // Predicated region
      $region33: #{cnn_forward.4} parent=11 // pred_check
        %p210 = pneg %p150
      $region34: #{cnn_forward.4} parent=11 // pred_check_branch
        %212 = sbr.rel (%p210) target = $region36
      $region35: #{cnn_forward.4} parent=11 // pred_region
        _
      $region36: #{cnn_forward.4} parent=11 // pred_fallthru
        _
    $region12: #{cnn_forward.4} parent=5 // pred_fallthru
      _
    %p213 = scmp.lt.s32.totalorder %s12, 4
    // Predicated region
    $region37: #{cnn_forward.4} parent=5 // pred_check
      %p214 = pneg %p213
    $region38: #{cnn_forward.4} parent=5 // pred_check_branch
      %216 = sbr.rel (%p214) target = $region40
    $region39: #{cnn_forward.4} parent=5 // pred_region
      _
    $region40: #{cnn_forward.4} parent=5 // pred_fallthru
      _
    %p217 = scmp.le.s32.totalorder 1, %s12
    %p218 = scmp.lt.s32.totalorder %s12, 5
    %p219 = pnand %p217, %p218
    %p220 = pneg %p219
    // Predicated region
    $region41: #{cnn_forward.4} parent=5 // pred_check
      _
    $region42: #{cnn_forward.4} parent=5 // pred_check_branch
      %222 = sbr.rel (%p219) target = $region44
    $region43: #{cnn_forward.4} parent=5 // pred_region
      %s223 = ssub.s32 %s12, 1
      %p224 = pneg %p45
      %p225 = pneg %p42
      %p226 = pneg %p66
      %p227 = pneg %p63
      %p228 = pneg %p87
      %p229 = pneg %p84
      %p230 = pneg %p108
      %p231 = pneg %p105
      %p232 = pneg %p129
      %p233 = pneg %p126
      %p234 = pneg %p150
      %p235 = pneg %p147
      %p236 = pneg %p180
      %p237 = pneg %p177
      %s238 = smul.u32 %s21, 2
      %s239 = sadd.s32 %s238, %s22
      %s240 = smul.u32 8, %s239
      %p241 = scmp.lt.s32.totalorder %s240, 31
      %s242 = scalar_select %p241, %s240, 31
      %s243 = smul.addr %s242, 4
      %s244 = scalar_lea.vmem %s6, %s243
      %s245 = smul.u32 %s21, 2
      %s246 = sadd.s32 %s245, %s22
      %s247 = smul.u32 8, %s246
      %p248 = scmp.lt.s32.totalorder %s247, 31
      %s249 = scalar_select %p248, %s247, 31
      %s250 = smul.addr %s249, 4
      %s251 = scalar_lea.vmem %s6, %s250
      %s252 = smul.u32 %s21, 2
      %s253 = sadd.s32 %s252, %s22
      %s254 = smul.u32 8, %s253
      %s256 = smul.u32 %s22, 8
      %s257 = smul.u32 %s21, 136
      %s258 = smul.u32 %s22, 64
      %s259 = sadd.s32 %s257, %s258
      %s260 = sshra.s32 %s259, 3
      %s261 = sand.u32 %s259, 7
      %s262 = smul.u32 %s260, 2
      %s263 = smul.addr %s262, 4
      %s264 = scalar_lea.vmem %s0, %s263
      %v265 = vld [vmem:[%s264] sm:$0xff]
      %v266 = vld [vmem:[%s264 + $0x8] sm:$0xff]
      %v267 = vld [vmem:[%s264 + $0x10] sm:$0xff]
      %v268 = vld [vmem:[%s264 + $0x18] sm:$0xff]
      %v269 = vld [vmem:[%s264 + $0x20] sm:$0xff]
      %v270 = vld [vmem:[%s264 + $0x28] sm:$0xff]
      %v271 = vld [vmem:[%s264 + $0x30] sm:$0xff]
      %v272 = vld [vmem:[%s264 + $0x38] sm:$0xff]
      %v273 = vld [vmem:[%s4] sm:$0xf]
      %v274 = vld [vmem:[%s4 + $0x4] sm:$0xf]
      %v275 = vld [vmem:[%s4 + $0x8] sm:$0xf]
      %v276 = vld [vmem:[%s4 + $0xc] sm:$0xf]
      %v277 = vld [vmem:[%s4 + $0x10] sm:$0xf]
      %v278 = vld [vmem:[%s4 + $0x14] sm:$0xf]
      %v279 = vld [vmem:[%s4 + $0x18] sm:$0xf]
      %v280 = vld [vmem:[%s4 + $0x1c] sm:$0xf]
      %v281 = vld [vmem:[%s4 + $0x20] sm:$0xf]
      %v282 = vld [vmem:[%s4 + $0x24] sm:$0xf]
      %v283 = vld [vmem:[%s4 + $0x28] sm:$0xf]
      %v284 = vld [vmem:[%s4 + $0x2c] sm:$0xf]
      %v285 = vld [vmem:[%s4 + $0x30] sm:$0xf]
      %v286 = vld [vmem:[%s4 + $0x34] sm:$0xf]
      %v287 = vld [vmem:[%s4 + $0x38] sm:$0xf]
      %v288 = vld [vmem:[%s4 + $0x3c] sm:$0xf]
      %v289 = vld [vmem:[%s4 + $0x40] sm:$0xf]
      %v290 = vld [vmem:[%s4 + $0x44] sm:$0xf]
      %v291 = vld [vmem:[%s4 + $0x48] sm:$0xf]
      %v292 = vld [vmem:[%s4 + $0x4c] sm:$0xf]
      %v293 = vld [vmem:[%s4 + $0x50] sm:$0xf]
      %v294 = vld [vmem:[%s4 + $0x54] sm:$0xf]
      %v295 = vld [vmem:[%s4 + $0x58] sm:$0xf]
      %v296 = vld [vmem:[%s4 + $0x5c] sm:$0xf]
      %s297 = smul.addr %s262, 4
      %s298 = scalar_lea.vmem %s2, %s297
      %v299 = vld [vmem:[%s298] sm:$0xff]
      %v300 = vld [vmem:[%s298 + $0x8] sm:$0xff]
      %v301 = vld [vmem:[%s298 + $0x10] sm:$0xff]
      %v302 = vld [vmem:[%s298 + $0x18] sm:$0xff]
      %v303 = vld [vmem:[%s298 + $0x20] sm:$0xff]
      %v304 = vld [vmem:[%s298 + $0x28] sm:$0xff]
      %v305 = vld [vmem:[%s298 + $0x30] sm:$0xff]
      %v306 = vld [vmem:[%s298 + $0x38] sm:$0xff]
      %s307 = scalar_lea.vmem %s4, 96
      %v308 = vld [vmem:[%s307] sm:$0xf]
      %v309 = vld [vmem:[%s307 + $0x4] sm:$0xf]
      %v310 = vld [vmem:[%s307 + $0x8] sm:$0xf]
      %v311 = vld [vmem:[%s307 + $0xc] sm:$0xf]
      %v312 = vld [vmem:[%s307 + $0x10] sm:$0xf]
      %v313 = vld [vmem:[%s307 + $0x14] sm:$0xf]
      %v314 = vld [vmem:[%s307 + $0x18] sm:$0xf]
      %v315 = vld [vmem:[%s307 + $0x1c] sm:$0xf]
      %v316 = vld [vmem:[%s307 + $0x20] sm:$0xf]
      %v317 = vld [vmem:[%s307 + $0x24] sm:$0xf]
      %v318 = vld [vmem:[%s307 + $0x28] sm:$0xf]
      %v319 = vld [vmem:[%s307 + $0x2c] sm:$0xf]
      %v320 = vld [vmem:[%s307 + $0x30] sm:$0xf]
      %v321 = vld [vmem:[%s307 + $0x34] sm:$0xf]
      %v322 = vld [vmem:[%s307 + $0x38] sm:$0xf]
      %v323 = vld [vmem:[%s307 + $0x3c] sm:$0xf]
      %v324 = vld [vmem:[%s307 + $0x40] sm:$0xf]
      %v325 = vld [vmem:[%s307 + $0x44] sm:$0xf]
      %v326 = vld [vmem:[%s307 + $0x48] sm:$0xf]
      %v327 = vld [vmem:[%s307 + $0x4c] sm:$0xf]
      %v328 = vld [vmem:[%s307 + $0x50] sm:$0xf]
      %v329 = vld [vmem:[%s307 + $0x54] sm:$0xf]
      %v330 = vld [vmem:[%s307 + $0x58] sm:$0xf]
      %v331 = vld [vmem:[%s307 + $0x5c] sm:$0xf]
      %v340 = vunpack.c.l.b16 %v299
      %v341 = vunpack.c.h.b16 %v299
      %v342 = vunpack.c.l.b16 %v300
      %v343 = vunpack.c.h.b16 %v300
      %v344 = vunpack.c.l.b16 %v301
      %v345 = vunpack.c.h.b16 %v301
      %v346 = vunpack.c.l.b16 %v302
      %v347 = vunpack.c.h.b16 %v302
      %v348 = vunpack.c.l.b16 %v303
      %v349 = vunpack.c.h.b16 %v303
      %v350 = vunpack.c.l.b16 %v304
      %v351 = vunpack.c.h.b16 %v304
      %v352 = vunpack.c.l.b16 %v305
      %v353 = vunpack.c.h.b16 %v305
      %v354 = vunpack.c.l.b16 %v306
      %v355 = vunpack.c.h.b16 %v306
      %v356 = vpack.c.b16 %v342, %v340
      %v357 = vpack.c.b16 %v343, %v341
      %v358 = vpack.c.b16 %v346, %v344
      %v359 = vpack.c.b16 %v347, %v345
      %v360 = vpack.c.b16 %v350, %v348
      %v361 = vpack.c.b16 %v351, %v349
      %v362 = vpack.c.b16 %v354, %v352
      %v363 = vpack.c.b16 %v355, %v353
      %v392 = vunpack.c.l.b16 %v308
      %v393 = vunpack.c.l.b16 %v309
      %v394 = vunpack.c.l.b16 %v310
      %v395 = vunpack.c.l.b16 %v311
      %v396 = vunpack.c.l.b16 %v312
      %v397 = vunpack.c.l.b16 %v313
      %v398 = vunpack.c.l.b16 %v314
      %v399 = vunpack.c.l.b16 %v315
      %v400 = vunpack.c.l.b16 %v316
      %v401 = vunpack.c.l.b16 %v317
      %v402 = vunpack.c.l.b16 %v318
      %v403 = vunpack.c.l.b16 %v319
      %v404 = vunpack.c.l.b16 %v320
      %v405 = vunpack.c.l.b16 %v321
      %v406 = vunpack.c.l.b16 %v322
      %v407 = vunpack.c.l.b16 %v323
      %v408 = vunpack.c.l.b16 %v324
      %v409 = vunpack.c.l.b16 %v325
      %v410 = vunpack.c.l.b16 %v326
      %v411 = vunpack.c.l.b16 %v327
      %v412 = vunpack.c.l.b16 %v328
      %v413 = vunpack.c.l.b16 %v329
      %v414 = vunpack.c.l.b16 %v330
      %v415 = vunpack.c.l.b16 %v331
      %v416 = vpack.c.b16 %v393, %v392
      %v417 = vpack.c.b16 %v395, %v394
      %v418 = vpack.c.b16 %v397, %v396
      %v419 = vpack.c.b16 %v399, %v398
      %v420 = vpack.c.b16 %v401, %v400
      %v421 = vpack.c.b16 %v403, %v402
      %v422 = vpack.c.b16 %v405, %v404
      %v423 = vpack.c.b16 %v407, %v406
      %v424 = vpack.c.b16 %v409, %v408
      %v425 = vpack.c.b16 %v411, %v410
      %v426 = vpack.c.b16 %v413, %v412
      %v427 = vpack.c.b16 %v415, %v414
      %vm440 = vcmask 523264
      %v442 = vsel %vm440, %v357, 0
      %v445 = vsel %vm440, %v359, 0
      %v448 = vsel %vm440, %v361, 0
      %v451 = vsel %vm440, %v363, 0
      %453 = vmatpush.bf16.msra.mxu0 %v423
      %454 = vmatpush.bf16.msra.mxu0 %v422
      %455 = vmatpush.bf16.msra.mxu0 %v421
      %456 = vmatpush.bf16.msra.mxu0 %v420
      %457 = vmatpush.bf16.msra.mxu0 %v419
      %458 = vmatpush.bf16.msra.mxu0 %v418
      %459 = vmatpush.bf16.msra.mxu0 %v417
      %460 = vmatpush.bf16.msra.mxu0 %v416
      %461 = vmatmul.bf16.gmra.mxu0 %v356
      %v462 = vpop.f32.mrf.mxu0
      %v463 = vadd.f32 0.0, %v462
      %v464 = vpop.f32.mrf.mxu0
      %v465 = vadd.f32 0.0, %v464
      %466 = vmatmul.bf16.gmra.mxu0 %v358
      %v467 = vpop.f32.mrf.mxu0
      %v468 = vadd.f32 0.0, %v467
      %v469 = vpop.f32.mrf.mxu0
      %v470 = vadd.f32 0.0, %v469
      %471 = vmatmul.bf16.gmra.mxu0 %v360
      %v472 = vpop.f32.mrf.mxu0
      %v473 = vadd.f32 0.0, %v472
      %v474 = vpop.f32.mrf.mxu0
      %v475 = vadd.f32 0.0, %v474
      %476 = vmatmul.bf16.gmra.mxu0 %v362
      %v477 = vpop.f32.mrf.mxu0
      %v478 = vadd.f32 0.0, %v477
      %v479 = vpop.f32.mrf.mxu0
      %v480 = vadd.f32 0.0, %v479
      %481 = vdwg.mxu0
      %482 = vmatpush.bf16.msra.mxu0 0
      %483 = vmatpush.bf16.msra.mxu0 0
      %484 = vmatpush.bf16.msra.mxu0 0
      %485 = vmatpush.bf16.msra.mxu0 0
      %486 = vmatpush.bf16.msra.mxu0 %v427
      %487 = vmatpush.bf16.msra.mxu0 %v426
      %488 = vmatpush.bf16.msra.mxu0 %v425
      %489 = vmatpush.bf16.msra.mxu0 %v424
      %490 = vmatmul.bf16.gmra.mxu0 %v442
      %v491 = vpop.f32.mrf.mxu0
      %v492 = vadd.f32 %v463, %v491
      %v493 = vpop.f32.mrf.mxu0
      %v494 = vadd.f32 %v465, %v493
      %495 = vmatmul.bf16.gmra.mxu0 %v445
      %v496 = vpop.f32.mrf.mxu0
      %v497 = vadd.f32 %v468, %v496
      %v498 = vpop.f32.mrf.mxu0
      %v499 = vadd.f32 %v470, %v498
      %500 = vmatmul.bf16.gmra.mxu0 %v448
      %v501 = vpop.f32.mrf.mxu0
      %v502 = vadd.f32 %v473, %v501
      %v503 = vpop.f32.mrf.mxu0
      %v504 = vadd.f32 %v475, %v503
      %505 = vmatmul.bf16.gmra.mxu0 %v451
      %v506 = vpop.f32.mrf.mxu0
      %v507 = vadd.f32 %v478, %v506
      %v508 = vpop.f32.mrf.mxu0
      %v509 = vadd.f32 %v480, %v508
      %510 = vdwg.mxu0
      %v519 = vunpack.c.l.b16 %v265
      %v520 = vunpack.c.h.b16 %v265
      %v521 = vunpack.c.l.b16 %v266
      %v522 = vunpack.c.h.b16 %v266
      %v523 = vunpack.c.l.b16 %v267
      %v524 = vunpack.c.h.b16 %v267
      %v525 = vunpack.c.l.b16 %v268
      %v526 = vunpack.c.h.b16 %v268
      %v527 = vunpack.c.l.b16 %v269
      %v528 = vunpack.c.h.b16 %v269
      %v529 = vunpack.c.l.b16 %v270
      %v530 = vunpack.c.h.b16 %v270
      %v531 = vunpack.c.l.b16 %v271
      %v532 = vunpack.c.h.b16 %v271
      %v533 = vunpack.c.l.b16 %v272
      %v534 = vunpack.c.h.b16 %v272
      %v535 = vpack.c.b16 %v521, %v519
      %v536 = vpack.c.b16 %v522, %v520
      %v537 = vpack.c.b16 %v525, %v523
      %v538 = vpack.c.b16 %v526, %v524
      %v539 = vpack.c.b16 %v529, %v527
      %v540 = vpack.c.b16 %v530, %v528
      %v541 = vpack.c.b16 %v533, %v531
      %v542 = vpack.c.b16 %v534, %v532
      %v571 = vunpack.c.l.b16 %v273
      %v572 = vunpack.c.l.b16 %v274
      %v573 = vunpack.c.l.b16 %v275
      %v574 = vunpack.c.l.b16 %v276
      %v575 = vunpack.c.l.b16 %v277
      %v576 = vunpack.c.l.b16 %v278
      %v577 = vunpack.c.l.b16 %v279
      %v578 = vunpack.c.l.b16 %v280
      %v579 = vunpack.c.l.b16 %v281
      %v580 = vunpack.c.l.b16 %v282
      %v581 = vunpack.c.l.b16 %v283
      %v582 = vunpack.c.l.b16 %v284
      %v583 = vunpack.c.l.b16 %v285
      %v584 = vunpack.c.l.b16 %v286
      %v585 = vunpack.c.l.b16 %v287
      %v586 = vunpack.c.l.b16 %v288
      %v587 = vunpack.c.l.b16 %v289
      %v588 = vunpack.c.l.b16 %v290
      %v589 = vunpack.c.l.b16 %v291
      %v590 = vunpack.c.l.b16 %v292
      %v591 = vunpack.c.l.b16 %v293
      %v592 = vunpack.c.l.b16 %v294
      %v593 = vunpack.c.l.b16 %v295
      %v594 = vunpack.c.l.b16 %v296
      %v595 = vpack.c.b16 %v572, %v571
      %v596 = vpack.c.b16 %v574, %v573
      %v597 = vpack.c.b16 %v576, %v575
      %v598 = vpack.c.b16 %v578, %v577
      %v599 = vpack.c.b16 %v580, %v579
      %v600 = vpack.c.b16 %v582, %v581
      %v601 = vpack.c.b16 %v584, %v583
      %v602 = vpack.c.b16 %v586, %v585
      %v603 = vpack.c.b16 %v588, %v587
      %v604 = vpack.c.b16 %v590, %v589
      %v605 = vpack.c.b16 %v592, %v591
      %v606 = vpack.c.b16 %v594, %v593
      %v620 = vsel %vm440, %v536, 0
      %v623 = vsel %vm440, %v538, 0
      %v626 = vsel %vm440, %v540, 0
      %v629 = vsel %vm440, %v542, 0
      %631 = vmatpush.bf16.msra.mxu0 %v602
      %632 = vmatpush.bf16.msra.mxu0 %v601
      %633 = vmatpush.bf16.msra.mxu0 %v600
      %634 = vmatpush.bf16.msra.mxu0 %v599
      %635 = vmatpush.bf16.msra.mxu0 %v598
      %636 = vmatpush.bf16.msra.mxu0 %v597
      %637 = vmatpush.bf16.msra.mxu0 %v596
      %638 = vmatpush.bf16.msra.mxu0 %v595
      %639 = vmatmul.bf16.gmra.mxu0 %v535
      %v640 = vpop.f32.mrf.mxu0
      %v641 = vadd.f32 %v492, %v640
      %v642 = vpop.f32.mrf.mxu0
      %v643 = vadd.f32 %v494, %v642
      %644 = vmatmul.bf16.gmra.mxu0 %v537
      %v645 = vpop.f32.mrf.mxu0
      %v646 = vadd.f32 %v497, %v645
      %v647 = vpop.f32.mrf.mxu0
      %v648 = vadd.f32 %v499, %v647
      %649 = vmatmul.bf16.gmra.mxu0 %v539
      %v650 = vpop.f32.mrf.mxu0
      %v651 = vadd.f32 %v502, %v650
      %v652 = vpop.f32.mrf.mxu0
      %v653 = vadd.f32 %v504, %v652
      %654 = vmatmul.bf16.gmra.mxu0 %v541
      %v655 = vpop.f32.mrf.mxu0
      %v656 = vadd.f32 %v507, %v655
      %v657 = vpop.f32.mrf.mxu0
      %v658 = vadd.f32 %v509, %v657
      %659 = vdwg.mxu0
      %660 = vmatpush.bf16.msra.mxu0 0
      %661 = vmatpush.bf16.msra.mxu0 0
      %662 = vmatpush.bf16.msra.mxu0 0
      %663 = vmatpush.bf16.msra.mxu0 0
      %664 = vmatpush.bf16.msra.mxu0 %v606
      %665 = vmatpush.bf16.msra.mxu0 %v605
      %666 = vmatpush.bf16.msra.mxu0 %v604
      %667 = vmatpush.bf16.msra.mxu0 %v603
      %668 = vmatmul.bf16.gmra.mxu0 %v620
      %v669 = vpop.f32.mrf.mxu0
      %v670 = vadd.f32 %v641, %v669
      %v671 = vpop.f32.mrf.mxu0
      %v672 = vadd.f32 %v643, %v671
      %673 = vmatmul.bf16.gmra.mxu0 %v623
      %v674 = vpop.f32.mrf.mxu0
      %v675 = vadd.f32 %v646, %v674
      %v676 = vpop.f32.mrf.mxu0
      %v677 = vadd.f32 %v648, %v676
      %678 = vmatmul.bf16.gmra.mxu0 %v626
      %v679 = vpop.f32.mrf.mxu0
      %v680 = vadd.f32 %v651, %v679
      %v681 = vpop.f32.mrf.mxu0
      %v682 = vadd.f32 %v653, %v681
      %683 = vmatmul.bf16.gmra.mxu0 %v629
      %v684 = vpop.f32.mrf.mxu0
      %v685 = vadd.f32 %v656, %v684
      %v686 = vpop.f32.mrf.mxu0
      %v687 = vadd.f32 %v658, %v686
      %688 = vdwg.mxu0
      %s689 = sadd.s32 %s256, 1
      %s690 = smul.u32 %s689, 8
      %s691 = sadd.s32 %s257, %s690
      %s692 = sshra.s32 %s691, 3
      %s693 = sand.u32 %s691, 7
      %s694 = smul.u32 %s692, 2
      %s695 = smul.addr %s694, 4
      %s696 = scalar_lea.vmem %s0, %s695
      %v697 = vld [vmem:[%s696] sm:$0xff]
      %v698 = vld [vmem:[%s696 + $0x8] sm:$0xff]
      %v699 = vld [vmem:[%s696 + $0x10] sm:$0xff]
      %v700 = vld [vmem:[%s696 + $0x18] sm:$0xff]
      %v701 = vld [vmem:[%s696 + $0x20] sm:$0xff]
      %v702 = vld [vmem:[%s696 + $0x28] sm:$0xff]
      %v703 = vld [vmem:[%s696 + $0x30] sm:$0xff]
      %v704 = vld [vmem:[%s696 + $0x38] sm:$0xff]
      %s705 = scalar_lea.vmem %s4, 192
      %v706 = vld [vmem:[%s705] sm:$0xf]
      %v707 = vld [vmem:[%s705 + $0x4] sm:$0xf]
      %v708 = vld [vmem:[%s705 + $0x8] sm:$0xf]
      %v709 = vld [vmem:[%s705 + $0xc] sm:$0xf]
      %v710 = vld [vmem:[%s705 + $0x10] sm:$0xf]
      %v711 = vld [vmem:[%s705 + $0x14] sm:$0xf]
      %v712 = vld [vmem:[%s705 + $0x18] sm:$0xf]
      %v713 = vld [vmem:[%s705 + $0x1c] sm:$0xf]
      %v714 = vld [vmem:[%s705 + $0x20] sm:$0xf]
      %v715 = vld [vmem:[%s705 + $0x24] sm:$0xf]
      %v716 = vld [vmem:[%s705 + $0x28] sm:$0xf]
      %v717 = vld [vmem:[%s705 + $0x2c] sm:$0xf]
      %v718 = vld [vmem:[%s705 + $0x30] sm:$0xf]
      %v719 = vld [vmem:[%s705 + $0x34] sm:$0xf]
      %v720 = vld [vmem:[%s705 + $0x38] sm:$0xf]
      %v721 = vld [vmem:[%s705 + $0x3c] sm:$0xf]
      %v722 = vld [vmem:[%s705 + $0x40] sm:$0xf]
      %v723 = vld [vmem:[%s705 + $0x44] sm:$0xf]
      %v724 = vld [vmem:[%s705 + $0x48] sm:$0xf]
      %v725 = vld [vmem:[%s705 + $0x4c] sm:$0xf]
      %v726 = vld [vmem:[%s705 + $0x50] sm:$0xf]
      %v727 = vld [vmem:[%s705 + $0x54] sm:$0xf]
      %v728 = vld [vmem:[%s705 + $0x58] sm:$0xf]
      %v729 = vld [vmem:[%s705 + $0x5c] sm:$0xf]
      %v738 = vunpack.c.l.b16 %v697
      %v739 = vunpack.c.h.b16 %v697
      %v740 = vunpack.c.l.b16 %v698
      %v741 = vunpack.c.h.b16 %v698
      %v742 = vunpack.c.l.b16 %v699
      %v743 = vunpack.c.h.b16 %v699
      %v744 = vunpack.c.l.b16 %v700
      %v745 = vunpack.c.h.b16 %v700
      %v746 = vunpack.c.l.b16 %v701
      %v747 = vunpack.c.h.b16 %v701
      %v748 = vunpack.c.l.b16 %v702
      %v749 = vunpack.c.h.b16 %v702
      %v750 = vunpack.c.l.b16 %v703
      %v751 = vunpack.c.h.b16 %v703
      %v752 = vunpack.c.l.b16 %v704
      %v753 = vunpack.c.h.b16 %v704
      %v754 = vpack.c.b16 %v740, %v738
      %v755 = vpack.c.b16 %v741, %v739
      %v756 = vpack.c.b16 %v744, %v742
      %v757 = vpack.c.b16 %v745, %v743
      %v758 = vpack.c.b16 %v748, %v746
      %v759 = vpack.c.b16 %v749, %v747
      %v760 = vpack.c.b16 %v752, %v750
      %v761 = vpack.c.b16 %v753, %v751
      %v790 = vunpack.c.l.b16 %v706
      %v791 = vunpack.c.l.b16 %v707
      %v792 = vunpack.c.l.b16 %v708
      %v793 = vunpack.c.l.b16 %v709
      %v794 = vunpack.c.l.b16 %v710
      %v795 = vunpack.c.l.b16 %v711
      %v796 = vunpack.c.l.b16 %v712
      %v797 = vunpack.c.l.b16 %v713
      %v798 = vunpack.c.l.b16 %v714
      %v799 = vunpack.c.l.b16 %v715
      %v800 = vunpack.c.l.b16 %v716
      %v801 = vunpack.c.l.b16 %v717
      %v802 = vunpack.c.l.b16 %v718
      %v803 = vunpack.c.l.b16 %v719
      %v804 = vunpack.c.l.b16 %v720
      %v805 = vunpack.c.l.b16 %v721
      %v806 = vunpack.c.l.b16 %v722
      %v807 = vunpack.c.l.b16 %v723
      %v808 = vunpack.c.l.b16 %v724
      %v809 = vunpack.c.l.b16 %v725
      %v810 = vunpack.c.l.b16 %v726
      %v811 = vunpack.c.l.b16 %v727
      %v812 = vunpack.c.l.b16 %v728
      %v813 = vunpack.c.l.b16 %v729
      %v814 = vpack.c.b16 %v791, %v790
      %v815 = vpack.c.b16 %v793, %v792
      %v816 = vpack.c.b16 %v795, %v794
      %v817 = vpack.c.b16 %v797, %v796
      %v818 = vpack.c.b16 %v799, %v798
      %v819 = vpack.c.b16 %v801, %v800
      %v820 = vpack.c.b16 %v803, %v802
      %v821 = vpack.c.b16 %v805, %v804
      %v822 = vpack.c.b16 %v807, %v806
      %v823 = vpack.c.b16 %v809, %v808
      %v824 = vpack.c.b16 %v811, %v810
      %v825 = vpack.c.b16 %v813, %v812
      %v839 = vsel %vm440, %v755, 0
      %v842 = vsel %vm440, %v757, 0
      %v845 = vsel %vm440, %v759, 0
      %v848 = vsel %vm440, %v761, 0
      %850 = vmatpush.bf16.msra.mxu0 %v821
      %851 = vmatpush.bf16.msra.mxu0 %v820
      %852 = vmatpush.bf16.msra.mxu0 %v819
      %853 = vmatpush.bf16.msra.mxu0 %v818
      %854 = vmatpush.bf16.msra.mxu0 %v817
      %855 = vmatpush.bf16.msra.mxu0 %v816
      %856 = vmatpush.bf16.msra.mxu0 %v815
      %857 = vmatpush.bf16.msra.mxu0 %v814
      %858 = vmatmul.bf16.gmra.mxu0 %v754
      %v859 = vpop.f32.mrf.mxu0
      %v860 = vadd.f32 0.0, %v859
      %v861 = vpop.f32.mrf.mxu0
      %v862 = vadd.f32 0.0, %v861
      %863 = vmatmul.bf16.gmra.mxu0 %v756
      %v864 = vpop.f32.mrf.mxu0
      %v865 = vadd.f32 0.0, %v864
      %v866 = vpop.f32.mrf.mxu0
      %v867 = vadd.f32 0.0, %v866
      %868 = vmatmul.bf16.gmra.mxu0 %v758
      %v869 = vpop.f32.mrf.mxu0
      %v870 = vadd.f32 0.0, %v869
      %v871 = vpop.f32.mrf.mxu0
      %v872 = vadd.f32 0.0, %v871
      %873 = vmatmul.bf16.gmra.mxu0 %v760
      %v874 = vpop.f32.mrf.mxu0
      %v875 = vadd.f32 0.0, %v874
      %v876 = vpop.f32.mrf.mxu0
      %v877 = vadd.f32 0.0, %v876
      %878 = vdwg.mxu0
      %879 = vmatpush.bf16.msra.mxu0 0
      %880 = vmatpush.bf16.msra.mxu0 0
      %881 = vmatpush.bf16.msra.mxu0 0
      %882 = vmatpush.bf16.msra.mxu0 0
      %883 = vmatpush.bf16.msra.mxu0 %v825
      %884 = vmatpush.bf16.msra.mxu0 %v824
      %885 = vmatpush.bf16.msra.mxu0 %v823
      %886 = vmatpush.bf16.msra.mxu0 %v822
      %887 = vmatmul.bf16.gmra.mxu0 %v839
      %v888 = vpop.f32.mrf.mxu0
      %v889 = vadd.f32 %v860, %v888
      %v890 = vpop.f32.mrf.mxu0
      %v891 = vadd.f32 %v862, %v890
      %892 = vmatmul.bf16.gmra.mxu0 %v842
      %v893 = vpop.f32.mrf.mxu0
      %v894 = vadd.f32 %v865, %v893
      %v895 = vpop.f32.mrf.mxu0
      %v896 = vadd.f32 %v867, %v895
      %897 = vmatmul.bf16.gmra.mxu0 %v845
      %v898 = vpop.f32.mrf.mxu0
      %v899 = vadd.f32 %v870, %v898
      %v900 = vpop.f32.mrf.mxu0
      %v901 = vadd.f32 %v872, %v900
      %902 = vmatmul.bf16.gmra.mxu0 %v848
      %v903 = vpop.f32.mrf.mxu0
      %v904 = vadd.f32 %v875, %v903
      %v905 = vpop.f32.mrf.mxu0
      %v906 = vadd.f32 %v877, %v905
      %907 = vdwg.mxu0
      %v908 = vadd.f32 %v670, %v889
      %v909 = vadd.f32 %v672, %v891
      %v910 = vadd.f32 %v675, %v894
      %v911 = vadd.f32 %v677, %v896
      %v912 = vadd.f32 %v680, %v899
      %v913 = vadd.f32 %v682, %v901
      %v914 = vadd.f32 %v685, %v904
      %v915 = vadd.f32 %v687, %v906
      %s916 = smul.addr %s262, 4
      %s917 = scalar_lea.vmem %s1, %s916
      %v918 = vld [vmem:[%s917] sm:$0xff]
      %v919 = vld [vmem:[%s917 + $0x8] sm:$0xff]
      %v920 = vld [vmem:[%s917 + $0x10] sm:$0xff]
      %v921 = vld [vmem:[%s917 + $0x18] sm:$0xff]
      %v922 = vld [vmem:[%s917 + $0x20] sm:$0xff]
      %v923 = vld [vmem:[%s917 + $0x28] sm:$0xff]
      %v924 = vld [vmem:[%s917 + $0x30] sm:$0xff]
      %v925 = vld [vmem:[%s917 + $0x38] sm:$0xff]
      %s926 = smul.addr %s262, 4
      %s927 = scalar_lea.vmem %s3, %s926
      %v928 = vld [vmem:[%s927] sm:$0xff]
      %v929 = vld [vmem:[%s927 + $0x8] sm:$0xff]
      %v930 = vld [vmem:[%s927 + $0x10] sm:$0xff]
      %v931 = vld [vmem:[%s927 + $0x18] sm:$0xff]
      %v932 = vld [vmem:[%s927 + $0x20] sm:$0xff]
      %v933 = vld [vmem:[%s927 + $0x28] sm:$0xff]
      %v934 = vld [vmem:[%s927 + $0x30] sm:$0xff]
      %v935 = vld [vmem:[%s927 + $0x38] sm:$0xff]
      %v944 = vunpack.c.l.b16 %v928
      %v945 = vunpack.c.h.b16 %v928
      %v946 = vunpack.c.l.b16 %v929
      %v947 = vunpack.c.h.b16 %v929
      %v948 = vunpack.c.l.b16 %v930
      %v949 = vunpack.c.h.b16 %v930
      %v950 = vunpack.c.l.b16 %v931
      %v951 = vunpack.c.h.b16 %v931
      %v952 = vunpack.c.l.b16 %v932
      %v953 = vunpack.c.h.b16 %v932
      %v954 = vunpack.c.l.b16 %v933
      %v955 = vunpack.c.h.b16 %v933
      %v956 = vunpack.c.l.b16 %v934
      %v957 = vunpack.c.h.b16 %v934
      %v958 = vunpack.c.l.b16 %v935
      %v959 = vunpack.c.h.b16 %v935
      %v960 = vpack.c.b16 %v946, %v944
      %v961 = vpack.c.b16 %v947, %v945
      %v962 = vpack.c.b16 %v950, %v948
      %v963 = vpack.c.b16 %v951, %v949
      %v964 = vpack.c.b16 %v954, %v952
      %v965 = vpack.c.b16 %v955, %v953
      %v966 = vpack.c.b16 %v958, %v956
      %v967 = vpack.c.b16 %v959, %v957
      %v973 = vsel %vm440, %v961, 0
      %v976 = vsel %vm440, %v963, 0
      %v979 = vsel %vm440, %v965, 0
      %v982 = vsel %vm440, %v967, 0
      %984 = vmatpush.bf16.msra.mxu0 %v423
      %985 = vmatpush.bf16.msra.mxu0 %v422
      %986 = vmatpush.bf16.msra.mxu0 %v421
      %987 = vmatpush.bf16.msra.mxu0 %v420
      %988 = vmatpush.bf16.msra.mxu0 %v419
      %989 = vmatpush.bf16.msra.mxu0 %v418
      %990 = vmatpush.bf16.msra.mxu0 %v417
      %991 = vmatpush.bf16.msra.mxu0 %v416
      %992 = vmatmul.bf16.gmra.mxu0 %v960
      %v993 = vpop.f32.mrf.mxu0
      %v994 = vadd.f32 0.0, %v993
      %v995 = vpop.f32.mrf.mxu0
      %v996 = vadd.f32 0.0, %v995
      %997 = vmatmul.bf16.gmra.mxu0 %v962
      %v998 = vpop.f32.mrf.mxu0
      %v999 = vadd.f32 0.0, %v998
      %v1000 = vpop.f32.mrf.mxu0
      %v1001 = vadd.f32 0.0, %v1000
      %1002 = vmatmul.bf16.gmra.mxu0 %v964
      %v1003 = vpop.f32.mrf.mxu0
      %v1004 = vadd.f32 0.0, %v1003
      %v1005 = vpop.f32.mrf.mxu0
      %v1006 = vadd.f32 0.0, %v1005
      %1007 = vmatmul.bf16.gmra.mxu0 %v966
      %v1008 = vpop.f32.mrf.mxu0
      %v1009 = vadd.f32 0.0, %v1008
      %v1010 = vpop.f32.mrf.mxu0
      %v1011 = vadd.f32 0.0, %v1010
      %1012 = vdwg.mxu0
      %1013 = vmatpush.bf16.msra.mxu0 0
      %1014 = vmatpush.bf16.msra.mxu0 0
      %1015 = vmatpush.bf16.msra.mxu0 0
      %1016 = vmatpush.bf16.msra.mxu0 0
      %1017 = vmatpush.bf16.msra.mxu0 %v427
      %1018 = vmatpush.bf16.msra.mxu0 %v426
      %1019 = vmatpush.bf16.msra.mxu0 %v425
      %1020 = vmatpush.bf16.msra.mxu0 %v424
      %1021 = vmatmul.bf16.gmra.mxu0 %v973
      %v1022 = vpop.f32.mrf.mxu0
      %v1023 = vadd.f32 %v994, %v1022
      %v1024 = vpop.f32.mrf.mxu0
      %v1025 = vadd.f32 %v996, %v1024
      %1026 = vmatmul.bf16.gmra.mxu0 %v976
      %v1027 = vpop.f32.mrf.mxu0
      %v1028 = vadd.f32 %v999, %v1027
      %v1029 = vpop.f32.mrf.mxu0
      %v1030 = vadd.f32 %v1001, %v1029
      %1031 = vmatmul.bf16.gmra.mxu0 %v979
      %v1032 = vpop.f32.mrf.mxu0
      %v1033 = vadd.f32 %v1004, %v1032
      %v1034 = vpop.f32.mrf.mxu0
      %v1035 = vadd.f32 %v1006, %v1034
      %1036 = vmatmul.bf16.gmra.mxu0 %v982
      %v1037 = vpop.f32.mrf.mxu0
      %v1038 = vadd.f32 %v1009, %v1037
      %v1039 = vpop.f32.mrf.mxu0
      %v1040 = vadd.f32 %v1011, %v1039
      %1041 = vdwg.mxu0
      %v1050 = vunpack.c.l.b16 %v918
      %v1051 = vunpack.c.h.b16 %v918
      %v1052 = vunpack.c.l.b16 %v919
      %v1053 = vunpack.c.h.b16 %v919
      %v1054 = vunpack.c.l.b16 %v920
      %v1055 = vunpack.c.h.b16 %v920
      %v1056 = vunpack.c.l.b16 %v921
      %v1057 = vunpack.c.h.b16 %v921
      %v1058 = vunpack.c.l.b16 %v922
      %v1059 = vunpack.c.h.b16 %v922
      %v1060 = vunpack.c.l.b16 %v923
      %v1061 = vunpack.c.h.b16 %v923
      %v1062 = vunpack.c.l.b16 %v924
      %v1063 = vunpack.c.h.b16 %v924
      %v1064 = vunpack.c.l.b16 %v925
      %v1065 = vunpack.c.h.b16 %v925
      %v1066 = vpack.c.b16 %v1052, %v1050
      %v1067 = vpack.c.b16 %v1053, %v1051
      %v1068 = vpack.c.b16 %v1056, %v1054
      %v1069 = vpack.c.b16 %v1057, %v1055
      %v1070 = vpack.c.b16 %v1060, %v1058
      %v1071 = vpack.c.b16 %v1061, %v1059
      %v1072 = vpack.c.b16 %v1064, %v1062
      %v1073 = vpack.c.b16 %v1065, %v1063
      %v1079 = vsel %vm440, %v1067, 0
      %v1082 = vsel %vm440, %v1069, 0
      %v1085 = vsel %vm440, %v1071, 0
      %v1088 = vsel %vm440, %v1073, 0
      %1090 = vmatpush.bf16.msra.mxu0 %v602
      %1091 = vmatpush.bf16.msra.mxu0 %v601
      %1092 = vmatpush.bf16.msra.mxu0 %v600
      %1093 = vmatpush.bf16.msra.mxu0 %v599
      %1094 = vmatpush.bf16.msra.mxu0 %v598
      %1095 = vmatpush.bf16.msra.mxu0 %v597
      %1096 = vmatpush.bf16.msra.mxu0 %v596
      %1097 = vmatpush.bf16.msra.mxu0 %v595
      %1098 = vmatmul.bf16.gmra.mxu0 %v1066
      %v1099 = vpop.f32.mrf.mxu0
      %v1100 = vadd.f32 %v1023, %v1099
      %v1101 = vpop.f32.mrf.mxu0
      %v1102 = vadd.f32 %v1025, %v1101
      %1103 = vmatmul.bf16.gmra.mxu0 %v1068
      %v1104 = vpop.f32.mrf.mxu0
      %v1105 = vadd.f32 %v1028, %v1104
      %v1106 = vpop.f32.mrf.mxu0
      %v1107 = vadd.f32 %v1030, %v1106
      %1108 = vmatmul.bf16.gmra.mxu0 %v1070
      %v1109 = vpop.f32.mrf.mxu0
      %v1110 = vadd.f32 %v1033, %v1109
      %v1111 = vpop.f32.mrf.mxu0
      %v1112 = vadd.f32 %v1035, %v1111
      %1113 = vmatmul.bf16.gmra.mxu0 %v1072
      %v1114 = vpop.f32.mrf.mxu0
      %v1115 = vadd.f32 %v1038, %v1114
      %v1116 = vpop.f32.mrf.mxu0
      %v1117 = vadd.f32 %v1040, %v1116
      %1118 = vdwg.mxu0
      %1119 = vmatpush.bf16.msra.mxu0 0
      %1120 = vmatpush.bf16.msra.mxu0 0
      %1121 = vmatpush.bf16.msra.mxu0 0
      %1122 = vmatpush.bf16.msra.mxu0 0
      %1123 = vmatpush.bf16.msra.mxu0 %v606
      %1124 = vmatpush.bf16.msra.mxu0 %v605
      %1125 = vmatpush.bf16.msra.mxu0 %v604
      %1126 = vmatpush.bf16.msra.mxu0 %v603
      %1127 = vmatmul.bf16.gmra.mxu0 %v1079
      %v1128 = vpop.f32.mrf.mxu0
      %v1129 = vadd.f32 %v1100, %v1128
      %v1130 = vpop.f32.mrf.mxu0
      %v1131 = vadd.f32 %v1102, %v1130
      %1132 = vmatmul.bf16.gmra.mxu0 %v1082
      %v1133 = vpop.f32.mrf.mxu0
      %v1134 = vadd.f32 %v1105, %v1133
      %v1135 = vpop.f32.mrf.mxu0
      %v1136 = vadd.f32 %v1107, %v1135
      %1137 = vmatmul.bf16.gmra.mxu0 %v1085
      %v1138 = vpop.f32.mrf.mxu0
      %v1139 = vadd.f32 %v1110, %v1138
      %v1140 = vpop.f32.mrf.mxu0
      %v1141 = vadd.f32 %v1112, %v1140
      %1142 = vmatmul.bf16.gmra.mxu0 %v1088
      %v1143 = vpop.f32.mrf.mxu0
      %v1144 = vadd.f32 %v1115, %v1143
      %v1145 = vpop.f32.mrf.mxu0
      %v1146 = vadd.f32 %v1117, %v1145
      %1147 = vdwg.mxu0
      %s1148 = smul.addr %s694, 4
      %s1149 = scalar_lea.vmem %s1, %s1148
      %v1150 = vld [vmem:[%s1149] sm:$0xff]
      %v1151 = vld [vmem:[%s1149 + $0x8] sm:$0xff]
      %v1152 = vld [vmem:[%s1149 + $0x10] sm:$0xff]
      %v1153 = vld [vmem:[%s1149 + $0x18] sm:$0xff]
      %v1154 = vld [vmem:[%s1149 + $0x20] sm:$0xff]
      %v1155 = vld [vmem:[%s1149 + $0x28] sm:$0xff]
      %v1156 = vld [vmem:[%s1149 + $0x30] sm:$0xff]
      %v1157 = vld [vmem:[%s1149 + $0x38] sm:$0xff]
      %v1166 = vunpack.c.l.b16 %v1150
      %v1167 = vunpack.c.h.b16 %v1150
      %v1168 = vunpack.c.l.b16 %v1151
      %v1169 = vunpack.c.h.b16 %v1151
      %v1170 = vunpack.c.l.b16 %v1152
      %v1171 = vunpack.c.h.b16 %v1152
      %v1172 = vunpack.c.l.b16 %v1153
      %v1173 = vunpack.c.h.b16 %v1153
      %v1174 = vunpack.c.l.b16 %v1154
      %v1175 = vunpack.c.h.b16 %v1154
      %v1176 = vunpack.c.l.b16 %v1155
      %v1177 = vunpack.c.h.b16 %v1155
      %v1178 = vunpack.c.l.b16 %v1156
      %v1179 = vunpack.c.h.b16 %v1156
      %v1180 = vunpack.c.l.b16 %v1157
      %v1181 = vunpack.c.h.b16 %v1157
      %v1182 = vpack.c.b16 %v1168, %v1166
      %v1183 = vpack.c.b16 %v1169, %v1167
      %v1184 = vpack.c.b16 %v1172, %v1170
      %v1185 = vpack.c.b16 %v1173, %v1171
      %v1186 = vpack.c.b16 %v1176, %v1174
      %v1187 = vpack.c.b16 %v1177, %v1175
      %v1188 = vpack.c.b16 %v1180, %v1178
      %v1189 = vpack.c.b16 %v1181, %v1179
      %v1195 = vsel %vm440, %v1183, 0
      %v1198 = vsel %vm440, %v1185, 0
      %v1201 = vsel %vm440, %v1187, 0
      %v1204 = vsel %vm440, %v1189, 0
      %1206 = vmatpush.bf16.msra.mxu0 %v821
      %1207 = vmatpush.bf16.msra.mxu0 %v820
      %1208 = vmatpush.bf16.msra.mxu0 %v819
      %1209 = vmatpush.bf16.msra.mxu0 %v818
      %1210 = vmatpush.bf16.msra.mxu0 %v817
      %1211 = vmatpush.bf16.msra.mxu0 %v816
      %1212 = vmatpush.bf16.msra.mxu0 %v815
      %1213 = vmatpush.bf16.msra.mxu0 %v814
      %1214 = vmatmul.bf16.gmra.mxu0 %v1182
      %v1215 = vpop.f32.mrf.mxu0
      %v1216 = vadd.f32 0.0, %v1215
      %v1217 = vpop.f32.mrf.mxu0
      %v1218 = vadd.f32 0.0, %v1217
      %1219 = vmatmul.bf16.gmra.mxu0 %v1184
      %v1220 = vpop.f32.mrf.mxu0
      %v1221 = vadd.f32 0.0, %v1220
      %v1222 = vpop.f32.mrf.mxu0
      %v1223 = vadd.f32 0.0, %v1222
      %1224 = vmatmul.bf16.gmra.mxu0 %v1186
      %v1225 = vpop.f32.mrf.mxu0
      %v1226 = vadd.f32 0.0, %v1225
      %v1227 = vpop.f32.mrf.mxu0
      %v1228 = vadd.f32 0.0, %v1227
      %1229 = vmatmul.bf16.gmra.mxu0 %v1188
      %v1230 = vpop.f32.mrf.mxu0
      %v1231 = vadd.f32 0.0, %v1230
      %v1232 = vpop.f32.mrf.mxu0
      %v1233 = vadd.f32 0.0, %v1232
      %1234 = vdwg.mxu0
      %1235 = vmatpush.bf16.msra.mxu0 0
      %1236 = vmatpush.bf16.msra.mxu0 0
      %1237 = vmatpush.bf16.msra.mxu0 0
      %1238 = vmatpush.bf16.msra.mxu0 0
      %1239 = vmatpush.bf16.msra.mxu0 %v825
      %1240 = vmatpush.bf16.msra.mxu0 %v824
      %1241 = vmatpush.bf16.msra.mxu0 %v823
      %1242 = vmatpush.bf16.msra.mxu0 %v822
      %1243 = vmatmul.bf16.gmra.mxu0 %v1195
      %v1244 = vpop.f32.mrf.mxu0
      %v1245 = vadd.f32 %v1216, %v1244
      %v1246 = vpop.f32.mrf.mxu0
      %v1247 = vadd.f32 %v1218, %v1246
      %1248 = vmatmul.bf16.gmra.mxu0 %v1198
      %v1249 = vpop.f32.mrf.mxu0
      %v1250 = vadd.f32 %v1221, %v1249
      %v1251 = vpop.f32.mrf.mxu0
      %v1252 = vadd.f32 %v1223, %v1251
      %1253 = vmatmul.bf16.gmra.mxu0 %v1201
      %v1254 = vpop.f32.mrf.mxu0
      %v1255 = vadd.f32 %v1226, %v1254
      %v1256 = vpop.f32.mrf.mxu0
      %v1257 = vadd.f32 %v1228, %v1256
      %1258 = vmatmul.bf16.gmra.mxu0 %v1204
      %v1259 = vpop.f32.mrf.mxu0
      %v1260 = vadd.f32 %v1231, %v1259
      %v1261 = vpop.f32.mrf.mxu0
      %v1262 = vadd.f32 %v1233, %v1261
      %1263 = vdwg.mxu0
      %v1264 = vadd.f32 %v1129, %v1245
      %v1265 = vadd.f32 %v1131, %v1247
      %v1266 = vadd.f32 %v1134, %v1250
      %v1267 = vadd.f32 %v1136, %v1252
      %v1268 = vadd.f32 %v1139, %v1255
      %v1269 = vadd.f32 %v1141, %v1257
      %v1270 = vadd.f32 %v1144, %v1260
      %v1271 = vadd.f32 %v1146, %v1262
      %v1272 = vmax.f32 %v908, %v1264
      %v1273 = vmax.f32 %v909, %v1265
      %v1274 = vmax.f32 %v910, %v1266
      %v1275 = vmax.f32 %v911, %v1267
      %v1276 = vmax.f32 %v912, %v1268
      %v1277 = vmax.f32 %v913, %v1269
      %v1278 = vmax.f32 %v914, %v1270
      %v1279 = vmax.f32 %v915, %v1271
      %1280 = vmatpush.bf16.msra.mxu0 %v423
      %1281 = vmatpush.bf16.msra.mxu0 %v422
      %1282 = vmatpush.bf16.msra.mxu0 %v421
      %1283 = vmatpush.bf16.msra.mxu0 %v420
      %1284 = vmatpush.bf16.msra.mxu0 %v419
      %1285 = vmatpush.bf16.msra.mxu0 %v418
      %1286 = vmatpush.bf16.msra.mxu0 %v417
      %1287 = vmatpush.bf16.msra.mxu0 %v416
      %1288 = vmatmul.bf16.gmra.mxu0 %v754
      %v1289 = vpop.f32.mrf.mxu0
      %v1290 = vadd.f32 0.0, %v1289
      %v1291 = vpop.f32.mrf.mxu0
      %v1292 = vadd.f32 0.0, %v1291
      %1293 = vmatmul.bf16.gmra.mxu0 %v756
      %v1294 = vpop.f32.mrf.mxu0
      %v1295 = vadd.f32 0.0, %v1294
      %v1296 = vpop.f32.mrf.mxu0
      %v1297 = vadd.f32 0.0, %v1296
      %1298 = vmatmul.bf16.gmra.mxu0 %v758
      %v1299 = vpop.f32.mrf.mxu0
      %v1300 = vadd.f32 0.0, %v1299
      %v1301 = vpop.f32.mrf.mxu0
      %v1302 = vadd.f32 0.0, %v1301
      %1303 = vmatmul.bf16.gmra.mxu0 %v760
      %v1304 = vpop.f32.mrf.mxu0
      %v1305 = vadd.f32 0.0, %v1304
      %v1306 = vpop.f32.mrf.mxu0
      %v1307 = vadd.f32 0.0, %v1306
      %1308 = vdwg.mxu0
      %1309 = vmatpush.bf16.msra.mxu0 0
      %1310 = vmatpush.bf16.msra.mxu0 0
      %1311 = vmatpush.bf16.msra.mxu0 0
      %1312 = vmatpush.bf16.msra.mxu0 0
      %1313 = vmatpush.bf16.msra.mxu0 %v427
      %1314 = vmatpush.bf16.msra.mxu0 %v426
      %1315 = vmatpush.bf16.msra.mxu0 %v425
      %1316 = vmatpush.bf16.msra.mxu0 %v424
      %1317 = vmatmul.bf16.gmra.mxu0 %v839
      %v1318 = vpop.f32.mrf.mxu0
      %v1319 = vadd.f32 %v1290, %v1318
      %v1320 = vpop.f32.mrf.mxu0
      %v1321 = vadd.f32 %v1292, %v1320
      %1322 = vmatmul.bf16.gmra.mxu0 %v842
      %v1323 = vpop.f32.mrf.mxu0
      %v1324 = vadd.f32 %v1295, %v1323
      %v1325 = vpop.f32.mrf.mxu0
      %v1326 = vadd.f32 %v1297, %v1325
      %1327 = vmatmul.bf16.gmra.mxu0 %v845
      %v1328 = vpop.f32.mrf.mxu0
      %v1329 = vadd.f32 %v1300, %v1328
      %v1330 = vpop.f32.mrf.mxu0
      %v1331 = vadd.f32 %v1302, %v1330
      %1332 = vmatmul.bf16.gmra.mxu0 %v848
      %v1333 = vpop.f32.mrf.mxu0
      %v1334 = vadd.f32 %v1305, %v1333
      %v1335 = vpop.f32.mrf.mxu0
      %v1336 = vadd.f32 %v1307, %v1335
      %1337 = vdwg.mxu0
      %1338 = vmatpush.bf16.msra.mxu0 %v602
      %1339 = vmatpush.bf16.msra.mxu0 %v601
      %1340 = vmatpush.bf16.msra.mxu0 %v600
      %1341 = vmatpush.bf16.msra.mxu0 %v599
      %1342 = vmatpush.bf16.msra.mxu0 %v598
      %1343 = vmatpush.bf16.msra.mxu0 %v597
      %1344 = vmatpush.bf16.msra.mxu0 %v596
      %1345 = vmatpush.bf16.msra.mxu0 %v595
      %1346 = vmatmul.bf16.gmra.mxu0 %v356
      %v1347 = vpop.f32.mrf.mxu0
      %v1348 = vadd.f32 %v1319, %v1347
      %v1349 = vpop.f32.mrf.mxu0
      %v1350 = vadd.f32 %v1321, %v1349
      %1351 = vmatmul.bf16.gmra.mxu0 %v358
      %v1352 = vpop.f32.mrf.mxu0
      %v1353 = vadd.f32 %v1324, %v1352
      %v1354 = vpop.f32.mrf.mxu0
      %v1355 = vadd.f32 %v1326, %v1354
      %1356 = vmatmul.bf16.gmra.mxu0 %v360
      %v1357 = vpop.f32.mrf.mxu0
      %v1358 = vadd.f32 %v1329, %v1357
      %v1359 = vpop.f32.mrf.mxu0
      %v1360 = vadd.f32 %v1331, %v1359
      %1361 = vmatmul.bf16.gmra.mxu0 %v362
      %v1362 = vpop.f32.mrf.mxu0
      %v1363 = vadd.f32 %v1334, %v1362
      %v1364 = vpop.f32.mrf.mxu0
      %v1365 = vadd.f32 %v1336, %v1364
      %1366 = vdwg.mxu0
      %1367 = vmatpush.bf16.msra.mxu0 0
      %1368 = vmatpush.bf16.msra.mxu0 0
      %1369 = vmatpush.bf16.msra.mxu0 0
      %1370 = vmatpush.bf16.msra.mxu0 0
      %1371 = vmatpush.bf16.msra.mxu0 %v606
      %1372 = vmatpush.bf16.msra.mxu0 %v605
      %1373 = vmatpush.bf16.msra.mxu0 %v604
      %1374 = vmatpush.bf16.msra.mxu0 %v603
      %1375 = vmatmul.bf16.gmra.mxu0 %v442
      %v1376 = vpop.f32.mrf.mxu0
      %v1377 = vadd.f32 %v1348, %v1376
      %v1378 = vpop.f32.mrf.mxu0
      %v1379 = vadd.f32 %v1350, %v1378
      %1380 = vmatmul.bf16.gmra.mxu0 %v445
      %v1381 = vpop.f32.mrf.mxu0
      %v1382 = vadd.f32 %v1353, %v1381
      %v1383 = vpop.f32.mrf.mxu0
      %v1384 = vadd.f32 %v1355, %v1383
      %1385 = vmatmul.bf16.gmra.mxu0 %v448
      %v1386 = vpop.f32.mrf.mxu0
      %v1387 = vadd.f32 %v1358, %v1386
      %v1388 = vpop.f32.mrf.mxu0
      %v1389 = vadd.f32 %v1360, %v1388
      %1390 = vmatmul.bf16.gmra.mxu0 %v451
      %v1391 = vpop.f32.mrf.mxu0
      %v1392 = vadd.f32 %v1363, %v1391
      %v1393 = vpop.f32.mrf.mxu0
      %v1394 = vadd.f32 %v1365, %v1393
      %1395 = vdwg.mxu0
      %s1396 = smul.addr %s694, 4
      %s1397 = scalar_lea.vmem %s2, %s1396
      %v1398 = vld [vmem:[%s1397] sm:$0xff]
      %v1399 = vld [vmem:[%s1397 + $0x8] sm:$0xff]
      %v1400 = vld [vmem:[%s1397 + $0x10] sm:$0xff]
      %v1401 = vld [vmem:[%s1397 + $0x18] sm:$0xff]
      %v1402 = vld [vmem:[%s1397 + $0x20] sm:$0xff]
      %v1403 = vld [vmem:[%s1397 + $0x28] sm:$0xff]
      %v1404 = vld [vmem:[%s1397 + $0x30] sm:$0xff]
      %v1405 = vld [vmem:[%s1397 + $0x38] sm:$0xff]
      %v1414 = vunpack.c.l.b16 %v1398
      %v1415 = vunpack.c.h.b16 %v1398
      %v1416 = vunpack.c.l.b16 %v1399
      %v1417 = vunpack.c.h.b16 %v1399
      %v1418 = vunpack.c.l.b16 %v1400
      %v1419 = vunpack.c.h.b16 %v1400
      %v1420 = vunpack.c.l.b16 %v1401
      %v1421 = vunpack.c.h.b16 %v1401
      %v1422 = vunpack.c.l.b16 %v1402
      %v1423 = vunpack.c.h.b16 %v1402
      %v1424 = vunpack.c.l.b16 %v1403
      %v1425 = vunpack.c.h.b16 %v1403
      %v1426 = vunpack.c.l.b16 %v1404
      %v1427 = vunpack.c.h.b16 %v1404
      %v1428 = vunpack.c.l.b16 %v1405
      %v1429 = vunpack.c.h.b16 %v1405
      %v1430 = vpack.c.b16 %v1416, %v1414
      %v1431 = vpack.c.b16 %v1417, %v1415
      %v1432 = vpack.c.b16 %v1420, %v1418
      %v1433 = vpack.c.b16 %v1421, %v1419
      %v1434 = vpack.c.b16 %v1424, %v1422
      %v1435 = vpack.c.b16 %v1425, %v1423
      %v1436 = vpack.c.b16 %v1428, %v1426
      %v1437 = vpack.c.b16 %v1429, %v1427
      %v1443 = vsel %vm440, %v1431, 0
      %v1446 = vsel %vm440, %v1433, 0
      %v1449 = vsel %vm440, %v1435, 0
      %v1452 = vsel %vm440, %v1437, 0
      %1454 = vmatpush.bf16.msra.mxu0 %v821
      %1455 = vmatpush.bf16.msra.mxu0 %v820
      %1456 = vmatpush.bf16.msra.mxu0 %v819
      %1457 = vmatpush.bf16.msra.mxu0 %v818
      %1458 = vmatpush.bf16.msra.mxu0 %v817
      %1459 = vmatpush.bf16.msra.mxu0 %v816
      %1460 = vmatpush.bf16.msra.mxu0 %v815
      %1461 = vmatpush.bf16.msra.mxu0 %v814
      %1462 = vmatmul.bf16.gmra.mxu0 %v1430
      %v1463 = vpop.f32.mrf.mxu0
      %v1464 = vadd.f32 0.0, %v1463
      %v1465 = vpop.f32.mrf.mxu0
      %v1466 = vadd.f32 0.0, %v1465
      %1467 = vmatmul.bf16.gmra.mxu0 %v1432
      %v1468 = vpop.f32.mrf.mxu0
      %v1469 = vadd.f32 0.0, %v1468
      %v1470 = vpop.f32.mrf.mxu0
      %v1471 = vadd.f32 0.0, %v1470
      %1472 = vmatmul.bf16.gmra.mxu0 %v1434
      %v1473 = vpop.f32.mrf.mxu0
      %v1474 = vadd.f32 0.0, %v1473
      %v1475 = vpop.f32.mrf.mxu0
      %v1476 = vadd.f32 0.0, %v1475
      %1477 = vmatmul.bf16.gmra.mxu0 %v1436
      %v1478 = vpop.f32.mrf.mxu0
      %v1479 = vadd.f32 0.0, %v1478
      %v1480 = vpop.f32.mrf.mxu0
      %v1481 = vadd.f32 0.0, %v1480
      %1482 = vdwg.mxu0
      %1483 = vmatpush.bf16.msra.mxu0 0
      %1484 = vmatpush.bf16.msra.mxu0 0
      %1485 = vmatpush.bf16.msra.mxu0 0
      %1486 = vmatpush.bf16.msra.mxu0 0
      %1487 = vmatpush.bf16.msra.mxu0 %v825
      %1488 = vmatpush.bf16.msra.mxu0 %v824
      %1489 = vmatpush.bf16.msra.mxu0 %v823
      %1490 = vmatpush.bf16.msra.mxu0 %v822
      %1491 = vmatmul.bf16.gmra.mxu0 %v1443
      %v1492 = vpop.f32.mrf.mxu0
      %v1493 = vadd.f32 %v1464, %v1492
      %v1494 = vpop.f32.mrf.mxu0
      %v1495 = vadd.f32 %v1466, %v1494
      %1496 = vmatmul.bf16.gmra.mxu0 %v1446
      %v1497 = vpop.f32.mrf.mxu0
      %v1498 = vadd.f32 %v1469, %v1497
      %v1499 = vpop.f32.mrf.mxu0
      %v1500 = vadd.f32 %v1471, %v1499
      %1501 = vmatmul.bf16.gmra.mxu0 %v1449
      %v1502 = vpop.f32.mrf.mxu0
      %v1503 = vadd.f32 %v1474, %v1502
      %v1504 = vpop.f32.mrf.mxu0
      %v1505 = vadd.f32 %v1476, %v1504
      %1506 = vmatmul.bf16.gmra.mxu0 %v1452
      %v1507 = vpop.f32.mrf.mxu0
      %v1508 = vadd.f32 %v1479, %v1507
      %v1509 = vpop.f32.mrf.mxu0
      %v1510 = vadd.f32 %v1481, %v1509
      %1511 = vdwg.mxu0
      %v1512 = vadd.f32 %v1377, %v1493
      %v1513 = vadd.f32 %v1379, %v1495
      %v1514 = vadd.f32 %v1382, %v1498
      %v1515 = vadd.f32 %v1384, %v1500
      %v1516 = vadd.f32 %v1387, %v1503
      %v1517 = vadd.f32 %v1389, %v1505
      %v1518 = vadd.f32 %v1392, %v1508
      %v1519 = vadd.f32 %v1394, %v1510
      %v1520 = vmax.f32 %v1272, %v1512
      %v1521 = vmax.f32 %v1273, %v1513
      %v1522 = vmax.f32 %v1274, %v1514
      %v1523 = vmax.f32 %v1275, %v1515
      %v1524 = vmax.f32 %v1276, %v1516
      %v1525 = vmax.f32 %v1277, %v1517
      %v1526 = vmax.f32 %v1278, %v1518
      %v1527 = vmax.f32 %v1279, %v1519
      %1528 = vmatpush.bf16.msra.mxu0 %v423
      %1529 = vmatpush.bf16.msra.mxu0 %v422
      %1530 = vmatpush.bf16.msra.mxu0 %v421
      %1531 = vmatpush.bf16.msra.mxu0 %v420
      %1532 = vmatpush.bf16.msra.mxu0 %v419
      %1533 = vmatpush.bf16.msra.mxu0 %v418
      %1534 = vmatpush.bf16.msra.mxu0 %v417
      %1535 = vmatpush.bf16.msra.mxu0 %v416
      %1536 = vmatmul.bf16.gmra.mxu0 %v1182
      %v1537 = vpop.f32.mrf.mxu0
      %v1538 = vadd.f32 0.0, %v1537
      %v1539 = vpop.f32.mrf.mxu0
      %v1540 = vadd.f32 0.0, %v1539
      %1541 = vmatmul.bf16.gmra.mxu0 %v1184
      %v1542 = vpop.f32.mrf.mxu0
      %v1543 = vadd.f32 0.0, %v1542
      %v1544 = vpop.f32.mrf.mxu0
      %v1545 = vadd.f32 0.0, %v1544
      %1546 = vmatmul.bf16.gmra.mxu0 %v1186
      %v1547 = vpop.f32.mrf.mxu0
      %v1548 = vadd.f32 0.0, %v1547
      %v1549 = vpop.f32.mrf.mxu0
      %v1550 = vadd.f32 0.0, %v1549
      %1551 = vmatmul.bf16.gmra.mxu0 %v1188
      %v1552 = vpop.f32.mrf.mxu0
      %v1553 = vadd.f32 0.0, %v1552
      %v1554 = vpop.f32.mrf.mxu0
      %v1555 = vadd.f32 0.0, %v1554
      %1556 = vdwg.mxu0
      %1557 = vmatpush.bf16.msra.mxu0 0
      %1558 = vmatpush.bf16.msra.mxu0 0
      %1559 = vmatpush.bf16.msra.mxu0 0
      %1560 = vmatpush.bf16.msra.mxu0 0
      %1561 = vmatpush.bf16.msra.mxu0 %v427
      %1562 = vmatpush.bf16.msra.mxu0 %v426
      %1563 = vmatpush.bf16.msra.mxu0 %v425
      %1564 = vmatpush.bf16.msra.mxu0 %v424
      %1565 = vmatmul.bf16.gmra.mxu0 %v1195
      %v1566 = vpop.f32.mrf.mxu0
      %v1567 = vadd.f32 %v1538, %v1566
      %v1568 = vpop.f32.mrf.mxu0
      %v1569 = vadd.f32 %v1540, %v1568
      %1570 = vmatmul.bf16.gmra.mxu0 %v1198
      %v1571 = vpop.f32.mrf.mxu0
      %v1572 = vadd.f32 %v1543, %v1571
      %v1573 = vpop.f32.mrf.mxu0
      %v1574 = vadd.f32 %v1545, %v1573
      %1575 = vmatmul.bf16.gmra.mxu0 %v1201
      %v1576 = vpop.f32.mrf.mxu0
      %v1577 = vadd.f32 %v1548, %v1576
      %v1578 = vpop.f32.mrf.mxu0
      %v1579 = vadd.f32 %v1550, %v1578
      %1580 = vmatmul.bf16.gmra.mxu0 %v1204
      %v1581 = vpop.f32.mrf.mxu0
      %v1582 = vadd.f32 %v1553, %v1581
      %v1583 = vpop.f32.mrf.mxu0
      %v1584 = vadd.f32 %v1555, %v1583
      %1585 = vdwg.mxu0
      %1586 = vmatpush.bf16.msra.mxu0 %v602
      %1587 = vmatpush.bf16.msra.mxu0 %v601
      %1588 = vmatpush.bf16.msra.mxu0 %v600
      %1589 = vmatpush.bf16.msra.mxu0 %v599
      %1590 = vmatpush.bf16.msra.mxu0 %v598
      %1591 = vmatpush.bf16.msra.mxu0 %v597
      %1592 = vmatpush.bf16.msra.mxu0 %v596
      %1593 = vmatpush.bf16.msra.mxu0 %v595
      %1594 = vmatmul.bf16.gmra.mxu0 %v960
      %v1595 = vpop.f32.mrf.mxu0
      %v1596 = vadd.f32 %v1567, %v1595
      %v1597 = vpop.f32.mrf.mxu0
      %v1598 = vadd.f32 %v1569, %v1597
      %1599 = vmatmul.bf16.gmra.mxu0 %v962
      %v1600 = vpop.f32.mrf.mxu0
      %v1601 = vadd.f32 %v1572, %v1600
      %v1602 = vpop.f32.mrf.mxu0
      %v1603 = vadd.f32 %v1574, %v1602
      %1604 = vmatmul.bf16.gmra.mxu0 %v964
      %v1605 = vpop.f32.mrf.mxu0
      %v1606 = vadd.f32 %v1577, %v1605
      %v1607 = vpop.f32.mrf.mxu0
      %v1608 = vadd.f32 %v1579, %v1607
      %1609 = vmatmul.bf16.gmra.mxu0 %v966
      %v1610 = vpop.f32.mrf.mxu0
      %v1611 = vadd.f32 %v1582, %v1610
      %v1612 = vpop.f32.mrf.mxu0
      %v1613 = vadd.f32 %v1584, %v1612
      %1614 = vdwg.mxu0
      %1615 = vmatpush.bf16.msra.mxu0 0
      %1616 = vmatpush.bf16.msra.mxu0 0
      %1617 = vmatpush.bf16.msra.mxu0 0
      %1618 = vmatpush.bf16.msra.mxu0 0
      %1619 = vmatpush.bf16.msra.mxu0 %v606
      %1620 = vmatpush.bf16.msra.mxu0 %v605
      %1621 = vmatpush.bf16.msra.mxu0 %v604
      %1622 = vmatpush.bf16.msra.mxu0 %v603
      %1623 = vmatmul.bf16.gmra.mxu0 %v973
      %v1624 = vpop.f32.mrf.mxu0
      %v1625 = vadd.f32 %v1596, %v1624
      %v1626 = vpop.f32.mrf.mxu0
      %v1627 = vadd.f32 %v1598, %v1626
      %1628 = vmatmul.bf16.gmra.mxu0 %v976
      %v1629 = vpop.f32.mrf.mxu0
      %v1630 = vadd.f32 %v1601, %v1629
      %v1631 = vpop.f32.mrf.mxu0
      %v1632 = vadd.f32 %v1603, %v1631
      %1633 = vmatmul.bf16.gmra.mxu0 %v979
      %v1634 = vpop.f32.mrf.mxu0
      %v1635 = vadd.f32 %v1606, %v1634
      %v1636 = vpop.f32.mrf.mxu0
      %v1637 = vadd.f32 %v1608, %v1636
      %1638 = vmatmul.bf16.gmra.mxu0 %v982
      %v1639 = vpop.f32.mrf.mxu0
      %v1640 = vadd.f32 %v1611, %v1639
      %v1641 = vpop.f32.mrf.mxu0
      %v1642 = vadd.f32 %v1613, %v1641
      %1643 = vdwg.mxu0
      %s1644 = smul.addr %s694, 4
      %s1645 = scalar_lea.vmem %s3, %s1644
      %v1646 = vld [vmem:[%s1645] sm:$0xff]
      %v1647 = vld [vmem:[%s1645 + $0x8] sm:$0xff]
      %v1648 = vld [vmem:[%s1645 + $0x10] sm:$0xff]
      %v1649 = vld [vmem:[%s1645 + $0x18] sm:$0xff]
      %v1650 = vld [vmem:[%s1645 + $0x20] sm:$0xff]
      %v1651 = vld [vmem:[%s1645 + $0x28] sm:$0xff]
      %v1652 = vld [vmem:[%s1645 + $0x30] sm:$0xff]
      %v1653 = vld [vmem:[%s1645 + $0x38] sm:$0xff]
      %v1662 = vunpack.c.l.b16 %v1646
      %v1663 = vunpack.c.h.b16 %v1646
      %v1664 = vunpack.c.l.b16 %v1647
      %v1665 = vunpack.c.h.b16 %v1647
      %v1666 = vunpack.c.l.b16 %v1648
      %v1667 = vunpack.c.h.b16 %v1648
      %v1668 = vunpack.c.l.b16 %v1649
      %v1669 = vunpack.c.h.b16 %v1649
      %v1670 = vunpack.c.l.b16 %v1650
      %v1671 = vunpack.c.h.b16 %v1650
      %v1672 = vunpack.c.l.b16 %v1651
      %v1673 = vunpack.c.h.b16 %v1651
      %v1674 = vunpack.c.l.b16 %v1652
      %v1675 = vunpack.c.h.b16 %v1652
      %v1676 = vunpack.c.l.b16 %v1653
      %v1677 = vunpack.c.h.b16 %v1653
      %v1678 = vpack.c.b16 %v1664, %v1662
      %v1679 = vpack.c.b16 %v1665, %v1663
      %v1680 = vpack.c.b16 %v1668, %v1666
      %v1681 = vpack.c.b16 %v1669, %v1667
      %v1682 = vpack.c.b16 %v1672, %v1670
      %v1683 = vpack.c.b16 %v1673, %v1671
      %v1684 = vpack.c.b16 %v1676, %v1674
      %v1685 = vpack.c.b16 %v1677, %v1675
      %v1691 = vsel %vm440, %v1679, 0
      %v1694 = vsel %vm440, %v1681, 0
      %v1697 = vsel %vm440, %v1683, 0
      %v1700 = vsel %vm440, %v1685, 0
      %1702 = vmatpush.bf16.msra.mxu0 %v821
      %1703 = vmatpush.bf16.msra.mxu0 %v820
      %1704 = vmatpush.bf16.msra.mxu0 %v819
      %1705 = vmatpush.bf16.msra.mxu0 %v818
      %1706 = vmatpush.bf16.msra.mxu0 %v817
      %1707 = vmatpush.bf16.msra.mxu0 %v816
      %1708 = vmatpush.bf16.msra.mxu0 %v815
      %1709 = vmatpush.bf16.msra.mxu0 %v814
      %1710 = vmatmul.bf16.gmra.mxu0 %v1678
      %v1711 = vpop.f32.mrf.mxu0
      %v1712 = vadd.f32 0.0, %v1711
      %v1713 = vpop.f32.mrf.mxu0
      %v1714 = vadd.f32 0.0, %v1713
      %1715 = vmatmul.bf16.gmra.mxu0 %v1680
      %v1716 = vpop.f32.mrf.mxu0
      %v1717 = vadd.f32 0.0, %v1716
      %v1718 = vpop.f32.mrf.mxu0
      %v1719 = vadd.f32 0.0, %v1718
      %1720 = vmatmul.bf16.gmra.mxu0 %v1682
      %v1721 = vpop.f32.mrf.mxu0
      %v1722 = vadd.f32 0.0, %v1721
      %v1723 = vpop.f32.mrf.mxu0
      %v1724 = vadd.f32 0.0, %v1723
      %1725 = vmatmul.bf16.gmra.mxu0 %v1684
      %v1726 = vpop.f32.mrf.mxu0
      %v1727 = vadd.f32 0.0, %v1726
      %v1728 = vpop.f32.mrf.mxu0
      %v1729 = vadd.f32 0.0, %v1728
      %1730 = vdwg.mxu0
      %1731 = vmatpush.bf16.msra.mxu0 0
      %1732 = vmatpush.bf16.msra.mxu0 0
      %1733 = vmatpush.bf16.msra.mxu0 0
      %1734 = vmatpush.bf16.msra.mxu0 0
      %1735 = vmatpush.bf16.msra.mxu0 %v825
      %1736 = vmatpush.bf16.msra.mxu0 %v824
      %1737 = vmatpush.bf16.msra.mxu0 %v823
      %1738 = vmatpush.bf16.msra.mxu0 %v822
      %1739 = vmatmul.bf16.gmra.mxu0 %v1691
      %v1740 = vpop.f32.mrf.mxu0
      %v1741 = vadd.f32 %v1712, %v1740
      %v1742 = vpop.f32.mrf.mxu0
      %v1743 = vadd.f32 %v1714, %v1742
      %1744 = vmatmul.bf16.gmra.mxu0 %v1694
      %v1745 = vpop.f32.mrf.mxu0
      %v1746 = vadd.f32 %v1717, %v1745
      %v1747 = vpop.f32.mrf.mxu0
      %v1748 = vadd.f32 %v1719, %v1747
      %1749 = vmatmul.bf16.gmra.mxu0 %v1697
      %v1750 = vpop.f32.mrf.mxu0
      %v1751 = vadd.f32 %v1722, %v1750
      %v1752 = vpop.f32.mrf.mxu0
      %v1753 = vadd.f32 %v1724, %v1752
      %1754 = vmatmul.bf16.gmra.mxu0 %v1700
      %v1755 = vpop.f32.mrf.mxu0
      %v1756 = vadd.f32 %v1727, %v1755
      %v1757 = vpop.f32.mrf.mxu0
      %v1758 = vadd.f32 %v1729, %v1757
      %1759 = vdwg.mxu0
      %v1760 = vadd.f32 %v1625, %v1741
      %v1761 = vadd.f32 %v1627, %v1743
      %v1762 = vadd.f32 %v1630, %v1746
      %v1763 = vadd.f32 %v1632, %v1748
      %v1764 = vadd.f32 %v1635, %v1751
      %v1765 = vadd.f32 %v1637, %v1753
      %v1766 = vadd.f32 %v1640, %v1756
      %v1767 = vadd.f32 %v1642, %v1758
      %v1768 = vmax.f32 %v1520, %v1760
      %v1769 = vmax.f32 %v1521, %v1761
      %v1770 = vmax.f32 %v1522, %v1762
      %v1771 = vmax.f32 %v1523, %v1763
      %v1772 = vmax.f32 %v1524, %v1764
      %v1773 = vmax.f32 %v1525, %v1765
      %v1774 = vmax.f32 %v1526, %v1766
      %v1775 = vmax.f32 %v1527, %v1767
      %v1776 = vld [vmem:[%s5] sm:$0x1]
      %v1778 = vperm.slane %v1776, 0
      %v1780 = vadd.f32 %v1768, %v1778
      %v1781 = vadd.f32 %v1769, %v1778
      %v1782 = vadd.f32 %v1770, %v1778
      %v1783 = vadd.f32 %v1771, %v1778
      %v1784 = vadd.f32 %v1772, %v1778
      %v1785 = vadd.f32 %v1773, %v1778
      %v1786 = vadd.f32 %v1774, %v1778
      %v1787 = vadd.f32 %v1775, %v1778
      %v1788 = vmax.f32 %v1780, 0.0
      %v1789 = vmax.f32 %v1781, 0.0
      %v1790 = vmax.f32 %v1782, 0.0
      %v1791 = vmax.f32 %v1783, 0.0
      %v1792 = vmax.f32 %v1784, 0.0
      %v1793 = vmax.f32 %v1785, 0.0
      %v1794 = vmax.f32 %v1786, 0.0
      %v1795 = vmax.f32 %v1787, 0.0
      %v1796 = vpack.c.bf16 %v1788, %v1788
      %v1797 = vpack.c.bf16 %v1789, %v1789
      %v1798 = vpack.c.bf16 %v1790, %v1790
      %v1799 = vpack.c.bf16 %v1791, %v1791
      %v1800 = vpack.c.bf16 %v1792, %v1792
      %v1801 = vpack.c.bf16 %v1793, %v1793
      %v1802 = vpack.c.bf16 %v1794, %v1794
      %v1803 = vpack.c.bf16 %v1795, %v1795
      %1804 = vst [vmem:[%s251] sm:$0xf] %v1796
      %1805 = vst [vmem:[%s251 + $0x4] sm:$0xf] %v1797
      %1806 = vst [vmem:[%s251 + $0x8] sm:$0xf] %v1798
      %1807 = vst [vmem:[%s251 + $0xc] sm:$0xf] %v1799
      %1808 = vst [vmem:[%s251 + $0x10] sm:$0xf] %v1800
      %1809 = vst [vmem:[%s251 + $0x14] sm:$0xf] %v1801
      %1810 = vst [vmem:[%s251 + $0x18] sm:$0xf] %v1802
      %1811 = vst [vmem:[%s251 + $0x1c] sm:$0xf] %v1803
      %s1812 = smul.u32 %s21, 2
      %s1813 = sadd.s32 %s1812, %s22
      %s1814 = smul.u32 8, %s1813
      %p1815 = scmp.lt.s32.totalorder %s1814, 31
      %s1816 = scalar_select %p1815, %s1814, 31
      %s1817 = smul.addr %s1816, 4
      %s1818 = scalar_lea.vmem %s6, %s1817
      // Predicated region
      $region45: #{cnn_forward.4} parent=43 // pred_check
        %p1819 = pneg %p177
      $region46: #{cnn_forward.4} parent=43 // pred_check_branch
        %1821 = sbr.rel (%p1819) target = $region48
      $region47: #{cnn_forward.4} parent=43 // pred_region
        %s1822 = smul.u32 %s21, 2
        %s1823 = sadd.s32 %s1822, %s22
        %s1824 = smul.u32 8, %s1823
      $region48: #{cnn_forward.4} parent=43 // pred_fallthru
        _
    $region44: #{cnn_forward.4} parent=5 // pred_fallthru
      _
    %p1825 = scmp.le.s32.totalorder 2, %s12
    // Predicated region
    $region49: #{cnn_forward.4} parent=5 // pred_check
      %p1826 = pneg %p1825
    $region50: #{cnn_forward.4} parent=5 // pred_check_branch
      %1828 = sbr.rel (%p1826) target = $region52
    $region51: #{cnn_forward.4} parent=5 // pred_region
      %s1829 = ssub.s32 %s12, 2
      // Predicated region
      $region53: #{cnn_forward.4} parent=51 // pred_check
        %p1830 = pneg %p183
      $region54: #{cnn_forward.4} parent=51 // pred_check_branch
        %1832 = sbr.rel (%p1830) target = $region56
      $region55: #{cnn_forward.4} parent=51 // pred_region
        %s1833 = smul.u32 %s23, 2
        %s1834 = sadd.s32 %s1833, %s24
        %s1835 = smul.u32 8, %s1834
        %p1836 = scmp.lt.s32.totalorder %s1835, 31
        %s1837 = scalar_select %p1836, %s1835, 31
        %s1838 = smul.addr %s1837, 4
        %s1839 = scalar_lea.vmem %s6, %s1838
      $region56: #{cnn_forward.4} parent=51 // pred_fallthru
        _
    $region52: #{cnn_forward.4} parent=5 // pred_fallthru
      _
  $region6: #{cnn_forward.4} parent=0 // loop_footer
    %s16 = sadd.s32 1, %s12
  $region7: #{cnn_forward.4} parent=0 // loop_footer_branch
    %11 = sbr.rel target = $region3
  $region8: #{cnn_forward.4} parent=0 // loop_exit
    _

// kernel: cnn_forward.5
$region0: #{cnn_forward.5}
  #allocation0 [shape = 'u32[]', space=smem, size = 0x4, offset = 0x4, fixed_abs, tag = 'smem constant byte address 0x4 - core index']
  #allocation1 [shape = 'u32[72,128]{1,0:T(1,128)}', space=vmem, size = 0x9000, scoped, tag = 'internal scratch']
  #allocation2 [shape = 'f32[2,128]{1,0:T(2,128)}', space=vmem, size = 0x400, scoped, tag = 'scratch operand']
  %s0 = inlined_call_operand.vmem [shape: bf16[2,16384], index: 0, kind: input, shape index: {}]
  %s1 = inlined_call_operand.vmem [shape: bf16[16384,128], index: 1, kind: input, shape index: {}]
  %s2 = inlined_call_operand.vmem [shape: f32[1,128], index: 2, kind: input, shape index: {}]
  %s3 = inlined_call_operand.vmem [shape: bf16[128,10], index: 3, kind: input, shape index: {}]
  %s4 = inlined_call_operand.vmem [shape: f32[1,10], index: 4, kind: input, shape index: {}]
  %s5 = inlined_call_operand.hbm [shape: f32[2,10], index: 5, kind: output, shape index: {}]
  %s6 = sld [smem:[#allocation0]]
  $region61: #{cnn_forward.5} parent=0
    _
  %s8 = ssub.s32 1, %s6
  %s9 = scalar_select 0, %s8, %s6
  $region1: #{cnn_forward.5} parent=0
    #allocation3 [shape = 'u8[1024]{0}', space=vmem, size = 0x400, scoped, tag = 'output window, operand 0, single buffered']
    #allocation4 [shape = 's32[2]{0}', space=sflag, size = 0x8, scoped, tag = 'scoped memory for cnn_forward.5']
    %10 = vsyncpa [#allocation4], 0
    loop: start=0, step=1, limit=4
    $region2: #{cnn_forward.5} parent=1 // loop_pre_header
      _
    $region3: #{cnn_forward.5} parent=1 // loop_header
      %s12 = sphi 0, %s16
      %p13 = scmp.ge.s32.totalorder %s12, 4
      %s22 = sphi 0, %s24
      %s25 = sphi 0, %s22
      %s26 = sphi 0, %s25
      %s42 = sphi 0, %s26
      %s48 = sphi 0, %s50
      %s51 = sphi 0, %s48
      %s52 = sphi 0, %s51
      %s68 = sphi 0, %s52
      %s72 = sphi 0, %s72
      %s74 = sphi 0, %s72
      %s75 = sphi 0, %s74
      %s89 = sphi 0, %s75
      %s93 = sphi 0, %s93
      %s95 = sphi 0, %s93
      %s96 = sphi 0, %s95
      %s110 = sphi 0, %s96
      %s114 = sphi 0, %s114
      %s116 = sphi 0, %s114
      %s117 = sphi 0, %s116
      %s131 = sphi 0, %s117
      %s135 = sphi 0, %s135
      %s137 = sphi 0, %s135
      %s138 = sphi 0, %s137
      %s152 = sphi 0, %s138
    $region4: #{cnn_forward.5} parent=1 // loop_header_branch
      %15 = sbr.rel (%p13) target = $region8
    $region5: #{cnn_forward.5} parent=1 // loop_body
      %s17 = ssub.s32 %s12, 1
      %s18 = ssub.s32 %s12, 2
      %s19 = sadd.s32 %s12, 1
      %s20 = ssub.s32 %s12, %s19
      %p21 = scmp.eq.s32.totalorder %s20, 0
      %s23 = sadd.s32 %s22, 1
      %s24 = scalar_select %p21, %s22, %s23
      %p27 = pneg %p21
      %p28 = scmp.eq.s32.totalorder %s12, 1
      %p29 = por %p27, %p28
      %p30 = scmp.ne.s32.totalorder %s22, %s25
      %p31 = scmp.eq.s32.totalorder %s12, 0
      %p32 = por %p30, %p31
      %p33 = scmp.ne.s32.totalorder %s22, %s25
      %p34 = scmp.eq.s32.totalorder %s17, 1
      %p35 = por %p33, %p34
      %p36 = scmp.ne.s32.totalorder %s25, %s26
      %p37 = scmp.eq.s32.totalorder %s17, 0
      %p38 = por %p36, %p37
      %p39 = scmp.ne.s32.totalorder %s25, %s26
      %p40 = scmp.eq.s32.totalorder %s18, 1
      %p41 = por %p39, %p40
      %p43 = scmp.ne.s32.totalorder %s26, %s42
      %p44 = scmp.eq.s32.totalorder %s18, 0
      %p45 = por %p43, %p44
      %s46 = ssub.s32 %s12, %s19
      %p47 = scmp.eq.s32.totalorder %s46, 0
      %s49 = sadd.s32 %s48, 1
      %s50 = scalar_select %p47, %s48, %s49
      %p53 = pneg %p47
      %p54 = scmp.eq.s32.totalorder %s12, 1
      %p55 = por %p53, %p54
      %p56 = scmp.ne.s32.totalorder %s48, %s51
      %p57 = scmp.eq.s32.totalorder %s12, 0
      %p58 = por %p56, %p57
      %p59 = scmp.ne.s32.totalorder %s48, %s51
      %p60 = scmp.eq.s32.totalorder %s17, 1
      %p61 = por %p59, %p60
      %p62 = scmp.ne.s32.totalorder %s51, %s52
      %p63 = scmp.eq.s32.totalorder %s17, 0
      %p64 = por %p62, %p63
      %p65 = scmp.ne.s32.totalorder %s51, %s52
      %p66 = scmp.eq.s32.totalorder %s18, 1
      %p67 = por %p65, %p66
      %p69 = scmp.ne.s32.totalorder %s52, %s68
      %p70 = scmp.eq.s32.totalorder %s18, 0
      %p71 = por %p69, %p70
      %s73 = sadd.s32 %s72, 1
      %p76 = scmp.eq.s32.totalorder %s12, 1
      %p77 = scmp.ne.s32.totalorder %s72, %s74
      %p78 = scmp.eq.s32.totalorder %s12, 0
      %p79 = por %p77, %p78
      %p80 = scmp.ne.s32.totalorder %s72, %s74
      %p81 = scmp.eq.s32.totalorder %s17, 1
      %p82 = por %p80, %p81
      %p83 = scmp.ne.s32.totalorder %s74, %s75
      %p84 = scmp.eq.s32.totalorder %s17, 0
      %p85 = por %p83, %p84
      %p86 = scmp.ne.s32.totalorder %s74, %s75
      %p87 = scmp.eq.s32.totalorder %s18, 1
      %p88 = por %p86, %p87
      %p90 = scmp.ne.s32.totalorder %s75, %s89
      %p91 = scmp.eq.s32.totalorder %s18, 0
      %p92 = por %p90, %p91
      %s94 = sadd.s32 %s93, 1
      %p97 = scmp.eq.s32.totalorder %s12, 1
      %p98 = scmp.ne.s32.totalorder %s93, %s95
      %p99 = scmp.eq.s32.totalorder %s12, 0
      %p100 = por %p98, %p99
      %p101 = scmp.ne.s32.totalorder %s93, %s95
      %p102 = scmp.eq.s32.totalorder %s17, 1
      %p103 = por %p101, %p102
      %p104 = scmp.ne.s32.totalorder %s95, %s96
      %p105 = scmp.eq.s32.totalorder %s17, 0
      %p106 = por %p104, %p105
      %p107 = scmp.ne.s32.totalorder %s95, %s96
      %p108 = scmp.eq.s32.totalorder %s18, 1
      %p109 = por %p107, %p108
      %p111 = scmp.ne.s32.totalorder %s96, %s110
      %p112 = scmp.eq.s32.totalorder %s18, 0
      %p113 = por %p111, %p112
      %s115 = sadd.s32 %s114, 1
      %p118 = scmp.eq.s32.totalorder %s12, 1
      %p119 = scmp.ne.s32.totalorder %s114, %s116
      %p120 = scmp.eq.s32.totalorder %s12, 0
      %p121 = por %p119, %p120
      %p122 = scmp.ne.s32.totalorder %s114, %s116
      %p123 = scmp.eq.s32.totalorder %s17, 1
      %p124 = por %p122, %p123
      %p125 = scmp.ne.s32.totalorder %s116, %s117
      %p126 = scmp.eq.s32.totalorder %s17, 0
      %p127 = por %p125, %p126
      %p128 = scmp.ne.s32.totalorder %s116, %s117
      %p129 = scmp.eq.s32.totalorder %s18, 1
      %p130 = por %p128, %p129
      %p132 = scmp.ne.s32.totalorder %s117, %s131
      %p133 = scmp.eq.s32.totalorder %s18, 0
      %p134 = por %p132, %p133
      %s136 = sadd.s32 %s135, 1
      %p139 = scmp.eq.s32.totalorder %s12, 1
      %p140 = scmp.ne.s32.totalorder %s135, %s137
      %p141 = scmp.eq.s32.totalorder %s12, 0
      %p142 = por %p140, %p141
      %p143 = scmp.ne.s32.totalorder %s135, %s137
      %p144 = scmp.eq.s32.totalorder %s17, 1
      %p145 = por %p143, %p144
      %p146 = scmp.ne.s32.totalorder %s137, %s138
      %p147 = scmp.eq.s32.totalorder %s17, 0
      %p148 = por %p146, %p147
      %p149 = scmp.ne.s32.totalorder %s137, %s138
      %p150 = scmp.eq.s32.totalorder %s18, 1
      %p151 = por %p149, %p150
      %p153 = scmp.ne.s32.totalorder %s138, %s152
      %p154 = scmp.eq.s32.totalorder %s18, 0
      %p155 = por %p153, %p154
      %p156 = scmp.le.s32.totalorder 1, %s12
      %p157 = scmp.lt.s32.totalorder %s12, 3
      %p158 = pnand %p156, %p157
      %p159 = pneg %p158
      // Predicated region
      $region9: #{cnn_forward.5} parent=5 // pred_check
        _
      $region10: #{cnn_forward.5} parent=5 // pred_check_branch
        %161 = sbr.rel (%p158) target = $region12
      $region11: #{cnn_forward.5} parent=5 // pred_region
        %s162 = ssub.s32 %s12, 1
        // Predicated region
        $region13: #{cnn_forward.5} parent=11 // pred_check
          %p163 = pneg %p85
        $region14: #{cnn_forward.5} parent=11 // pred_check_branch
          %165 = sbr.rel (%p163) target = $region16
        $region15: #{cnn_forward.5} parent=11 // pred_region
          _
        $region16: #{cnn_forward.5} parent=11 // pred_fallthru
          _
        // Predicated region
        $region17: #{cnn_forward.5} parent=11 // pred_check
          %p166 = pneg %p106
        $region18: #{cnn_forward.5} parent=11 // pred_check_branch
          %168 = sbr.rel (%p166) target = $region20
        $region19: #{cnn_forward.5} parent=11 // pred_region
          _
        $region20: #{cnn_forward.5} parent=11 // pred_fallthru
          _
        // Predicated region
        $region21: #{cnn_forward.5} parent=11 // pred_check
          %p169 = pneg %p127
        $region22: #{cnn_forward.5} parent=11 // pred_check_branch
          %171 = sbr.rel (%p169) target = $region24
        $region23: #{cnn_forward.5} parent=11 // pred_region
          _
        $region24: #{cnn_forward.5} parent=11 // pred_fallthru
          _
      $region12: #{cnn_forward.5} parent=5 // pred_fallthru
        _
      %p172 = scmp.lt.s32.totalorder %s12, 2
      // Predicated region
      $region25: #{cnn_forward.5} parent=5 // pred_check
        %p173 = pneg %p172
      $region26: #{cnn_forward.5} parent=5 // pred_check_branch
        %175 = sbr.rel (%p173) target = $region28
      $region27: #{cnn_forward.5} parent=5 // pred_region
        // Predicated region
        $region29: #{cnn_forward.5} parent=27 // pred_check
          %p176 = pneg %p32
        $region30: #{cnn_forward.5} parent=27 // pred_check_branch
          %178 = sbr.rel (%p176) target = $region32
        $region31: #{cnn_forward.5} parent=27 // pred_region
          %s179 = smul.u32 64, %s12
          %p180 = scmp.lt.s32.totalorder %s179, 127
          %s181 = scalar_select %p180, %s179, 127
          %s182 = scalar_lea.vmem %s0, %s181
          %s183 = smul.u32 64, %s12
        $region32: #{cnn_forward.5} parent=27 // pred_fallthru
          _
        // Predicated region
        $region33: #{cnn_forward.5} parent=27 // pred_check
          %p184 = pneg %p58
        $region34: #{cnn_forward.5} parent=27 // pred_check_branch
          %186 = sbr.rel (%p184) target = $region36
        $region35: #{cnn_forward.5} parent=27 // pred_region
          %s187 = smul.u32 1024, %s12
          %p188 = scmp.lt.s32.totalorder %s187, 2047
          %s189 = scalar_select %p188, %s187, 2047
          %s190 = smul.addr %s189, 4
          %s191 = scalar_lea.vmem %s1, %s190
          %s192 = smul.u32 1024, %s12
        $region36: #{cnn_forward.5} parent=27 // pred_fallthru
          _
      $region28: #{cnn_forward.5} parent=5 // pred_fallthru
        _
      %p193 = scmp.le.s32.totalorder 1, %s12
      %p194 = scmp.lt.s32.totalorder %s12, 3
      %p195 = pnand %p193, %p194
      %p196 = pneg %p195
      // Predicated region
      $region37: #{cnn_forward.5} parent=5 // pred_check
        _
      $region38: #{cnn_forward.5} parent=5 // pred_check_branch
        %198 = sbr.rel (%p195) target = $region40
      $region39: #{cnn_forward.5} parent=5 // pred_region
        %s199 = ssub.s32 %s12, 1
        %s200 = smul.u32 64, %s17
        %p201 = scmp.lt.s32.totalorder %s200, 127
        %s202 = scalar_select %p201, %s200, 127
        %s203 = scalar_lea.vmem %s0, %s202
        %p204 = pneg %p38
        %p205 = pneg %p35
        %s206 = smul.u32 1024, %s17
        %p207 = scmp.lt.s32.totalorder %s206, 2047
        %s208 = scalar_select %p207, %s206, 2047
        %s209 = smul.addr %s208, 4
        %s210 = scalar_lea.vmem %s1, %s209
        %p211 = pneg %p64
        %p212 = pneg %p61
        %p213 = pneg %p85
        %p214 = pneg %p82
        %p215 = pneg %p106
        %p216 = pneg %p103
        %p217 = pneg %p127
        %p218 = pneg %p124
        %p219 = pneg %p148
        %p220 = pneg %p145
        %s221 = smul.u32 64, %s17
        %p222 = scmp.lt.s32.totalorder %s221, 127
        %s223 = scalar_select %p222, %s221, 127
        %s224 = scalar_lea.vmem %s0, %s223
        %s225 = smul.u32 64, %s17
        %s226 = smul.u32 1024, %s17
        %p227 = scmp.lt.s32.totalorder %s226, 2047
        %s228 = scalar_select %p227, %s226, 2047
        %s229 = smul.addr %s228, 4
        %s230 = scalar_lea.vmem %s1, %s229
        %s231 = smul.u32 1024, %s17
        %p232 = scmp.eq.s32.totalorder %s17, 0
        // Predicated region
        $region41: #{cnn_forward.5} parent=39 // pred_check
          %p233 = pneg %p232
        $region42: #{cnn_forward.5} parent=39 // pred_check_branch
          %235 = sbr.rel (%p233) target = $region44
        $region43: #{cnn_forward.5} parent=39 // pred_region
          %236 = vst [vmem:[#allocation2] sm:$0x3] 0.0
        $region44: #{cnn_forward.5} parent=39 // pred_fallthru
          _
        %v237 = vld [vmem:[#allocation2] sm:$0x3]
        %v238 = vld [vmem:[%s224] sm:$0xff]
        %v239 = vld [vmem:[%s224 + $0x8] sm:$0xff]
        %v240 = vld [vmem:[%s224 + $0x10] sm:$0xff]
        %v241 = vld [vmem:[%s224 + $0x18] sm:$0xff]
        %v242 = vld [vmem:[%s224 + $0x20] sm:$0xff]
        %v243 = vld [vmem:[%s224 + $0x28] sm:$0xff]
        %v244 = vld [vmem:[%s224 + $0x30] sm:$0xff]
        %v245 = vld [vmem:[%s224 + $0x38] sm:$0xff]
        %v246 = vld [vmem:[%s230] sm:$0xf]
        %v247 = vld [vmem:[%s230 + $0x4] sm:$0xf]
        %v248 = vld [vmem:[%s230 + $0x8] sm:$0xf]
        %v249 = vld [vmem:[%s230 + $0xc] sm:$0xf]
        %v250 = vld [vmem:[%s230 + $0x10] sm:$0xf]
        %v251 = vld [vmem:[%s230 + $0x14] sm:$0xf]
        %v252 = vld [vmem:[%s230 + $0x18] sm:$0xf]
        %v253 = vld [vmem:[%s230 + $0x1c] sm:$0xf]
        %v254 = vld [vmem:[%s230 + $0x20] sm:$0xf]
        %v255 = vld [vmem:[%s230 + $0x24] sm:$0xf]
        %v256 = vld [vmem:[%s230 + $0x28] sm:$0xf]
        %v257 = vld [vmem:[%s230 + $0x2c] sm:$0xf]
        %v258 = vld [vmem:[%s230 + $0x30] sm:$0xf]
        %v259 = vld [vmem:[%s230 + $0x34] sm:$0xf]
        %v260 = vld [vmem:[%s230 + $0x38] sm:$0xf]
        %v261 = vld [vmem:[%s230 + $0x3c] sm:$0xf]
        %v262 = vld [vmem:[%s230 + $0x40] sm:$0xf]
        %v263 = vld [vmem:[%s230 + $0x44] sm:$0xf]
        %v264 = vld [vmem:[%s230 + $0x48] sm:$0xf]
        %v265 = vld [vmem:[%s230 + $0x4c] sm:$0xf]
        %v266 = vld [vmem:[%s230 + $0x50] sm:$0xf]
        %v267 = vld [vmem:[%s230 + $0x54] sm:$0xf]
        %v268 = vld [vmem:[%s230 + $0x58] sm:$0xf]
        %v269 = vld [vmem:[%s230 + $0x5c] sm:$0xf]
        %v270 = vld [vmem:[%s230 + $0x60] sm:$0xf]
        %v271 = vld [vmem:[%s230 + $0x64] sm:$0xf]
        %v272 = vld [vmem:[%s230 + $0x68] sm:$0xf]
        %v273 = vld [vmem:[%s230 + $0x6c] sm:$0xf]
        %v274 = vld [vmem:[%s230 + $0x70] sm:$0xf]
        %v275 = vld [vmem:[%s230 + $0x74] sm:$0xf]
        %v276 = vld [vmem:[%s230 + $0x78] sm:$0xf]
        %v277 = vld [vmem:[%s230 + $0x7c] sm:$0xf]
        %v278 = vld [vmem:[%s230 + $0x80] sm:$0xf]
        %v279 = vld [vmem:[%s230 + $0x84] sm:$0xf]
        %v280 = vld [vmem:[%s230 + $0x88] sm:$0xf]
        %v281 = vld [vmem:[%s230 + $0x8c] sm:$0xf]
        %v282 = vld [vmem:[%s230 + $0x90] sm:$0xf]
        %v283 = vld [vmem:[%s230 + $0x94] sm:$0xf]
        %v284 = vld [vmem:[%s230 + $0x98] sm:$0xf]
        %v285 = vld [vmem:[%s230 + $0x9c] sm:$0xf]
        %v286 = vld [vmem:[%s230 + $0xa0] sm:$0xf]
        %v287 = vld [vmem:[%s230 + $0xa4] sm:$0xf]
        %v288 = vld [vmem:[%s230 + $0xa8] sm:$0xf]
        %v289 = vld [vmem:[%s230 + $0xac] sm:$0xf]
        %v290 = vld [vmem:[%s230 + $0xb0] sm:$0xf]
        %v291 = vld [vmem:[%s230 + $0xb4] sm:$0xf]
        %v292 = vld [vmem:[%s230 + $0xb8] sm:$0xf]
        %v293 = vld [vmem:[%s230 + $0xbc] sm:$0xf]
        %v294 = vld [vmem:[%s230 + $0xc0] sm:$0xf]
        %v295 = vld [vmem:[%s230 + $0xc4] sm:$0xf]
        %v296 = vld [vmem:[%s230 + $0xc8] sm:$0xf]
        %v297 = vld [vmem:[%s230 + $0xcc] sm:$0xf]
        %v298 = vld [vmem:[%s230 + $0xd0] sm:$0xf]
        %v299 = vld [vmem:[%s230 + $0xd4] sm:$0xf]
        %v300 = vld [vmem:[%s230 + $0xd8] sm:$0xf]
        %v301 = vld [vmem:[%s230 + $0xdc] sm:$0xf]
        %v302 = vld [vmem:[%s230 + $0xe0] sm:$0xf]
        %v303 = vld [vmem:[%s230 + $0xe4] sm:$0xf]
        %v304 = vld [vmem:[%s230 + $0xe8] sm:$0xf]
        %v305 = vld [vmem:[%s230 + $0xec] sm:$0xf]
        %v306 = vld [vmem:[%s230 + $0xf0] sm:$0xf]
        %v307 = vld [vmem:[%s230 + $0xf4] sm:$0xf]
        %v308 = vld [vmem:[%s230 + $0xf8] sm:$0xf]
        %v309 = vld [vmem:[%s230 + $0xfc] sm:$0xf]
        %v310 = vld [vmem:[%s230 + $0x100] sm:$0xf]
        %v311 = vld [vmem:[%s230 + $0x104] sm:$0xf]
        %v312 = vld [vmem:[%s230 + $0x108] sm:$0xf]
        %v313 = vld [vmem:[%s230 + $0x10c] sm:$0xf]
        %v314 = vld [vmem:[%s230 + $0x110] sm:$0xf]
        %v315 = vld [vmem:[%s230 + $0x114] sm:$0xf]
        %v316 = vld [vmem:[%s230 + $0x118] sm:$0xf]
        %v317 = vld [vmem:[%s230 + $0x11c] sm:$0xf]
        %v318 = vld [vmem:[%s230 + $0x120] sm:$0xf]
        %v319 = vld [vmem:[%s230 + $0x124] sm:$0xf]
        %v320 = vld [vmem:[%s230 + $0x128] sm:$0xf]
        %v321 = vld [vmem:[%s230 + $0x12c] sm:$0xf]
        %v322 = vld [vmem:[%s230 + $0x130] sm:$0xf]
        %v323 = vld [vmem:[%s230 + $0x134] sm:$0xf]
        %v324 = vld [vmem:[%s230 + $0x138] sm:$0xf]
        %v325 = vld [vmem:[%s230 + $0x13c] sm:$0xf]
        %v326 = vld [vmem:[%s230 + $0x140] sm:$0xf]
        %v327 = vld [vmem:[%s230 + $0x144] sm:$0xf]
        %v328 = vld [vmem:[%s230 + $0x148] sm:$0xf]
        %v329 = vld [vmem:[%s230 + $0x14c] sm:$0xf]
        %v330 = vld [vmem:[%s230 + $0x150] sm:$0xf]
        %v331 = vld [vmem:[%s230 + $0x154] sm:$0xf]
        %v332 = vld [vmem:[%s230 + $0x158] sm:$0xf]
        %v333 = vld [vmem:[%s230 + $0x15c] sm:$0xf]
        %v334 = vld [vmem:[%s230 + $0x160] sm:$0xf]
        %v335 = vld [vmem:[%s230 + $0x164] sm:$0xf]
        %v336 = vld [vmem:[%s230 + $0x168] sm:$0xf]
        %v337 = vld [vmem:[%s230 + $0x16c] sm:$0xf]
        %v338 = vld [vmem:[%s230 + $0x170] sm:$0xf]
        %v339 = vld [vmem:[%s230 + $0x174] sm:$0xf]
        %v340 = vld [vmem:[%s230 + $0x178] sm:$0xf]
        %v341 = vld [vmem:[%s230 + $0x17c] sm:$0xf]
        %v342 = vld [vmem:[%s230 + $0x180] sm:$0xf]
        %v343 = vld [vmem:[%s230 + $0x184] sm:$0xf]
        %v344 = vld [vmem:[%s230 + $0x188] sm:$0xf]
        %v345 = vld [vmem:[%s230 + $0x18c] sm:$0xf]
        %v346 = vld [vmem:[%s230 + $0x190] sm:$0xf]
        %v347 = vld [vmem:[%s230 + $0x194] sm:$0xf]
        %v348 = vld [vmem:[%s230 + $0x198] sm:$0xf]
        %v349 = vld [vmem:[%s230 + $0x19c] sm:$0xf]
        %v350 = vld [vmem:[%s230 + $0x1a0] sm:$0xf]
        %v351 = vld [vmem:[%s230 + $0x1a4] sm:$0xf]
        %v352 = vld [vmem:[%s230 + $0x1a8] sm:$0xf]
        %v353 = vld [vmem:[%s230 + $0x1ac] sm:$0xf]
        %v354 = vld [vmem:[%s230 + $0x1b0] sm:$0xf]
        %v355 = vld [vmem:[%s230 + $0x1b4] sm:$0xf]
        %v356 = vld [vmem:[%s230 + $0x1b8] sm:$0xf]
        %v357 = vld [vmem:[%s230 + $0x1bc] sm:$0xf]
        %v358 = vld [vmem:[%s230 + $0x1c0] sm:$0xf]
        %v359 = vld [vmem:[%s230 + $0x1c4] sm:$0xf]
        %v360 = vld [vmem:[%s230 + $0x1c8] sm:$0xf]
        %v361 = vld [vmem:[%s230 + $0x1cc] sm:$0xf]
        %v362 = vld [vmem:[%s230 + $0x1d0] sm:$0xf]
        %v363 = vld [vmem:[%s230 + $0x1d4] sm:$0xf]
        %v364 = vld [vmem:[%s230 + $0x1d8] sm:$0xf]
        %v365 = vld [vmem:[%s230 + $0x1dc] sm:$0xf]
        %v366 = vld [vmem:[%s230 + $0x1e0] sm:$0xf]
        %v367 = vld [vmem:[%s230 + $0x1e4] sm:$0xf]
        %v368 = vld [vmem:[%s230 + $0x1e8] sm:$0xf]
        %v369 = vld [vmem:[%s230 + $0x1ec] sm:$0xf]
        %v370 = vld [vmem:[%s230 + $0x1f0] sm:$0xf]
        %v371 = vld [vmem:[%s230 + $0x1f4] sm:$0xf]
        %v372 = vld [vmem:[%s230 + $0x1f8] sm:$0xf]
        %v373 = vld [vmem:[%s230 + $0x1fc] sm:$0xf]
        %v374 = vld [vmem:[%s230 + $0x200] sm:$0xf]
        %v375 = vld [vmem:[%s230 + $0x204] sm:$0xf]
        %v376 = vld [vmem:[%s230 + $0x208] sm:$0xf]
        %v377 = vld [vmem:[%s230 + $0x20c] sm:$0xf]
        %v378 = vld [vmem:[%s230 + $0x210] sm:$0xf]
        %v379 = vld [vmem:[%s230 + $0x214] sm:$0xf]
        %v380 = vld [vmem:[%s230 + $0x218] sm:$0xf]
        %v381 = vld [vmem:[%s230 + $0x21c] sm:$0xf]
        %v382 = vld [vmem:[%s230 + $0x220] sm:$0xf]
        %v383 = vld [vmem:[%s230 + $0x224] sm:$0xf]
        %v384 = vld [vmem:[%s230 + $0x228] sm:$0xf]
        %v385 = vld [vmem:[%s230 + $0x22c] sm:$0xf]
        %v386 = vld [vmem:[%s230 + $0x230] sm:$0xf]
        %v387 = vld [vmem:[%s230 + $0x234] sm:$0xf]
        %v388 = vld [vmem:[%s230 + $0x238] sm:$0xf]
        %v389 = vld [vmem:[%s230 + $0x23c] sm:$0xf]
        %v390 = vld [vmem:[%s230 + $0x240] sm:$0xf]
        %v391 = vld [vmem:[%s230 + $0x244] sm:$0xf]
        %v392 = vld [vmem:[%s230 + $0x248] sm:$0xf]
        %v393 = vld [vmem:[%s230 + $0x24c] sm:$0xf]
        %v394 = vld [vmem:[%s230 + $0x250] sm:$0xf]
        %v395 = vld [vmem:[%s230 + $0x254] sm:$0xf]
        %v396 = vld [vmem:[%s230 + $0x258] sm:$0xf]
        %v397 = vld [vmem:[%s230 + $0x25c] sm:$0xf]
        %v398 = vld [vmem:[%s230 + $0x260] sm:$0xf]
        %v399 = vld [vmem:[%s230 + $0x264] sm:$0xf]
        %v400 = vld [vmem:[%s230 + $0x268] sm:$0xf]
        %v401 = vld [vmem:[%s230 + $0x26c] sm:$0xf]
        %v402 = vld [vmem:[%s230 + $0x270] sm:$0xf]
        %v403 = vld [vmem:[%s230 + $0x274] sm:$0xf]
        %v404 = vld [vmem:[%s230 + $0x278] sm:$0xf]
        %v405 = vld [vmem:[%s230 + $0x27c] sm:$0xf]
        %v406 = vld [vmem:[%s230 + $0x280] sm:$0xf]
        %v407 = vld [vmem:[%s230 + $0x284] sm:$0xf]
        %v408 = vld [vmem:[%s230 + $0x288] sm:$0xf]
        %v409 = vld [vmem:[%s230 + $0x28c] sm:$0xf]
        %v410 = vld [vmem:[%s230 + $0x290] sm:$0xf]
        %v411 = vld [vmem:[%s230 + $0x294] sm:$0xf]
        %v412 = vld [vmem:[%s230 + $0x298] sm:$0xf]
        %v413 = vld [vmem:[%s230 + $0x29c] sm:$0xf]
        %v414 = vld [vmem:[%s230 + $0x2a0] sm:$0xf]
        %v415 = vld [vmem:[%s230 + $0x2a4] sm:$0xf]
        %v416 = vld [vmem:[%s230 + $0x2a8] sm:$0xf]
        %v417 = vld [vmem:[%s230 + $0x2ac] sm:$0xf]
        %v418 = vld [vmem:[%s230 + $0x2b0] sm:$0xf]
        %v419 = vld [vmem:[%s230 + $0x2b4] sm:$0xf]
        %v420 = vld [vmem:[%s230 + $0x2b8] sm:$0xf]
        %v421 = vld [vmem:[%s230 + $0x2bc] sm:$0xf]
        %v422 = vld [vmem:[%s230 + $0x2c0] sm:$0xf]
        %v423 = vld [vmem:[%s230 + $0x2c4] sm:$0xf]
        %v424 = vld [vmem:[%s230 + $0x2c8] sm:$0xf]
        %v425 = vld [vmem:[%s230 + $0x2cc] sm:$0xf]
        %v426 = vld [vmem:[%s230 + $0x2d0] sm:$0xf]
        %v427 = vld [vmem:[%s230 + $0x2d4] sm:$0xf]
        %v428 = vld [vmem:[%s230 + $0x2d8] sm:$0xf]
        %v429 = vld [vmem:[%s230 + $0x2dc] sm:$0xf]
        %v430 = vld [vmem:[%s230 + $0x2e0] sm:$0xf]
        %v431 = vld [vmem:[%s230 + $0x2e4] sm:$0xf]
        %v432 = vld [vmem:[%s230 + $0x2e8] sm:$0xf]
        %v433 = vld [vmem:[%s230 + $0x2ec] sm:$0xf]
        %v434 = vld [vmem:[%s230 + $0x2f0] sm:$0xf]
        %v435 = vld [vmem:[%s230 + $0x2f4] sm:$0xf]
        %v436 = vld [vmem:[%s230 + $0x2f8] sm:$0xf]
        %v437 = vld [vmem:[%s230 + $0x2fc] sm:$0xf]
        %v438 = vld [vmem:[%s230 + $0x300] sm:$0xf]
        %v439 = vld [vmem:[%s230 + $0x304] sm:$0xf]
        %v440 = vld [vmem:[%s230 + $0x308] sm:$0xf]
        %v441 = vld [vmem:[%s230 + $0x30c] sm:$0xf]
        %v442 = vld [vmem:[%s230 + $0x310] sm:$0xf]
        %v443 = vld [vmem:[%s230 + $0x314] sm:$0xf]
        %v444 = vld [vmem:[%s230 + $0x318] sm:$0xf]
        %v445 = vld [vmem:[%s230 + $0x31c] sm:$0xf]
        %v446 = vld [vmem:[%s230 + $0x320] sm:$0xf]
        %v447 = vld [vmem:[%s230 + $0x324] sm:$0xf]
        %v448 = vld [vmem:[%s230 + $0x328] sm:$0xf]
        %v449 = vld [vmem:[%s230 + $0x32c] sm:$0xf]
        %v450 = vld [vmem:[%s230 + $0x330] sm:$0xf]
        %v451 = vld [vmem:[%s230 + $0x334] sm:$0xf]
        %v452 = vld [vmem:[%s230 + $0x338] sm:$0xf]
        %v453 = vld [vmem:[%s230 + $0x33c] sm:$0xf]
        %v454 = vld [vmem:[%s230 + $0x340] sm:$0xf]
        %v455 = vld [vmem:[%s230 + $0x344] sm:$0xf]
        %v456 = vld [vmem:[%s230 + $0x348] sm:$0xf]
        %v457 = vld [vmem:[%s230 + $0x34c] sm:$0xf]
        %v458 = vld [vmem:[%s230 + $0x350] sm:$0xf]
        %v459 = vld [vmem:[%s230 + $0x354] sm:$0xf]
        %v460 = vld [vmem:[%s230 + $0x358] sm:$0xf]
        %v461 = vld [vmem:[%s230 + $0x35c] sm:$0xf]
        %v462 = vld [vmem:[%s230 + $0x360] sm:$0xf]
        %v463 = vld [vmem:[%s230 + $0x364] sm:$0xf]
        %v464 = vld [vmem:[%s230 + $0x368] sm:$0xf]
        %v465 = vld [vmem:[%s230 + $0x36c] sm:$0xf]
        %v466 = vld [vmem:[%s230 + $0x370] sm:$0xf]
        %v467 = vld [vmem:[%s230 + $0x374] sm:$0xf]
        %v468 = vld [vmem:[%s230 + $0x378] sm:$0xf]
        %v469 = vld [vmem:[%s230 + $0x37c] sm:$0xf]
        %v470 = vld [vmem:[%s230 + $0x380] sm:$0xf]
        %v471 = vld [vmem:[%s230 + $0x384] sm:$0xf]
        %v472 = vld [vmem:[%s230 + $0x388] sm:$0xf]
        %v473 = vld [vmem:[%s230 + $0x38c] sm:$0xf]
        %v474 = vld [vmem:[%s230 + $0x390] sm:$0xf]
        %v475 = vld [vmem:[%s230 + $0x394] sm:$0xf]
        %v476 = vld [vmem:[%s230 + $0x398] sm:$0xf]
        %v477 = vld [vmem:[%s230 + $0x39c] sm:$0xf]
        %v478 = vld [vmem:[%s230 + $0x3a0] sm:$0xf]
        %v479 = vld [vmem:[%s230 + $0x3a4] sm:$0xf]
        %v480 = vld [vmem:[%s230 + $0x3a8] sm:$0xf]
        %v481 = vld [vmem:[%s230 + $0x3ac] sm:$0xf]
        %v482 = vld [vmem:[%s230 + $0x3b0] sm:$0xf]
        %v483 = vld [vmem:[%s230 + $0x3b4] sm:$0xf]
        %v484 = vld [vmem:[%s230 + $0x3b8] sm:$0xf]
        %v485 = vld [vmem:[%s230 + $0x3bc] sm:$0xf]
        %v486 = vld [vmem:[%s230 + $0x3c0] sm:$0xf]
        %v487 = vld [vmem:[%s230 + $0x3c4] sm:$0xf]
        %v488 = vld [vmem:[%s230 + $0x3c8] sm:$0xf]
        %v489 = vld [vmem:[%s230 + $0x3cc] sm:$0xf]
        %v490 = vld [vmem:[%s230 + $0x3d0] sm:$0xf]
        %v491 = vld [vmem:[%s230 + $0x3d4] sm:$0xf]
        %v492 = vld [vmem:[%s230 + $0x3d8] sm:$0xf]
        %v493 = vld [vmem:[%s230 + $0x3dc] sm:$0xf]
        %v494 = vld [vmem:[%s230 + $0x3e0] sm:$0xf]
        %v495 = vld [vmem:[%s230 + $0x3e4] sm:$0xf]
        %v496 = vld [vmem:[%s230 + $0x3e8] sm:$0xf]
        %v497 = vld [vmem:[%s230 + $0x3ec] sm:$0xf]
        %v498 = vld [vmem:[%s230 + $0x3f0] sm:$0xf]
        %v499 = vld [vmem:[%s230 + $0x3f4] sm:$0xf]
        %v500 = vld [vmem:[%s230 + $0x3f8] sm:$0xf]
        %v501 = vld [vmem:[%s230 + $0x3fc] sm:$0xf]
        %v502 = vld [vmem:[%s230 + $0x400] sm:$0xf]
        %v503 = vld [vmem:[%s230 + $0x404] sm:$0xf]
        %v504 = vld [vmem:[%s230 + $0x408] sm:$0xf]
        %v505 = vld [vmem:[%s230 + $0x40c] sm:$0xf]
        %v506 = vld [vmem:[%s230 + $0x410] sm:$0xf]
        %v507 = vld [vmem:[%s230 + $0x414] sm:$0xf]
        %v508 = vld [vmem:[%s230 + $0x418] sm:$0xf]
        %v509 = vld [vmem:[%s230 + $0x41c] sm:$0xf]
        %v510 = vld [vmem:[%s230 + $0x420] sm:$0xf]
        %v511 = vld [vmem:[%s230 + $0x424] sm:$0xf]
        %v512 = vld [vmem:[%s230 + $0x428] sm:$0xf]
        %v513 = vld [vmem:[%s230 + $0x42c] sm:$0xf]
        %v514 = vld [vmem:[%s230 + $0x430] sm:$0xf]
        %v515 = vld [vmem:[%s230 + $0x434] sm:$0xf]
        %v516 = vld [vmem:[%s230 + $0x438] sm:$0xf]
        %v517 = vld [vmem:[%s230 + $0x43c] sm:$0xf]
        %v518 = vld [vmem:[%s230 + $0x440] sm:$0xf]
        %v519 = vld [vmem:[%s230 + $0x444] sm:$0xf]
        %v520 = vld [vmem:[%s230 + $0x448] sm:$0xf]
        %v521 = vld [vmem:[%s230 + $0x44c] sm:$0xf]
        %v522 = vld [vmem:[%s230 + $0x450] sm:$0xf]
        %v523 = vld [vmem:[%s230 + $0x454] sm:$0xf]
        %v524 = vld [vmem:[%s230 + $0x458] sm:$0xf]
        %v525 = vld [vmem:[%s230 + $0x45c] sm:$0xf]
        %v526 = vld [vmem:[%s230 + $0x460] sm:$0xf]
        %v527 = vld [vmem:[%s230 + $0x464] sm:$0xf]
        %v528 = vld [vmem:[%s230 + $0x468] sm:$0xf]
        %v529 = vld [vmem:[%s230 + $0x46c] sm:$0xf]
        %v530 = vld [vmem:[%s230 + $0x470] sm:$0xf]
        %v531 = vld [vmem:[%s230 + $0x474] sm:$0xf]
        %v532 = vld [vmem:[%s230 + $0x478] sm:$0xf]
        %v533 = vld [vmem:[%s230 + $0x47c] sm:$0xf]
        %v534 = vld [vmem:[%s230 + $0x480] sm:$0xf]
        %v535 = vld [vmem:[%s230 + $0x484] sm:$0xf]
        %v536 = vld [vmem:[%s230 + $0x488] sm:$0xf]
        %v537 = vld [vmem:[%s230 + $0x48c] sm:$0xf]
        %v538 = vld [vmem:[%s230 + $0x490] sm:$0xf]
        %v539 = vld [vmem:[%s230 + $0x494] sm:$0xf]
        %v540 = vld [vmem:[%s230 + $0x498] sm:$0xf]
        %v541 = vld [vmem:[%s230 + $0x49c] sm:$0xf]
        %v542 = vld [vmem:[%s230 + $0x4a0] sm:$0xf]
        %v543 = vld [vmem:[%s230 + $0x4a4] sm:$0xf]
        %v544 = vld [vmem:[%s230 + $0x4a8] sm:$0xf]
        %v545 = vld [vmem:[%s230 + $0x4ac] sm:$0xf]
        %v546 = vld [vmem:[%s230 + $0x4b0] sm:$0xf]
        %v547 = vld [vmem:[%s230 + $0x4b4] sm:$0xf]
        %v548 = vld [vmem:[%s230 + $0x4b8] sm:$0xf]
        %v549 = vld [vmem:[%s230 + $0x4bc] sm:$0xf]
        %v550 = vld [vmem:[%s230 + $0x4c0] sm:$0xf]
        %v551 = vld [vmem:[%s230 + $0x4c4] sm:$0xf]
        %v552 = vld [vmem:[%s230 + $0x4c8] sm:$0xf]
        %v553 = vld [vmem:[%s230 + $0x4cc] sm:$0xf]
        %v554 = vld [vmem:[%s230 + $0x4d0] sm:$0xf]
        %v555 = vld [vmem:[%s230 + $0x4d4] sm:$0xf]
        %v556 = vld [vmem:[%s230 + $0x4d8] sm:$0xf]
        %v557 = vld [vmem:[%s230 + $0x4dc] sm:$0xf]
        %v558 = vld [vmem:[%s230 + $0x4e0] sm:$0xf]
        %v559 = vld [vmem:[%s230 + $0x4e4] sm:$0xf]
        %v560 = vld [vmem:[%s230 + $0x4e8] sm:$0xf]
        %v561 = vld [vmem:[%s230 + $0x4ec] sm:$0xf]
        %v562 = vld [vmem:[%s230 + $0x4f0] sm:$0xf]
        %v563 = vld [vmem:[%s230 + $0x4f4] sm:$0xf]
        %v564 = vld [vmem:[%s230 + $0x4f8] sm:$0xf]
        %v565 = vld [vmem:[%s230 + $0x4fc] sm:$0xf]
        %v566 = vld [vmem:[%s230 + $0x500] sm:$0xf]
        %v567 = vld [vmem:[%s230 + $0x504] sm:$0xf]
        %v568 = vld [vmem:[%s230 + $0x508] sm:$0xf]
        %v569 = vld [vmem:[%s230 + $0x50c] sm:$0xf]
        %v570 = vld [vmem:[%s230 + $0x510] sm:$0xf]
        %v571 = vld [vmem:[%s230 + $0x514] sm:$0xf]
        %v572 = vld [vmem:[%s230 + $0x518] sm:$0xf]
        %v573 = vld [vmem:[%s230 + $0x51c] sm:$0xf]
        %v574 = vld [vmem:[%s230 + $0x520] sm:$0xf]
        %v575 = vld [vmem:[%s230 + $0x524] sm:$0xf]
        %v576 = vld [vmem:[%s230 + $0x528] sm:$0xf]
        %v577 = vld [vmem:[%s230 + $0x52c] sm:$0xf]
        %v578 = vld [vmem:[%s230 + $0x530] sm:$0xf]
        %v579 = vld [vmem:[%s230 + $0x534] sm:$0xf]
        %v580 = vld [vmem:[%s230 + $0x538] sm:$0xf]
        %v581 = vld [vmem:[%s230 + $0x53c] sm:$0xf]
        %v582 = vld [vmem:[%s230 + $0x540] sm:$0xf]
        %v583 = vld [vmem:[%s230 + $0x544] sm:$0xf]
        %v584 = vld [vmem:[%s230 + $0x548] sm:$0xf]
        %v585 = vld [vmem:[%s230 + $0x54c] sm:$0xf]
        %v586 = vld [vmem:[%s230 + $0x550] sm:$0xf]
        %v587 = vld [vmem:[%s230 + $0x554] sm:$0xf]
        %v588 = vld [vmem:[%s230 + $0x558] sm:$0xf]
        %v589 = vld [vmem:[%s230 + $0x55c] sm:$0xf]
        %v590 = vld [vmem:[%s230 + $0x560] sm:$0xf]
        %v591 = vld [vmem:[%s230 + $0x564] sm:$0xf]
        %v592 = vld [vmem:[%s230 + $0x568] sm:$0xf]
        %v593 = vld [vmem:[%s230 + $0x56c] sm:$0xf]
        %v594 = vld [vmem:[%s230 + $0x570] sm:$0xf]
        %v595 = vld [vmem:[%s230 + $0x574] sm:$0xf]
        %v596 = vld [vmem:[%s230 + $0x578] sm:$0xf]
        %v597 = vld [vmem:[%s230 + $0x57c] sm:$0xf]
        %v598 = vld [vmem:[%s230 + $0x580] sm:$0xf]
        %v599 = vld [vmem:[%s230 + $0x584] sm:$0xf]
        %v600 = vld [vmem:[%s230 + $0x588] sm:$0xf]
        %v601 = vld [vmem:[%s230 + $0x58c] sm:$0xf]
        %v602 = vld [vmem:[%s230 + $0x590] sm:$0xf]
        %v603 = vld [vmem:[%s230 + $0x594] sm:$0xf]
        %v604 = vld [vmem:[%s230 + $0x598] sm:$0xf]
        %v605 = vld [vmem:[%s230 + $0x59c] sm:$0xf]
        %v606 = vld [vmem:[%s230 + $0x5a0] sm:$0xf]
        %v607 = vld [vmem:[%s230 + $0x5a4] sm:$0xf]
        %v608 = vld [vmem:[%s230 + $0x5a8] sm:$0xf]
        %v609 = vld [vmem:[%s230 + $0x5ac] sm:$0xf]
        %v610 = vld [vmem:[%s230 + $0x5b0] sm:$0xf]
        %v611 = vld [vmem:[%s230 + $0x5b4] sm:$0xf]
        %v612 = vld [vmem:[%s230 + $0x5b8] sm:$0xf]
        %v613 = vld [vmem:[%s230 + $0x5bc] sm:$0xf]
        %v614 = vld [vmem:[%s230 + $0x5c0] sm:$0xf]
        %v615 = vld [vmem:[%s230 + $0x5c4] sm:$0xf]
        %v616 = vld [vmem:[%s230 + $0x5c8] sm:$0xf]
        %v617 = vld [vmem:[%s230 + $0x5cc] sm:$0xf]
        %v618 = vld [vmem:[%s230 + $0x5d0] sm:$0xf]
        %v619 = vld [vmem:[%s230 + $0x5d4] sm:$0xf]
        %v620 = vld [vmem:[%s230 + $0x5d8] sm:$0xf]
        %v621 = vld [vmem:[%s230 + $0x5dc] sm:$0xf]
        %v622 = vld [vmem:[%s230 + $0x5e0] sm:$0xf]
        %v623 = vld [vmem:[%s230 + $0x5e4] sm:$0xf]
        %v624 = vld [vmem:[%s230 + $0x5e8] sm:$0xf]
        %v625 = vld [vmem:[%s230 + $0x5ec] sm:$0xf]
        %v626 = vld [vmem:[%s230 + $0x5f0] sm:$0xf]
        %v627 = vld [vmem:[%s230 + $0x5f4] sm:$0xf]
        %v628 = vld [vmem:[%s230 + $0x5f8] sm:$0xf]
        %v629 = vld [vmem:[%s230 + $0x5fc] sm:$0xf]
        %v630 = vld [vmem:[%s230 + $0x600] sm:$0xf]
        %v631 = vld [vmem:[%s230 + $0x604] sm:$0xf]
        %v632 = vld [vmem:[%s230 + $0x608] sm:$0xf]
        %v633 = vld [vmem:[%s230 + $0x60c] sm:$0xf]
        %v634 = vld [vmem:[%s230 + $0x610] sm:$0xf]
        %v635 = vld [vmem:[%s230 + $0x614] sm:$0xf]
        %v636 = vld [vmem:[%s230 + $0x618] sm:$0xf]
        %v637 = vld [vmem:[%s230 + $0x61c] sm:$0xf]
        %v638 = vld [vmem:[%s230 + $0x620] sm:$0xf]
        %v639 = vld [vmem:[%s230 + $0x624] sm:$0xf]
        %v640 = vld [vmem:[%s230 + $0x628] sm:$0xf]
        %v641 = vld [vmem:[%s230 + $0x62c] sm:$0xf]
        %v642 = vld [vmem:[%s230 + $0x630] sm:$0xf]
        %v643 = vld [vmem:[%s230 + $0x634] sm:$0xf]
        %v644 = vld [vmem:[%s230 + $0x638] sm:$0xf]
        %v645 = vld [vmem:[%s230 + $0x63c] sm:$0xf]
        %v646 = vld [vmem:[%s230 + $0x640] sm:$0xf]
        %v647 = vld [vmem:[%s230 + $0x644] sm:$0xf]
        %v648 = vld [vmem:[%s230 + $0x648] sm:$0xf]
        %v649 = vld [vmem:[%s230 + $0x64c] sm:$0xf]
        %v650 = vld [vmem:[%s230 + $0x650] sm:$0xf]
        %v651 = vld [vmem:[%s230 + $0x654] sm:$0xf]
        %v652 = vld [vmem:[%s230 + $0x658] sm:$0xf]
        %v653 = vld [vmem:[%s230 + $0x65c] sm:$0xf]
        %v654 = vld [vmem:[%s230 + $0x660] sm:$0xf]
        %v655 = vld [vmem:[%s230 + $0x664] sm:$0xf]
        %v656 = vld [vmem:[%s230 + $0x668] sm:$0xf]
        %v657 = vld [vmem:[%s230 + $0x66c] sm:$0xf]
        %v658 = vld [vmem:[%s230 + $0x670] sm:$0xf]
        %v659 = vld [vmem:[%s230 + $0x674] sm:$0xf]
        %v660 = vld [vmem:[%s230 + $0x678] sm:$0xf]
        %v661 = vld [vmem:[%s230 + $0x67c] sm:$0xf]
        %v662 = vld [vmem:[%s230 + $0x680] sm:$0xf]
        %v663 = vld [vmem:[%s230 + $0x684] sm:$0xf]
        %v664 = vld [vmem:[%s230 + $0x688] sm:$0xf]
        %v665 = vld [vmem:[%s230 + $0x68c] sm:$0xf]
        %v666 = vld [vmem:[%s230 + $0x690] sm:$0xf]
        %v667 = vld [vmem:[%s230 + $0x694] sm:$0xf]
        %v668 = vld [vmem:[%s230 + $0x698] sm:$0xf]
        %v669 = vld [vmem:[%s230 + $0x69c] sm:$0xf]
        %v670 = vld [vmem:[%s230 + $0x6a0] sm:$0xf]
        %v671 = vld [vmem:[%s230 + $0x6a4] sm:$0xf]
        %v672 = vld [vmem:[%s230 + $0x6a8] sm:$0xf]
        %v673 = vld [vmem:[%s230 + $0x6ac] sm:$0xf]
        %v674 = vld [vmem:[%s230 + $0x6b0] sm:$0xf]
        %v675 = vld [vmem:[%s230 + $0x6b4] sm:$0xf]
        %v676 = vld [vmem:[%s230 + $0x6b8] sm:$0xf]
        %v677 = vld [vmem:[%s230 + $0x6bc] sm:$0xf]
        %v678 = vld [vmem:[%s230 + $0x6c0] sm:$0xf]
        %v679 = vld [vmem:[%s230 + $0x6c4] sm:$0xf]
        %v680 = vld [vmem:[%s230 + $0x6c8] sm:$0xf]
        %v681 = vld [vmem:[%s230 + $0x6cc] sm:$0xf]
        %v682 = vld [vmem:[%s230 + $0x6d0] sm:$0xf]
        %v683 = vld [vmem:[%s230 + $0x6d4] sm:$0xf]
        %v684 = vld [vmem:[%s230 + $0x6d8] sm:$0xf]
        %v685 = vld [vmem:[%s230 + $0x6dc] sm:$0xf]
        %v686 = vld [vmem:[%s230 + $0x6e0] sm:$0xf]
        %v687 = vld [vmem:[%s230 + $0x6e4] sm:$0xf]
        %v688 = vld [vmem:[%s230 + $0x6e8] sm:$0xf]
        %v689 = vld [vmem:[%s230 + $0x6ec] sm:$0xf]
        %v690 = vld [vmem:[%s230 + $0x6f0] sm:$0xf]
        %v691 = vld [vmem:[%s230 + $0x6f4] sm:$0xf]
        %v692 = vld [vmem:[%s230 + $0x6f8] sm:$0xf]
        %v693 = vld [vmem:[%s230 + $0x6fc] sm:$0xf]
        %v694 = vld [vmem:[%s230 + $0x700] sm:$0xf]
        %v695 = vld [vmem:[%s230 + $0x704] sm:$0xf]
        %v696 = vld [vmem:[%s230 + $0x708] sm:$0xf]
        %v697 = vld [vmem:[%s230 + $0x70c] sm:$0xf]
        %v698 = vld [vmem:[%s230 + $0x710] sm:$0xf]
        %v699 = vld [vmem:[%s230 + $0x714] sm:$0xf]
        %v700 = vld [vmem:[%s230 + $0x718] sm:$0xf]
        %v701 = vld [vmem:[%s230 + $0x71c] sm:$0xf]
        %v702 = vld [vmem:[%s230 + $0x720] sm:$0xf]
        %v703 = vld [vmem:[%s230 + $0x724] sm:$0xf]
        %v704 = vld [vmem:[%s230 + $0x728] sm:$0xf]
        %v705 = vld [vmem:[%s230 + $0x72c] sm:$0xf]
        %v706 = vld [vmem:[%s230 + $0x730] sm:$0xf]
        %v707 = vld [vmem:[%s230 + $0x734] sm:$0xf]
        %v708 = vld [vmem:[%s230 + $0x738] sm:$0xf]
        %v709 = vld [vmem:[%s230 + $0x73c] sm:$0xf]
        %v710 = vld [vmem:[%s230 + $0x740] sm:$0xf]
        %v711 = vld [vmem:[%s230 + $0x744] sm:$0xf]
        %v712 = vld [vmem:[%s230 + $0x748] sm:$0xf]
        %v713 = vld [vmem:[%s230 + $0x74c] sm:$0xf]
        %v714 = vld [vmem:[%s230 + $0x750] sm:$0xf]
        %v715 = vld [vmem:[%s230 + $0x754] sm:$0xf]
        %v716 = vld [vmem:[%s230 + $0x758] sm:$0xf]
        %v717 = vld [vmem:[%s230 + $0x75c] sm:$0xf]
        %v718 = vld [vmem:[%s230 + $0x760] sm:$0xf]
        %v719 = vld [vmem:[%s230 + $0x764] sm:$0xf]
        %v720 = vld [vmem:[%s230 + $0x768] sm:$0xf]
        %v721 = vld [vmem:[%s230 + $0x76c] sm:$0xf]
        %v722 = vld [vmem:[%s230 + $0x770] sm:$0xf]
        %v723 = vld [vmem:[%s230 + $0x774] sm:$0xf]
        %v724 = vld [vmem:[%s230 + $0x778] sm:$0xf]
        %v725 = vld [vmem:[%s230 + $0x77c] sm:$0xf]
        %v726 = vld [vmem:[%s230 + $0x780] sm:$0xf]
        %v727 = vld [vmem:[%s230 + $0x784] sm:$0xf]
        %v728 = vld [vmem:[%s230 + $0x788] sm:$0xf]
        %v729 = vld [vmem:[%s230 + $0x78c] sm:$0xf]
        %v730 = vld [vmem:[%s230 + $0x790] sm:$0xf]
        %v731 = vld [vmem:[%s230 + $0x794] sm:$0xf]
        %v732 = vld [vmem:[%s230 + $0x798] sm:$0xf]
        %v733 = vld [vmem:[%s230 + $0x79c] sm:$0xf]
        %v734 = vld [vmem:[%s230 + $0x7a0] sm:$0xf]
        %v735 = vld [vmem:[%s230 + $0x7a4] sm:$0xf]
        %v736 = vld [vmem:[%s230 + $0x7a8] sm:$0xf]
        %v737 = vld [vmem:[%s230 + $0x7ac] sm:$0xf]
        %v738 = vld [vmem:[%s230 + $0x7b0] sm:$0xf]
        %v739 = vld [vmem:[%s230 + $0x7b4] sm:$0xf]
        %v740 = vld [vmem:[%s230 + $0x7b8] sm:$0xf]
        %v741 = vld [vmem:[%s230 + $0x7bc] sm:$0xf]
        %v742 = vld [vmem:[%s230 + $0x7c0] sm:$0xf]
        %v743 = vld [vmem:[%s230 + $0x7c4] sm:$0xf]
        %v744 = vld [vmem:[%s230 + $0x7c8] sm:$0xf]
        %v745 = vld [vmem:[%s230 + $0x7cc] sm:$0xf]
        %v746 = vld [vmem:[%s230 + $0x7d0] sm:$0xf]
        %v747 = vld [vmem:[%s230 + $0x7d4] sm:$0xf]
        %v748 = vld [vmem:[%s230 + $0x7d8] sm:$0xf]
        %v749 = vld [vmem:[%s230 + $0x7dc] sm:$0xf]
        %v750 = vld [vmem:[%s230 + $0x7e0] sm:$0xf]
        %v751 = vld [vmem:[%s230 + $0x7e4] sm:$0xf]
        %v752 = vld [vmem:[%s230 + $0x7e8] sm:$0xf]
        %v753 = vld [vmem:[%s230 + $0x7ec] sm:$0xf]
        %v754 = vld [vmem:[%s230 + $0x7f0] sm:$0xf]
        %v755 = vld [vmem:[%s230 + $0x7f4] sm:$0xf]
        %v756 = vld [vmem:[%s230 + $0x7f8] sm:$0xf]
        %v757 = vld [vmem:[%s230 + $0x7fc] sm:$0xf]
        %v758 = vld [vmem:[%s230 + $0x800] sm:$0xf]
        %v759 = vld [vmem:[%s230 + $0x804] sm:$0xf]
        %v760 = vld [vmem:[%s230 + $0x808] sm:$0xf]
        %v761 = vld [vmem:[%s230 + $0x80c] sm:$0xf]
        %v762 = vld [vmem:[%s230 + $0x810] sm:$0xf]
        %v763 = vld [vmem:[%s230 + $0x814] sm:$0xf]
        %v764 = vld [vmem:[%s230 + $0x818] sm:$0xf]
        %v765 = vld [vmem:[%s230 + $0x81c] sm:$0xf]
        %v766 = vld [vmem:[%s230 + $0x820] sm:$0xf]
        %v767 = vld [vmem:[%s230 + $0x824] sm:$0xf]
        %v768 = vld [vmem:[%s230 + $0x828] sm:$0xf]
        %v769 = vld [vmem:[%s230 + $0x82c] sm:$0xf]
        %v770 = vld [vmem:[%s230 + $0x830] sm:$0xf]
        %v771 = vld [vmem:[%s230 + $0x834] sm:$0xf]
        %v772 = vld [vmem:[%s230 + $0x838] sm:$0xf]
        %v773 = vld [vmem:[%s230 + $0x83c] sm:$0xf]
        %v774 = vld [vmem:[%s230 + $0x840] sm:$0xf]
        %v775 = vld [vmem:[%s230 + $0x844] sm:$0xf]
        %v776 = vld [vmem:[%s230 + $0x848] sm:$0xf]
        %v777 = vld [vmem:[%s230 + $0x84c] sm:$0xf]
        %v778 = vld [vmem:[%s230 + $0x850] sm:$0xf]
        %v779 = vld [vmem:[%s230 + $0x854] sm:$0xf]
        %v780 = vld [vmem:[%s230 + $0x858] sm:$0xf]
        %v781 = vld [vmem:[%s230 + $0x85c] sm:$0xf]
        %v782 = vld [vmem:[%s230 + $0x860] sm:$0xf]
        %v783 = vld [vmem:[%s230 + $0x864] sm:$0xf]
        %v784 = vld [vmem:[%s230 + $0x868] sm:$0xf]
        %v785 = vld [vmem:[%s230 + $0x86c] sm:$0xf]
        %v786 = vld [vmem:[%s230 + $0x870] sm:$0xf]
        %v787 = vld [vmem:[%s230 + $0x874] sm:$0xf]
        %v788 = vld [vmem:[%s230 + $0x878] sm:$0xf]
        %v789 = vld [vmem:[%s230 + $0x87c] sm:$0xf]
        %v790 = vld [vmem:[%s230 + $0x880] sm:$0xf]
        %v791 = vld [vmem:[%s230 + $0x884] sm:$0xf]
        %v792 = vld [vmem:[%s230 + $0x888] sm:$0xf]
        %v793 = vld [vmem:[%s230 + $0x88c] sm:$0xf]
        %v794 = vld [vmem:[%s230 + $0x890] sm:$0xf]
        %v795 = vld [vmem:[%s230 + $0x894] sm:$0xf]
        %v796 = vld [vmem:[%s230 + $0x898] sm:$0xf]
        %v797 = vld [vmem:[%s230 + $0x89c] sm:$0xf]
        %v798 = vld [vmem:[%s230 + $0x8a0] sm:$0xf]
        %v799 = vld [vmem:[%s230 + $0x8a4] sm:$0xf]
        %v800 = vld [vmem:[%s230 + $0x8a8] sm:$0xf]
        %v801 = vld [vmem:[%s230 + $0x8ac] sm:$0xf]
        %v802 = vld [vmem:[%s230 + $0x8b0] sm:$0xf]
        %v803 = vld [vmem:[%s230 + $0x8b4] sm:$0xf]
        %v804 = vld [vmem:[%s230 + $0x8b8] sm:$0xf]
        %v805 = vld [vmem:[%s230 + $0x8bc] sm:$0xf]
        %v806 = vld [vmem:[%s230 + $0x8c0] sm:$0xf]
        %v807 = vld [vmem:[%s230 + $0x8c4] sm:$0xf]
        %v808 = vld [vmem:[%s230 + $0x8c8] sm:$0xf]
        %v809 = vld [vmem:[%s230 + $0x8cc] sm:$0xf]
        %v810 = vld [vmem:[%s230 + $0x8d0] sm:$0xf]
        %v811 = vld [vmem:[%s230 + $0x8d4] sm:$0xf]
        %v812 = vld [vmem:[%s230 + $0x8d8] sm:$0xf]
        %v813 = vld [vmem:[%s230 + $0x8dc] sm:$0xf]
        %v814 = vld [vmem:[%s230 + $0x8e0] sm:$0xf]
        %v815 = vld [vmem:[%s230 + $0x8e4] sm:$0xf]
        %v816 = vld [vmem:[%s230 + $0x8e8] sm:$0xf]
        %v817 = vld [vmem:[%s230 + $0x8ec] sm:$0xf]
        %v818 = vld [vmem:[%s230 + $0x8f0] sm:$0xf]
        %v819 = vld [vmem:[%s230 + $0x8f4] sm:$0xf]
        %v820 = vld [vmem:[%s230 + $0x8f8] sm:$0xf]
        %v821 = vld [vmem:[%s230 + $0x8fc] sm:$0xf]
        %v822 = vld [vmem:[%s230 + $0x900] sm:$0xf]
        %v823 = vld [vmem:[%s230 + $0x904] sm:$0xf]
        %v824 = vld [vmem:[%s230 + $0x908] sm:$0xf]
        %v825 = vld [vmem:[%s230 + $0x90c] sm:$0xf]
        %v826 = vld [vmem:[%s230 + $0x910] sm:$0xf]
        %v827 = vld [vmem:[%s230 + $0x914] sm:$0xf]
        %v828 = vld [vmem:[%s230 + $0x918] sm:$0xf]
        %v829 = vld [vmem:[%s230 + $0x91c] sm:$0xf]
        %v830 = vld [vmem:[%s230 + $0x920] sm:$0xf]
        %v831 = vld [vmem:[%s230 + $0x924] sm:$0xf]
        %v832 = vld [vmem:[%s230 + $0x928] sm:$0xf]
        %v833 = vld [vmem:[%s230 + $0x92c] sm:$0xf]
        %v834 = vld [vmem:[%s230 + $0x930] sm:$0xf]
        %v835 = vld [vmem:[%s230 + $0x934] sm:$0xf]
        %v836 = vld [vmem:[%s230 + $0x938] sm:$0xf]
        %v837 = vld [vmem:[%s230 + $0x93c] sm:$0xf]
        %v838 = vld [vmem:[%s230 + $0x940] sm:$0xf]
        %v839 = vld [vmem:[%s230 + $0x944] sm:$0xf]
        %v840 = vld [vmem:[%s230 + $0x948] sm:$0xf]
        %v841 = vld [vmem:[%s230 + $0x94c] sm:$0xf]
        %v842 = vld [vmem:[%s230 + $0x950] sm:$0xf]
        %v843 = vld [vmem:[%s230 + $0x954] sm:$0xf]
        %v844 = vld [vmem:[%s230 + $0x958] sm:$0xf]
        %v845 = vld [vmem:[%s230 + $0x95c] sm:$0xf]
        %v846 = vld [vmem:[%s230 + $0x960] sm:$0xf]
        %v847 = vld [vmem:[%s230 + $0x964] sm:$0xf]
        %v848 = vld [vmem:[%s230 + $0x968] sm:$0xf]
        %v849 = vld [vmem:[%s230 + $0x96c] sm:$0xf]
        %v850 = vld [vmem:[%s230 + $0x970] sm:$0xf]
        %v851 = vld [vmem:[%s230 + $0x974] sm:$0xf]
        %v852 = vld [vmem:[%s230 + $0x978] sm:$0xf]
        %v853 = vld [vmem:[%s230 + $0x97c] sm:$0xf]
        %v854 = vld [vmem:[%s230 + $0x980] sm:$0xf]
        %v855 = vld [vmem:[%s230 + $0x984] sm:$0xf]
        %v856 = vld [vmem:[%s230 + $0x988] sm:$0xf]
        %v857 = vld [vmem:[%s230 + $0x98c] sm:$0xf]
        %v858 = vld [vmem:[%s230 + $0x990] sm:$0xf]
        %v859 = vld [vmem:[%s230 + $0x994] sm:$0xf]
        %v860 = vld [vmem:[%s230 + $0x998] sm:$0xf]
        %v861 = vld [vmem:[%s230 + $0x99c] sm:$0xf]
        %v862 = vld [vmem:[%s230 + $0x9a0] sm:$0xf]
        %v863 = vld [vmem:[%s230 + $0x9a4] sm:$0xf]
        %v864 = vld [vmem:[%s230 + $0x9a8] sm:$0xf]
        %v865 = vld [vmem:[%s230 + $0x9ac] sm:$0xf]
        %v866 = vld [vmem:[%s230 + $0x9b0] sm:$0xf]
        %v867 = vld [vmem:[%s230 + $0x9b4] sm:$0xf]
        %v868 = vld [vmem:[%s230 + $0x9b8] sm:$0xf]
        %v869 = vld [vmem:[%s230 + $0x9bc] sm:$0xf]
        %v870 = vld [vmem:[%s230 + $0x9c0] sm:$0xf]
        %v871 = vld [vmem:[%s230 + $0x9c4] sm:$0xf]
        %v872 = vld [vmem:[%s230 + $0x9c8] sm:$0xf]
        %v873 = vld [vmem:[%s230 + $0x9cc] sm:$0xf]
        %v874 = vld [vmem:[%s230 + $0x9d0] sm:$0xf]
        %v875 = vld [vmem:[%s230 + $0x9d4] sm:$0xf]
        %v876 = vld [vmem:[%s230 + $0x9d8] sm:$0xf]
        %v877 = vld [vmem:[%s230 + $0x9dc] sm:$0xf]
        %v878 = vld [vmem:[%s230 + $0x9e0] sm:$0xf]
        %v879 = vld [vmem:[%s230 + $0x9e4] sm:$0xf]
        %v880 = vld [vmem:[%s230 + $0x9e8] sm:$0xf]
        %v881 = vld [vmem:[%s230 + $0x9ec] sm:$0xf]
        %v882 = vld [vmem:[%s230 + $0x9f0] sm:$0xf]
        %v883 = vld [vmem:[%s230 + $0x9f4] sm:$0xf]
        %v884 = vld [vmem:[%s230 + $0x9f8] sm:$0xf]
        %v885 = vld [vmem:[%s230 + $0x9fc] sm:$0xf]
        %v886 = vld [vmem:[%s230 + $0xa00] sm:$0xf]
        %v887 = vld [vmem:[%s230 + $0xa04] sm:$0xf]
        %v888 = vld [vmem:[%s230 + $0xa08] sm:$0xf]
        %v889 = vld [vmem:[%s230 + $0xa0c] sm:$0xf]
        %v890 = vld [vmem:[%s230 + $0xa10] sm:$0xf]
        %v891 = vld [vmem:[%s230 + $0xa14] sm:$0xf]
        %v892 = vld [vmem:[%s230 + $0xa18] sm:$0xf]
        %v893 = vld [vmem:[%s230 + $0xa1c] sm:$0xf]
        %v894 = vld [vmem:[%s230 + $0xa20] sm:$0xf]
        %v895 = vld [vmem:[%s230 + $0xa24] sm:$0xf]
        %v896 = vld [vmem:[%s230 + $0xa28] sm:$0xf]
        %v897 = vld [vmem:[%s230 + $0xa2c] sm:$0xf]
        %v898 = vld [vmem:[%s230 + $0xa30] sm:$0xf]
        %v899 = vld [vmem:[%s230 + $0xa34] sm:$0xf]
        %v900 = vld [vmem:[%s230 + $0xa38] sm:$0xf]
        %v901 = vld [vmem:[%s230 + $0xa3c] sm:$0xf]
        %v902 = vld [vmem:[%s230 + $0xa40] sm:$0xf]
        %v903 = vld [vmem:[%s230 + $0xa44] sm:$0xf]
        %v904 = vld [vmem:[%s230 + $0xa48] sm:$0xf]
        %v905 = vld [vmem:[%s230 + $0xa4c] sm:$0xf]
        %v906 = vld [vmem:[%s230 + $0xa50] sm:$0xf]
        %v907 = vld [vmem:[%s230 + $0xa54] sm:$0xf]
        %v908 = vld [vmem:[%s230 + $0xa58] sm:$0xf]
        %v909 = vld [vmem:[%s230 + $0xa5c] sm:$0xf]
        %v910 = vld [vmem:[%s230 + $0xa60] sm:$0xf]
        %v911 = vld [vmem:[%s230 + $0xa64] sm:$0xf]
        %v912 = vld [vmem:[%s230 + $0xa68] sm:$0xf]
        %v913 = vld [vmem:[%s230 + $0xa6c] sm:$0xf]
        %v914 = vld [vmem:[%s230 + $0xa70] sm:$0xf]
        %v915 = vld [vmem:[%s230 + $0xa74] sm:$0xf]
        %v916 = vld [vmem:[%s230 + $0xa78] sm:$0xf]
        %v917 = vld [vmem:[%s230 + $0xa7c] sm:$0xf]
        %v918 = vld [vmem:[%s230 + $0xa80] sm:$0xf]
        %v919 = vld [vmem:[%s230 + $0xa84] sm:$0xf]
        %v920 = vld [vmem:[%s230 + $0xa88] sm:$0xf]
        %v921 = vld [vmem:[%s230 + $0xa8c] sm:$0xf]
        %v922 = vld [vmem:[%s230 + $0xa90] sm:$0xf]
        %v923 = vld [vmem:[%s230 + $0xa94] sm:$0xf]
        %v924 = vld [vmem:[%s230 + $0xa98] sm:$0xf]
        %v925 = vld [vmem:[%s230 + $0xa9c] sm:$0xf]
        %v926 = vld [vmem:[%s230 + $0xaa0] sm:$0xf]
        %v927 = vld [vmem:[%s230 + $0xaa4] sm:$0xf]
        %v928 = vld [vmem:[%s230 + $0xaa8] sm:$0xf]
        %v929 = vld [vmem:[%s230 + $0xaac] sm:$0xf]
        %v930 = vld [vmem:[%s230 + $0xab0] sm:$0xf]
        %v931 = vld [vmem:[%s230 + $0xab4] sm:$0xf]
        %v932 = vld [vmem:[%s230 + $0xab8] sm:$0xf]
        %v933 = vld [vmem:[%s230 + $0xabc] sm:$0xf]
        %v934 = vld [vmem:[%s230 + $0xac0] sm:$0xf]
        %v935 = vld [vmem:[%s230 + $0xac4] sm:$0xf]
        %v936 = vld [vmem:[%s230 + $0xac8] sm:$0xf]
        %v937 = vld [vmem:[%s230 + $0xacc] sm:$0xf]
        %v938 = vld [vmem:[%s230 + $0xad0] sm:$0xf]
        %v939 = vld [vmem:[%s230 + $0xad4] sm:$0xf]
        %v940 = vld [vmem:[%s230 + $0xad8] sm:$0xf]
        %v941 = vld [vmem:[%s230 + $0xadc] sm:$0xf]
        %v942 = vld [vmem:[%s230 + $0xae0] sm:$0xf]
        %v943 = vld [vmem:[%s230 + $0xae4] sm:$0xf]
        %v944 = vld [vmem:[%s230 + $0xae8] sm:$0xf]
        %v945 = vld [vmem:[%s230 + $0xaec] sm:$0xf]
        %v946 = vld [vmem:[%s230 + $0xaf0] sm:$0xf]
        %v947 = vld [vmem:[%s230 + $0xaf4] sm:$0xf]
        %v948 = vld [vmem:[%s230 + $0xaf8] sm:$0xf]
        %v949 = vld [vmem:[%s230 + $0xafc] sm:$0xf]
        %v950 = vld [vmem:[%s230 + $0xb00] sm:$0xf]
        %v951 = vld [vmem:[%s230 + $0xb04] sm:$0xf]
        %v952 = vld [vmem:[%s230 + $0xb08] sm:$0xf]
        %v953 = vld [vmem:[%s230 + $0xb0c] sm:$0xf]
        %v954 = vld [vmem:[%s230 + $0xb10] sm:$0xf]
        %v955 = vld [vmem:[%s230 + $0xb14] sm:$0xf]
        %v956 = vld [vmem:[%s230 + $0xb18] sm:$0xf]
        %v957 = vld [vmem:[%s230 + $0xb1c] sm:$0xf]
        %v958 = vld [vmem:[%s230 + $0xb20] sm:$0xf]
        %v959 = vld [vmem:[%s230 + $0xb24] sm:$0xf]
        %v960 = vld [vmem:[%s230 + $0xb28] sm:$0xf]
        %v961 = vld [vmem:[%s230 + $0xb2c] sm:$0xf]
        %v962 = vld [vmem:[%s230 + $0xb30] sm:$0xf]
        %v963 = vld [vmem:[%s230 + $0xb34] sm:$0xf]
        %v964 = vld [vmem:[%s230 + $0xb38] sm:$0xf]
        %v965 = vld [vmem:[%s230 + $0xb3c] sm:$0xf]
        %v966 = vld [vmem:[%s230 + $0xb40] sm:$0xf]
        %v967 = vld [vmem:[%s230 + $0xb44] sm:$0xf]
        %v968 = vld [vmem:[%s230 + $0xb48] sm:$0xf]
        %v969 = vld [vmem:[%s230 + $0xb4c] sm:$0xf]
        %v970 = vld [vmem:[%s230 + $0xb50] sm:$0xf]
        %v971 = vld [vmem:[%s230 + $0xb54] sm:$0xf]
        %v972 = vld [vmem:[%s230 + $0xb58] sm:$0xf]
        %v973 = vld [vmem:[%s230 + $0xb5c] sm:$0xf]
        %v974 = vld [vmem:[%s230 + $0xb60] sm:$0xf]
        %v975 = vld [vmem:[%s230 + $0xb64] sm:$0xf]
        %v976 = vld [vmem:[%s230 + $0xb68] sm:$0xf]
        %v977 = vld [vmem:[%s230 + $0xb6c] sm:$0xf]
        %v978 = vld [vmem:[%s230 + $0xb70] sm:$0xf]
        %v979 = vld [vmem:[%s230 + $0xb74] sm:$0xf]
        %v980 = vld [vmem:[%s230 + $0xb78] sm:$0xf]
        %v981 = vld [vmem:[%s230 + $0xb7c] sm:$0xf]
        %v982 = vld [vmem:[%s230 + $0xb80] sm:$0xf]
        %v983 = vld [vmem:[%s230 + $0xb84] sm:$0xf]
        %v984 = vld [vmem:[%s230 + $0xb88] sm:$0xf]
        %v985 = vld [vmem:[%s230 + $0xb8c] sm:$0xf]
        %v986 = vld [vmem:[%s230 + $0xb90] sm:$0xf]
        %v987 = vld [vmem:[%s230 + $0xb94] sm:$0xf]
        %v988 = vld [vmem:[%s230 + $0xb98] sm:$0xf]
        %v989 = vld [vmem:[%s230 + $0xb9c] sm:$0xf]
        %v990 = vld [vmem:[%s230 + $0xba0] sm:$0xf]
        %v991 = vld [vmem:[%s230 + $0xba4] sm:$0xf]
        %v992 = vld [vmem:[%s230 + $0xba8] sm:$0xf]
        %v993 = vld [vmem:[%s230 + $0xbac] sm:$0xf]
        %v994 = vld [vmem:[%s230 + $0xbb0] sm:$0xf]
        %v995 = vld [vmem:[%s230 + $0xbb4] sm:$0xf]
        %v996 = vld [vmem:[%s230 + $0xbb8] sm:$0xf]
        %v997 = vld [vmem:[%s230 + $0xbbc] sm:$0xf]
        %v998 = vld [vmem:[%s230 + $0xbc0] sm:$0xf]
        %v999 = vld [vmem:[%s230 + $0xbc4] sm:$0xf]
        %v1000 = vld [vmem:[%s230 + $0xbc8] sm:$0xf]
        %v1001 = vld [vmem:[%s230 + $0xbcc] sm:$0xf]
        %v1002 = vld [vmem:[%s230 + $0xbd0] sm:$0xf]
        %v1003 = vld [vmem:[%s230 + $0xbd4] sm:$0xf]
        %v1004 = vld [vmem:[%s230 + $0xbd8] sm:$0xf]
        %v1005 = vld [vmem:[%s230 + $0xbdc] sm:$0xf]
        %v1006 = vld [vmem:[%s230 + $0xbe0] sm:$0xf]
        %v1007 = vld [vmem:[%s230 + $0xbe4] sm:$0xf]
        %v1008 = vld [vmem:[%s230 + $0xbe8] sm:$0xf]
        %v1009 = vld [vmem:[%s230 + $0xbec] sm:$0xf]
        %v1010 = vld [vmem:[%s230 + $0xbf0] sm:$0xf]
        %v1011 = vld [vmem:[%s230 + $0xbf4] sm:$0xf]
        %v1012 = vld [vmem:[%s230 + $0xbf8] sm:$0xf]
        %v1013 = vld [vmem:[%s230 + $0xbfc] sm:$0xf]
        %v1014 = vld [vmem:[%s230 + $0xc00] sm:$0xf]
        %v1015 = vld [vmem:[%s230 + $0xc04] sm:$0xf]
        %v1016 = vld [vmem:[%s230 + $0xc08] sm:$0xf]
        %v1017 = vld [vmem:[%s230 + $0xc0c] sm:$0xf]
        %v1018 = vld [vmem:[%s230 + $0xc10] sm:$0xf]
        %v1019 = vld [vmem:[%s230 + $0xc14] sm:$0xf]
        %v1020 = vld [vmem:[%s230 + $0xc18] sm:$0xf]
        %v1021 = vld [vmem:[%s230 + $0xc1c] sm:$0xf]
        %v1022 = vld [vmem:[%s230 + $0xc20] sm:$0xf]
        %v1023 = vld [vmem:[%s230 + $0xc24] sm:$0xf]
        %v1024 = vld [vmem:[%s230 + $0xc28] sm:$0xf]
        %v1025 = vld [vmem:[%s230 + $0xc2c] sm:$0xf]
        %v1026 = vld [vmem:[%s230 + $0xc30] sm:$0xf]
        %v1027 = vld [vmem:[%s230 + $0xc34] sm:$0xf]
        %v1028 = vld [vmem:[%s230 + $0xc38] sm:$0xf]
        %v1029 = vld [vmem:[%s230 + $0xc3c] sm:$0xf]
        %v1030 = vld [vmem:[%s230 + $0xc40] sm:$0xf]
        %v1031 = vld [vmem:[%s230 + $0xc44] sm:$0xf]
        %v1032 = vld [vmem:[%s230 + $0xc48] sm:$0xf]
        %v1033 = vld [vmem:[%s230 + $0xc4c] sm:$0xf]
        %v1034 = vld [vmem:[%s230 + $0xc50] sm:$0xf]
        %v1035 = vld [vmem:[%s230 + $0xc54] sm:$0xf]
        %v1036 = vld [vmem:[%s230 + $0xc58] sm:$0xf]
        %v1037 = vld [vmem:[%s230 + $0xc5c] sm:$0xf]
        %v1038 = vld [vmem:[%s230 + $0xc60] sm:$0xf]
        %v1039 = vld [vmem:[%s230 + $0xc64] sm:$0xf]
        %v1040 = vld [vmem:[%s230 + $0xc68] sm:$0xf]
        %v1041 = vld [vmem:[%s230 + $0xc6c] sm:$0xf]
        %v1042 = vld [vmem:[%s230 + $0xc70] sm:$0xf]
        %v1043 = vld [vmem:[%s230 + $0xc74] sm:$0xf]
        %v1044 = vld [vmem:[%s230 + $0xc78] sm:$0xf]
        %v1045 = vld [vmem:[%s230 + $0xc7c] sm:$0xf]
        %v1046 = vld [vmem:[%s230 + $0xc80] sm:$0xf]
        %v1047 = vld [vmem:[%s230 + $0xc84] sm:$0xf]
        %v1048 = vld [vmem:[%s230 + $0xc88] sm:$0xf]
        %v1049 = vld [vmem:[%s230 + $0xc8c] sm:$0xf]
        %v1050 = vld [vmem:[%s230 + $0xc90] sm:$0xf]
        %v1051 = vld [vmem:[%s230 + $0xc94] sm:$0xf]
        %v1052 = vld [vmem:[%s230 + $0xc98] sm:$0xf]
        %v1053 = vld [vmem:[%s230 + $0xc9c] sm:$0xf]
        %v1054 = vld [vmem:[%s230 + $0xca0] sm:$0xf]
        %v1055 = vld [vmem:[%s230 + $0xca4] sm:$0xf]
        %v1056 = vld [vmem:[%s230 + $0xca8] sm:$0xf]
        %v1057 = vld [vmem:[%s230 + $0xcac] sm:$0xf]
        %v1058 = vld [vmem:[%s230 + $0xcb0] sm:$0xf]
        %v1059 = vld [vmem:[%s230 + $0xcb4] sm:$0xf]
        %v1060 = vld [vmem:[%s230 + $0xcb8] sm:$0xf]
        %v1061 = vld [vmem:[%s230 + $0xcbc] sm:$0xf]
        %v1062 = vld [vmem:[%s230 + $0xcc0] sm:$0xf]
        %v1063 = vld [vmem:[%s230 + $0xcc4] sm:$0xf]
        %v1064 = vld [vmem:[%s230 + $0xcc8] sm:$0xf]
        %v1065 = vld [vmem:[%s230 + $0xccc] sm:$0xf]
        %v1066 = vld [vmem:[%s230 + $0xcd0] sm:$0xf]
        %v1067 = vld [vmem:[%s230 + $0xcd4] sm:$0xf]
        %v1068 = vld [vmem:[%s230 + $0xcd8] sm:$0xf]
        %v1069 = vld [vmem:[%s230 + $0xcdc] sm:$0xf]
        %v1070 = vld [vmem:[%s230 + $0xce0] sm:$0xf]
        %v1071 = vld [vmem:[%s230 + $0xce4] sm:$0xf]
        %v1072 = vld [vmem:[%s230 + $0xce8] sm:$0xf]
        %v1073 = vld [vmem:[%s230 + $0xcec] sm:$0xf]
        %v1074 = vld [vmem:[%s230 + $0xcf0] sm:$0xf]
        %v1075 = vld [vmem:[%s230 + $0xcf4] sm:$0xf]
        %v1076 = vld [vmem:[%s230 + $0xcf8] sm:$0xf]
        %v1077 = vld [vmem:[%s230 + $0xcfc] sm:$0xf]
        %v1078 = vld [vmem:[%s230 + $0xd00] sm:$0xf]
        %v1079 = vld [vmem:[%s230 + $0xd04] sm:$0xf]
        %v1080 = vld [vmem:[%s230 + $0xd08] sm:$0xf]
        %v1081 = vld [vmem:[%s230 + $0xd0c] sm:$0xf]
        %v1082 = vld [vmem:[%s230 + $0xd10] sm:$0xf]
        %v1083 = vld [vmem:[%s230 + $0xd14] sm:$0xf]
        %v1084 = vld [vmem:[%s230 + $0xd18] sm:$0xf]
        %v1085 = vld [vmem:[%s230 + $0xd1c] sm:$0xf]
        %v1086 = vld [vmem:[%s230 + $0xd20] sm:$0xf]
        %v1087 = vld [vmem:[%s230 + $0xd24] sm:$0xf]
        %v1088 = vld [vmem:[%s230 + $0xd28] sm:$0xf]
        %v1089 = vld [vmem:[%s230 + $0xd2c] sm:$0xf]
        %v1090 = vld [vmem:[%s230 + $0xd30] sm:$0xf]
        %v1091 = vld [vmem:[%s230 + $0xd34] sm:$0xf]
        %v1092 = vld [vmem:[%s230 + $0xd38] sm:$0xf]
        %v1093 = vld [vmem:[%s230 + $0xd3c] sm:$0xf]
        %v1094 = vld [vmem:[%s230 + $0xd40] sm:$0xf]
        %v1095 = vld [vmem:[%s230 + $0xd44] sm:$0xf]
        %v1096 = vld [vmem:[%s230 + $0xd48] sm:$0xf]
        %v1097 = vld [vmem:[%s230 + $0xd4c] sm:$0xf]
        %v1098 = vld [vmem:[%s230 + $0xd50] sm:$0xf]
        %v1099 = vld [vmem:[%s230 + $0xd54] sm:$0xf]
        %v1100 = vld [vmem:[%s230 + $0xd58] sm:$0xf]
        %v1101 = vld [vmem:[%s230 + $0xd5c] sm:$0xf]
        %v1102 = vld [vmem:[%s230 + $0xd60] sm:$0xf]
        %v1103 = vld [vmem:[%s230 + $0xd64] sm:$0xf]
        %v1104 = vld [vmem:[%s230 + $0xd68] sm:$0xf]
        %v1105 = vld [vmem:[%s230 + $0xd6c] sm:$0xf]
        %v1106 = vld [vmem:[%s230 + $0xd70] sm:$0xf]
        %v1107 = vld [vmem:[%s230 + $0xd74] sm:$0xf]
        %v1108 = vld [vmem:[%s230 + $0xd78] sm:$0xf]
        %v1109 = vld [vmem:[%s230 + $0xd7c] sm:$0xf]
        %v1110 = vld [vmem:[%s230 + $0xd80] sm:$0xf]
        %v1111 = vld [vmem:[%s230 + $0xd84] sm:$0xf]
        %v1112 = vld [vmem:[%s230 + $0xd88] sm:$0xf]
        %v1113 = vld [vmem:[%s230 + $0xd8c] sm:$0xf]
        %v1114 = vld [vmem:[%s230 + $0xd90] sm:$0xf]
        %v1115 = vld [vmem:[%s230 + $0xd94] sm:$0xf]
        %v1116 = vld [vmem:[%s230 + $0xd98] sm:$0xf]
        %v1117 = vld [vmem:[%s230 + $0xd9c] sm:$0xf]
        %v1118 = vld [vmem:[%s230 + $0xda0] sm:$0xf]
        %v1119 = vld [vmem:[%s230 + $0xda4] sm:$0xf]
        %v1120 = vld [vmem:[%s230 + $0xda8] sm:$0xf]
        %v1121 = vld [vmem:[%s230 + $0xdac] sm:$0xf]
        %v1122 = vld [vmem:[%s230 + $0xdb0] sm:$0xf]
        %v1123 = vld [vmem:[%s230 + $0xdb4] sm:$0xf]
        %v1124 = vld [vmem:[%s230 + $0xdb8] sm:$0xf]
        %v1125 = vld [vmem:[%s230 + $0xdbc] sm:$0xf]
        %v1126 = vld [vmem:[%s230 + $0xdc0] sm:$0xf]
        %v1127 = vld [vmem:[%s230 + $0xdc4] sm:$0xf]
        %v1128 = vld [vmem:[%s230 + $0xdc8] sm:$0xf]
        %v1129 = vld [vmem:[%s230 + $0xdcc] sm:$0xf]
        %v1130 = vld [vmem:[%s230 + $0xdd0] sm:$0xf]
        %v1131 = vld [vmem:[%s230 + $0xdd4] sm:$0xf]
        %v1132 = vld [vmem:[%s230 + $0xdd8] sm:$0xf]
        %v1133 = vld [vmem:[%s230 + $0xddc] sm:$0xf]
        %v1134 = vld [vmem:[%s230 + $0xde0] sm:$0xf]
        %v1135 = vld [vmem:[%s230 + $0xde4] sm:$0xf]
        %v1136 = vld [vmem:[%s230 + $0xde8] sm:$0xf]
        %v1137 = vld [vmem:[%s230 + $0xdec] sm:$0xf]
        %v1138 = vld [vmem:[%s230 + $0xdf0] sm:$0xf]
        %v1139 = vld [vmem:[%s230 + $0xdf4] sm:$0xf]
        %v1140 = vld [vmem:[%s230 + $0xdf8] sm:$0xf]
        %v1141 = vld [vmem:[%s230 + $0xdfc] sm:$0xf]
        %v1142 = vld [vmem:[%s230 + $0xe00] sm:$0xf]
        %v1143 = vld [vmem:[%s230 + $0xe04] sm:$0xf]
        %v1144 = vld [vmem:[%s230 + $0xe08] sm:$0xf]
        %v1145 = vld [vmem:[%s230 + $0xe0c] sm:$0xf]
        %v1146 = vld [vmem:[%s230 + $0xe10] sm:$0xf]
        %v1147 = vld [vmem:[%s230 + $0xe14] sm:$0xf]
        %v1148 = vld [vmem:[%s230 + $0xe18] sm:$0xf]
        %v1149 = vld [vmem:[%s230 + $0xe1c] sm:$0xf]
        %v1150 = vld [vmem:[%s230 + $0xe20] sm:$0xf]
        %v1151 = vld [vmem:[%s230 + $0xe24] sm:$0xf]
        %v1152 = vld [vmem:[%s230 + $0xe28] sm:$0xf]
        %v1153 = vld [vmem:[%s230 + $0xe2c] sm:$0xf]
        %v1154 = vld [vmem:[%s230 + $0xe30] sm:$0xf]
        %v1155 = vld [vmem:[%s230 + $0xe34] sm:$0xf]
        %v1156 = vld [vmem:[%s230 + $0xe38] sm:$0xf]
        %v1157 = vld [vmem:[%s230 + $0xe3c] sm:$0xf]
        %v1158 = vld [vmem:[%s230 + $0xe40] sm:$0xf]
        %v1159 = vld [vmem:[%s230 + $0xe44] sm:$0xf]
        %v1160 = vld [vmem:[%s230 + $0xe48] sm:$0xf]
        %v1161 = vld [vmem:[%s230 + $0xe4c] sm:$0xf]
        %v1162 = vld [vmem:[%s230 + $0xe50] sm:$0xf]
        %v1163 = vld [vmem:[%s230 + $0xe54] sm:$0xf]
        %v1164 = vld [vmem:[%s230 + $0xe58] sm:$0xf]
        %v1165 = vld [vmem:[%s230 + $0xe5c] sm:$0xf]
        %v1166 = vld [vmem:[%s230 + $0xe60] sm:$0xf]
        %v1167 = vld [vmem:[%s230 + $0xe64] sm:$0xf]
        %v1168 = vld [vmem:[%s230 + $0xe68] sm:$0xf]
        %v1169 = vld [vmem:[%s230 + $0xe6c] sm:$0xf]
        %v1170 = vld [vmem:[%s230 + $0xe70] sm:$0xf]
        %v1171 = vld [vmem:[%s230 + $0xe74] sm:$0xf]
        %v1172 = vld [vmem:[%s230 + $0xe78] sm:$0xf]
        %v1173 = vld [vmem:[%s230 + $0xe7c] sm:$0xf]
        %v1174 = vld [vmem:[%s230 + $0xe80] sm:$0xf]
        %v1175 = vld [vmem:[%s230 + $0xe84] sm:$0xf]
        %v1176 = vld [vmem:[%s230 + $0xe88] sm:$0xf]
        %v1177 = vld [vmem:[%s230 + $0xe8c] sm:$0xf]
        %v1178 = vld [vmem:[%s230 + $0xe90] sm:$0xf]
        %v1179 = vld [vmem:[%s230 + $0xe94] sm:$0xf]
        %v1180 = vld [vmem:[%s230 + $0xe98] sm:$0xf]
        %v1181 = vld [vmem:[%s230 + $0xe9c] sm:$0xf]
        %v1182 = vld [vmem:[%s230 + $0xea0] sm:$0xf]
        %v1183 = vld [vmem:[%s230 + $0xea4] sm:$0xf]
        %v1184 = vld [vmem:[%s230 + $0xea8] sm:$0xf]
        %v1185 = vld [vmem:[%s230 + $0xeac] sm:$0xf]
        %v1186 = vld [vmem:[%s230 + $0xeb0] sm:$0xf]
        %v1187 = vld [vmem:[%s230 + $0xeb4] sm:$0xf]
        %v1188 = vld [vmem:[%s230 + $0xeb8] sm:$0xf]
        %v1189 = vld [vmem:[%s230 + $0xebc] sm:$0xf]
        %v1190 = vld [vmem:[%s230 + $0xec0] sm:$0xf]
        %v1191 = vld [vmem:[%s230 + $0xec4] sm:$0xf]
        %v1192 = vld [vmem:[%s230 + $0xec8] sm:$0xf]
        %v1193 = vld [vmem:[%s230 + $0xecc] sm:$0xf]
        %v1194 = vld [vmem:[%s230 + $0xed0] sm:$0xf]
        %v1195 = vld [vmem:[%s230 + $0xed4] sm:$0xf]
        %v1196 = vld [vmem:[%s230 + $0xed8] sm:$0xf]
        %v1197 = vld [vmem:[%s230 + $0xedc] sm:$0xf]
        %v1198 = vld [vmem:[%s230 + $0xee0] sm:$0xf]
        %v1199 = vld [vmem:[%s230 + $0xee4] sm:$0xf]
        %v1200 = vld [vmem:[%s230 + $0xee8] sm:$0xf]
        %v1201 = vld [vmem:[%s230 + $0xeec] sm:$0xf]
        %v1202 = vld [vmem:[%s230 + $0xef0] sm:$0xf]
        %v1203 = vld [vmem:[%s230 + $0xef4] sm:$0xf]
        %v1204 = vld [vmem:[%s230 + $0xef8] sm:$0xf]
        %v1205 = vld [vmem:[%s230 + $0xefc] sm:$0xf]
        %v1206 = vld [vmem:[%s230 + $0xf00] sm:$0xf]
        %v1207 = vld [vmem:[%s230 + $0xf04] sm:$0xf]
        %v1208 = vld [vmem:[%s230 + $0xf08] sm:$0xf]
        %v1209 = vld [vmem:[%s230 + $0xf0c] sm:$0xf]
        %v1210 = vld [vmem:[%s230 + $0xf10] sm:$0xf]
        %v1211 = vld [vmem:[%s230 + $0xf14] sm:$0xf]
        %v1212 = vld [vmem:[%s230 + $0xf18] sm:$0xf]
        %v1213 = vld [vmem:[%s230 + $0xf1c] sm:$0xf]
        %v1214 = vld [vmem:[%s230 + $0xf20] sm:$0xf]
        %v1215 = vld [vmem:[%s230 + $0xf24] sm:$0xf]
        %v1216 = vld [vmem:[%s230 + $0xf28] sm:$0xf]
        %v1217 = vld [vmem:[%s230 + $0xf2c] sm:$0xf]
        %v1218 = vld [vmem:[%s230 + $0xf30] sm:$0xf]
        %v1219 = vld [vmem:[%s230 + $0xf34] sm:$0xf]
        %v1220 = vld [vmem:[%s230 + $0xf38] sm:$0xf]
        %v1221 = vld [vmem:[%s230 + $0xf3c] sm:$0xf]
        %v1222 = vld [vmem:[%s230 + $0xf40] sm:$0xf]
        %v1223 = vld [vmem:[%s230 + $0xf44] sm:$0xf]
        %v1224 = vld [vmem:[%s230 + $0xf48] sm:$0xf]
        %v1225 = vld [vmem:[%s230 + $0xf4c] sm:$0xf]
        %v1226 = vld [vmem:[%s230 + $0xf50] sm:$0xf]
        %v1227 = vld [vmem:[%s230 + $0xf54] sm:$0xf]
        %v1228 = vld [vmem:[%s230 + $0xf58] sm:$0xf]
        %v1229 = vld [vmem:[%s230 + $0xf5c] sm:$0xf]
        %v1230 = vld [vmem:[%s230 + $0xf60] sm:$0xf]
        %v1231 = vld [vmem:[%s230 + $0xf64] sm:$0xf]
        %v1232 = vld [vmem:[%s230 + $0xf68] sm:$0xf]
        %v1233 = vld [vmem:[%s230 + $0xf6c] sm:$0xf]
        %v1234 = vld [vmem:[%s230 + $0xf70] sm:$0xf]
        %v1235 = vld [vmem:[%s230 + $0xf74] sm:$0xf]
        %v1236 = vld [vmem:[%s230 + $0xf78] sm:$0xf]
        %v1237 = vld [vmem:[%s230 + $0xf7c] sm:$0xf]
        %v1238 = vld [vmem:[%s230 + $0xf80] sm:$0xf]
        %v1239 = vld [vmem:[%s230 + $0xf84] sm:$0xf]
        %v1240 = vld [vmem:[%s230 + $0xf88] sm:$0xf]
        %v1241 = vld [vmem:[%s230 + $0xf8c] sm:$0xf]
        %v1242 = vld [vmem:[%s230 + $0xf90] sm:$0xf]
        %v1243 = vld [vmem:[%s230 + $0xf94] sm:$0xf]
        %v1244 = vld [vmem:[%s230 + $0xf98] sm:$0xf]
        %v1245 = vld [vmem:[%s230 + $0xf9c] sm:$0xf]
        %v1246 = vld [vmem:[%s230 + $0xfa0] sm:$0xf]
        %v1247 = vld [vmem:[%s230 + $0xfa4] sm:$0xf]
        %v1248 = vld [vmem:[%s230 + $0xfa8] sm:$0xf]
        %v1249 = vld [vmem:[%s230 + $0xfac] sm:$0xf]
        %v1250 = vld [vmem:[%s230 + $0xfb0] sm:$0xf]
        %v1251 = vld [vmem:[%s230 + $0xfb4] sm:$0xf]
        %v1252 = vld [vmem:[%s230 + $0xfb8] sm:$0xf]
        %v1253 = vld [vmem:[%s230 + $0xfbc] sm:$0xf]
        %v1254 = vld [vmem:[%s230 + $0xfc0] sm:$0xf]
        %v1255 = vld [vmem:[%s230 + $0xfc4] sm:$0xf]
        %v1256 = vld [vmem:[%s230 + $0xfc8] sm:$0xf]
        %v1257 = vld [vmem:[%s230 + $0xfcc] sm:$0xf]
        %v1258 = vld [vmem:[%s230 + $0xfd0] sm:$0xf]
        %v1259 = vld [vmem:[%s230 + $0xfd4] sm:$0xf]
        %v1260 = vld [vmem:[%s230 + $0xfd8] sm:$0xf]
        %v1261 = vld [vmem:[%s230 + $0xfdc] sm:$0xf]
        %v1262 = vld [vmem:[%s230 + $0xfe0] sm:$0xf]
        %v1263 = vld [vmem:[%s230 + $0xfe4] sm:$0xf]
        %v1264 = vld [vmem:[%s230 + $0xfe8] sm:$0xf]
        %v1265 = vld [vmem:[%s230 + $0xfec] sm:$0xf]
        %v1266 = vld [vmem:[%s230 + $0xff0] sm:$0xf]
        %v1267 = vld [vmem:[%s230 + $0xff4] sm:$0xf]
        %v1268 = vld [vmem:[%s230 + $0xff8] sm:$0xf]
        %v1269 = vld [vmem:[%s230 + $0xffc] sm:$0xf]
        %1271 = vst [vmem:[#allocation1] ss:$9 sm:$0xff] %v238
        %v1272 = vld [vmem:[#allocation1] sm:$0xff]
        %v1273 = vld [vmem:[#allocation1 + $0x9] sm:$0xff]
        %v1274 = vld [vmem:[#allocation1 + $0x12] sm:$0xff]
        %v1275 = vld [vmem:[#allocation1 + $0x1b] sm:$0xff]
        %v1276 = vld [vmem:[#allocation1 + $0x24] sm:$0xff]
        %v1277 = vld [vmem:[#allocation1 + $0x2d] sm:$0xff]
        %v1278 = vld [vmem:[#allocation1 + $0x36] sm:$0xff]
        %v1279 = vld [vmem:[#allocation1 + $0x3f] sm:$0xff]
        %1281 = vst [vmem:[#allocation1] ss:$9 sm:$0xff] %v239
        %v1282 = vld [vmem:[#allocation1] sm:$0xff]
        %v1283 = vld [vmem:[#allocation1 + $0x9] sm:$0xff]
        %v1284 = vld [vmem:[#allocation1 + $0x12] sm:$0xff]
        %v1285 = vld [vmem:[#allocation1 + $0x1b] sm:$0xff]
        %v1286 = vld [vmem:[#allocation1 + $0x24] sm:$0xff]
        %v1287 = vld [vmem:[#allocation1 + $0x2d] sm:$0xff]
        %v1288 = vld [vmem:[#allocation1 + $0x36] sm:$0xff]
        %v1289 = vld [vmem:[#allocation1 + $0x3f] sm:$0xff]
        %1291 = vst [vmem:[#allocation1] ss:$9 sm:$0xff] %v240
        %v1292 = vld [vmem:[#allocation1] sm:$0xff]
        %v1293 = vld [vmem:[#allocation1 + $0x9] sm:$0xff]
        %v1294 = vld [vmem:[#allocation1 + $0x12] sm:$0xff]
        %v1295 = vld [vmem:[#allocation1 + $0x1b] sm:$0xff]
        %v1296 = vld [vmem:[#allocation1 + $0x24] sm:$0xff]
        %v1297 = vld [vmem:[#allocation1 + $0x2d] sm:$0xff]
        %v1298 = vld [vmem:[#allocation1 + $0x36] sm:$0xff]
        %v1299 = vld [vmem:[#allocation1 + $0x3f] sm:$0xff]
        %1301 = vst [vmem:[#allocation1] ss:$9 sm:$0xff] %v241
        %v1302 = vld [vmem:[#allocation1] sm:$0xff]
        %v1303 = vld [vmem:[#allocation1 + $0x9] sm:$0xff]
        %v1304 = vld [vmem:[#allocation1 + $0x12] sm:$0xff]
        %v1305 = vld [vmem:[#allocation1 + $0x1b] sm:$0xff]
        %v1306 = vld [vmem:[#allocation1 + $0x24] sm:$0xff]
        %v1307 = vld [vmem:[#allocation1 + $0x2d] sm:$0xff]
        %v1308 = vld [vmem:[#allocation1 + $0x36] sm:$0xff]
        %v1309 = vld [vmem:[#allocation1 + $0x3f] sm:$0xff]
        %1311 = vst [vmem:[#allocation1] ss:$9 sm:$0xff] %v242
        %v1312 = vld [vmem:[#allocation1] sm:$0xff]
        %v1313 = vld [vmem:[#allocation1 + $0x9] sm:$0xff]
        %v1314 = vld [vmem:[#allocation1 + $0x12] sm:$0xff]
        %v1315 = vld [vmem:[#allocation1 + $0x1b] sm:$0xff]
        %v1316 = vld [vmem:[#allocation1 + $0x24] sm:$0xff]
        %v1317 = vld [vmem:[#allocation1 + $0x2d] sm:$0xff]
        %v1318 = vld [vmem:[#allocation1 + $0x36] sm:$0xff]
        %v1319 = vld [vmem:[#allocation1 + $0x3f] sm:$0xff]
        %1321 = vst [vmem:[#allocation1] ss:$9 sm:$0xff] %v243
        %v1322 = vld [vmem:[#allocation1] sm:$0xff]
        %v1323 = vld [vmem:[#allocation1 + $0x9] sm:$0xff]
        %v1324 = vld [vmem:[#allocation1 + $0x12] sm:$0xff]
        %v1325 = vld [vmem:[#allocation1 + $0x1b] sm:$0xff]
        %v1326 = vld [vmem:[#allocation1 + $0x24] sm:$0xff]
        %v1327 = vld [vmem:[#allocation1 + $0x2d] sm:$0xff]
        %v1328 = vld [vmem:[#allocation1 + $0x36] sm:$0xff]
        %v1329 = vld [vmem:[#allocation1 + $0x3f] sm:$0xff]
        %1331 = vst [vmem:[#allocation1] ss:$9 sm:$0xff] %v244
        %v1332 = vld [vmem:[#allocation1] sm:$0xff]
        %v1333 = vld [vmem:[#allocation1 + $0x9] sm:$0xff]
        %v1334 = vld [vmem:[#allocation1 + $0x12] sm:$0xff]
        %v1335 = vld [vmem:[#allocation1 + $0x1b] sm:$0xff]
        %v1336 = vld [vmem:[#allocation1 + $0x24] sm:$0xff]
        %v1337 = vld [vmem:[#allocation1 + $0x2d] sm:$0xff]
        %v1338 = vld [vmem:[#allocation1 + $0x36] sm:$0xff]
        %v1339 = vld [vmem:[#allocation1 + $0x3f] sm:$0xff]
        %1341 = vst [vmem:[#allocation1] ss:$9 sm:$0xff] %v245
        %v1342 = vld [vmem:[#allocation1] sm:$0xff]
        %v1343 = vld [vmem:[#allocation1 + $0x9] sm:$0xff]
        %v1344 = vld [vmem:[#allocation1 + $0x12] sm:$0xff]
        %v1345 = vld [vmem:[#allocation1 + $0x1b] sm:$0xff]
        %v1346 = vld [vmem:[#allocation1 + $0x24] sm:$0xff]
        %v1347 = vld [vmem:[#allocation1 + $0x2d] sm:$0xff]
        %v1348 = vld [vmem:[#allocation1 + $0x36] sm:$0xff]
        %v1349 = vld [vmem:[#allocation1 + $0x3f] sm:$0xff]
        %v2438 = vunpack.c.l.b16 %v246
        %v2439 = vunpack.c.l.b16 %v247
        %v2440 = vunpack.c.l.b16 %v248
        %v2441 = vunpack.c.l.b16 %v249
        %v2442 = vunpack.c.l.b16 %v250
        %v2443 = vunpack.c.l.b16 %v251
        %v2444 = vunpack.c.l.b16 %v252
        %v2445 = vunpack.c.l.b16 %v253
        %v2446 = vunpack.c.l.b16 %v254
        %v2447 = vunpack.c.l.b16 %v255
        %v2448 = vunpack.c.l.b16 %v256
        %v2449 = vunpack.c.l.b16 %v257
        %v2450 = vunpack.c.l.b16 %v258
        %v2451 = vunpack.c.l.b16 %v259
        %v2452 = vunpack.c.l.b16 %v260
        %v2453 = vunpack.c.l.b16 %v261
        %v2454 = vunpack.c.l.b16 %v262
        %v2455 = vunpack.c.l.b16 %v263
        %v2456 = vunpack.c.l.b16 %v264
        %v2457 = vunpack.c.l.b16 %v265
        %v2458 = vunpack.c.l.b16 %v266
        %v2459 = vunpack.c.l.b16 %v267
        %v2460 = vunpack.c.l.b16 %v268
        %v2461 = vunpack.c.l.b16 %v269
        %v2462 = vunpack.c.l.b16 %v270
        %v2463 = vunpack.c.l.b16 %v271
        %v2464 = vunpack.c.l.b16 %v272
        %v2465 = vunpack.c.l.b16 %v273
        %v2466 = vunpack.c.l.b16 %v274
        %v2467 = vunpack.c.l.b16 %v275
        %v2468 = vunpack.c.l.b16 %v276
        %v2469 = vunpack.c.l.b16 %v277
        %v2470 = vunpack.c.l.b16 %v278
        %v2471 = vunpack.c.l.b16 %v279
        %v2472 = vunpack.c.l.b16 %v280
        %v2473 = vunpack.c.l.b16 %v281
        %v2474 = vunpack.c.l.b16 %v282
        %v2475 = vunpack.c.l.b16 %v283
        %v2476 = vunpack.c.l.b16 %v284
        %v2477 = vunpack.c.l.b16 %v285
        %v2478 = vunpack.c.l.b16 %v286
        %v2479 = vunpack.c.l.b16 %v287
        %v2480 = vunpack.c.l.b16 %v288
        %v2481 = vunpack.c.l.b16 %v289
        %v2482 = vunpack.c.l.b16 %v290
        %v2483 = vunpack.c.l.b16 %v291
        %v2484 = vunpack.c.l.b16 %v292
        %v2485 = vunpack.c.l.b16 %v293
        %v2486 = vunpack.c.l.b16 %v294
        %v2487 = vunpack.c.l.b16 %v295
        %v2488 = vunpack.c.l.b16 %v296
        %v2489 = vunpack.c.l.b16 %v297
        %v2490 = vunpack.c.l.b16 %v298
        %v2491 = vunpack.c.l.b16 %v299
        %v2492 = vunpack.c.l.b16 %v300
        %v2493 = vunpack.c.l.b16 %v301
        %v2494 = vunpack.c.l.b16 %v302
        %v2495 = vunpack.c.l.b16 %v303
        %v2496 = vunpack.c.l.b16 %v304
        %v2497 = vunpack.c.l.b16 %v305
        %v2498 = vunpack.c.l.b16 %v306
        %v2499 = vunpack.c.l.b16 %v307
        %v2500 = vunpack.c.l.b16 %v308
        %v2501 = vunpack.c.l.b16 %v309
        %v2502 = vunpack.c.l.b16 %v310
        %v2503 = vunpack.c.l.b16 %v311
        %v2504 = vunpack.c.l.b16 %v312
        %v2505 = vunpack.c.l.b16 %v313
        %v2506 = vunpack.c.l.b16 %v314
        %v2507 = vunpack.c.l.b16 %v315
        %v2508 = vunpack.c.l.b16 %v316
        %v2509 = vunpack.c.l.b16 %v317
        %v2510 = vunpack.c.l.b16 %v318
        %v2511 = vunpack.c.l.b16 %v319
        %v2512 = vunpack.c.l.b16 %v320
        %v2513 = vunpack.c.l.b16 %v321
        %v2514 = vunpack.c.l.b16 %v322
        %v2515 = vunpack.c.l.b16 %v323
        %v2516 = vunpack.c.l.b16 %v324
        %v2517 = vunpack.c.l.b16 %v325
        %v2518 = vunpack.c.l.b16 %v326
        %v2519 = vunpack.c.l.b16 %v327
        %v2520 = vunpack.c.l.b16 %v328
        %v2521 = vunpack.c.l.b16 %v329
        %v2522 = vunpack.c.l.b16 %v330
        %v2523 = vunpack.c.l.b16 %v331
        %v2524 = vunpack.c.l.b16 %v332
        %v2525 = vunpack.c.l.b16 %v333
        %v2526 = vunpack.c.l.b16 %v334
        %v2527 = vunpack.c.l.b16 %v335
        %v2528 = vunpack.c.l.b16 %v336
        %v2529 = vunpack.c.l.b16 %v337
        %v2530 = vunpack.c.l.b16 %v338
        %v2531 = vunpack.c.l.b16 %v339
        %v2532 = vunpack.c.l.b16 %v340
        %v2533 = vunpack.c.l.b16 %v341
        %v2534 = vunpack.c.l.b16 %v342
        %v2535 = vunpack.c.l.b16 %v343
        %v2536 = vunpack.c.l.b16 %v344
        %v2537 = vunpack.c.l.b16 %v345
        %v2538 = vunpack.c.l.b16 %v346
        %v2539 = vunpack.c.l.b16 %v347
        %v2540 = vunpack.c.l.b16 %v348
        %v2541 = vunpack.c.l.b16 %v349
        %v2542 = vunpack.c.l.b16 %v350
        %v2543 = vunpack.c.l.b16 %v351
        %v2544 = vunpack.c.l.b16 %v352
        %v2545 = vunpack.c.l.b16 %v353
        %v2546 = vunpack.c.l.b16 %v354
        %v2547 = vunpack.c.l.b16 %v355
        %v2548 = vunpack.c.l.b16 %v356
        %v2549 = vunpack.c.l.b16 %v357
        %v2550 = vunpack.c.l.b16 %v358
        %v2551 = vunpack.c.l.b16 %v359
        %v2552 = vunpack.c.l.b16 %v360
        %v2553 = vunpack.c.l.b16 %v361
        %v2554 = vunpack.c.l.b16 %v362
        %v2555 = vunpack.c.l.b16 %v363
        %v2556 = vunpack.c.l.b16 %v364
        %v2557 = vunpack.c.l.b16 %v365
        %v2558 = vunpack.c.l.b16 %v366
        %v2559 = vunpack.c.l.b16 %v367
        %v2560 = vunpack.c.l.b16 %v368
        %v2561 = vunpack.c.l.b16 %v369
        %v2562 = vunpack.c.l.b16 %v370
        %v2563 = vunpack.c.l.b16 %v371
        %v2564 = vunpack.c.l.b16 %v372
        %v2565 = vunpack.c.l.b16 %v373
        %v2566 = vunpack.c.l.b16 %v374
        %v2567 = vunpack.c.l.b16 %v375
        %v2568 = vunpack.c.l.b16 %v376
        %v2569 = vunpack.c.l.b16 %v377
        %v2570 = vunpack.c.l.b16 %v378
        %v2571 = vunpack.c.l.b16 %v379
        %v2572 = vunpack.c.l.b16 %v380
        %v2573 = vunpack.c.l.b16 %v381
        %v2574 = vunpack.c.l.b16 %v382
        %v2575 = vunpack.c.l.b16 %v383
        %v2576 = vunpack.c.l.b16 %v384
        %v2577 = vunpack.c.l.b16 %v385
        %v2578 = vunpack.c.l.b16 %v386
        %v2579 = vunpack.c.l.b16 %v387
        %v2580 = vunpack.c.l.b16 %v388
        %v2581 = vunpack.c.l.b16 %v389
        %v2582 = vunpack.c.l.b16 %v390
        %v2583 = vunpack.c.l.b16 %v391
        %v2584 = vunpack.c.l.b16 %v392
        %v2585 = vunpack.c.l.b16 %v393
        %v2586 = vunpack.c.l.b16 %v394
        %v2587 = vunpack.c.l.b16 %v395
        %v2588 = vunpack.c.l.b16 %v396
        %v2589 = vunpack.c.l.b16 %v397
        %v2590 = vunpack.c.l.b16 %v398
        %v2591 = vunpack.c.l.b16 %v399
        %v2592 = vunpack.c.l.b16 %v400
        %v2593 = vunpack.c.l.b16 %v401
        %v2594 = vunpack.c.l.b16 %v402
        %v2595 = vunpack.c.l.b16 %v403
        %v2596 = vunpack.c.l.b16 %v404
        %v2597 = vunpack.c.l.b16 %v405
        %v2598 = vunpack.c.l.b16 %v406
        %v2599 = vunpack.c.l.b16 %v407
        %v2600 = vunpack.c.l.b16 %v408
        %v2601 = vunpack.c.l.b16 %v409
        %v2602 = vunpack.c.l.b16 %v410
        %v2603 = vunpack.c.l.b16 %v411
        %v2604 = vunpack.c.l.b16 %v412
        %v2605 = vunpack.c.l.b16 %v413
        %v2606 = vunpack.c.l.b16 %v414
        %v2607 = vunpack.c.l.b16 %v415
        %v2608 = vunpack.c.l.b16 %v416
        %v2609 = vunpack.c.l.b16 %v417
        %v2610 = vunpack.c.l.b16 %v418
        %v2611 = vunpack.c.l.b16 %v419
        %v2612 = vunpack.c.l.b16 %v420
        %v2613 = vunpack.c.l.b16 %v421
        %v2614 = vunpack.c.l.b16 %v422
        %v2615 = vunpack.c.l.b16 %v423
        %v2616 = vunpack.c.l.b16 %v424
        %v2617 = vunpack.c.l.b16 %v425
        %v2618 = vunpack.c.l.b16 %v426
        %v2619 = vunpack.c.l.b16 %v427
        %v2620 = vunpack.c.l.b16 %v428
        %v2621 = vunpack.c.l.b16 %v429
        %v2622 = vunpack.c.l.b16 %v430
        %v2623 = vunpack.c.l.b16 %v431
        %v2624 = vunpack.c.l.b16 %v432
        %v2625 = vunpack.c.l.b16 %v433
        %v2626 = vunpack.c.l.b16 %v434
        %v2627 = vunpack.c.l.b16 %v435
        %v2628 = vunpack.c.l.b16 %v436
        %v2629 = vunpack.c.l.b16 %v437
        %v2630 = vunpack.c.l.b16 %v438
        %v2631 = vunpack.c.l.b16 %v439
        %v2632 = vunpack.c.l.b16 %v440
        %v2633 = vunpack.c.l.b16 %v441
        %v2634 = vunpack.c.l.b16 %v442
        %v2635 = vunpack.c.l.b16 %v443
        %v2636 = vunpack.c.l.b16 %v444
        %v2637 = vunpack.c.l.b16 %v445
        %v2638 = vunpack.c.l.b16 %v446
        %v2639 = vunpack.c.l.b16 %v447
        %v2640 = vunpack.c.l.b16 %v448
        %v2641 = vunpack.c.l.b16 %v449
        %v2642 = vunpack.c.l.b16 %v450
        %v2643 = vunpack.c.l.b16 %v451
        %v2644 = vunpack.c.l.b16 %v452
        %v2645 = vunpack.c.l.b16 %v453
        %v2646 = vunpack.c.l.b16 %v454
        %v2647 = vunpack.c.l.b16 %v455
        %v2648 = vunpack.c.l.b16 %v456
        %v2649 = vunpack.c.l.b16 %v457
        %v2650 = vunpack.c.l.b16 %v458
        %v2651 = vunpack.c.l.b16 %v459
        %v2652 = vunpack.c.l.b16 %v460
        %v2653 = vunpack.c.l.b16 %v461
        %v2654 = vunpack.c.l.b16 %v462
        %v2655 = vunpack.c.l.b16 %v463
        %v2656 = vunpack.c.l.b16 %v464
        %v2657 = vunpack.c.l.b16 %v465
        %v2658 = vunpack.c.l.b16 %v466
        %v2659 = vunpack.c.l.b16 %v467
        %v2660 = vunpack.c.l.b16 %v468
        %v2661 = vunpack.c.l.b16 %v469
        %v2662 = vunpack.c.l.b16 %v470
        %v2663 = vunpack.c.l.b16 %v471
        %v2664 = vunpack.c.l.b16 %v472
        %v2665 = vunpack.c.l.b16 %v473
        %v2666 = vunpack.c.l.b16 %v474
        %v2667 = vunpack.c.l.b16 %v475
        %v2668 = vunpack.c.l.b16 %v476
        %v2669 = vunpack.c.l.b16 %v477
        %v2670 = vunpack.c.l.b16 %v478
        %v2671 = vunpack.c.l.b16 %v479
        %v2672 = vunpack.c.l.b16 %v480
        %v2673 = vunpack.c.l.b16 %v481
        %v2674 = vunpack.c.l.b16 %v482
        %v2675 = vunpack.c.l.b16 %v483
        %v2676 = vunpack.c.l.b16 %v484
        %v2677 = vunpack.c.l.b16 %v485
        %v2678 = vunpack.c.l.b16 %v486
        %v2679 = vunpack.c.l.b16 %v487
        %v2680 = vunpack.c.l.b16 %v488
        %v2681 = vunpack.c.l.b16 %v489
        %v2682 = vunpack.c.l.b16 %v490
        %v2683 = vunpack.c.l.b16 %v491
        %v2684 = vunpack.c.l.b16 %v492
        %v2685 = vunpack.c.l.b16 %v493
        %v2686 = vunpack.c.l.b16 %v494
        %v2687 = vunpack.c.l.b16 %v495
        %v2688 = vunpack.c.l.b16 %v496
        %v2689 = vunpack.c.l.b16 %v497
        %v2690 = vunpack.c.l.b16 %v498
        %v2691 = vunpack.c.l.b16 %v499
        %v2692 = vunpack.c.l.b16 %v500
        %v2693 = vunpack.c.l.b16 %v501
        %v2694 = vunpack.c.l.b16 %v502
        %v2695 = vunpack.c.l.b16 %v503
        %v2696 = vunpack.c.l.b16 %v504
        %v2697 = vunpack.c.l.b16 %v505
        %v2698 = vunpack.c.l.b16 %v506
        %v2699 = vunpack.c.l.b16 %v507
        %v2700 = vunpack.c.l.b16 %v508
        %v2701 = vunpack.c.l.b16 %v509
        %v2702 = vunpack.c.l.b16 %v510
        %v2703 = vunpack.c.l.b16 %v511
        %v2704 = vunpack.c.l.b16 %v512
        %v2705 = vunpack.c.l.b16 %v513
        %v2706 = vunpack.c.l.b16 %v514
        %v2707 = vunpack.c.l.b16 %v515
        %v2708 = vunpack.c.l.b16 %v516
        %v2709 = vunpack.c.l.b16 %v517
        %v2710 = vunpack.c.l.b16 %v518
        %v2711 = vunpack.c.l.b16 %v519
        %v2712 = vunpack.c.l.b16 %v520
        %v2713 = vunpack.c.l.b16 %v521
        %v2714 = vunpack.c.l.b16 %v522
        %v2715 = vunpack.c.l.b16 %v523
        %v2716 = vunpack.c.l.b16 %v524
        %v2717 = vunpack.c.l.b16 %v525
        %v2718 = vunpack.c.l.b16 %v526
        %v2719 = vunpack.c.l.b16 %v527
        %v2720 = vunpack.c.l.b16 %v528
        %v2721 = vunpack.c.l.b16 %v529
        %v2722 = vunpack.c.l.b16 %v530
        %v2723 = vunpack.c.l.b16 %v531
        %v2724 = vunpack.c.l.b16 %v532
        %v2725 = vunpack.c.l.b16 %v533
        %v2726 = vunpack.c.l.b16 %v534
        %v2727 = vunpack.c.l.b16 %v535
        %v2728 = vunpack.c.l.b16 %v536
        %v2729 = vunpack.c.l.b16 %v537
        %v2730 = vunpack.c.l.b16 %v538
        %v2731 = vunpack.c.l.b16 %v539
        %v2732 = vunpack.c.l.b16 %v540
        %v2733 = vunpack.c.l.b16 %v541
        %v2734 = vunpack.c.l.b16 %v542
        %v2735 = vunpack.c.l.b16 %v543
        %v2736 = vunpack.c.l.b16 %v544
        %v2737 = vunpack.c.l.b16 %v545
        %v2738 = vunpack.c.l.b16 %v546
        %v2739 = vunpack.c.l.b16 %v547
        %v2740 = vunpack.c.l.b16 %v548
        %v2741 = vunpack.c.l.b16 %v549
        %v2742 = vunpack.c.l.b16 %v550
        %v2743 = vunpack.c.l.b16 %v551
        %v2744 = vunpack.c.l.b16 %v552
        %v2745 = vunpack.c.l.b16 %v553
        %v2746 = vunpack.c.l.b16 %v554
        %v2747 = vunpack.c.l.b16 %v555
        %v2748 = vunpack.c.l.b16 %v556
        %v2749 = vunpack.c.l.b16 %v557
        %v2750 = vunpack.c.l.b16 %v558
        %v2751 = vunpack.c.l.b16 %v559
        %v2752 = vunpack.c.l.b16 %v560
        %v2753 = vunpack.c.l.b16 %v561
        %v2754 = vunpack.c.l.b16 %v562
        %v2755 = vunpack.c.l.b16 %v563
        %v2756 = vunpack.c.l.b16 %v564
        %v2757 = vunpack.c.l.b16 %v565
        %v2758 = vunpack.c.l.b16 %v566
        %v2759 = vunpack.c.l.b16 %v567
        %v2760 = vunpack.c.l.b16 %v568
        %v2761 = vunpack.c.l.b16 %v569
        %v2762 = vunpack.c.l.b16 %v570
        %v2763 = vunpack.c.l.b16 %v571
        %v2764 = vunpack.c.l.b16 %v572
        %v2765 = vunpack.c.l.b16 %v573
        %v2766 = vunpack.c.l.b16 %v574
        %v2767 = vunpack.c.l.b16 %v575
        %v2768 = vunpack.c.l.b16 %v576
        %v2769 = vunpack.c.l.b16 %v577
        %v2770 = vunpack.c.l.b16 %v578
        %v2771 = vunpack.c.l.b16 %v579
        %v2772 = vunpack.c.l.b16 %v580
        %v2773 = vunpack.c.l.b16 %v581
        %v2774 = vunpack.c.l.b16 %v582
        %v2775 = vunpack.c.l.b16 %v583
        %v2776 = vunpack.c.l.b16 %v584
        %v2777 = vunpack.c.l.b16 %v585
        %v2778 = vunpack.c.l.b16 %v586
        %v2779 = vunpack.c.l.b16 %v587
        %v2780 = vunpack.c.l.b16 %v588
        %v2781 = vunpack.c.l.b16 %v589
        %v2782 = vunpack.c.l.b16 %v590
        %v2783 = vunpack.c.l.b16 %v591
        %v2784 = vunpack.c.l.b16 %v592
        %v2785 = vunpack.c.l.b16 %v593
        %v2786 = vunpack.c.l.b16 %v594
        %v2787 = vunpack.c.l.b16 %v595
        %v2788 = vunpack.c.l.b16 %v596
        %v2789 = vunpack.c.l.b16 %v597
        %v2790 = vunpack.c.l.b16 %v598
        %v2791 = vunpack.c.l.b16 %v599
        %v2792 = vunpack.c.l.b16 %v600
        %v2793 = vunpack.c.l.b16 %v601
        %v2794 = vunpack.c.l.b16 %v602
        %v2795 = vunpack.c.l.b16 %v603
        %v2796 = vunpack.c.l.b16 %v604
        %v2797 = vunpack.c.l.b16 %v605
        %v2798 = vunpack.c.l.b16 %v606
        %v2799 = vunpack.c.l.b16 %v607
        %v2800 = vunpack.c.l.b16 %v608
        %v2801 = vunpack.c.l.b16 %v609
        %v2802 = vunpack.c.l.b16 %v610
        %v2803 = vunpack.c.l.b16 %v611
        %v2804 = vunpack.c.l.b16 %v612
        %v2805 = vunpack.c.l.b16 %v613
        %v2806 = vunpack.c.l.b16 %v614
        %v2807 = vunpack.c.l.b16 %v615
        %v2808 = vunpack.c.l.b16 %v616
        %v2809 = vunpack.c.l.b16 %v617
        %v2810 = vunpack.c.l.b16 %v618
        %v2811 = vunpack.c.l.b16 %v619
        %v2812 = vunpack.c.l.b16 %v620
        %v2813 = vunpack.c.l.b16 %v621
        %v2814 = vunpack.c.l.b16 %v622
        %v2815 = vunpack.c.l.b16 %v623
        %v2816 = vunpack.c.l.b16 %v624
        %v2817 = vunpack.c.l.b16 %v625
        %v2818 = vunpack.c.l.b16 %v626
        %v2819 = vunpack.c.l.b16 %v627
        %v2820 = vunpack.c.l.b16 %v628
        %v2821 = vunpack.c.l.b16 %v629
        %v2822 = vunpack.c.l.b16 %v630
        %v2823 = vunpack.c.l.b16 %v631
        %v2824 = vunpack.c.l.b16 %v632
        %v2825 = vunpack.c.l.b16 %v633
        %v2826 = vunpack.c.l.b16 %v634
        %v2827 = vunpack.c.l.b16 %v635
        %v2828 = vunpack.c.l.b16 %v636
        %v2829 = vunpack.c.l.b16 %v637
        %v2830 = vunpack.c.l.b16 %v638
        %v2831 = vunpack.c.l.b16 %v639
        %v2832 = vunpack.c.l.b16 %v640
        %v2833 = vunpack.c.l.b16 %v641
        %v2834 = vunpack.c.l.b16 %v642
        %v2835 = vunpack.c.l.b16 %v643
        %v2836 = vunpack.c.l.b16 %v644
        %v2837 = vunpack.c.l.b16 %v645
        %v2838 = vunpack.c.l.b16 %v646
        %v2839 = vunpack.c.l.b16 %v647
        %v2840 = vunpack.c.l.b16 %v648
        %v2841 = vunpack.c.l.b16 %v649
        %v2842 = vunpack.c.l.b16 %v650
        %v2843 = vunpack.c.l.b16 %v651
        %v2844 = vunpack.c.l.b16 %v652
        %v2845 = vunpack.c.l.b16 %v653
        %v2846 = vunpack.c.l.b16 %v654
        %v2847 = vunpack.c.l.b16 %v655
        %v2848 = vunpack.c.l.b16 %v656
        %v2849 = vunpack.c.l.b16 %v657
        %v2850 = vunpack.c.l.b16 %v658
        %v2851 = vunpack.c.l.b16 %v659
        %v2852 = vunpack.c.l.b16 %v660
        %v2853 = vunpack.c.l.b16 %v661
        %v2854 = vunpack.c.l.b16 %v662
        %v2855 = vunpack.c.l.b16 %v663
        %v2856 = vunpack.c.l.b16 %v664
        %v2857 = vunpack.c.l.b16 %v665
        %v2858 = vunpack.c.l.b16 %v666
        %v2859 = vunpack.c.l.b16 %v667
        %v2860 = vunpack.c.l.b16 %v668
        %v2861 = vunpack.c.l.b16 %v669
        %v2862 = vunpack.c.l.b16 %v670
        %v2863 = vunpack.c.l.b16 %v671
        %v2864 = vunpack.c.l.b16 %v672
        %v2865 = vunpack.c.l.b16 %v673
        %v2866 = vunpack.c.l.b16 %v674
        %v2867 = vunpack.c.l.b16 %v675
        %v2868 = vunpack.c.l.b16 %v676
        %v2869 = vunpack.c.l.b16 %v677
        %v2870 = vunpack.c.l.b16 %v678
        %v2871 = vunpack.c.l.b16 %v679
        %v2872 = vunpack.c.l.b16 %v680
        %v2873 = vunpack.c.l.b16 %v681
        %v2874 = vunpack.c.l.b16 %v682
        %v2875 = vunpack.c.l.b16 %v683
        %v2876 = vunpack.c.l.b16 %v684
        %v2877 = vunpack.c.l.b16 %v685
        %v2878 = vunpack.c.l.b16 %v686
        %v2879 = vunpack.c.l.b16 %v687
        %v2880 = vunpack.c.l.b16 %v688
        %v2881 = vunpack.c.l.b16 %v689
        %v2882 = vunpack.c.l.b16 %v690
        %v2883 = vunpack.c.l.b16 %v691
        %v2884 = vunpack.c.l.b16 %v692
        %v2885 = vunpack.c.l.b16 %v693
        %v2886 = vunpack.c.l.b16 %v694
        %v2887 = vunpack.c.l.b16 %v695
        %v2888 = vunpack.c.l.b16 %v696
        %v2889 = vunpack.c.l.b16 %v697
        %v2890 = vunpack.c.l.b16 %v698
        %v2891 = vunpack.c.l.b16 %v699
        %v2892 = vunpack.c.l.b16 %v700
        %v2893 = vunpack.c.l.b16 %v701
        %v2894 = vunpack.c.l.b16 %v702
        %v2895 = vunpack.c.l.b16 %v703
        %v2896 = vunpack.c.l.b16 %v704
        %v2897 = vunpack.c.l.b16 %v705
        %v2898 = vunpack.c.l.b16 %v706
        %v2899 = vunpack.c.l.b16 %v707
        %v2900 = vunpack.c.l.b16 %v708
        %v2901 = vunpack.c.l.b16 %v709
        %v2902 = vunpack.c.l.b16 %v710
        %v2903 = vunpack.c.l.b16 %v711
        %v2904 = vunpack.c.l.b16 %v712
        %v2905 = vunpack.c.l.b16 %v713
        %v2906 = vunpack.c.l.b16 %v714
        %v2907 = vunpack.c.l.b16 %v715
        %v2908 = vunpack.c.l.b16 %v716
        %v2909 = vunpack.c.l.b16 %v717
        %v2910 = vunpack.c.l.b16 %v718
        %v2911 = vunpack.c.l.b16 %v719
        %v2912 = vunpack.c.l.b16 %v720
        %v2913 = vunpack.c.l.b16 %v721
        %v2914 = vunpack.c.l.b16 %v722
        %v2915 = vunpack.c.l.b16 %v723
        %v2916 = vunpack.c.l.b16 %v724
        %v2917 = vunpack.c.l.b16 %v725
        %v2918 = vunpack.c.l.b16 %v726
        %v2919 = vunpack.c.l.b16 %v727
        %v2920 = vunpack.c.l.b16 %v728
        %v2921 = vunpack.c.l.b16 %v729
        %v2922 = vunpack.c.l.b16 %v730
        %v2923 = vunpack.c.l.b16 %v731
        %v2924 = vunpack.c.l.b16 %v732
        %v2925 = vunpack.c.l.b16 %v733
        %v2926 = vunpack.c.l.b16 %v734
        %v2927 = vunpack.c.l.b16 %v735
        %v2928 = vunpack.c.l.b16 %v736
        %v2929 = vunpack.c.l.b16 %v737
        %v2930 = vunpack.c.l.b16 %v738
        %v2931 = vunpack.c.l.b16 %v739
        %v2932 = vunpack.c.l.b16 %v740
        %v2933 = vunpack.c.l.b16 %v741
        %v2934 = vunpack.c.l.b16 %v742
        %v2935 = vunpack.c.l.b16 %v743
        %v2936 = vunpack.c.l.b16 %v744
        %v2937 = vunpack.c.l.b16 %v745
        %v2938 = vunpack.c.l.b16 %v746
        %v2939 = vunpack.c.l.b16 %v747
        %v2940 = vunpack.c.l.b16 %v748
        %v2941 = vunpack.c.l.b16 %v749
        %v2942 = vunpack.c.l.b16 %v750
        %v2943 = vunpack.c.l.b16 %v751
        %v2944 = vunpack.c.l.b16 %v752
        %v2945 = vunpack.c.l.b16 %v753
        %v2946 = vunpack.c.l.b16 %v754
        %v2947 = vunpack.c.l.b16 %v755
        %v2948 = vunpack.c.l.b16 %v756
        %v2949 = vunpack.c.l.b16 %v757
        %v2950 = vunpack.c.l.b16 %v758
        %v2951 = vunpack.c.l.b16 %v759
        %v2952 = vunpack.c.l.b16 %v760
        %v2953 = vunpack.c.l.b16 %v761
        %v2954 = vunpack.c.l.b16 %v762
        %v2955 = vunpack.c.l.b16 %v763
        %v2956 = vunpack.c.l.b16 %v764
        %v2957 = vunpack.c.l.b16 %v765
        %v2958 = vunpack.c.l.b16 %v766
        %v2959 = vunpack.c.l.b16 %v767
        %v2960 = vunpack.c.l.b16 %v768
        %v2961 = vunpack.c.l.b16 %v769
        %v2962 = vunpack.c.l.b16 %v770
        %v2963 = vunpack.c.l.b16 %v771
        %v2964 = vunpack.c.l.b16 %v772
        %v2965 = vunpack.c.l.b16 %v773
        %v2966 = vunpack.c.l.b16 %v774
        %v2967 = vunpack.c.l.b16 %v775
        %v2968 = vunpack.c.l.b16 %v776
        %v2969 = vunpack.c.l.b16 %v777
        %v2970 = vunpack.c.l.b16 %v778
        %v2971 = vunpack.c.l.b16 %v779
        %v2972 = vunpack.c.l.b16 %v780
        %v2973 = vunpack.c.l.b16 %v781
        %v2974 = vunpack.c.l.b16 %v782
        %v2975 = vunpack.c.l.b16 %v783
        %v2976 = vunpack.c.l.b16 %v784
        %v2977 = vunpack.c.l.b16 %v785
        %v2978 = vunpack.c.l.b16 %v786
        %v2979 = vunpack.c.l.b16 %v787
        %v2980 = vunpack.c.l.b16 %v788
        %v2981 = vunpack.c.l.b16 %v789
        %v2982 = vunpack.c.l.b16 %v790
        %v2983 = vunpack.c.l.b16 %v791
        %v2984 = vunpack.c.l.b16 %v792
        %v2985 = vunpack.c.l.b16 %v793
        %v2986 = vunpack.c.l.b16 %v794
        %v2987 = vunpack.c.l.b16 %v795
        %v2988 = vunpack.c.l.b16 %v796
        %v2989 = vunpack.c.l.b16 %v797
        %v2990 = vunpack.c.l.b16 %v798
        %v2991 = vunpack.c.l.b16 %v799
        %v2992 = vunpack.c.l.b16 %v800
        %v2993 = vunpack.c.l.b16 %v801
        %v2994 = vunpack.c.l.b16 %v802
        %v2995 = vunpack.c.l.b16 %v803
        %v2996 = vunpack.c.l.b16 %v804
        %v2997 = vunpack.c.l.b16 %v805
        %v2998 = vunpack.c.l.b16 %v806
        %v2999 = vunpack.c.l.b16 %v807
        %v3000 = vunpack.c.l.b16 %v808
        %v3001 = vunpack.c.l.b16 %v809
        %v3002 = vunpack.c.l.b16 %v810
        %v3003 = vunpack.c.l.b16 %v811
        %v3004 = vunpack.c.l.b16 %v812
        %v3005 = vunpack.c.l.b16 %v813
        %v3006 = vunpack.c.l.b16 %v814
        %v3007 = vunpack.c.l.b16 %v815
        %v3008 = vunpack.c.l.b16 %v816
        %v3009 = vunpack.c.l.b16 %v817
        %v3010 = vunpack.c.l.b16 %v818
        %v3011 = vunpack.c.l.b16 %v819
        %v3012 = vunpack.c.l.b16 %v820
        %v3013 = vunpack.c.l.b16 %v821
        %v3014 = vunpack.c.l.b16 %v822
        %v3015 = vunpack.c.l.b16 %v823
        %v3016 = vunpack.c.l.b16 %v824
        %v3017 = vunpack.c.l.b16 %v825
        %v3018 = vunpack.c.l.b16 %v826
        %v3019 = vunpack.c.l.b16 %v827
        %v3020 = vunpack.c.l.b16 %v828
        %v3021 = vunpack.c.l.b16 %v829
        %v3022 = vunpack.c.l.b16 %v830
        %v3023 = vunpack.c.l.b16 %v831
        %v3024 = vunpack.c.l.b16 %v832
        %v3025 = vunpack.c.l.b16 %v833
        %v3026 = vunpack.c.l.b16 %v834
        %v3027 = vunpack.c.l.b16 %v835
        %v3028 = vunpack.c.l.b16 %v836
        %v3029 = vunpack.c.l.b16 %v837
        %v3030 = vunpack.c.l.b16 %v838
        %v3031 = vunpack.c.l.b16 %v839
        %v3032 = vunpack.c.l.b16 %v840
        %v3033 = vunpack.c.l.b16 %v841
        %v3034 = vunpack.c.l.b16 %v842
        %v3035 = vunpack.c.l.b16 %v843
        %v3036 = vunpack.c.l.b16 %v844
        %v3037 = vunpack.c.l.b16 %v845
        %v3038 = vunpack.c.l.b16 %v846
        %v3039 = vunpack.c.l.b16 %v847
        %v3040 = vunpack.c.l.b16 %v848
        %v3041 = vunpack.c.l.b16 %v849
        %v3042 = vunpack.c.l.b16 %v850
        %v3043 = vunpack.c.l.b16 %v851
        %v3044 = vunpack.c.l.b16 %v852
        %v3045 = vunpack.c.l.b16 %v853
        %v3046 = vunpack.c.l.b16 %v854
        %v3047 = vunpack.c.l.b16 %v855
        %v3048 = vunpack.c.l.b16 %v856
        %v3049 = vunpack.c.l.b16 %v857
        %v3050 = vunpack.c.l.b16 %v858
        %v3051 = vunpack.c.l.b16 %v859
        %v3052 = vunpack.c.l.b16 %v860
        %v3053 = vunpack.c.l.b16 %v861
        %v3054 = vunpack.c.l.b16 %v862
        %v3055 = vunpack.c.l.b16 %v863
        %v3056 = vunpack.c.l.b16 %v864
        %v3057 = vunpack.c.l.b16 %v865
        %v3058 = vunpack.c.l.b16 %v866
        %v3059 = vunpack.c.l.b16 %v867
        %v3060 = vunpack.c.l.b16 %v868
        %v3061 = vunpack.c.l.b16 %v869
        %v3062 = vunpack.c.l.b16 %v870
        %v3063 = vunpack.c.l.b16 %v871
        %v3064 = vunpack.c.l.b16 %v872
        %v3065 = vunpack.c.l.b16 %v873
        %v3066 = vunpack.c.l.b16 %v874
        %v3067 = vunpack.c.l.b16 %v875
        %v3068 = vunpack.c.l.b16 %v876
        %v3069 = vunpack.c.l.b16 %v877
        %v3070 = vunpack.c.l.b16 %v878
        %v3071 = vunpack.c.l.b16 %v879
        %v3072 = vunpack.c.l.b16 %v880
        %v3073 = vunpack.c.l.b16 %v881
        %v3074 = vunpack.c.l.b16 %v882
        %v3075 = vunpack.c.l.b16 %v883
        %v3076 = vunpack.c.l.b16 %v884
        %v3077 = vunpack.c.l.b16 %v885
        %v3078 = vunpack.c.l.b16 %v886
        %v3079 = vunpack.c.l.b16 %v887
        %v3080 = vunpack.c.l.b16 %v888
        %v3081 = vunpack.c.l.b16 %v889
        %v3082 = vunpack.c.l.b16 %v890
        %v3083 = vunpack.c.l.b16 %v891
        %v3084 = vunpack.c.l.b16 %v892
        %v3085 = vunpack.c.l.b16 %v893
        %v3086 = vunpack.c.l.b16 %v894
        %v3087 = vunpack.c.l.b16 %v895
        %v3088 = vunpack.c.l.b16 %v896
        %v3089 = vunpack.c.l.b16 %v897
        %v3090 = vunpack.c.l.b16 %v898
        %v3091 = vunpack.c.l.b16 %v899
        %v3092 = vunpack.c.l.b16 %v900
        %v3093 = vunpack.c.l.b16 %v901
        %v3094 = vunpack.c.l.b16 %v902
        %v3095 = vunpack.c.l.b16 %v903
        %v3096 = vunpack.c.l.b16 %v904
        %v3097 = vunpack.c.l.b16 %v905
        %v3098 = vunpack.c.l.b16 %v906
        %v3099 = vunpack.c.l.b16 %v907
        %v3100 = vunpack.c.l.b16 %v908
        %v3101 = vunpack.c.l.b16 %v909
        %v3102 = vunpack.c.l.b16 %v910
        %v3103 = vunpack.c.l.b16 %v911
        %v3104 = vunpack.c.l.b16 %v912
        %v3105 = vunpack.c.l.b16 %v913
        %v3106 = vunpack.c.l.b16 %v914
        %v3107 = vunpack.c.l.b16 %v915
        %v3108 = vunpack.c.l.b16 %v916
        %v3109 = vunpack.c.l.b16 %v917
        %v3110 = vunpack.c.l.b16 %v918
        %v3111 = vunpack.c.l.b16 %v919
        %v3112 = vunpack.c.l.b16 %v920
        %v3113 = vunpack.c.l.b16 %v921
        %v3114 = vunpack.c.l.b16 %v922
        %v3115 = vunpack.c.l.b16 %v923
        %v3116 = vunpack.c.l.b16 %v924
        %v3117 = vunpack.c.l.b16 %v925
        %v3118 = vunpack.c.l.b16 %v926
        %v3119 = vunpack.c.l.b16 %v927
        %v3120 = vunpack.c.l.b16 %v928
        %v3121 = vunpack.c.l.b16 %v929
        %v3122 = vunpack.c.l.b16 %v930
        %v3123 = vunpack.c.l.b16 %v931
        %v3124 = vunpack.c.l.b16 %v932
        %v3125 = vunpack.c.l.b16 %v933
        %v3126 = vunpack.c.l.b16 %v934
        %v3127 = vunpack.c.l.b16 %v935
        %v3128 = vunpack.c.l.b16 %v936
        %v3129 = vunpack.c.l.b16 %v937
        %v3130 = vunpack.c.l.b16 %v938
        %v3131 = vunpack.c.l.b16 %v939
        %v3132 = vunpack.c.l.b16 %v940
        %v3133 = vunpack.c.l.b16 %v941
        %v3134 = vunpack.c.l.b16 %v942
        %v3135 = vunpack.c.l.b16 %v943
        %v3136 = vunpack.c.l.b16 %v944
        %v3137 = vunpack.c.l.b16 %v945
        %v3138 = vunpack.c.l.b16 %v946
        %v3139 = vunpack.c.l.b16 %v947
        %v3140 = vunpack.c.l.b16 %v948
        %v3141 = vunpack.c.l.b16 %v949
        %v3142 = vunpack.c.l.b16 %v950
        %v3143 = vunpack.c.l.b16 %v951
        %v3144 = vunpack.c.l.b16 %v952
        %v3145 = vunpack.c.l.b16 %v953
        %v3146 = vunpack.c.l.b16 %v954
        %v3147 = vunpack.c.l.b16 %v955
        %v3148 = vunpack.c.l.b16 %v956
        %v3149 = vunpack.c.l.b16 %v957
        %v3150 = vunpack.c.l.b16 %v958
        %v3151 = vunpack.c.l.b16 %v959
        %v3152 = vunpack.c.l.b16 %v960
        %v3153 = vunpack.c.l.b16 %v961
        %v3154 = vunpack.c.l.b16 %v962
        %v3155 = vunpack.c.l.b16 %v963
        %v3156 = vunpack.c.l.b16 %v964
        %v3157 = vunpack.c.l.b16 %v965
        %v3158 = vunpack.c.l.b16 %v966
        %v3159 = vunpack.c.l.b16 %v967
        %v3160 = vunpack.c.l.b16 %v968
        %v3161 = vunpack.c.l.b16 %v969
        %v3162 = vunpack.c.l.b16 %v970
        %v3163 = vunpack.c.l.b16 %v971
        %v3164 = vunpack.c.l.b16 %v972
        %v3165 = vunpack.c.l.b16 %v973
        %v3166 = vunpack.c.l.b16 %v974
        %v3167 = vunpack.c.l.b16 %v975
        %v3168 = vunpack.c.l.b16 %v976
        %v3169 = vunpack.c.l.b16 %v977
        %v3170 = vunpack.c.l.b16 %v978
        %v3171 = vunpack.c.l.b16 %v979
        %v3172 = vunpack.c.l.b16 %v980
        %v3173 = vunpack.c.l.b16 %v981
        %v3174 = vunpack.c.l.b16 %v982
        %v3175 = vunpack.c.l.b16 %v983
        %v3176 = vunpack.c.l.b16 %v984
        %v3177 = vunpack.c.l.b16 %v985
        %v3178 = vunpack.c.l.b16 %v986
        %v3179 = vunpack.c.l.b16 %v987
        %v3180 = vunpack.c.l.b16 %v988
        %v3181 = vunpack.c.l.b16 %v989
        %v3182 = vunpack.c.l.b16 %v990
        %v3183 = vunpack.c.l.b16 %v991
        %v3184 = vunpack.c.l.b16 %v992
        %v3185 = vunpack.c.l.b16 %v993
        %v3186 = vunpack.c.l.b16 %v994
        %v3187 = vunpack.c.l.b16 %v995
        %v3188 = vunpack.c.l.b16 %v996
        %v3189 = vunpack.c.l.b16 %v997
        %v3190 = vunpack.c.l.b16 %v998
        %v3191 = vunpack.c.l.b16 %v999
        %v3192 = vunpack.c.l.b16 %v1000
        %v3193 = vunpack.c.l.b16 %v1001
        %v3194 = vunpack.c.l.b16 %v1002
        %v3195 = vunpack.c.l.b16 %v1003
        %v3196 = vunpack.c.l.b16 %v1004
        %v3197 = vunpack.c.l.b16 %v1005
        %v3198 = vunpack.c.l.b16 %v1006
        %v3199 = vunpack.c.l.b16 %v1007
        %v3200 = vunpack.c.l.b16 %v1008
        %v3201 = vunpack.c.l.b16 %v1009
        %v3202 = vunpack.c.l.b16 %v1010
        %v3203 = vunpack.c.l.b16 %v1011
        %v3204 = vunpack.c.l.b16 %v1012
        %v3205 = vunpack.c.l.b16 %v1013
        %v3206 = vunpack.c.l.b16 %v1014
        %v3207 = vunpack.c.l.b16 %v1015
        %v3208 = vunpack.c.l.b16 %v1016
        %v3209 = vunpack.c.l.b16 %v1017
        %v3210 = vunpack.c.l.b16 %v1018
        %v3211 = vunpack.c.l.b16 %v1019
        %v3212 = vunpack.c.l.b16 %v1020
        %v3213 = vunpack.c.l.b16 %v1021
        %v3214 = vunpack.c.l.b16 %v1022
        %v3215 = vunpack.c.l.b16 %v1023
        %v3216 = vunpack.c.l.b16 %v1024
        %v3217 = vunpack.c.l.b16 %v1025
        %v3218 = vunpack.c.l.b16 %v1026
        %v3219 = vunpack.c.l.b16 %v1027
        %v3220 = vunpack.c.l.b16 %v1028
        %v3221 = vunpack.c.l.b16 %v1029
        %v3222 = vunpack.c.l.b16 %v1030
        %v3223 = vunpack.c.l.b16 %v1031
        %v3224 = vunpack.c.l.b16 %v1032
        %v3225 = vunpack.c.l.b16 %v1033
        %v3226 = vunpack.c.l.b16 %v1034
        %v3227 = vunpack.c.l.b16 %v1035
        %v3228 = vunpack.c.l.b16 %v1036
        %v3229 = vunpack.c.l.b16 %v1037
        %v3230 = vunpack.c.l.b16 %v1038
        %v3231 = vunpack.c.l.b16 %v1039
        %v3232 = vunpack.c.l.b16 %v1040
        %v3233 = vunpack.c.l.b16 %v1041
        %v3234 = vunpack.c.l.b16 %v1042
        %v3235 = vunpack.c.l.b16 %v1043
        %v3236 = vunpack.c.l.b16 %v1044
        %v3237 = vunpack.c.l.b16 %v1045
        %v3238 = vunpack.c.l.b16 %v1046
        %v3239 = vunpack.c.l.b16 %v1047
        %v3240 = vunpack.c.l.b16 %v1048
        %v3241 = vunpack.c.l.b16 %v1049
        %v3242 = vunpack.c.l.b16 %v1050
        %v3243 = vunpack.c.l.b16 %v1051
        %v3244 = vunpack.c.l.b16 %v1052
        %v3245 = vunpack.c.l.b16 %v1053
        %v3246 = vunpack.c.l.b16 %v1054
        %v3247 = vunpack.c.l.b16 %v1055
        %v3248 = vunpack.c.l.b16 %v1056
        %v3249 = vunpack.c.l.b16 %v1057
        %v3250 = vunpack.c.l.b16 %v1058
        %v3251 = vunpack.c.l.b16 %v1059
        %v3252 = vunpack.c.l.b16 %v1060
        %v3253 = vunpack.c.l.b16 %v1061
        %v3254 = vunpack.c.l.b16 %v1062
        %v3255 = vunpack.c.l.b16 %v1063
        %v3256 = vunpack.c.l.b16 %v1064
        %v3257 = vunpack.c.l.b16 %v1065
        %v3258 = vunpack.c.l.b16 %v1066
        %v3259 = vunpack.c.l.b16 %v1067
        %v3260 = vunpack.c.l.b16 %v1068
        %v3261 = vunpack.c.l.b16 %v1069
        %v3262 = vunpack.c.l.b16 %v1070
        %v3263 = vunpack.c.l.b16 %v1071
        %v3264 = vunpack.c.l.b16 %v1072
        %v3265 = vunpack.c.l.b16 %v1073
        %v3266 = vunpack.c.l.b16 %v1074
        %v3267 = vunpack.c.l.b16 %v1075
        %v3268 = vunpack.c.l.b16 %v1076
        %v3269 = vunpack.c.l.b16 %v1077
        %v3270 = vunpack.c.l.b16 %v1078
        %v3271 = vunpack.c.l.b16 %v1079
        %v3272 = vunpack.c.l.b16 %v1080
        %v3273 = vunpack.c.l.b16 %v1081
        %v3274 = vunpack.c.l.b16 %v1082
        %v3275 = vunpack.c.l.b16 %v1083
        %v3276 = vunpack.c.l.b16 %v1084
        %v3277 = vunpack.c.l.b16 %v1085
        %v3278 = vunpack.c.l.b16 %v1086
        %v3279 = vunpack.c.l.b16 %v1087
        %v3280 = vunpack.c.l.b16 %v1088
        %v3281 = vunpack.c.l.b16 %v1089
        %v3282 = vunpack.c.l.b16 %v1090
        %v3283 = vunpack.c.l.b16 %v1091
        %v3284 = vunpack.c.l.b16 %v1092
        %v3285 = vunpack.c.l.b16 %v1093
        %v3286 = vunpack.c.l.b16 %v1094
        %v3287 = vunpack.c.l.b16 %v1095
        %v3288 = vunpack.c.l.b16 %v1096
        %v3289 = vunpack.c.l.b16 %v1097
        %v3290 = vunpack.c.l.b16 %v1098
        %v3291 = vunpack.c.l.b16 %v1099
        %v3292 = vunpack.c.l.b16 %v1100
        %v3293 = vunpack.c.l.b16 %v1101
        %v3294 = vunpack.c.l.b16 %v1102
        %v3295 = vunpack.c.l.b16 %v1103
        %v3296 = vunpack.c.l.b16 %v1104
        %v3297 = vunpack.c.l.b16 %v1105
        %v3298 = vunpack.c.l.b16 %v1106
        %v3299 = vunpack.c.l.b16 %v1107
        %v3300 = vunpack.c.l.b16 %v1108
        %v3301 = vunpack.c.l.b16 %v1109
        %v3302 = vunpack.c.l.b16 %v1110
        %v3303 = vunpack.c.l.b16 %v1111
        %v3304 = vunpack.c.l.b16 %v1112
        %v3305 = vunpack.c.l.b16 %v1113
        %v3306 = vunpack.c.l.b16 %v1114
        %v3307 = vunpack.c.l.b16 %v1115
        %v3308 = vunpack.c.l.b16 %v1116
        %v3309 = vunpack.c.l.b16 %v1117
        %v3310 = vunpack.c.l.b16 %v1118
        %v3311 = vunpack.c.l.b16 %v1119
        %v3312 = vunpack.c.l.b16 %v1120
        %v3313 = vunpack.c.l.b16 %v1121
        %v3314 = vunpack.c.l.b16 %v1122
        %v3315 = vunpack.c.l.b16 %v1123
        %v3316 = vunpack.c.l.b16 %v1124
        %v3317 = vunpack.c.l.b16 %v1125
        %v3318 = vunpack.c.l.b16 %v1126
        %v3319 = vunpack.c.l.b16 %v1127
        %v3320 = vunpack.c.l.b16 %v1128
        %v3321 = vunpack.c.l.b16 %v1129
        %v3322 = vunpack.c.l.b16 %v1130
        %v3323 = vunpack.c.l.b16 %v1131
        %v3324 = vunpack.c.l.b16 %v1132
        %v3325 = vunpack.c.l.b16 %v1133
        %v3326 = vunpack.c.l.b16 %v1134
        %v3327 = vunpack.c.l.b16 %v1135
        %v3328 = vunpack.c.l.b16 %v1136
        %v3329 = vunpack.c.l.b16 %v1137
        %v3330 = vunpack.c.l.b16 %v1138
        %v3331 = vunpack.c.l.b16 %v1139
        %v3332 = vunpack.c.l.b16 %v1140
        %v3333 = vunpack.c.l.b16 %v1141
        %v3334 = vunpack.c.l.b16 %v1142
        %v3335 = vunpack.c.l.b16 %v1143
        %v3336 = vunpack.c.l.b16 %v1144
        %v3337 = vunpack.c.l.b16 %v1145
        %v3338 = vunpack.c.l.b16 %v1146
        %v3339 = vunpack.c.l.b16 %v1147
        %v3340 = vunpack.c.l.b16 %v1148
        %v3341 = vunpack.c.l.b16 %v1149
        %v3342 = vunpack.c.l.b16 %v1150
        %v3343 = vunpack.c.l.b16 %v1151
        %v3344 = vunpack.c.l.b16 %v1152
        %v3345 = vunpack.c.l.b16 %v1153
        %v3346 = vunpack.c.l.b16 %v1154
        %v3347 = vunpack.c.l.b16 %v1155
        %v3348 = vunpack.c.l.b16 %v1156
        %v3349 = vunpack.c.l.b16 %v1157
        %v3350 = vunpack.c.l.b16 %v1158
        %v3351 = vunpack.c.l.b16 %v1159
        %v3352 = vunpack.c.l.b16 %v1160
        %v3353 = vunpack.c.l.b16 %v1161
        %v3354 = vunpack.c.l.b16 %v1162
        %v3355 = vunpack.c.l.b16 %v1163
        %v3356 = vunpack.c.l.b16 %v1164
        %v3357 = vunpack.c.l.b16 %v1165
        %v3358 = vunpack.c.l.b16 %v1166
        %v3359 = vunpack.c.l.b16 %v1167
        %v3360 = vunpack.c.l.b16 %v1168
        %v3361 = vunpack.c.l.b16 %v1169
        %v3362 = vunpack.c.l.b16 %v1170
        %v3363 = vunpack.c.l.b16 %v1171
        %v3364 = vunpack.c.l.b16 %v1172
        %v3365 = vunpack.c.l.b16 %v1173
        %v3366 = vunpack.c.l.b16 %v1174
        %v3367 = vunpack.c.l.b16 %v1175
        %v3368 = vunpack.c.l.b16 %v1176
        %v3369 = vunpack.c.l.b16 %v1177
        %v3370 = vunpack.c.l.b16 %v1178
        %v3371 = vunpack.c.l.b16 %v1179
        %v3372 = vunpack.c.l.b16 %v1180
        %v3373 = vunpack.c.l.b16 %v1181
        %v3374 = vunpack.c.l.b16 %v1182
        %v3375 = vunpack.c.l.b16 %v1183
        %v3376 = vunpack.c.l.b16 %v1184
        %v3377 = vunpack.c.l.b16 %v1185
        %v3378 = vunpack.c.l.b16 %v1186
        %v3379 = vunpack.c.l.b16 %v1187
        %v3380 = vunpack.c.l.b16 %v1188
        %v3381 = vunpack.c.l.b16 %v1189
        %v3382 = vunpack.c.l.b16 %v1190
        %v3383 = vunpack.c.l.b16 %v1191
        %v3384 = vunpack.c.l.b16 %v1192
        %v3385 = vunpack.c.l.b16 %v1193
        %v3386 = vunpack.c.l.b16 %v1194
        %v3387 = vunpack.c.l.b16 %v1195
        %v3388 = vunpack.c.l.b16 %v1196
        %v3389 = vunpack.c.l.b16 %v1197
        %v3390 = vunpack.c.l.b16 %v1198
        %v3391 = vunpack.c.l.b16 %v1199
        %v3392 = vunpack.c.l.b16 %v1200
        %v3393 = vunpack.c.l.b16 %v1201
        %v3394 = vunpack.c.l.b16 %v1202
        %v3395 = vunpack.c.l.b16 %v1203
        %v3396 = vunpack.c.l.b16 %v1204
        %v3397 = vunpack.c.l.b16 %v1205
        %v3398 = vunpack.c.l.b16 %v1206
        %v3399 = vunpack.c.l.b16 %v1207
        %v3400 = vunpack.c.l.b16 %v1208
        %v3401 = vunpack.c.l.b16 %v1209
        %v3402 = vunpack.c.l.b16 %v1210
        %v3403 = vunpack.c.l.b16 %v1211
        %v3404 = vunpack.c.l.b16 %v1212
        %v3405 = vunpack.c.l.b16 %v1213
        %v3406 = vunpack.c.l.b16 %v1214
        %v3407 = vunpack.c.l.b16 %v1215
        %v3408 = vunpack.c.l.b16 %v1216
        %v3409 = vunpack.c.l.b16 %v1217
        %v3410 = vunpack.c.l.b16 %v1218
        %v3411 = vunpack.c.l.b16 %v1219
        %v3412 = vunpack.c.l.b16 %v1220
        %v3413 = vunpack.c.l.b16 %v1221
        %v3414 = vunpack.c.l.b16 %v1222
        %v3415 = vunpack.c.l.b16 %v1223
        %v3416 = vunpack.c.l.b16 %v1224
        %v3417 = vunpack.c.l.b16 %v1225
        %v3418 = vunpack.c.l.b16 %v1226
        %v3419 = vunpack.c.l.b16 %v1227
        %v3420 = vunpack.c.l.b16 %v1228
        %v3421 = vunpack.c.l.b16 %v1229
        %v3422 = vunpack.c.l.b16 %v1230
        %v3423 = vunpack.c.l.b16 %v1231
        %v3424 = vunpack.c.l.b16 %v1232
        %v3425 = vunpack.c.l.b16 %v1233
        %v3426 = vunpack.c.l.b16 %v1234
        %v3427 = vunpack.c.l.b16 %v1235
        %v3428 = vunpack.c.l.b16 %v1236
        %v3429 = vunpack.c.l.b16 %v1237
        %v3430 = vunpack.c.l.b16 %v1238
        %v3431 = vunpack.c.l.b16 %v1239
        %v3432 = vunpack.c.l.b16 %v1240
        %v3433 = vunpack.c.l.b16 %v1241
        %v3434 = vunpack.c.l.b16 %v1242
        %v3435 = vunpack.c.l.b16 %v1243
        %v3436 = vunpack.c.l.b16 %v1244
        %v3437 = vunpack.c.l.b16 %v1245
        %v3438 = vunpack.c.l.b16 %v1246
        %v3439 = vunpack.c.l.b16 %v1247
        %v3440 = vunpack.c.l.b16 %v1248
        %v3441 = vunpack.c.l.b16 %v1249
        %v3442 = vunpack.c.l.b16 %v1250
        %v3443 = vunpack.c.l.b16 %v1251
        %v3444 = vunpack.c.l.b16 %v1252
        %v3445 = vunpack.c.l.b16 %v1253
        %v3446 = vunpack.c.l.b16 %v1254
        %v3447 = vunpack.c.l.b16 %v1255
        %v3448 = vunpack.c.l.b16 %v1256
        %v3449 = vunpack.c.l.b16 %v1257
        %v3450 = vunpack.c.l.b16 %v1258
        %v3451 = vunpack.c.l.b16 %v1259
        %v3452 = vunpack.c.l.b16 %v1260
        %v3453 = vunpack.c.l.b16 %v1261
        %v3454 = vunpack.c.l.b16 %v1262
        %v3455 = vunpack.c.l.b16 %v1263
        %v3456 = vunpack.c.l.b16 %v1264
        %v3457 = vunpack.c.l.b16 %v1265
        %v3458 = vunpack.c.l.b16 %v1266
        %v3459 = vunpack.c.l.b16 %v1267
        %v3460 = vunpack.c.l.b16 %v1268
        %v3461 = vunpack.c.l.b16 %v1269
        %v3462 = vpack.c.b16 %v2439, %v2438
        %v3463 = vpack.c.b16 %v2441, %v2440
        %v3464 = vpack.c.b16 %v2443, %v2442
        %v3465 = vpack.c.b16 %v2445, %v2444
        %v3466 = vpack.c.b16 %v2447, %v2446
        %v3467 = vpack.c.b16 %v2449, %v2448
        %v3468 = vpack.c.b16 %v2451, %v2450
        %v3469 = vpack.c.b16 %v2453, %v2452
        %v3470 = vpack.c.b16 %v2455, %v2454
        %v3471 = vpack.c.b16 %v2457, %v2456
        %v3472 = vpack.c.b16 %v2459, %v2458
        %v3473 = vpack.c.b16 %v2461, %v2460
        %v3474 = vpack.c.b16 %v2463, %v2462
        %v3475 = vpack.c.b16 %v2465, %v2464
        %v3476 = vpack.c.b16 %v2467, %v2466
        %v3477 = vpack.c.b16 %v2469, %v2468
        %v3478 = vpack.c.b16 %v2471, %v2470
        %v3479 = vpack.c.b16 %v2473, %v2472
        %v3480 = vpack.c.b16 %v2475, %v2474
        %v3481 = vpack.c.b16 %v2477, %v2476
        %v3482 = vpack.c.b16 %v2479, %v2478
        %v3483 = vpack.c.b16 %v2481, %v2480
        %v3484 = vpack.c.b16 %v2483, %v2482
        %v3485 = vpack.c.b16 %v2485, %v2484
        %v3486 = vpack.c.b16 %v2487, %v2486
        %v3487 = vpack.c.b16 %v2489, %v2488
        %v3488 = vpack.c.b16 %v2491, %v2490
        %v3489 = vpack.c.b16 %v2493, %v2492
        %v3490 = vpack.c.b16 %v2495, %v2494
        %v3491 = vpack.c.b16 %v2497, %v2496
        %v3492 = vpack.c.b16 %v2499, %v2498
        %v3493 = vpack.c.b16 %v2501, %v2500
        %v3494 = vpack.c.b16 %v2503, %v2502
        %v3495 = vpack.c.b16 %v2505, %v2504
        %v3496 = vpack.c.b16 %v2507, %v2506
        %v3497 = vpack.c.b16 %v2509, %v2508
        %v3498 = vpack.c.b16 %v2511, %v2510
        %v3499 = vpack.c.b16 %v2513, %v2512
        %v3500 = vpack.c.b16 %v2515, %v2514
        %v3501 = vpack.c.b16 %v2517, %v2516
        %v3502 = vpack.c.b16 %v2519, %v2518
        %v3503 = vpack.c.b16 %v2521, %v2520
        %v3504 = vpack.c.b16 %v2523, %v2522
        %v3505 = vpack.c.b16 %v2525, %v2524
        %v3506 = vpack.c.b16 %v2527, %v2526
        %v3507 = vpack.c.b16 %v2529, %v2528
        %v3508 = vpack.c.b16 %v2531, %v2530
        %v3509 = vpack.c.b16 %v2533, %v2532
        %v3510 = vpack.c.b16 %v2535, %v2534
        %v3511 = vpack.c.b16 %v2537, %v2536
        %v3512 = vpack.c.b16 %v2539, %v2538
        %v3513 = vpack.c.b16 %v2541, %v2540
        %v3514 = vpack.c.b16 %v2543, %v2542
        %v3515 = vpack.c.b16 %v2545, %v2544
        %v3516 = vpack.c.b16 %v2547, %v2546
        %v3517 = vpack.c.b16 %v2549, %v2548
        %v3518 = vpack.c.b16 %v2551, %v2550
        %v3519 = vpack.c.b16 %v2553, %v2552
        %v3520 = vpack.c.b16 %v2555, %v2554
        %v3521 = vpack.c.b16 %v2557, %v2556
        %v3522 = vpack.c.b16 %v2559, %v2558
        %v3523 = vpack.c.b16 %v2561, %v2560
        %v3524 = vpack.c.b16 %v2563, %v2562
        %v3525 = vpack.c.b16 %v2565, %v2564
        %v3526 = vpack.c.b16 %v2567, %v2566
        %v3527 = vpack.c.b16 %v2569, %v2568
        %v3528 = vpack.c.b16 %v2571, %v2570
        %v3529 = vpack.c.b16 %v2573, %v2572
        %v3530 = vpack.c.b16 %v2575, %v2574
        %v3531 = vpack.c.b16 %v2577, %v2576
        %v3532 = vpack.c.b16 %v2579, %v2578
        %v3533 = vpack.c.b16 %v2581, %v2580
        %v3534 = vpack.c.b16 %v2583, %v2582
        %v3535 = vpack.c.b16 %v2585, %v2584
        %v3536 = vpack.c.b16 %v2587, %v2586
        %v3537 = vpack.c.b16 %v2589, %v2588
        %v3538 = vpack.c.b16 %v2591, %v2590
        %v3539 = vpack.c.b16 %v2593, %v2592
        %v3540 = vpack.c.b16 %v2595, %v2594
        %v3541 = vpack.c.b16 %v2597, %v2596
        %v3542 = vpack.c.b16 %v2599, %v2598
        %v3543 = vpack.c.b16 %v2601, %v2600
        %v3544 = vpack.c.b16 %v2603, %v2602
        %v3545 = vpack.c.b16 %v2605, %v2604
        %v3546 = vpack.c.b16 %v2607, %v2606
        %v3547 = vpack.c.b16 %v2609, %v2608
        %v3548 = vpack.c.b16 %v2611, %v2610
        %v3549 = vpack.c.b16 %v2613, %v2612
        %v3550 = vpack.c.b16 %v2615, %v2614
        %v3551 = vpack.c.b16 %v2617, %v2616
        %v3552 = vpack.c.b16 %v2619, %v2618
        %v3553 = vpack.c.b16 %v2621, %v2620
        %v3554 = vpack.c.b16 %v2623, %v2622
        %v3555 = vpack.c.b16 %v2625, %v2624
        %v3556 = vpack.c.b16 %v2627, %v2626
        %v3557 = vpack.c.b16 %v2629, %v2628
        %v3558 = vpack.c.b16 %v2631, %v2630
        %v3559 = vpack.c.b16 %v2633, %v2632
        %v3560 = vpack.c.b16 %v2635, %v2634
        %v3561 = vpack.c.b16 %v2637, %v2636
        %v3562 = vpack.c.b16 %v2639, %v2638
        %v3563 = vpack.c.b16 %v2641, %v2640
        %v3564 = vpack.c.b16 %v2643, %v2642
        %v3565 = vpack.c.b16 %v2645, %v2644
        %v3566 = vpack.c.b16 %v2647, %v2646
        %v3567 = vpack.c.b16 %v2649, %v2648
        %v3568 = vpack.c.b16 %v2651, %v2650
        %v3569 = vpack.c.b16 %v2653, %v2652
        %v3570 = vpack.c.b16 %v2655, %v2654
        %v3571 = vpack.c.b16 %v2657, %v2656
        %v3572 = vpack.c.b16 %v2659, %v2658
        %v3573 = vpack.c.b16 %v2661, %v2660
        %v3574 = vpack.c.b16 %v2663, %v2662
        %v3575 = vpack.c.b16 %v2665, %v2664
        %v3576 = vpack.c.b16 %v2667, %v2666
        %v3577 = vpack.c.b16 %v2669, %v2668
        %v3578 = vpack.c.b16 %v2671, %v2670
        %v3579 = vpack.c.b16 %v2673, %v2672
        %v3580 = vpack.c.b16 %v2675, %v2674
        %v3581 = vpack.c.b16 %v2677, %v2676
        %v3582 = vpack.c.b16 %v2679, %v2678
        %v3583 = vpack.c.b16 %v2681, %v2680
        %v3584 = vpack.c.b16 %v2683, %v2682
        %v3585 = vpack.c.b16 %v2685, %v2684
        %v3586 = vpack.c.b16 %v2687, %v2686
        %v3587 = vpack.c.b16 %v2689, %v2688
        %v3588 = vpack.c.b16 %v2691, %v2690
        %v3589 = vpack.c.b16 %v2693, %v2692
        %v3590 = vpack.c.b16 %v2695, %v2694
        %v3591 = vpack.c.b16 %v2697, %v2696
        %v3592 = vpack.c.b16 %v2699, %v2698
        %v3593 = vpack.c.b16 %v2701, %v2700
        %v3594 = vpack.c.b16 %v2703, %v2702
        %v3595 = vpack.c.b16 %v2705, %v2704
        %v3596 = vpack.c.b16 %v2707, %v2706
        %v3597 = vpack.c.b16 %v2709, %v2708
        %v3598 = vpack.c.b16 %v2711, %v2710
        %v3599 = vpack.c.b16 %v2713, %v2712
        %v3600 = vpack.c.b16 %v2715, %v2714
        %v3601 = vpack.c.b16 %v2717, %v2716
        %v3602 = vpack.c.b16 %v2719, %v2718
        %v3603 = vpack.c.b16 %v2721, %v2720
        %v3604 = vpack.c.b16 %v2723, %v2722
        %v3605 = vpack.c.b16 %v2725, %v2724
        %v3606 = vpack.c.b16 %v2727, %v2726
        %v3607 = vpack.c.b16 %v2729, %v2728
        %v3608 = vpack.c.b16 %v2731, %v2730
        %v3609 = vpack.c.b16 %v2733, %v2732
        %v3610 = vpack.c.b16 %v2735, %v2734
        %v3611 = vpack.c.b16 %v2737, %v2736
        %v3612 = vpack.c.b16 %v2739, %v2738
        %v3613 = vpack.c.b16 %v2741, %v2740
        %v3614 = vpack.c.b16 %v2743, %v2742
        %v3615 = vpack.c.b16 %v2745, %v2744
        %v3616 = vpack.c.b16 %v2747, %v2746
        %v3617 = vpack.c.b16 %v2749, %v2748
        %v3618 = vpack.c.b16 %v2751, %v2750
        %v3619 = vpack.c.b16 %v2753, %v2752
        %v3620 = vpack.c.b16 %v2755, %v2754
        %v3621 = vpack.c.b16 %v2757, %v2756
        %v3622 = vpack.c.b16 %v2759, %v2758
        %v3623 = vpack.c.b16 %v2761, %v2760
        %v3624 = vpack.c.b16 %v2763, %v2762
        %v3625 = vpack.c.b16 %v2765, %v2764
        %v3626 = vpack.c.b16 %v2767, %v2766
        %v3627 = vpack.c.b16 %v2769, %v2768
        %v3628 = vpack.c.b16 %v2771, %v2770
        %v3629 = vpack.c.b16 %v2773, %v2772
        %v3630 = vpack.c.b16 %v2775, %v2774
        %v3631 = vpack.c.b16 %v2777, %v2776
        %v3632 = vpack.c.b16 %v2779, %v2778
        %v3633 = vpack.c.b16 %v2781, %v2780
        %v3634 = vpack.c.b16 %v2783, %v2782
        %v3635 = vpack.c.b16 %v2785, %v2784
        %v3636 = vpack.c.b16 %v2787, %v2786
        %v3637 = vpack.c.b16 %v2789, %v2788
        %v3638 = vpack.c.b16 %v2791, %v2790
        %v3639 = vpack.c.b16 %v2793, %v2792
        %v3640 = vpack.c.b16 %v2795, %v2794
        %v3641 = vpack.c.b16 %v2797, %v2796
        %v3642 = vpack.c.b16 %v2799, %v2798
        %v3643 = vpack.c.b16 %v2801, %v2800
        %v3644 = vpack.c.b16 %v2803, %v2802
        %v3645 = vpack.c.b16 %v2805, %v2804
        %v3646 = vpack.c.b16 %v2807, %v2806
        %v3647 = vpack.c.b16 %v2809, %v2808
        %v3648 = vpack.c.b16 %v2811, %v2810
        %v3649 = vpack.c.b16 %v2813, %v2812
        %v3650 = vpack.c.b16 %v2815, %v2814
        %v3651 = vpack.c.b16 %v2817, %v2816
        %v3652 = vpack.c.b16 %v2819, %v2818
        %v3653 = vpack.c.b16 %v2821, %v2820
        %v3654 = vpack.c.b16 %v2823, %v2822
        %v3655 = vpack.c.b16 %v2825, %v2824
        %v3656 = vpack.c.b16 %v2827, %v2826
        %v3657 = vpack.c.b16 %v2829, %v2828
        %v3658 = vpack.c.b16 %v2831, %v2830
        %v3659 = vpack.c.b16 %v2833, %v2832
        %v3660 = vpack.c.b16 %v2835, %v2834
        %v3661 = vpack.c.b16 %v2837, %v2836
        %v3662 = vpack.c.b16 %v2839, %v2838
        %v3663 = vpack.c.b16 %v2841, %v2840
        %v3664 = vpack.c.b16 %v2843, %v2842
        %v3665 = vpack.c.b16 %v2845, %v2844
        %v3666 = vpack.c.b16 %v2847, %v2846
        %v3667 = vpack.c.b16 %v2849, %v2848
        %v3668 = vpack.c.b16 %v2851, %v2850
        %v3669 = vpack.c.b16 %v2853, %v2852
        %v3670 = vpack.c.b16 %v2855, %v2854
        %v3671 = vpack.c.b16 %v2857, %v2856
        %v3672 = vpack.c.b16 %v2859, %v2858
        %v3673 = vpack.c.b16 %v2861, %v2860
        %v3674 = vpack.c.b16 %v2863, %v2862
        %v3675 = vpack.c.b16 %v2865, %v2864
        %v3676 = vpack.c.b16 %v2867, %v2866
        %v3677 = vpack.c.b16 %v2869, %v2868
        %v3678 = vpack.c.b16 %v2871, %v2870
        %v3679 = vpack.c.b16 %v2873, %v2872
        %v3680 = vpack.c.b16 %v2875, %v2874
        %v3681 = vpack.c.b16 %v2877, %v2876
        %v3682 = vpack.c.b16 %v2879, %v2878
        %v3683 = vpack.c.b16 %v2881, %v2880
        %v3684 = vpack.c.b16 %v2883, %v2882
        %v3685 = vpack.c.b16 %v2885, %v2884
        %v3686 = vpack.c.b16 %v2887, %v2886
        %v3687 = vpack.c.b16 %v2889, %v2888
        %v3688 = vpack.c.b16 %v2891, %v2890
        %v3689 = vpack.c.b16 %v2893, %v2892
        %v3690 = vpack.c.b16 %v2895, %v2894
        %v3691 = vpack.c.b16 %v2897, %v2896
        %v3692 = vpack.c.b16 %v2899, %v2898
        %v3693 = vpack.c.b16 %v2901, %v2900
        %v3694 = vpack.c.b16 %v2903, %v2902
        %v3695 = vpack.c.b16 %v2905, %v2904
        %v3696 = vpack.c.b16 %v2907, %v2906
        %v3697 = vpack.c.b16 %v2909, %v2908
        %v3698 = vpack.c.b16 %v2911, %v2910
        %v3699 = vpack.c.b16 %v2913, %v2912
        %v3700 = vpack.c.b16 %v2915, %v2914
        %v3701 = vpack.c.b16 %v2917, %v2916
        %v3702 = vpack.c.b16 %v2919, %v2918
        %v3703 = vpack.c.b16 %v2921, %v2920
        %v3704 = vpack.c.b16 %v2923, %v2922
        %v3705 = vpack.c.b16 %v2925, %v2924
        %v3706 = vpack.c.b16 %v2927, %v2926
        %v3707 = vpack.c.b16 %v2929, %v2928
        %v3708 = vpack.c.b16 %v2931, %v2930
        %v3709 = vpack.c.b16 %v2933, %v2932
        %v3710 = vpack.c.b16 %v2935, %v2934
        %v3711 = vpack.c.b16 %v2937, %v2936
        %v3712 = vpack.c.b16 %v2939, %v2938
        %v3713 = vpack.c.b16 %v2941, %v2940
        %v3714 = vpack.c.b16 %v2943, %v2942
        %v3715 = vpack.c.b16 %v2945, %v2944
        %v3716 = vpack.c.b16 %v2947, %v2946
        %v3717 = vpack.c.b16 %v2949, %v2948
        %v3718 = vpack.c.b16 %v2951, %v2950
        %v3719 = vpack.c.b16 %v2953, %v2952
        %v3720 = vpack.c.b16 %v2955, %v2954
        %v3721 = vpack.c.b16 %v2957, %v2956
        %v3722 = vpack.c.b16 %v2959, %v2958
        %v3723 = vpack.c.b16 %v2961, %v2960
        %v3724 = vpack.c.b16 %v2963, %v2962
        %v3725 = vpack.c.b16 %v2965, %v2964
        %v3726 = vpack.c.b16 %v2967, %v2966
        %v3727 = vpack.c.b16 %v2969, %v2968
        %v3728 = vpack.c.b16 %v2971, %v2970
        %v3729 = vpack.c.b16 %v2973, %v2972
        %v3730 = vpack.c.b16 %v2975, %v2974
        %v3731 = vpack.c.b16 %v2977, %v2976
        %v3732 = vpack.c.b16 %v2979, %v2978
        %v3733 = vpack.c.b16 %v2981, %v2980
        %v3734 = vpack.c.b16 %v2983, %v2982
        %v3735 = vpack.c.b16 %v2985, %v2984
        %v3736 = vpack.c.b16 %v2987, %v2986
        %v3737 = vpack.c.b16 %v2989, %v2988
        %v3738 = vpack.c.b16 %v2991, %v2990
        %v3739 = vpack.c.b16 %v2993, %v2992
        %v3740 = vpack.c.b16 %v2995, %v2994
        %v3741 = vpack.c.b16 %v2997, %v2996
        %v3742 = vpack.c.b16 %v2999, %v2998
        %v3743 = vpack.c.b16 %v3001, %v3000
        %v3744 = vpack.c.b16 %v3003, %v3002
        %v3745 = vpack.c.b16 %v3005, %v3004
        %v3746 = vpack.c.b16 %v3007, %v3006
        %v3747 = vpack.c.b16 %v3009, %v3008
        %v3748 = vpack.c.b16 %v3011, %v3010
        %v3749 = vpack.c.b16 %v3013, %v3012
        %v3750 = vpack.c.b16 %v3015, %v3014
        %v3751 = vpack.c.b16 %v3017, %v3016
        %v3752 = vpack.c.b16 %v3019, %v3018
        %v3753 = vpack.c.b16 %v3021, %v3020
        %v3754 = vpack.c.b16 %v3023, %v3022
        %v3755 = vpack.c.b16 %v3025, %v3024
        %v3756 = vpack.c.b16 %v3027, %v3026
        %v3757 = vpack.c.b16 %v3029, %v3028
        %v3758 = vpack.c.b16 %v3031, %v3030
        %v3759 = vpack.c.b16 %v3033, %v3032
        %v3760 = vpack.c.b16 %v3035, %v3034
        %v3761 = vpack.c.b16 %v3037, %v3036
        %v3762 = vpack.c.b16 %v3039, %v3038
        %v3763 = vpack.c.b16 %v3041, %v3040
        %v3764 = vpack.c.b16 %v3043, %v3042
        %v3765 = vpack.c.b16 %v3045, %v3044
        %v3766 = vpack.c.b16 %v3047, %v3046
        %v3767 = vpack.c.b16 %v3049, %v3048
        %v3768 = vpack.c.b16 %v3051, %v3050
        %v3769 = vpack.c.b16 %v3053, %v3052
        %v3770 = vpack.c.b16 %v3055, %v3054
        %v3771 = vpack.c.b16 %v3057, %v3056
        %v3772 = vpack.c.b16 %v3059, %v3058
        %v3773 = vpack.c.b16 %v3061, %v3060
        %v3774 = vpack.c.b16 %v3063, %v3062
        %v3775 = vpack.c.b16 %v3065, %v3064
        %v3776 = vpack.c.b16 %v3067, %v3066
        %v3777 = vpack.c.b16 %v3069, %v3068
        %v3778 = vpack.c.b16 %v3071, %v3070
        %v3779 = vpack.c.b16 %v3073, %v3072
        %v3780 = vpack.c.b16 %v3075, %v3074
        %v3781 = vpack.c.b16 %v3077, %v3076
        %v3782 = vpack.c.b16 %v3079, %v3078
        %v3783 = vpack.c.b16 %v3081, %v3080
        %v3784 = vpack.c.b16 %v3083, %v3082
        %v3785 = vpack.c.b16 %v3085, %v3084
        %v3786 = vpack.c.b16 %v3087, %v3086
        %v3787 = vpack.c.b16 %v3089, %v3088
        %v3788 = vpack.c.b16 %v3091, %v3090
        %v3789 = vpack.c.b16 %v3093, %v3092
        %v3790 = vpack.c.b16 %v3095, %v3094
        %v3791 = vpack.c.b16 %v3097, %v3096
        %v3792 = vpack.c.b16 %v3099, %v3098
        %v3793 = vpack.c.b16 %v3101, %v3100
        %v3794 = vpack.c.b16 %v3103, %v3102
        %v3795 = vpack.c.b16 %v3105, %v3104
        %v3796 = vpack.c.b16 %v3107, %v3106
        %v3797 = vpack.c.b16 %v3109, %v3108
        %v3798 = vpack.c.b16 %v3111, %v3110
        %v3799 = vpack.c.b16 %v3113, %v3112
        %v3800 = vpack.c.b16 %v3115, %v3114
        %v3801 = vpack.c.b16 %v3117, %v3116
        %v3802 = vpack.c.b16 %v3119, %v3118
        %v3803 = vpack.c.b16 %v3121, %v3120
        %v3804 = vpack.c.b16 %v3123, %v3122
        %v3805 = vpack.c.b16 %v3125, %v3124
        %v3806 = vpack.c.b16 %v3127, %v3126
        %v3807 = vpack.c.b16 %v3129, %v3128
        %v3808 = vpack.c.b16 %v3131, %v3130
        %v3809 = vpack.c.b16 %v3133, %v3132
        %v3810 = vpack.c.b16 %v3135, %v3134
        %v3811 = vpack.c.b16 %v3137, %v3136
        %v3812 = vpack.c.b16 %v3139, %v3138
        %v3813 = vpack.c.b16 %v3141, %v3140
        %v3814 = vpack.c.b16 %v3143, %v3142
        %v3815 = vpack.c.b16 %v3145, %v3144
        %v3816 = vpack.c.b16 %v3147, %v3146
        %v3817 = vpack.c.b16 %v3149, %v3148
        %v3818 = vpack.c.b16 %v3151, %v3150
        %v3819 = vpack.c.b16 %v3153, %v3152
        %v3820 = vpack.c.b16 %v3155, %v3154
        %v3821 = vpack.c.b16 %v3157, %v3156
        %v3822 = vpack.c.b16 %v3159, %v3158
        %v3823 = vpack.c.b16 %v3161, %v3160
        %v3824 = vpack.c.b16 %v3163, %v3162
        %v3825 = vpack.c.b16 %v3165, %v3164
        %v3826 = vpack.c.b16 %v3167, %v3166
        %v3827 = vpack.c.b16 %v3169, %v3168
        %v3828 = vpack.c.b16 %v3171, %v3170
        %v3829 = vpack.c.b16 %v3173, %v3172
        %v3830 = vpack.c.b16 %v3175, %v3174
        %v3831 = vpack.c.b16 %v3177, %v3176
        %v3832 = vpack.c.b16 %v3179, %v3178
        %v3833 = vpack.c.b16 %v3181, %v3180
        %v3834 = vpack.c.b16 %v3183, %v3182
        %v3835 = vpack.c.b16 %v3185, %v3184
        %v3836 = vpack.c.b16 %v3187, %v3186
        %v3837 = vpack.c.b16 %v3189, %v3188
        %v3838 = vpack.c.b16 %v3191, %v3190
        %v3839 = vpack.c.b16 %v3193, %v3192
        %v3840 = vpack.c.b16 %v3195, %v3194
        %v3841 = vpack.c.b16 %v3197, %v3196
        %v3842 = vpack.c.b16 %v3199, %v3198
        %v3843 = vpack.c.b16 %v3201, %v3200
        %v3844 = vpack.c.b16 %v3203, %v3202
        %v3845 = vpack.c.b16 %v3205, %v3204
        %v3846 = vpack.c.b16 %v3207, %v3206
        %v3847 = vpack.c.b16 %v3209, %v3208
        %v3848 = vpack.c.b16 %v3211, %v3210
        %v3849 = vpack.c.b16 %v3213, %v3212
        %v3850 = vpack.c.b16 %v3215, %v3214
        %v3851 = vpack.c.b16 %v3217, %v3216
        %v3852 = vpack.c.b16 %v3219, %v3218
        %v3853 = vpack.c.b16 %v3221, %v3220
        %v3854 = vpack.c.b16 %v3223, %v3222
        %v3855 = vpack.c.b16 %v3225, %v3224
        %v3856 = vpack.c.b16 %v3227, %v3226
        %v3857 = vpack.c.b16 %v3229, %v3228
        %v3858 = vpack.c.b16 %v3231, %v3230
        %v3859 = vpack.c.b16 %v3233, %v3232
        %v3860 = vpack.c.b16 %v3235, %v3234
        %v3861 = vpack.c.b16 %v3237, %v3236
        %v3862 = vpack.c.b16 %v3239, %v3238
        %v3863 = vpack.c.b16 %v3241, %v3240
        %v3864 = vpack.c.b16 %v3243, %v3242
        %v3865 = vpack.c.b16 %v3245, %v3244
        %v3866 = vpack.c.b16 %v3247, %v3246
        %v3867 = vpack.c.b16 %v3249, %v3248
        %v3868 = vpack.c.b16 %v3251, %v3250
        %v3869 = vpack.c.b16 %v3253, %v3252
        %v3870 = vpack.c.b16 %v3255, %v3254
        %v3871 = vpack.c.b16 %v3257, %v3256
        %v3872 = vpack.c.b16 %v3259, %v3258
        %v3873 = vpack.c.b16 %v3261, %v3260
        %v3874 = vpack.c.b16 %v3263, %v3262
        %v3875 = vpack.c.b16 %v3265, %v3264
        %v3876 = vpack.c.b16 %v3267, %v3266
        %v3877 = vpack.c.b16 %v3269, %v3268
        %v3878 = vpack.c.b16 %v3271, %v3270
        %v3879 = vpack.c.b16 %v3273, %v3272
        %v3880 = vpack.c.b16 %v3275, %v3274
        %v3881 = vpack.c.b16 %v3277, %v3276
        %v3882 = vpack.c.b16 %v3279, %v3278
        %v3883 = vpack.c.b16 %v3281, %v3280
        %v3884 = vpack.c.b16 %v3283, %v3282
        %v3885 = vpack.c.b16 %v3285, %v3284
        %v3886 = vpack.c.b16 %v3287, %v3286
        %v3887 = vpack.c.b16 %v3289, %v3288
        %v3888 = vpack.c.b16 %v3291, %v3290
        %v3889 = vpack.c.b16 %v3293, %v3292
        %v3890 = vpack.c.b16 %v3295, %v3294
        %v3891 = vpack.c.b16 %v3297, %v3296
        %v3892 = vpack.c.b16 %v3299, %v3298
        %v3893 = vpack.c.b16 %v3301, %v3300
        %v3894 = vpack.c.b16 %v3303, %v3302
        %v3895 = vpack.c.b16 %v3305, %v3304
        %v3896 = vpack.c.b16 %v3307, %v3306
        %v3897 = vpack.c.b16 %v3309, %v3308
        %v3898 = vpack.c.b16 %v3311, %v3310
        %v3899 = vpack.c.b16 %v3313, %v3312
        %v3900 = vpack.c.b16 %v3315, %v3314
        %v3901 = vpack.c.b16 %v3317, %v3316
        %v3902 = vpack.c.b16 %v3319, %v3318
        %v3903 = vpack.c.b16 %v3321, %v3320
        %v3904 = vpack.c.b16 %v3323, %v3322
        %v3905 = vpack.c.b16 %v3325, %v3324
        %v3906 = vpack.c.b16 %v3327, %v3326
        %v3907 = vpack.c.b16 %v3329, %v3328
        %v3908 = vpack.c.b16 %v3331, %v3330
        %v3909 = vpack.c.b16 %v3333, %v3332
        %v3910 = vpack.c.b16 %v3335, %v3334
        %v3911 = vpack.c.b16 %v3337, %v3336
        %v3912 = vpack.c.b16 %v3339, %v3338
        %v3913 = vpack.c.b16 %v3341, %v3340
        %v3914 = vpack.c.b16 %v3343, %v3342
        %v3915 = vpack.c.b16 %v3345, %v3344
        %v3916 = vpack.c.b16 %v3347, %v3346
        %v3917 = vpack.c.b16 %v3349, %v3348
        %v3918 = vpack.c.b16 %v3351, %v3350
        %v3919 = vpack.c.b16 %v3353, %v3352
        %v3920 = vpack.c.b16 %v3355, %v3354
        %v3921 = vpack.c.b16 %v3357, %v3356
        %v3922 = vpack.c.b16 %v3359, %v3358
        %v3923 = vpack.c.b16 %v3361, %v3360
        %v3924 = vpack.c.b16 %v3363, %v3362
        %v3925 = vpack.c.b16 %v3365, %v3364
        %v3926 = vpack.c.b16 %v3367, %v3366
        %v3927 = vpack.c.b16 %v3369, %v3368
        %v3928 = vpack.c.b16 %v3371, %v3370
        %v3929 = vpack.c.b16 %v3373, %v3372
        %v3930 = vpack.c.b16 %v3375, %v3374
        %v3931 = vpack.c.b16 %v3377, %v3376
        %v3932 = vpack.c.b16 %v3379, %v3378
        %v3933 = vpack.c.b16 %v3381, %v3380
        %v3934 = vpack.c.b16 %v3383, %v3382
        %v3935 = vpack.c.b16 %v3385, %v3384
        %v3936 = vpack.c.b16 %v3387, %v3386
        %v3937 = vpack.c.b16 %v3389, %v3388
        %v3938 = vpack.c.b16 %v3391, %v3390
        %v3939 = vpack.c.b16 %v3393, %v3392
        %v3940 = vpack.c.b16 %v3395, %v3394
        %v3941 = vpack.c.b16 %v3397, %v3396
        %v3942 = vpack.c.b16 %v3399, %v3398
        %v3943 = vpack.c.b16 %v3401, %v3400
        %v3944 = vpack.c.b16 %v3403, %v3402
        %v3945 = vpack.c.b16 %v3405, %v3404
        %v3946 = vpack.c.b16 %v3407, %v3406
        %v3947 = vpack.c.b16 %v3409, %v3408
        %v3948 = vpack.c.b16 %v3411, %v3410
        %v3949 = vpack.c.b16 %v3413, %v3412
        %v3950 = vpack.c.b16 %v3415, %v3414
        %v3951 = vpack.c.b16 %v3417, %v3416
        %v3952 = vpack.c.b16 %v3419, %v3418
        %v3953 = vpack.c.b16 %v3421, %v3420
        %v3954 = vpack.c.b16 %v3423, %v3422
        %v3955 = vpack.c.b16 %v3425, %v3424
        %v3956 = vpack.c.b16 %v3427, %v3426
        %v3957 = vpack.c.b16 %v3429, %v3428
        %v3958 = vpack.c.b16 %v3431, %v3430
        %v3959 = vpack.c.b16 %v3433, %v3432
        %v3960 = vpack.c.b16 %v3435, %v3434
        %v3961 = vpack.c.b16 %v3437, %v3436
        %v3962 = vpack.c.b16 %v3439, %v3438
        %v3963 = vpack.c.b16 %v3441, %v3440
        %v3964 = vpack.c.b16 %v3443, %v3442
        %v3965 = vpack.c.b16 %v3445, %v3444
        %v3966 = vpack.c.b16 %v3447, %v3446
        %v3967 = vpack.c.b16 %v3449, %v3448
        %v3968 = vpack.c.b16 %v3451, %v3450
        %v3969 = vpack.c.b16 %v3453, %v3452
        %v3970 = vpack.c.b16 %v3455, %v3454
        %v3971 = vpack.c.b16 %v3457, %v3456
        %v3972 = vpack.c.b16 %v3459, %v3458
        %v3973 = vpack.c.b16 %v3461, %v3460
        %4486 = vmatpush.bf16.msra.mxu0 %v3469
        %4487 = vmatpush.bf16.msra.mxu0 %v3468
        %4488 = vmatpush.bf16.msra.mxu0 %v3467
        %4489 = vmatpush.bf16.msra.mxu0 %v3466
        %4490 = vmatpush.bf16.msra.mxu0 %v3465
        %4491 = vmatpush.bf16.msra.mxu0 %v3464
        %4492 = vmatpush.bf16.msra.mxu0 %v3463
        %4493 = vmatpush.bf16.msra.mxu0 %v3462
        %4494 = vmatmul.bf16.gmra.mxu0 %v1272
        %v4495 = vpop.f32.mrf.mxu0
        %v4496 = vadd.f32 0.0, %v4495
        %v4497 = vpop.f32.mrf.mxu0
        %4498 = vdwg.mxu0
        %4499 = vmatpush.bf16.msra.mxu0 %v3477
        %4500 = vmatpush.bf16.msra.mxu0 %v3476
        %4501 = vmatpush.bf16.msra.mxu0 %v3475
        %4502 = vmatpush.bf16.msra.mxu0 %v3474
        %4503 = vmatpush.bf16.msra.mxu0 %v3473
        %4504 = vmatpush.bf16.msra.mxu0 %v3472
        %4505 = vmatpush.bf16.msra.mxu0 %v3471
        %4506 = vmatpush.bf16.msra.mxu0 %v3470
        %4507 = vmatmul.bf16.gmra.mxu0 %v1273
        %v4508 = vpop.f32.mrf.mxu0
        %v4509 = vadd.f32 %v4496, %v4508
        %v4510 = vpop.f32.mrf.mxu0
        %4511 = vdwg.mxu0
        %4512 = vmatpush.bf16.msra.mxu0 %v3485
        %4513 = vmatpush.bf16.msra.mxu0 %v3484
        %4514 = vmatpush.bf16.msra.mxu0 %v3483
        %4515 = vmatpush.bf16.msra.mxu0 %v3482
        %4516 = vmatpush.bf16.msra.mxu0 %v3481
        %4517 = vmatpush.bf16.msra.mxu0 %v3480
        %4518 = vmatpush.bf16.msra.mxu0 %v3479
        %4519 = vmatpush.bf16.msra.mxu0 %v3478
        %4520 = vmatmul.bf16.gmra.mxu0 %v1274
        %v4521 = vpop.f32.mrf.mxu0
        %v4522 = vadd.f32 %v4509, %v4521
        %v4523 = vpop.f32.mrf.mxu0
        %4524 = vdwg.mxu0
        %4525 = vmatpush.bf16.msra.mxu0 %v3493
        %4526 = vmatpush.bf16.msra.mxu0 %v3492
        %4527 = vmatpush.bf16.msra.mxu0 %v3491
        %4528 = vmatpush.bf16.msra.mxu0 %v3490
        %4529 = vmatpush.bf16.msra.mxu0 %v3489
        %4530 = vmatpush.bf16.msra.mxu0 %v3488
        %4531 = vmatpush.bf16.msra.mxu0 %v3487
        %4532 = vmatpush.bf16.msra.mxu0 %v3486
        %4533 = vmatmul.bf16.gmra.mxu0 %v1275
        %v4534 = vpop.f32.mrf.mxu0
        %v4535 = vadd.f32 %v4522, %v4534
        %v4536 = vpop.f32.mrf.mxu0
        %4537 = vdwg.mxu0
        %4538 = vmatpush.bf16.msra.mxu0 %v3501
        %4539 = vmatpush.bf16.msra.mxu0 %v3500
        %4540 = vmatpush.bf16.msra.mxu0 %v3499
        %4541 = vmatpush.bf16.msra.mxu0 %v3498
        %4542 = vmatpush.bf16.msra.mxu0 %v3497
        %4543 = vmatpush.bf16.msra.mxu0 %v3496
        %4544 = vmatpush.bf16.msra.mxu0 %v3495
        %4545 = vmatpush.bf16.msra.mxu0 %v3494
        %4546 = vmatmul.bf16.gmra.mxu0 %v1276
        %v4547 = vpop.f32.mrf.mxu0
        %v4548 = vadd.f32 %v4535, %v4547
        %v4549 = vpop.f32.mrf.mxu0
        %4550 = vdwg.mxu0
        %4551 = vmatpush.bf16.msra.mxu0 %v3509
        %4552 = vmatpush.bf16.msra.mxu0 %v3508
        %4553 = vmatpush.bf16.msra.mxu0 %v3507
        %4554 = vmatpush.bf16.msra.mxu0 %v3506
        %4555 = vmatpush.bf16.msra.mxu0 %v3505
        %4556 = vmatpush.bf16.msra.mxu0 %v3504
        %4557 = vmatpush.bf16.msra.mxu0 %v3503
        %4558 = vmatpush.bf16.msra.mxu0 %v3502
        %4559 = vmatmul.bf16.gmra.mxu0 %v1277
        %v4560 = vpop.f32.mrf.mxu0
        %v4561 = vadd.f32 %v4548, %v4560
        %v4562 = vpop.f32.mrf.mxu0
        %4563 = vdwg.mxu0
        %4564 = vmatpush.bf16.msra.mxu0 %v3517
        %4565 = vmatpush.bf16.msra.mxu0 %v3516
        %4566 = vmatpush.bf16.msra.mxu0 %v3515
        %4567 = vmatpush.bf16.msra.mxu0 %v3514
        %4568 = vmatpush.bf16.msra.mxu0 %v3513
        %4569 = vmatpush.bf16.msra.mxu0 %v3512
        %4570 = vmatpush.bf16.msra.mxu0 %v3511
        %4571 = vmatpush.bf16.msra.mxu0 %v3510
        %4572 = vmatmul.bf16.gmra.mxu0 %v1278
        %v4573 = vpop.f32.mrf.mxu0
        %v4574 = vadd.f32 %v4561, %v4573
        %v4575 = vpop.f32.mrf.mxu0
        %4576 = vdwg.mxu0
        %4577 = vmatpush.bf16.msra.mxu0 %v3525
        %4578 = vmatpush.bf16.msra.mxu0 %v3524
        %4579 = vmatpush.bf16.msra.mxu0 %v3523
        %4580 = vmatpush.bf16.msra.mxu0 %v3522
        %4581 = vmatpush.bf16.msra.mxu0 %v3521
        %4582 = vmatpush.bf16.msra.mxu0 %v3520
        %4583 = vmatpush.bf16.msra.mxu0 %v3519
        %4584 = vmatpush.bf16.msra.mxu0 %v3518
        %4585 = vmatmul.bf16.gmra.mxu0 %v1279
        %v4586 = vpop.f32.mrf.mxu0
        %v4587 = vadd.f32 %v4574, %v4586
        %v4588 = vpop.f32.mrf.mxu0
        %4589 = vdwg.mxu0
        %4590 = vmatpush.bf16.msra.mxu0 %v3533
        %4591 = vmatpush.bf16.msra.mxu0 %v3532
        %4592 = vmatpush.bf16.msra.mxu0 %v3531
        %4593 = vmatpush.bf16.msra.mxu0 %v3530
        %4594 = vmatpush.bf16.msra.mxu0 %v3529
        %4595 = vmatpush.bf16.msra.mxu0 %v3528
        %4596 = vmatpush.bf16.msra.mxu0 %v3527
        %4597 = vmatpush.bf16.msra.mxu0 %v3526
        %4598 = vmatmul.bf16.gmra.mxu0 %v1282
        %v4599 = vpop.f32.mrf.mxu0
        %v4600 = vadd.f32 %v4587, %v4599
        %v4601 = vpop.f32.mrf.mxu0
        %4602 = vdwg.mxu0
        %4603 = vmatpush.bf16.msra.mxu0 %v3541
        %4604 = vmatpush.bf16.msra.mxu0 %v3540
        %4605 = vmatpush.bf16.msra.mxu0 %v3539
        %4606 = vmatpush.bf16.msra.mxu0 %v3538
        %4607 = vmatpush.bf16.msra.mxu0 %v3537
        %4608 = vmatpush.bf16.msra.mxu0 %v3536
        %4609 = vmatpush.bf16.msra.mxu0 %v3535
        %4610 = vmatpush.bf16.msra.mxu0 %v3534
        %4611 = vmatmul.bf16.gmra.mxu0 %v1283
        %v4612 = vpop.f32.mrf.mxu0
        %v4613 = vadd.f32 %v4600, %v4612
        %v4614 = vpop.f32.mrf.mxu0
        %4615 = vdwg.mxu0
        %4616 = vmatpush.bf16.msra.mxu0 %v3549
        %4617 = vmatpush.bf16.msra.mxu0 %v3548
        %4618 = vmatpush.bf16.msra.mxu0 %v3547
        %4619 = vmatpush.bf16.msra.mxu0 %v3546
        %4620 = vmatpush.bf16.msra.mxu0 %v3545
        %4621 = vmatpush.bf16.msra.mxu0 %v3544
        %4622 = vmatpush.bf16.msra.mxu0 %v3543
        %4623 = vmatpush.bf16.msra.mxu0 %v3542
        %4624 = vmatmul.bf16.gmra.mxu0 %v1284
        %v4625 = vpop.f32.mrf.mxu0
        %v4626 = vadd.f32 %v4613, %v4625
        %v4627 = vpop.f32.mrf.mxu0
        %4628 = vdwg.mxu0
        %4629 = vmatpush.bf16.msra.mxu0 %v3557
        %4630 = vmatpush.bf16.msra.mxu0 %v3556
        %4631 = vmatpush.bf16.msra.mxu0 %v3555
        %4632 = vmatpush.bf16.msra.mxu0 %v3554
        %4633 = vmatpush.bf16.msra.mxu0 %v3553
        %4634 = vmatpush.bf16.msra.mxu0 %v3552
        %4635 = vmatpush.bf16.msra.mxu0 %v3551
        %4636 = vmatpush.bf16.msra.mxu0 %v3550
        %4637 = vmatmul.bf16.gmra.mxu0 %v1285
        %v4638 = vpop.f32.mrf.mxu0
        %v4639 = vadd.f32 %v4626, %v4638
        %v4640 = vpop.f32.mrf.mxu0
        %4641 = vdwg.mxu0
        %4642 = vmatpush.bf16.msra.mxu0 %v3565
        %4643 = vmatpush.bf16.msra.mxu0 %v3564
        %4644 = vmatpush.bf16.msra.mxu0 %v3563
        %4645 = vmatpush.bf16.msra.mxu0 %v3562
        %4646 = vmatpush.bf16.msra.mxu0 %v3561
        %4647 = vmatpush.bf16.msra.mxu0 %v3560
        %4648 = vmatpush.bf16.msra.mxu0 %v3559
        %4649 = vmatpush.bf16.msra.mxu0 %v3558
        %4650 = vmatmul.bf16.gmra.mxu0 %v1286
        %v4651 = vpop.f32.mrf.mxu0
        %v4652 = vadd.f32 %v4639, %v4651
        %v4653 = vpop.f32.mrf.mxu0
        %4654 = vdwg.mxu0
        %4655 = vmatpush.bf16.msra.mxu0 %v3573
        %4656 = vmatpush.bf16.msra.mxu0 %v3572
        %4657 = vmatpush.bf16.msra.mxu0 %v3571
        %4658 = vmatpush.bf16.msra.mxu0 %v3570
        %4659 = vmatpush.bf16.msra.mxu0 %v3569
        %4660 = vmatpush.bf16.msra.mxu0 %v3568
        %4661 = vmatpush.bf16.msra.mxu0 %v3567
        %4662 = vmatpush.bf16.msra.mxu0 %v3566
        %4663 = vmatmul.bf16.gmra.mxu0 %v1287
        %v4664 = vpop.f32.mrf.mxu0
        %v4665 = vadd.f32 %v4652, %v4664
        %v4666 = vpop.f32.mrf.mxu0
        %4667 = vdwg.mxu0
        %4668 = vmatpush.bf16.msra.mxu0 %v3581
        %4669 = vmatpush.bf16.msra.mxu0 %v3580
        %4670 = vmatpush.bf16.msra.mxu0 %v3579
        %4671 = vmatpush.bf16.msra.mxu0 %v3578
        %4672 = vmatpush.bf16.msra.mxu0 %v3577
        %4673 = vmatpush.bf16.msra.mxu0 %v3576
        %4674 = vmatpush.bf16.msra.mxu0 %v3575
        %4675 = vmatpush.bf16.msra.mxu0 %v3574
        %4676 = vmatmul.bf16.gmra.mxu0 %v1288
        %v4677 = vpop.f32.mrf.mxu0
        %v4678 = vadd.f32 %v4665, %v4677
        %v4679 = vpop.f32.mrf.mxu0
        %4680 = vdwg.mxu0
        %4681 = vmatpush.bf16.msra.mxu0 %v3589
        %4682 = vmatpush.bf16.msra.mxu0 %v3588
        %4683 = vmatpush.bf16.msra.mxu0 %v3587
        %4684 = vmatpush.bf16.msra.mxu0 %v3586
        %4685 = vmatpush.bf16.msra.mxu0 %v3585
        %4686 = vmatpush.bf16.msra.mxu0 %v3584
        %4687 = vmatpush.bf16.msra.mxu0 %v3583
        %4688 = vmatpush.bf16.msra.mxu0 %v3582
        %4689 = vmatmul.bf16.gmra.mxu0 %v1289
        %v4690 = vpop.f32.mrf.mxu0
        %v4691 = vadd.f32 %v4678, %v4690
        %v4692 = vpop.f32.mrf.mxu0
        %4693 = vdwg.mxu0
        %4694 = vmatpush.bf16.msra.mxu0 %v3597
        %4695 = vmatpush.bf16.msra.mxu0 %v3596
        %4696 = vmatpush.bf16.msra.mxu0 %v3595
        %4697 = vmatpush.bf16.msra.mxu0 %v3594
        %4698 = vmatpush.bf16.msra.mxu0 %v3593
        %4699 = vmatpush.bf16.msra.mxu0 %v3592
        %4700 = vmatpush.bf16.msra.mxu0 %v3591
        %4701 = vmatpush.bf16.msra.mxu0 %v3590
        %4702 = vmatmul.bf16.gmra.mxu0 %v1292
        %v4703 = vpop.f32.mrf.mxu0
        %v4704 = vadd.f32 %v4691, %v4703
        %v4705 = vpop.f32.mrf.mxu0
        %4706 = vdwg.mxu0
        %4707 = vmatpush.bf16.msra.mxu0 %v3605
        %4708 = vmatpush.bf16.msra.mxu0 %v3604
        %4709 = vmatpush.bf16.msra.mxu0 %v3603
        %4710 = vmatpush.bf16.msra.mxu0 %v3602
        %4711 = vmatpush.bf16.msra.mxu0 %v3601
        %4712 = vmatpush.bf16.msra.mxu0 %v3600
        %4713 = vmatpush.bf16.msra.mxu0 %v3599
        %4714 = vmatpush.bf16.msra.mxu0 %v3598
        %4715 = vmatmul.bf16.gmra.mxu0 %v1293
        %v4716 = vpop.f32.mrf.mxu0
        %v4717 = vadd.f32 %v4704, %v4716
        %v4718 = vpop.f32.mrf.mxu0
        %4719 = vdwg.mxu0
        %4720 = vmatpush.bf16.msra.mxu0 %v3613
        %4721 = vmatpush.bf16.msra.mxu0 %v3612
        %4722 = vmatpush.bf16.msra.mxu0 %v3611
        %4723 = vmatpush.bf16.msra.mxu0 %v3610
        %4724 = vmatpush.bf16.msra.mxu0 %v3609
        %4725 = vmatpush.bf16.msra.mxu0 %v3608
        %4726 = vmatpush.bf16.msra.mxu0 %v3607
        %4727 = vmatpush.bf16.msra.mxu0 %v3606
        %4728 = vmatmul.bf16.gmra.mxu0 %v1294
        %v4729 = vpop.f32.mrf.mxu0
        %v4730 = vadd.f32 %v4717, %v4729
        %v4731 = vpop.f32.mrf.mxu0
        %4732 = vdwg.mxu0
        %4733 = vmatpush.bf16.msra.mxu0 %v3621
        %4734 = vmatpush.bf16.msra.mxu0 %v3620
        %4735 = vmatpush.bf16.msra.mxu0 %v3619
        %4736 = vmatpush.bf16.msra.mxu0 %v3618
        %4737 = vmatpush.bf16.msra.mxu0 %v3617
        %4738 = vmatpush.bf16.msra.mxu0 %v3616
        %4739 = vmatpush.bf16.msra.mxu0 %v3615
        %4740 = vmatpush.bf16.msra.mxu0 %v3614
        %4741 = vmatmul.bf16.gmra.mxu0 %v1295
        %v4742 = vpop.f32.mrf.mxu0
        %v4743 = vadd.f32 %v4730, %v4742
        %v4744 = vpop.f32.mrf.mxu0
        %4745 = vdwg.mxu0
        %4746 = vmatpush.bf16.msra.mxu0 %v3629
        %4747 = vmatpush.bf16.msra.mxu0 %v3628
        %4748 = vmatpush.bf16.msra.mxu0 %v3627
        %4749 = vmatpush.bf16.msra.mxu0 %v3626
        %4750 = vmatpush.bf16.msra.mxu0 %v3625
        %4751 = vmatpush.bf16.msra.mxu0 %v3624
        %4752 = vmatpush.bf16.msra.mxu0 %v3623
        %4753 = vmatpush.bf16.msra.mxu0 %v3622
        %4754 = vmatmul.bf16.gmra.mxu0 %v1296
        %v4755 = vpop.f32.mrf.mxu0
        %v4756 = vadd.f32 %v4743, %v4755
        %v4757 = vpop.f32.mrf.mxu0
        %4758 = vdwg.mxu0
        %4759 = vmatpush.bf16.msra.mxu0 %v3637
        %4760 = vmatpush.bf16.msra.mxu0 %v3636
        %4761 = vmatpush.bf16.msra.mxu0 %v3635
        %4762 = vmatpush.bf16.msra.mxu0 %v3634
        %4763 = vmatpush.bf16.msra.mxu0 %v3633
        %4764 = vmatpush.bf16.msra.mxu0 %v3632
        %4765 = vmatpush.bf16.msra.mxu0 %v3631
        %4766 = vmatpush.bf16.msra.mxu0 %v3630
        %4767 = vmatmul.bf16.gmra.mxu0 %v1297
        %v4768 = vpop.f32.mrf.mxu0
        %v4769 = vadd.f32 %v4756, %v4768
        %v4770 = vpop.f32.mrf.mxu0
        %4771 = vdwg.mxu0
        %4772 = vmatpush.bf16.msra.mxu0 %v3645
        %4773 = vmatpush.bf16.msra.mxu0 %v3644
        %4774 = vmatpush.bf16.msra.mxu0 %v3643
        %4775 = vmatpush.bf16.msra.mxu0 %v3642
        %4776 = vmatpush.bf16.msra.mxu0 %v3641
        %4777 = vmatpush.bf16.msra.mxu0 %v3640
        %4778 = vmatpush.bf16.msra.mxu0 %v3639
        %4779 = vmatpush.bf16.msra.mxu0 %v3638
        %4780 = vmatmul.bf16.gmra.mxu0 %v1298
        %v4781 = vpop.f32.mrf.mxu0
        %v4782 = vadd.f32 %v4769, %v4781
        %v4783 = vpop.f32.mrf.mxu0
        %4784 = vdwg.mxu0
        %4785 = vmatpush.bf16.msra.mxu0 %v3653
        %4786 = vmatpush.bf16.msra.mxu0 %v3652
        %4787 = vmatpush.bf16.msra.mxu0 %v3651
        %4788 = vmatpush.bf16.msra.mxu0 %v3650
        %4789 = vmatpush.bf16.msra.mxu0 %v3649
        %4790 = vmatpush.bf16.msra.mxu0 %v3648
        %4791 = vmatpush.bf16.msra.mxu0 %v3647
        %4792 = vmatpush.bf16.msra.mxu0 %v3646
        %4793 = vmatmul.bf16.gmra.mxu0 %v1299
        %v4794 = vpop.f32.mrf.mxu0
        %v4795 = vadd.f32 %v4782, %v4794
        %v4796 = vpop.f32.mrf.mxu0
        %4797 = vdwg.mxu0
        %4798 = vmatpush.bf16.msra.mxu0 %v3661
        %4799 = vmatpush.bf16.msra.mxu0 %v3660
        %4800 = vmatpush.bf16.msra.mxu0 %v3659
        %4801 = vmatpush.bf16.msra.mxu0 %v3658
        %4802 = vmatpush.bf16.msra.mxu0 %v3657
        %4803 = vmatpush.bf16.msra.mxu0 %v3656
        %4804 = vmatpush.bf16.msra.mxu0 %v3655
        %4805 = vmatpush.bf16.msra.mxu0 %v3654
        %4806 = vmatmul.bf16.gmra.mxu0 %v1302
        %v4807 = vpop.f32.mrf.mxu0
        %v4808 = vadd.f32 %v4795, %v4807
        %v4809 = vpop.f32.mrf.mxu0
        %4810 = vdwg.mxu0
        %4811 = vmatpush.bf16.msra.mxu0 %v3669
        %4812 = vmatpush.bf16.msra.mxu0 %v3668
        %4813 = vmatpush.bf16.msra.mxu0 %v3667
        %4814 = vmatpush.bf16.msra.mxu0 %v3666
        %4815 = vmatpush.bf16.msra.mxu0 %v3665
        %4816 = vmatpush.bf16.msra.mxu0 %v3664
        %4817 = vmatpush.bf16.msra.mxu0 %v3663
        %4818 = vmatpush.bf16.msra.mxu0 %v3662
        %4819 = vmatmul.bf16.gmra.mxu0 %v1303
        %v4820 = vpop.f32.mrf.mxu0
        %v4821 = vadd.f32 %v4808, %v4820
        %v4822 = vpop.f32.mrf.mxu0
        %4823 = vdwg.mxu0
        %4824 = vmatpush.bf16.msra.mxu0 %v3677
        %4825 = vmatpush.bf16.msra.mxu0 %v3676
        %4826 = vmatpush.bf16.msra.mxu0 %v3675
        %4827 = vmatpush.bf16.msra.mxu0 %v3674
        %4828 = vmatpush.bf16.msra.mxu0 %v3673
        %4829 = vmatpush.bf16.msra.mxu0 %v3672
        %4830 = vmatpush.bf16.msra.mxu0 %v3671
        %4831 = vmatpush.bf16.msra.mxu0 %v3670
        %4832 = vmatmul.bf16.gmra.mxu0 %v1304
        %v4833 = vpop.f32.mrf.mxu0
        %v4834 = vadd.f32 %v4821, %v4833
        %v4835 = vpop.f32.mrf.mxu0
        %4836 = vdwg.mxu0
        %4837 = vmatpush.bf16.msra.mxu0 %v3685
        %4838 = vmatpush.bf16.msra.mxu0 %v3684
        %4839 = vmatpush.bf16.msra.mxu0 %v3683
        %4840 = vmatpush.bf16.msra.mxu0 %v3682
        %4841 = vmatpush.bf16.msra.mxu0 %v3681
        %4842 = vmatpush.bf16.msra.mxu0 %v3680
        %4843 = vmatpush.bf16.msra.mxu0 %v3679
        %4844 = vmatpush.bf16.msra.mxu0 %v3678
        %4845 = vmatmul.bf16.gmra.mxu0 %v1305
        %v4846 = vpop.f32.mrf.mxu0
        %v4847 = vadd.f32 %v4834, %v4846
        %v4848 = vpop.f32.mrf.mxu0
        %4849 = vdwg.mxu0
        %4850 = vmatpush.bf16.msra.mxu0 %v3693
        %4851 = vmatpush.bf16.msra.mxu0 %v3692
        %4852 = vmatpush.bf16.msra.mxu0 %v3691
        %4853 = vmatpush.bf16.msra.mxu0 %v3690
        %4854 = vmatpush.bf16.msra.mxu0 %v3689
        %4855 = vmatpush.bf16.msra.mxu0 %v3688
        %4856 = vmatpush.bf16.msra.mxu0 %v3687
        %4857 = vmatpush.bf16.msra.mxu0 %v3686
        %4858 = vmatmul.bf16.gmra.mxu0 %v1306
        %v4859 = vpop.f32.mrf.mxu0
        %v4860 = vadd.f32 %v4847, %v4859
        %v4861 = vpop.f32.mrf.mxu0
        %4862 = vdwg.mxu0
        %4863 = vmatpush.bf16.msra.mxu0 %v3701
        %4864 = vmatpush.bf16.msra.mxu0 %v3700
        %4865 = vmatpush.bf16.msra.mxu0 %v3699
        %4866 = vmatpush.bf16.msra.mxu0 %v3698
        %4867 = vmatpush.bf16.msra.mxu0 %v3697
        %4868 = vmatpush.bf16.msra.mxu0 %v3696
        %4869 = vmatpush.bf16.msra.mxu0 %v3695
        %4870 = vmatpush.bf16.msra.mxu0 %v3694
        %4871 = vmatmul.bf16.gmra.mxu0 %v1307
        %v4872 = vpop.f32.mrf.mxu0
        %v4873 = vadd.f32 %v4860, %v4872
        %v4874 = vpop.f32.mrf.mxu0
        %4875 = vdwg.mxu0
        %4876 = vmatpush.bf16.msra.mxu0 %v3709
        %4877 = vmatpush.bf16.msra.mxu0 %v3708
        %4878 = vmatpush.bf16.msra.mxu0 %v3707
        %4879 = vmatpush.bf16.msra.mxu0 %v3706
        %4880 = vmatpush.bf16.msra.mxu0 %v3705
        %4881 = vmatpush.bf16.msra.mxu0 %v3704
        %4882 = vmatpush.bf16.msra.mxu0 %v3703
        %4883 = vmatpush.bf16.msra.mxu0 %v3702
        %4884 = vmatmul.bf16.gmra.mxu0 %v1308
        %v4885 = vpop.f32.mrf.mxu0
        %v4886 = vadd.f32 %v4873, %v4885
        %v4887 = vpop.f32.mrf.mxu0
        %4888 = vdwg.mxu0
        %4889 = vmatpush.bf16.msra.mxu0 %v3717
        %4890 = vmatpush.bf16.msra.mxu0 %v3716
        %4891 = vmatpush.bf16.msra.mxu0 %v3715
        %4892 = vmatpush.bf16.msra.mxu0 %v3714
        %4893 = vmatpush.bf16.msra.mxu0 %v3713
        %4894 = vmatpush.bf16.msra.mxu0 %v3712
        %4895 = vmatpush.bf16.msra.mxu0 %v3711
        %4896 = vmatpush.bf16.msra.mxu0 %v3710
        %4897 = vmatmul.bf16.gmra.mxu0 %v1309
        %v4898 = vpop.f32.mrf.mxu0
        %v4899 = vadd.f32 %v4886, %v4898
        %v4900 = vpop.f32.mrf.mxu0
        %4901 = vdwg.mxu0
        %4902 = vmatpush.bf16.msra.mxu0 %v3725
        %4903 = vmatpush.bf16.msra.mxu0 %v3724
        %4904 = vmatpush.bf16.msra.mxu0 %v3723
        %4905 = vmatpush.bf16.msra.mxu0 %v3722
        %4906 = vmatpush.bf16.msra.mxu0 %v3721
        %4907 = vmatpush.bf16.msra.mxu0 %v3720
        %4908 = vmatpush.bf16.msra.mxu0 %v3719
        %4909 = vmatpush.bf16.msra.mxu0 %v3718
        %4910 = vmatmul.bf16.gmra.mxu0 %v1312
        %v4911 = vpop.f32.mrf.mxu0
        %v4912 = vadd.f32 %v4899, %v4911
        %v4913 = vpop.f32.mrf.mxu0
        %4914 = vdwg.mxu0
        %4915 = vmatpush.bf16.msra.mxu0 %v3733
        %4916 = vmatpush.bf16.msra.mxu0 %v3732
        %4917 = vmatpush.bf16.msra.mxu0 %v3731
        %4918 = vmatpush.bf16.msra.mxu0 %v3730
        %4919 = vmatpush.bf16.msra.mxu0 %v3729
        %4920 = vmatpush.bf16.msra.mxu0 %v3728
        %4921 = vmatpush.bf16.msra.mxu0 %v3727
        %4922 = vmatpush.bf16.msra.mxu0 %v3726
        %4923 = vmatmul.bf16.gmra.mxu0 %v1313
        %v4924 = vpop.f32.mrf.mxu0
        %v4925 = vadd.f32 %v4912, %v4924
        %v4926 = vpop.f32.mrf.mxu0
        %4927 = vdwg.mxu0
        %4928 = vmatpush.bf16.msra.mxu0 %v3741
        %4929 = vmatpush.bf16.msra.mxu0 %v3740
        %4930 = vmatpush.bf16.msra.mxu0 %v3739
        %4931 = vmatpush.bf16.msra.mxu0 %v3738
        %4932 = vmatpush.bf16.msra.mxu0 %v3737
        %4933 = vmatpush.bf16.msra.mxu0 %v3736
        %4934 = vmatpush.bf16.msra.mxu0 %v3735
        %4935 = vmatpush.bf16.msra.mxu0 %v3734
        %4936 = vmatmul.bf16.gmra.mxu0 %v1314
        %v4937 = vpop.f32.mrf.mxu0
        %v4938 = vadd.f32 %v4925, %v4937
        %v4939 = vpop.f32.mrf.mxu0
        %4940 = vdwg.mxu0
        %4941 = vmatpush.bf16.msra.mxu0 %v3749
        %4942 = vmatpush.bf16.msra.mxu0 %v3748
        %4943 = vmatpush.bf16.msra.mxu0 %v3747
        %4944 = vmatpush.bf16.msra.mxu0 %v3746
        %4945 = vmatpush.bf16.msra.mxu0 %v3745
        %4946 = vmatpush.bf16.msra.mxu0 %v3744
        %4947 = vmatpush.bf16.msra.mxu0 %v3743
        %4948 = vmatpush.bf16.msra.mxu0 %v3742
        %4949 = vmatmul.bf16.gmra.mxu0 %v1315
        %v4950 = vpop.f32.mrf.mxu0
        %v4951 = vadd.f32 %v4938, %v4950
        %v4952 = vpop.f32.mrf.mxu0
        %4953 = vdwg.mxu0
        %4954 = vmatpush.bf16.msra.mxu0 %v3757
        %4955 = vmatpush.bf16.msra.mxu0 %v3756
        %4956 = vmatpush.bf16.msra.mxu0 %v3755
        %4957 = vmatpush.bf16.msra.mxu0 %v3754
        %4958 = vmatpush.bf16.msra.mxu0 %v3753
        %4959 = vmatpush.bf16.msra.mxu0 %v3752
        %4960 = vmatpush.bf16.msra.mxu0 %v3751
        %4961 = vmatpush.bf16.msra.mxu0 %v3750
        %4962 = vmatmul.bf16.gmra.mxu0 %v1316
        %v4963 = vpop.f32.mrf.mxu0
        %v4964 = vadd.f32 %v4951, %v4963
        %v4965 = vpop.f32.mrf.mxu0
        %4966 = vdwg.mxu0
        %4967 = vmatpush.bf16.msra.mxu0 %v3765
        %4968 = vmatpush.bf16.msra.mxu0 %v3764
        %4969 = vmatpush.bf16.msra.mxu0 %v3763
        %4970 = vmatpush.bf16.msra.mxu0 %v3762
        %4971 = vmatpush.bf16.msra.mxu0 %v3761
        %4972 = vmatpush.bf16.msra.mxu0 %v3760
        %4973 = vmatpush.bf16.msra.mxu0 %v3759
        %4974 = vmatpush.bf16.msra.mxu0 %v3758
        %4975 = vmatmul.bf16.gmra.mxu0 %v1317
        %v4976 = vpop.f32.mrf.mxu0
        %v4977 = vadd.f32 %v4964, %v4976
        %v4978 = vpop.f32.mrf.mxu0
        %4979 = vdwg.mxu0
        %4980 = vmatpush.bf16.msra.mxu0 %v3773
        %4981 = vmatpush.bf16.msra.mxu0 %v3772
        %4982 = vmatpush.bf16.msra.mxu0 %v3771
        %4983 = vmatpush.bf16.msra.mxu0 %v3770
        %4984 = vmatpush.bf16.msra.mxu0 %v3769
        %4985 = vmatpush.bf16.msra.mxu0 %v3768
        %4986 = vmatpush.bf16.msra.mxu0 %v3767
        %4987 = vmatpush.bf16.msra.mxu0 %v3766
        %4988 = vmatmul.bf16.gmra.mxu0 %v1318
        %v4989 = vpop.f32.mrf.mxu0
        %v4990 = vadd.f32 %v4977, %v4989
        %v4991 = vpop.f32.mrf.mxu0
        %4992 = vdwg.mxu0
        %4993 = vmatpush.bf16.msra.mxu0 %v3781
        %4994 = vmatpush.bf16.msra.mxu0 %v3780
        %4995 = vmatpush.bf16.msra.mxu0 %v3779
        %4996 = vmatpush.bf16.msra.mxu0 %v3778
        %4997 = vmatpush.bf16.msra.mxu0 %v3777
        %4998 = vmatpush.bf16.msra.mxu0 %v3776
        %4999 = vmatpush.bf16.msra.mxu0 %v3775
        %5000 = vmatpush.bf16.msra.mxu0 %v3774
        %5001 = vmatmul.bf16.gmra.mxu0 %v1319
        %v5002 = vpop.f32.mrf.mxu0
        %v5003 = vadd.f32 %v4990, %v5002
        %v5004 = vpop.f32.mrf.mxu0
        %5005 = vdwg.mxu0
        %5006 = vmatpush.bf16.msra.mxu0 %v3789
        %5007 = vmatpush.bf16.msra.mxu0 %v3788
        %5008 = vmatpush.bf16.msra.mxu0 %v3787
        %5009 = vmatpush.bf16.msra.mxu0 %v3786
        %5010 = vmatpush.bf16.msra.mxu0 %v3785
        %5011 = vmatpush.bf16.msra.mxu0 %v3784
        %5012 = vmatpush.bf16.msra.mxu0 %v3783
        %5013 = vmatpush.bf16.msra.mxu0 %v3782
        %5014 = vmatmul.bf16.gmra.mxu0 %v1322
        %v5015 = vpop.f32.mrf.mxu0
        %v5016 = vadd.f32 %v5003, %v5015
        %v5017 = vpop.f32.mrf.mxu0
        %5018 = vdwg.mxu0
        %5019 = vmatpush.bf16.msra.mxu0 %v3797
        %5020 = vmatpush.bf16.msra.mxu0 %v3796
        %5021 = vmatpush.bf16.msra.mxu0 %v3795
        %5022 = vmatpush.bf16.msra.mxu0 %v3794
        %5023 = vmatpush.bf16.msra.mxu0 %v3793
        %5024 = vmatpush.bf16.msra.mxu0 %v3792
        %5025 = vmatpush.bf16.msra.mxu0 %v3791
        %5026 = vmatpush.bf16.msra.mxu0 %v3790
        %5027 = vmatmul.bf16.gmra.mxu0 %v1323
        %v5028 = vpop.f32.mrf.mxu0
        %v5029 = vadd.f32 %v5016, %v5028
        %v5030 = vpop.f32.mrf.mxu0
        %5031 = vdwg.mxu0
        %5032 = vmatpush.bf16.msra.mxu0 %v3805
        %5033 = vmatpush.bf16.msra.mxu0 %v3804
        %5034 = vmatpush.bf16.msra.mxu0 %v3803
        %5035 = vmatpush.bf16.msra.mxu0 %v3802
        %5036 = vmatpush.bf16.msra.mxu0 %v3801
        %5037 = vmatpush.bf16.msra.mxu0 %v3800
        %5038 = vmatpush.bf16.msra.mxu0 %v3799
        %5039 = vmatpush.bf16.msra.mxu0 %v3798
        %5040 = vmatmul.bf16.gmra.mxu0 %v1324
        %v5041 = vpop.f32.mrf.mxu0
        %v5042 = vadd.f32 %v5029, %v5041
        %v5043 = vpop.f32.mrf.mxu0
        %5044 = vdwg.mxu0
        %5045 = vmatpush.bf16.msra.mxu0 %v3813
        %5046 = vmatpush.bf16.msra.mxu0 %v3812
        %5047 = vmatpush.bf16.msra.mxu0 %v3811
        %5048 = vmatpush.bf16.msra.mxu0 %v3810
        %5049 = vmatpush.bf16.msra.mxu0 %v3809
        %5050 = vmatpush.bf16.msra.mxu0 %v3808
        %5051 = vmatpush.bf16.msra.mxu0 %v3807
        %5052 = vmatpush.bf16.msra.mxu0 %v3806
        %5053 = vmatmul.bf16.gmra.mxu0 %v1325
        %v5054 = vpop.f32.mrf.mxu0
        %v5055 = vadd.f32 %v5042, %v5054
        %v5056 = vpop.f32.mrf.mxu0
        %5057 = vdwg.mxu0
        %5058 = vmatpush.bf16.msra.mxu0 %v3821
        %5059 = vmatpush.bf16.msra.mxu0 %v3820
        %5060 = vmatpush.bf16.msra.mxu0 %v3819
        %5061 = vmatpush.bf16.msra.mxu0 %v3818
        %5062 = vmatpush.bf16.msra.mxu0 %v3817
        %5063 = vmatpush.bf16.msra.mxu0 %v3816
        %5064 = vmatpush.bf16.msra.mxu0 %v3815
        %5065 = vmatpush.bf16.msra.mxu0 %v3814
        %5066 = vmatmul.bf16.gmra.mxu0 %v1326
        %v5067 = vpop.f32.mrf.mxu0
        %v5068 = vadd.f32 %v5055, %v5067
        %v5069 = vpop.f32.mrf.mxu0
        %5070 = vdwg.mxu0
        %5071 = vmatpush.bf16.msra.mxu0 %v3829
        %5072 = vmatpush.bf16.msra.mxu0 %v3828
        %5073 = vmatpush.bf16.msra.mxu0 %v3827
        %5074 = vmatpush.bf16.msra.mxu0 %v3826
        %5075 = vmatpush.bf16.msra.mxu0 %v3825
        %5076 = vmatpush.bf16.msra.mxu0 %v3824
        %5077 = vmatpush.bf16.msra.mxu0 %v3823
        %5078 = vmatpush.bf16.msra.mxu0 %v3822
        %5079 = vmatmul.bf16.gmra.mxu0 %v1327
        %v5080 = vpop.f32.mrf.mxu0
        %v5081 = vadd.f32 %v5068, %v5080
        %v5082 = vpop.f32.mrf.mxu0
        %5083 = vdwg.mxu0
        %5084 = vmatpush.bf16.msra.mxu0 %v3837
        %5085 = vmatpush.bf16.msra.mxu0 %v3836
        %5086 = vmatpush.bf16.msra.mxu0 %v3835
        %5087 = vmatpush.bf16.msra.mxu0 %v3834
        %5088 = vmatpush.bf16.msra.mxu0 %v3833
        %5089 = vmatpush.bf16.msra.mxu0 %v3832
        %5090 = vmatpush.bf16.msra.mxu0 %v3831
        %5091 = vmatpush.bf16.msra.mxu0 %v3830
        %5092 = vmatmul.bf16.gmra.mxu0 %v1328
        %v5093 = vpop.f32.mrf.mxu0
        %v5094 = vadd.f32 %v5081, %v5093
        %v5095 = vpop.f32.mrf.mxu0
        %5096 = vdwg.mxu0
        %5097 = vmatpush.bf16.msra.mxu0 %v3845
        %5098 = vmatpush.bf16.msra.mxu0 %v3844
        %5099 = vmatpush.bf16.msra.mxu0 %v3843
        %5100 = vmatpush.bf16.msra.mxu0 %v3842
        %5101 = vmatpush.bf16.msra.mxu0 %v3841
        %5102 = vmatpush.bf16.msra.mxu0 %v3840
        %5103 = vmatpush.bf16.msra.mxu0 %v3839
        %5104 = vmatpush.bf16.msra.mxu0 %v3838
        %5105 = vmatmul.bf16.gmra.mxu0 %v1329
        %v5106 = vpop.f32.mrf.mxu0
        %v5107 = vadd.f32 %v5094, %v5106
        %v5108 = vpop.f32.mrf.mxu0
        %5109 = vdwg.mxu0
        %5110 = vmatpush.bf16.msra.mxu0 %v3853
        %5111 = vmatpush.bf16.msra.mxu0 %v3852
        %5112 = vmatpush.bf16.msra.mxu0 %v3851
        %5113 = vmatpush.bf16.msra.mxu0 %v3850
        %5114 = vmatpush.bf16.msra.mxu0 %v3849
        %5115 = vmatpush.bf16.msra.mxu0 %v3848
        %5116 = vmatpush.bf16.msra.mxu0 %v3847
        %5117 = vmatpush.bf16.msra.mxu0 %v3846
        %5118 = vmatmul.bf16.gmra.mxu0 %v1332
        %v5119 = vpop.f32.mrf.mxu0
        %v5120 = vadd.f32 %v5107, %v5119
        %v5121 = vpop.f32.mrf.mxu0
        %5122 = vdwg.mxu0
        %5123 = vmatpush.bf16.msra.mxu0 %v3861
        %5124 = vmatpush.bf16.msra.mxu0 %v3860
        %5125 = vmatpush.bf16.msra.mxu0 %v3859
        %5126 = vmatpush.bf16.msra.mxu0 %v3858
        %5127 = vmatpush.bf16.msra.mxu0 %v3857
        %5128 = vmatpush.bf16.msra.mxu0 %v3856
        %5129 = vmatpush.bf16.msra.mxu0 %v3855
        %5130 = vmatpush.bf16.msra.mxu0 %v3854
        %5131 = vmatmul.bf16.gmra.mxu0 %v1333
        %v5132 = vpop.f32.mrf.mxu0
        %v5133 = vadd.f32 %v5120, %v5132
        %v5134 = vpop.f32.mrf.mxu0
        %5135 = vdwg.mxu0
        %5136 = vmatpush.bf16.msra.mxu0 %v3869
        %5137 = vmatpush.bf16.msra.mxu0 %v3868
        %5138 = vmatpush.bf16.msra.mxu0 %v3867
        %5139 = vmatpush.bf16.msra.mxu0 %v3866
        %5140 = vmatpush.bf16.msra.mxu0 %v3865
        %5141 = vmatpush.bf16.msra.mxu0 %v3864
        %5142 = vmatpush.bf16.msra.mxu0 %v3863
        %5143 = vmatpush.bf16.msra.mxu0 %v3862
        %5144 = vmatmul.bf16.gmra.mxu0 %v1334
        %v5145 = vpop.f32.mrf.mxu0
        %v5146 = vadd.f32 %v5133, %v5145
        %v5147 = vpop.f32.mrf.mxu0
        %5148 = vdwg.mxu0
        %5149 = vmatpush.bf16.msra.mxu0 %v3877
        %5150 = vmatpush.bf16.msra.mxu0 %v3876
        %5151 = vmatpush.bf16.msra.mxu0 %v3875
        %5152 = vmatpush.bf16.msra.mxu0 %v3874
        %5153 = vmatpush.bf16.msra.mxu0 %v3873
        %5154 = vmatpush.bf16.msra.mxu0 %v3872
        %5155 = vmatpush.bf16.msra.mxu0 %v3871
        %5156 = vmatpush.bf16.msra.mxu0 %v3870
        %5157 = vmatmul.bf16.gmra.mxu0 %v1335
        %v5158 = vpop.f32.mrf.mxu0
        %v5159 = vadd.f32 %v5146, %v5158
        %v5160 = vpop.f32.mrf.mxu0
        %5161 = vdwg.mxu0
        %5162 = vmatpush.bf16.msra.mxu0 %v3885
        %5163 = vmatpush.bf16.msra.mxu0 %v3884
        %5164 = vmatpush.bf16.msra.mxu0 %v3883
        %5165 = vmatpush.bf16.msra.mxu0 %v3882
        %5166 = vmatpush.bf16.msra.mxu0 %v3881
        %5167 = vmatpush.bf16.msra.mxu0 %v3880
        %5168 = vmatpush.bf16.msra.mxu0 %v3879
        %5169 = vmatpush.bf16.msra.mxu0 %v3878
        %5170 = vmatmul.bf16.gmra.mxu0 %v1336
        %v5171 = vpop.f32.mrf.mxu0
        %v5172 = vadd.f32 %v5159, %v5171
        %v5173 = vpop.f32.mrf.mxu0
        %5174 = vdwg.mxu0
        %5175 = vmatpush.bf16.msra.mxu0 %v3893
        %5176 = vmatpush.bf16.msra.mxu0 %v3892
        %5177 = vmatpush.bf16.msra.mxu0 %v3891
        %5178 = vmatpush.bf16.msra.mxu0 %v3890
        %5179 = vmatpush.bf16.msra.mxu0 %v3889
        %5180 = vmatpush.bf16.msra.mxu0 %v3888
        %5181 = vmatpush.bf16.msra.mxu0 %v3887
        %5182 = vmatpush.bf16.msra.mxu0 %v3886
        %5183 = vmatmul.bf16.gmra.mxu0 %v1337
        %v5184 = vpop.f32.mrf.mxu0
        %v5185 = vadd.f32 %v5172, %v5184
        %v5186 = vpop.f32.mrf.mxu0
        %5187 = vdwg.mxu0
        %5188 = vmatpush.bf16.msra.mxu0 %v3901
        %5189 = vmatpush.bf16.msra.mxu0 %v3900
        %5190 = vmatpush.bf16.msra.mxu0 %v3899
        %5191 = vmatpush.bf16.msra.mxu0 %v3898
        %5192 = vmatpush.bf16.msra.mxu0 %v3897
        %5193 = vmatpush.bf16.msra.mxu0 %v3896
        %5194 = vmatpush.bf16.msra.mxu0 %v3895
        %5195 = vmatpush.bf16.msra.mxu0 %v3894
        %5196 = vmatmul.bf16.gmra.mxu0 %v1338
        %v5197 = vpop.f32.mrf.mxu0
        %v5198 = vadd.f32 %v5185, %v5197
        %v5199 = vpop.f32.mrf.mxu0
        %5200 = vdwg.mxu0
        %5201 = vmatpush.bf16.msra.mxu0 %v3909
        %5202 = vmatpush.bf16.msra.mxu0 %v3908
        %5203 = vmatpush.bf16.msra.mxu0 %v3907
        %5204 = vmatpush.bf16.msra.mxu0 %v3906
        %5205 = vmatpush.bf16.msra.mxu0 %v3905
        %5206 = vmatpush.bf16.msra.mxu0 %v3904
        %5207 = vmatpush.bf16.msra.mxu0 %v3903
        %5208 = vmatpush.bf16.msra.mxu0 %v3902
        %5209 = vmatmul.bf16.gmra.mxu0 %v1339
        %v5210 = vpop.f32.mrf.mxu0
        %v5211 = vadd.f32 %v5198, %v5210
        %v5212 = vpop.f32.mrf.mxu0
        %5213 = vdwg.mxu0
        %5214 = vmatpush.bf16.msra.mxu0 %v3917
        %5215 = vmatpush.bf16.msra.mxu0 %v3916
        %5216 = vmatpush.bf16.msra.mxu0 %v3915
        %5217 = vmatpush.bf16.msra.mxu0 %v3914
        %5218 = vmatpush.bf16.msra.mxu0 %v3913
        %5219 = vmatpush.bf16.msra.mxu0 %v3912
        %5220 = vmatpush.bf16.msra.mxu0 %v3911
        %5221 = vmatpush.bf16.msra.mxu0 %v3910
        %5222 = vmatmul.bf16.gmra.mxu0 %v1342
        %v5223 = vpop.f32.mrf.mxu0
        %v5224 = vadd.f32 %v5211, %v5223
        %v5225 = vpop.f32.mrf.mxu0
        %5226 = vdwg.mxu0
        %5227 = vmatpush.bf16.msra.mxu0 %v3925
        %5228 = vmatpush.bf16.msra.mxu0 %v3924
        %5229 = vmatpush.bf16.msra.mxu0 %v3923
        %5230 = vmatpush.bf16.msra.mxu0 %v3922
        %5231 = vmatpush.bf16.msra.mxu0 %v3921
        %5232 = vmatpush.bf16.msra.mxu0 %v3920
        %5233 = vmatpush.bf16.msra.mxu0 %v3919
        %5234 = vmatpush.bf16.msra.mxu0 %v3918
        %5235 = vmatmul.bf16.gmra.mxu0 %v1343
        %v5236 = vpop.f32.mrf.mxu0
        %v5237 = vadd.f32 %v5224, %v5236
        %v5238 = vpop.f32.mrf.mxu0
        %5239 = vdwg.mxu0
        %5240 = vmatpush.bf16.msra.mxu0 %v3933
        %5241 = vmatpush.bf16.msra.mxu0 %v3932
        %5242 = vmatpush.bf16.msra.mxu0 %v3931
        %5243 = vmatpush.bf16.msra.mxu0 %v3930
        %5244 = vmatpush.bf16.msra.mxu0 %v3929
        %5245 = vmatpush.bf16.msra.mxu0 %v3928
        %5246 = vmatpush.bf16.msra.mxu0 %v3927
        %5247 = vmatpush.bf16.msra.mxu0 %v3926
        %5248 = vmatmul.bf16.gmra.mxu0 %v1344
        %v5249 = vpop.f32.mrf.mxu0
        %v5250 = vadd.f32 %v5237, %v5249
        %v5251 = vpop.f32.mrf.mxu0
        %5252 = vdwg.mxu0
        %5253 = vmatpush.bf16.msra.mxu0 %v3941
        %5254 = vmatpush.bf16.msra.mxu0 %v3940
        %5255 = vmatpush.bf16.msra.mxu0 %v3939
        %5256 = vmatpush.bf16.msra.mxu0 %v3938
        %5257 = vmatpush.bf16.msra.mxu0 %v3937
        %5258 = vmatpush.bf16.msra.mxu0 %v3936
        %5259 = vmatpush.bf16.msra.mxu0 %v3935
        %5260 = vmatpush.bf16.msra.mxu0 %v3934
        %5261 = vmatmul.bf16.gmra.mxu0 %v1345
        %v5262 = vpop.f32.mrf.mxu0
        %v5263 = vadd.f32 %v5250, %v5262
        %v5264 = vpop.f32.mrf.mxu0
        %5265 = vdwg.mxu0
        %5266 = vmatpush.bf16.msra.mxu0 %v3949
        %5267 = vmatpush.bf16.msra.mxu0 %v3948
        %5268 = vmatpush.bf16.msra.mxu0 %v3947
        %5269 = vmatpush.bf16.msra.mxu0 %v3946
        %5270 = vmatpush.bf16.msra.mxu0 %v3945
        %5271 = vmatpush.bf16.msra.mxu0 %v3944
        %5272 = vmatpush.bf16.msra.mxu0 %v3943
        %5273 = vmatpush.bf16.msra.mxu0 %v3942
        %5274 = vmatmul.bf16.gmra.mxu0 %v1346
        %v5275 = vpop.f32.mrf.mxu0
        %v5276 = vadd.f32 %v5263, %v5275
        %v5277 = vpop.f32.mrf.mxu0
        %5278 = vdwg.mxu0
        %5279 = vmatpush.bf16.msra.mxu0 %v3957
        %5280 = vmatpush.bf16.msra.mxu0 %v3956
        %5281 = vmatpush.bf16.msra.mxu0 %v3955
        %5282 = vmatpush.bf16.msra.mxu0 %v3954
        %5283 = vmatpush.bf16.msra.mxu0 %v3953
        %5284 = vmatpush.bf16.msra.mxu0 %v3952
        %5285 = vmatpush.bf16.msra.mxu0 %v3951
        %5286 = vmatpush.bf16.msra.mxu0 %v3950
        %5287 = vmatmul.bf16.gmra.mxu0 %v1347
        %v5288 = vpop.f32.mrf.mxu0
        %v5289 = vadd.f32 %v5276, %v5288
        %v5290 = vpop.f32.mrf.mxu0
        %5291 = vdwg.mxu0
        %5292 = vmatpush.bf16.msra.mxu0 %v3965
        %5293 = vmatpush.bf16.msra.mxu0 %v3964
        %5294 = vmatpush.bf16.msra.mxu0 %v3963
        %5295 = vmatpush.bf16.msra.mxu0 %v3962
        %5296 = vmatpush.bf16.msra.mxu0 %v3961
        %5297 = vmatpush.bf16.msra.mxu0 %v3960
        %5298 = vmatpush.bf16.msra.mxu0 %v3959
        %5299 = vmatpush.bf16.msra.mxu0 %v3958
        %5300 = vmatmul.bf16.gmra.mxu0 %v1348
        %v5301 = vpop.f32.mrf.mxu0
        %v5302 = vadd.f32 %v5289, %v5301
        %v5303 = vpop.f32.mrf.mxu0
        %5304 = vdwg.mxu0
        %5305 = vmatpush.bf16.msra.mxu0 %v3973
        %5306 = vmatpush.bf16.msra.mxu0 %v3972
        %5307 = vmatpush.bf16.msra.mxu0 %v3971
        %5308 = vmatpush.bf16.msra.mxu0 %v3970
        %5309 = vmatpush.bf16.msra.mxu0 %v3969
        %5310 = vmatpush.bf16.msra.mxu0 %v3968
        %5311 = vmatpush.bf16.msra.mxu0 %v3967
        %5312 = vmatpush.bf16.msra.mxu0 %v3966
        %5313 = vmatmul.bf16.gmra.mxu0 %v1349
        %v5314 = vpop.f32.mrf.mxu0
        %v5315 = vadd.f32 %v5302, %v5314
        %v5316 = vpop.f32.mrf.mxu0
        %5317 = vdwg.mxu0
        %v5318 = vadd.f32 %v237, %v5315
        %5319 = vst [vmem:[#allocation2] sm:$0x3] %v5318
        %p5320 = scmp.eq.s32.totalorder %s17, 1
        // Predicated region
        $region45: #{cnn_forward.5} parent=39 // pred_check
          %p5321 = pneg %p5320
        $region46: #{cnn_forward.5} parent=39 // pred_check_branch
          %5323 = sbr.rel (%p5321) target = $region48
        $region47: #{cnn_forward.5} parent=39 // pred_region
          %v5324 = vld [vmem:[#allocation2] sm:$0x3]
          %v5325 = vld [vmem:[%s2] sm:$0x1]
          %v5327 = vperm.slane %v5325, 0
          %v5329 = vadd.f32 %v5324, %v5327
          %v5330 = vmax.f32 %v5329, 0.0
          %v5331 = vpack.c.bf16 %v5330, %v5330
          %v5332 = vld [vmem:[%s3] sm:$0xf]
          %v5333 = vld [vmem:[%s3 + $0x4] sm:$0xf]
          %v5334 = vld [vmem:[%s3 + $0x8] sm:$0xf]
          %v5335 = vld [vmem:[%s3 + $0xc] sm:$0xf]
          %v5336 = vld [vmem:[%s3 + $0x10] sm:$0xf]
          %v5337 = vld [vmem:[%s3 + $0x14] sm:$0xf]
          %v5338 = vld [vmem:[%s3 + $0x18] sm:$0xf]
          %v5339 = vld [vmem:[%s3 + $0x1c] sm:$0xf]
          %v5340 = vld [vmem:[%s3 + $0x20] sm:$0xf]
          %v5341 = vld [vmem:[%s3 + $0x24] sm:$0xf]
          %v5342 = vld [vmem:[%s3 + $0x28] sm:$0xf]
          %v5343 = vld [vmem:[%s3 + $0x2c] sm:$0xf]
          %v5344 = vld [vmem:[%s3 + $0x30] sm:$0xf]
          %v5345 = vld [vmem:[%s3 + $0x34] sm:$0xf]
          %v5346 = vld [vmem:[%s3 + $0x38] sm:$0xf]
          %v5347 = vld [vmem:[%s3 + $0x3c] sm:$0xf]
          %v5348 = vld [vmem:[%s4] sm:$0x1]
          %v5350 = vperm.slane %v5348, 0
          %v5368 = vunpack.c.l.b16 %v5332
          %v5369 = vunpack.c.l.b16 %v5333
          %v5370 = vunpack.c.l.b16 %v5334
          %v5371 = vunpack.c.l.b16 %v5335
          %v5372 = vunpack.c.l.b16 %v5336
          %v5373 = vunpack.c.l.b16 %v5337
          %v5374 = vunpack.c.l.b16 %v5338
          %v5375 = vunpack.c.l.b16 %v5339
          %v5376 = vunpack.c.l.b16 %v5340
          %v5377 = vunpack.c.l.b16 %v5341
          %v5378 = vunpack.c.l.b16 %v5342
          %v5379 = vunpack.c.l.b16 %v5343
          %v5380 = vunpack.c.l.b16 %v5344
          %v5381 = vunpack.c.l.b16 %v5345
          %v5382 = vunpack.c.l.b16 %v5346
          %v5383 = vunpack.c.l.b16 %v5347
          %v5384 = vpack.c.b16 %v5369, %v5368
          %v5385 = vpack.c.b16 %v5371, %v5370
          %v5386 = vpack.c.b16 %v5373, %v5372
          %v5387 = vpack.c.b16 %v5375, %v5374
          %v5388 = vpack.c.b16 %v5377, %v5376
          %v5389 = vpack.c.b16 %v5379, %v5378
          %v5390 = vpack.c.b16 %v5381, %v5380
          %v5391 = vpack.c.b16 %v5383, %v5382
          %5400 = vmatpush.bf16.msra.mxu0 %v5391
          %5401 = vmatpush.bf16.msra.mxu0 %v5390
          %5402 = vmatpush.bf16.msra.mxu0 %v5389
          %5403 = vmatpush.bf16.msra.mxu0 %v5388
          %5404 = vmatpush.bf16.msra.mxu0 %v5387
          %5405 = vmatpush.bf16.msra.mxu0 %v5386
          %5406 = vmatpush.bf16.msra.mxu0 %v5385
          %5407 = vmatpush.bf16.msra.mxu0 %v5384
          %5408 = vmatmul.bf16.gmra.mxu0 %v5331
          %v5409 = vpop.f32.mrf.mxu0
          %v5410 = vadd.f32 %v5350, %v5409
          %v5411 = vpop.f32.mrf.mxu0
          %5412 = vdwg.mxu0
          %vm5413 = vcmask 74752
          %5414 = vst.msk [vmem:[#allocation3] sm:$0x3] %vm5413, %v5410
        $region48: #{cnn_forward.5} parent=39 // pred_fallthru
          _
        // Predicated region
        $region49: #{cnn_forward.5} parent=39 // pred_check
          %p5415 = pneg %p145
        $region50: #{cnn_forward.5} parent=39 // pred_check_branch
          %5417 = sbr.rel (%p5415) target = $region52
        $region51: #{cnn_forward.5} parent=39 // pred_region
          %5419 = vsyncadd [#allocation4], 0
          %s5421 = sshll.u32 [#allocation3], 4
          %s5422 = int_to_ptr.vmem [resolvable:$true] %s5421
          %s5423 = sshll.u32 %s5, 4
          %s5424 = int_to_ptr.hbm [resolvable:$true] %s5423
          %5426 = dma.vmem_to_hbm [thread:$0]  %s5422, 32, %s5424, [#allocation4]
        $region52: #{cnn_forward.5} parent=39 // pred_fallthru
          _
        // Predicated region
        $region53: #{cnn_forward.5} parent=39 // pred_check
          %p5427 = pneg %p145
        $region54: #{cnn_forward.5} parent=39 // pred_check_branch
          %5429 = sbr.rel (%p5427) target = $region56
        $region55: #{cnn_forward.5} parent=39 // pred_region
          %5431 = dma.done [#allocation4], 32
        $region56: #{cnn_forward.5} parent=39 // pred_fallthru
          _
      $region40: #{cnn_forward.5} parent=5 // pred_fallthru
        _
      %p5432 = scmp.le.s32.totalorder 2, %s12
      // Predicated region
      $region57: #{cnn_forward.5} parent=5 // pred_check
        %p5433 = pneg %p5432
      $region58: #{cnn_forward.5} parent=5 // pred_check_branch
        %5435 = sbr.rel (%p5433) target = $region60
      $region59: #{cnn_forward.5} parent=5 // pred_region
        %s5436 = ssub.s32 %s12, 2
      $region60: #{cnn_forward.5} parent=5 // pred_fallthru
        _
    $region6: #{cnn_forward.5} parent=1 // loop_footer
      %s16 = sadd.s32 1, %s12
    $region7: #{cnn_forward.5} parent=1 // loop_footer_branch
      %11 = sbr.rel target = $region3
    $region8: #{cnn_forward.5} parent=1 // loop_exit
      _
    %5437 = vsyncpa [#allocation4], 1
    %s5438 = scalar_lea.sflag [#allocation4], 1
    %5439 = vsyncpa %s5438, 1

</llo_original>
